<compile_context>
chip_gen: v7x
topology: tpu7x:2x2x1
jax: 0.10.0
libtpu: 0.0.40
codegen_flags: <defaults>
</compile_context>

<pallas_src>
import functools
import math

import jax
import jax.numpy as jnp
from jax import lax
from jax.experimental import pallas as pl
from jax.experimental.pallas import tpu as pltpu

# MXU input dtype (accumulation stays f32 via preferred_element_type).
# Set to jnp.float32 for bit-faithful f32 matmuls.
MATMUL_DTYPE = jnp.bfloat16
LN_EPS = 1e-5
NEG_INF = -1e30

_COMPILER_PARAMS = pltpu.CompilerParams(
    dimension_semantics=("parallel",),
    vmem_limit_bytes=32 * 1024 * 1024,
)


# ------------------------------ kernel helpers ------------------------------ #

def _mm(a, b):
    """MXU matmul: bf16 inputs, f32 accumulation."""
    return jnp.dot(a.astype(MATMUL_DTYPE), b.astype(MATMUL_DTYPE),
                   preferred_element_type=jnp.float32)


def _layer_norm(x, g, b):
    """PyTorch LayerNorm over last dim (biased variance), f32 math."""
    mu = jnp.mean(x, axis=-1, keepdims=True)
    xc = x - mu
    var = jnp.mean(xc * xc, axis=-1, keepdims=True)
    return xc * lax.rsqrt(var + LN_EPS) * g + b


# -------------------------------- kernels ----------------------------------- #

def _embed_kernel(xc_ref, xm_ref, wc_ref, wt_ref, pe_ref, o_ref):
    # xc: (1, L, 3C) circularly-shifted token window, xm: (1, L, M) time marks.
    o_ref[0] = (_mm(xc_ref[0], wc_ref[...])
                + _mm(xm_ref[0], wt_ref[...])
                + pe_ref[...])


def _attention_body(x, xkv, wq_ref, bq_ref, wkv_ref, bkv_ref, wo_ref, bo_ref,
                    g_ref, b_ref, o_ref, n_heads, causal):
    """o = LayerNorm(x + OutProj(MHA(Q(x), K(xkv), V(xkv)))) for one batch elem."""
    L, D = x.shape                      # static Python ints
    S = xkv.shape[0]
    H = n_heads                         # static (bound via functools.partial)
    E = D // H
    scale = 1.0 / math.sqrt(E)

    q = _mm(x, wq_ref[...]) + bq_ref[...]          # (L, D)  f32
    kv = _mm(xkv, wkv_ref[...]) + bkv_ref[...]     # (S, 2D) f32, fused K|V proj
    k = kv[:, :D]
    v = kv[:, D:]

    # Heads become a batch dim: one batched dot_general instead of H lane-sliced
    # small-K matmuls.
    qh = jnp.transpose(q.reshape(L, H, E), (1, 0, 2)).astype(MATMUL_DTYPE)  # (H,L,E)
    kh = jnp.transpose(k.reshape(S, H, E), (1, 0, 2)).astype(MATMUL_DTYPE)  # (H,S,E)
    vh = jnp.transpose(v.reshape(S, H, E), (1, 0, 2)).astype(MATMUL_DTYPE)  # (H,S,E)

    s = jnp.einsum("hle,hse->hls", qh, kh,
                   preferred_element_type=jnp.float32) * scale              # (H,L,S)
    if causal:
        row = lax.broadcasted_iota(jnp.int32, (L, S), 0)
        col = lax.broadcasted_iota(jnp.int32, (L, S), 1)
        s = jnp.where((col > row)[None, :, :], NEG_INF, s)

    m = jnp.max(s, axis=-1, keepdims=True)
    p = jnp.exp(s - m)
    p = p / jnp.sum(p, axis=-1, keepdims=True)     # exact softmax normalization

    oh = jnp.einsum("hls,hse->hle", p.astype(MATMUL_DTYPE), vh,
                    preferred_element_type=jnp.float32)                     # (H,L,E)
    o = jnp.transpose(oh, (1, 0, 2)).reshape(L, D)                          # (L, D)

    attn_out = _mm(o, wo_ref[...]) + bo_ref[...]   # single full-depth out-proj
    o_ref[0] = _layer_norm(x + attn_out, g_ref[...], b_ref[...])


def _self_attn_kernel(x_ref, wq_ref, bq_ref, wkv_ref, bkv_ref, wo_ref, bo_ref,
                      g_ref, b_ref, o_ref, *, n_heads, causal):
    x = x_ref[0]
    _attention_body(x, x, wq_ref, bq_ref, wkv_ref, bkv_ref, wo_ref, bo_ref,
                    g_ref, b_ref, o_ref, n_heads, causal)


def _cross_attn_kernel(xq_ref, xkv_ref, wq_ref, bq_ref, wkv_ref, bkv_ref,
                       wo_ref, bo_ref, g_ref, b_ref, o_ref, *, n_heads, causal):
    _attention_body(xq_ref[0], xkv_ref[0], wq_ref, bq_ref, wkv_ref, bkv_ref,
                    wo_ref, bo_ref, g_ref, b_ref, o_ref, n_heads, causal)


def _ffn_block_kernel(x_ref, w1_ref, b1_ref, w2_ref, b2_ref, g_ref, b_ref, o_ref,
                      *, activation):
    """LayerNorm(x + W2 act(W1 x)) for one batch element."""
    x = x_ref[0]                                   # (L, D)
    h = _mm(x, w1_ref[...]) + b1_ref[...]
    if activation == "relu":
        h = jnp.maximum(h, 0.0)
    else:
        h = jax.nn.gelu(h, approximate=False)
    y = _mm(h, w2_ref[...]) + b2_ref[...]
    o_ref[0] = _layer_norm(x + y, g_ref[...], b_ref[...])


def _ln_kernel(x_ref, g_ref, b_ref, o_ref):
    o_ref[0] = _layer_norm(x_ref[0], g_ref[...], b_ref[...])


def _ln_proj_kernel(x_ref, g_ref, b_ref, wp_ref, bp_ref, o_ref):
    xn = _layer_norm(x_ref[0], g_ref[...], b_ref[...])
    o_ref[0] = _mm(xn, wp_ref[...]) + bp_ref[...]


# --------------------------- pallas_call wrappers ---------------------------- #

def _full_spec(shape):
    n = len(shape)
    return pl.BlockSpec(tuple(shape), lambda b, _n=n: (0,) * _n)


def _batch_spec(shape):
    n = len(shape)
    return pl.BlockSpec((1,) + tuple(shape), lambda b, _n=n: (b,) + (0,) * _n)


def data_embedding(x, x_mark, p, pe):
    """TokenEmbedding (circular conv1d k=3, no bias) + TimeFeature linear + pos."""
    B, L, C = x.shape
    M = x_mark.shape[-1]
    D = p["conv_w_flat"].shape[1]
    # circular conv window: [x[(t-1)%L], x[t], x[(t+1)%L]] -> one (3C, D) matmul
    x_cat = jnp.concatenate(
        [jnp.roll(x, 1, axis=1), x, jnp.roll(x, -1, axis=1)], axis=-1)
    return pl.pallas_call(
        _embed_kernel,
        out_shape=jax.ShapeDtypeStruct((B, L, D), jnp.float32),
        grid=(B,),
        in_specs=[_batch_spec((L, 3 * C)), _batch_spec((L, M)),
                  _full_spec((3 * C, D)), _full_spec((M, D)), _full_spec((L, D))],
        out_specs=_batch_spec((L, D)),
        compiler_params=_COMPILER_PARAMS,
    )(x_cat, x_mark, p["conv_w_flat"], p["temporal_w"], pe[:L])


def self_attention_block(x, ap, ln, n_heads, causal):
    B, L, D = x.shape
    kernel = functools.partial(_self_attn_kernel, n_heads=n_heads, causal=causal)
    return pl.pallas_call(
        kernel,
        out_shape=jax.ShapeDtypeStruct((B, L, D), jnp.float32),
        grid=(B,),
        in_specs=[_batch_spec((L, D)),
                  _full_spec((D, D)), _full_spec((1, D)),
                  _full_spec((D, 2 * D)), _full_spec((1, 2 * D)),
                  _full_spec((D, D)), _full_spec((1, D)),
                  _full_spec((1, D)), _full_spec((1, D))],
        out_specs=_batch_spec((L, D)),
        input_output_aliases={0: 0},   # residual buffer reused in place
        compiler_params=_COMPILER_PARAMS,
    )(x, ap["wq"], ap["bq"], ap["wkv"], ap["bkv"], ap["wo"], ap["bo"],
      ln["g"], ln["b"])


def cross_attention_block(x_q, x_kv, ap, ln, n_heads, causal):
    B, L, D = x_q.shape
    S = x_kv.shape[1]
    kernel = functools.partial(_cross_attn_kernel, n_heads=n_heads, causal=causal)
    return pl.pallas_call(
        kernel,
        out_shape=jax.ShapeDtypeStruct((B, L, D), jnp.float32),
        grid=(B,),
        in_specs=[_batch_spec((L, D)), _batch_spec((S, D)),
                  _full_spec((D, D)), _full_spec((1, D)),
                  _full_spec((D, 2 * D)), _full_spec((1, 2 * D)),
                  _full_spec((D, D)), _full_spec((1, D)),
                  _full_spec((1, D)), _full_spec((1, D))],
        out_specs=_batch_spec((L, D)),
        input_output_aliases={0: 0},
        compiler_params=_COMPILER_PARAMS,
    )(x_q, x_kv, ap["wq"], ap["bq"], ap["wkv"], ap["bkv"], ap["wo"], ap["bo"],
      ln["g"], ln["b"])


def ffn_block(x, fp, ln, activation):
    B, L, D = x.shape
    d_ff = fp["w1"].shape[1]
    kernel = functools.partial(_ffn_block_kernel, activation=activation)
    return pl.pallas_call(
        kernel,
        out_shape=jax.ShapeDtypeStruct((B, L, D), jnp.float32),
        grid=(B,),
        in_specs=[_batch_spec((L, D)),
                  _full_spec((D, d_ff)), _full_spec((1, d_ff)),
                  _full_spec((d_ff, D)), _full_spec((1, D)),
                  _full_spec((1, D)), _full_spec((1, D))],
        out_specs=_batch_spec((L, D)),
        input_output_aliases={0: 0},
        compiler_params=_COMPILER_PARAMS,
    )(x, fp["w1"], fp["b1"], fp["w2"], fp["b2"], ln["g"], ln["b"])


def layer_norm_call(x, ln):
    B, L, D = x.shape
    return pl.pallas_call(
        _ln_kernel,
        out_shape=jax.ShapeDtypeStruct((B, L, D), jnp.float32),
        grid=(B,),
        in_specs=[_batch_spec((L, D)), _full_spec((1, D)), _full_spec((1, D))],
        out_specs=_batch_spec((L, D)),
        compiler_params=_COMPILER_PARAMS,
    )(x, ln["g"], ln["b"])


def ln_project(x, ln, pp):
    B, L, D = x.shape
    c_out = pp["w"].shape[1]
    return pl.pallas_call(
        _ln_proj_kernel,
        out_shape=jax.ShapeDtypeStruct((B, L, c_out), jnp.float32),
        grid=(B,),
        in_specs=[_batch_spec((L, D)), _full_spec((1, D)), _full_spec((1, D)),
                  _full_spec((D, c_out)), _full_spec((1, c_out))],
        out_specs=_batch_spec((L, c_out)),
        compiler_params=_COMPILER_PARAMS,
    )(x, ln["g"], ln["b"], pp["w"], pp["b"])


# ------------------------------- model pieces -------------------------------- #

def positional_embedding(d_model, max_len=512):
    position = jnp.arange(max_len, dtype=jnp.float32)[:, None]
    div_term = jnp.exp(
        jnp.arange(0, d_model, 2, dtype=jnp.float32) * -(math.log(10000.0) / d_model))
    pe = jnp.zeros((max_len, d_model), jnp.float32)
    pe = pe.at[:, 0::2].set(jnp.sin(position * div_term))
    pe = pe.at[:, 1::2].set(jnp.cos(position * div_term))
    return pe


def encoder_layer(x, p, n_heads, activation):
    x = self_attention_block(x, p["attn"], p["norm1"], n_heads, causal=False)
    return ffn_block(x, p["ffn"], p["norm2"], activation)


def decoder_layer(x, cross, p, n_heads, activation):
    x = self_attention_block(x, p["self_attn"], p["norm1"], n_heads, causal=True)
    x = cross_attention_block(x, cross, p["cross_attn"], p["norm2"], n_heads,
                              causal=False)
    return ffn_block(x, p["ffn"], p["norm3"], activation)


def vanilla_transformer_forward(params, x_enc, x_mark_enc, x_dec, x_mark_dec,
                                *, n_heads, pred_len, activation):
    pe = params["pe"]
    enc_out = data_embedding(x_enc, x_mark_enc, params["enc_emb"], pe)
    for lp in params["enc_layers"]:
        enc_out = encoder_layer(enc_out, lp, n_heads, activation)
    enc_out = layer_norm_call(enc_out, params["enc_norm"])

    dec_out = data_embedding(x_dec, x_mark_dec, params["dec_emb"], pe)
    for lp in params["dec_layers"]:
        dec_out = decoder_layer(dec_out, enc_out, lp, n_heads, activation)
    # Final LayerNorm + Linear are per-row: slicing to the last pred_len rows
    # BEFORE the fused LN+proj kernel gives identical results to slicing after,
    # and skips label_len rows of work.
    dec_len = dec_out.shape[1]
    dec_tail = lax.slice_in_dim(dec_out, dec_len - pred_len, dec_len, axis=1)
    return ln_project(dec_tail, params["dec_norm"], params["proj"])


# ------------------------------ parameter init ------------------------------- #

def init_params(key, cfg):
    d_model, d_ff = cfg["d_model"], cfg["d_ff"]
    keys = iter(jax.random.split(key, 256))

    def w(din, dout):
        # Matmul weights pre-cast to bf16 (what feeds the MXU; halves DMA bytes).
        return (jax.random.normal(next(keys), (din, dout), jnp.float32)
                / math.sqrt(din)).astype(MATMUL_DTYPE)

    def b(dout):
        return (jax.random.normal(next(keys), (dout,), jnp.float32) * 0.02
                ).reshape(1, dout)

    def norm():
        return {"g": jnp.ones((1, d_model), jnp.float32),
                "b": jnp.zeros((1, d_model), jnp.float32)}

    def attn():
        # Q projection separate; K and V projections concatenated into one (D, 2D)
        # weight so the kernel does a single fused KV matmul.  (n_heads is NOT
        # stored here: it must stay a static Python int, not a traced leaf.)
        return {"wq": w(d_model, d_model), "bq": b(d_model),
                "wkv": jnp.concatenate([w(d_model, d_model), w(d_model, d_model)], 1),
                "bkv": jnp.concatenate([b(d_model), b(d_model)], 1),
                "wo": w(d_model, d_model), "bo": b(d_model)}

    def emb(c_in):
        # Conv1d(c_in, d_model, k=3, circular, bias=False) flattened to (3*c_in, D).
        # NOTE: a real PyTorch checkpoint maps via weight.permute(2, 1, 0).reshape(...).
        return {"conv_w_flat": w(3 * c_in, d_model),
                "temporal_w": w(cfg["n_mark"], d_model)}

    def ffn():
        return {"w1": w(d_model, d_ff), "b1": b(d_ff),
                "w2": w(d_ff, d_model), "b2": b(d_model)}

    def enc_layer():
        return {"attn": attn(), "ffn": ffn(), "norm1": norm(), "norm2": norm()}

    def dec_layer():
        return {"self_attn": attn(), "cross_attn": attn(), "ffn": ffn(),
                "norm1": norm(), "norm2": norm(), "norm3": norm()}

    return {
        "pe": positional_embedding(d_model),
        "enc_emb": emb(cfg["enc_in"]),
        "dec_emb": emb(cfg["dec_in"]),
        "enc_layers": [enc_layer() for _ in range(cfg["e_layers"])],
        "enc_norm": norm(),
        "dec_layers": [dec_layer() for _ in range(cfg["d_layers"])],
        "dec_norm": norm(),
        "proj": {"w": w(d_model, cfg["c_out"]), "b": b(cfg["c_out"])},
    }


# ----------------------------------- main ------------------------------------ #

if __name__ == "__main__":
    # Small config consistent with the module: embed='timeF', freq='h' (4 marks).
    # NOTE: d_model=32 / L=8 underfills the (8,128) vreg tile; the kernels are
    # only MXU/VPU-efficient at d_model >= 128 (shapes kept small per harness).
    cfg = dict(enc_in=4, dec_in=4, c_out=4, d_model=32, n_heads=4, d_ff=64,
               e_layers=2, d_layers=1, seq_len=8, label_len=4, pred_len=4,
               n_mark=4, activation="relu", output_attention=False)

    key = jax.random.PRNGKey(0)
    kp, kx1, kx2, kx3, kx4 = jax.random.split(key, 5)
    params = init_params(kp, cfg)

    B = 2
    dec_len = cfg["label_len"] + cfg["pred_len"]
    x_enc = jax.random.normal(kx1, (B, cfg["seq_len"], cfg["enc_in"]), jnp.float32)
    x_mark_enc = jax.random.normal(kx2, (B, cfg["seq_len"], cfg["n_mark"]), jnp.float32)
    x_dec = jax.random.normal(kx3, (B, dec_len, cfg["dec_in"]), jnp.float32)
    x_mark_dec = jax.random.normal(kx4, (B, dec_len, cfg["n_mark"]), jnp.float32)

    fwd = jax.jit(functools.partial(vanilla_transformer_forward,
                                    n_heads=cfg["n_heads"],
                                    pred_len=cfg["pred_len"],
                                    activation=cfg["activation"]))
    out = jax.block_until_ready(fwd(params, x_enc, x_mark_enc, x_dec, x_mark_dec))
    assert out.shape == (B, cfg["pred_len"], cfg["c_out"]), out.shape
    assert bool(jnp.all(jnp.isfinite(out)))
    print("KERNEL_OK")
</pallas_src>

<mosaic_0001>
module attributes {stable_mosaic.version = 11 : i64} {
  func.func @_embed_kernel(%arg0: i32, %arg1: memref<1x8x12xf32, #tpu.memory_space<vmem>>, %arg2: memref<1x8x4xf32, #tpu.memory_space<vmem>>, %arg3: memref<12x32xbf16, #tpu.memory_space<vmem>>, %arg4: memref<4x32xbf16, #tpu.memory_space<vmem>>, %arg5: memref<8x32xf32, #tpu.memory_space<vmem>>, %arg6: memref<1x8x32xf32, #tpu.memory_space<vmem>>) attributes {dimension_semantics = [#tpu.dimension_semantics<parallel>], iteration_bounds = array<i64: 2>, scalar_prefetch = 0 : i64, scratch_operands = 0 : i64, tpu.core_type = #tpu.core_type<tc>, window_params = [{transform_indices = @transform_0, window_bounds = array<i64: 1, 8, 12>}, {transform_indices = @transform_1, window_bounds = array<i64: 1, 8, 4>}, {pipeline_mode = #tpu.pipeline_mode<synchronous>, transform_indices = @transform_2, window_bounds = array<i64: 12, 32>}, {pipeline_mode = #tpu.pipeline_mode<synchronous>, transform_indices = @transform_3, window_bounds = array<i64: 4, 32>}, {pipeline_mode = #tpu.pipeline_mode<synchronous>, transform_indices = @transform_4, window_bounds = array<i64: 8, 32>}, {transform_indices = @transform_5, window_bounds = array<i64: 1, 8, 32>}]} {
    %c0 = arith.constant 0 : index
    %c0_0 = arith.constant 0 : index
    %c0_1 = arith.constant 0 : index
    %0 = vector.load %arg1[%c0, %c0_0, %c0_1] : memref<1x8x12xf32, #tpu.memory_space<vmem>>, vector<1x8x12xf32>
    %1 = vector.shape_cast %0 : vector<1x8x12xf32> to vector<8x12xf32>
    %c0_2 = arith.constant 0 : index
    %c0_3 = arith.constant 0 : index
    %2 = vector.load %arg3[%c0_2, %c0_3] : memref<12x32xbf16, #tpu.memory_space<vmem>>, vector<12x32xbf16>
    %3 = arith.truncf %1 : vector<8x12xf32> to vector<8x12xbf16>
    %cst = arith.constant dense<0.000000e+00> : vector<8x32xf32>
    %4 = tpu.matmul %3, %2, %cst {dimension_numbers = #tpu.dot_dimension_numbers<[1], [0], [0], [1], [0, 0, 1, 1], [], []>} : vector<8x12xbf16>, vector<12x32xbf16>, vector<8x32xf32> -> vector<8x32xf32>
    %c0_4 = arith.constant 0 : index
    %c0_5 = arith.constant 0 : index
    %c0_6 = arith.constant 0 : index
    %5 = vector.load %arg2[%c0_4, %c0_5, %c0_6] : memref<1x8x4xf32, #tpu.memory_space<vmem>>, vector<1x8x4xf32>
    %6 = vector.shape_cast %5 : vector<1x8x4xf32> to vector<8x4xf32>
    %c0_7 = arith.constant 0 : index
    %c0_8 = arith.constant 0 : index
    %7 = vector.load %arg4[%c0_7, %c0_8] : memref<4x32xbf16, #tpu.memory_space<vmem>>, vector<4x32xbf16>
    %8 = arith.truncf %6 : vector<8x4xf32> to vector<8x4xbf16>
    %cst_9 = arith.constant dense<0.000000e+00> : vector<8x32xf32>
    %9 = tpu.matmul %8, %7, %cst_9 {dimension_numbers = #tpu.dot_dimension_numbers<[1], [0], [0], [1], [0, 0, 1, 1], [], []>} : vector<8x4xbf16>, vector<4x32xbf16>, vector<8x32xf32> -> vector<8x32xf32>
    %10 = arith.addf %4, %9 : vector<8x32xf32>
    %c0_10 = arith.constant 0 : index
    %c0_11 = arith.constant 0 : index
    %11 = vector.load %arg5[%c0_10, %c0_11] : memref<8x32xf32, #tpu.memory_space<vmem>>, vector<8x32xf32>
    %12 = arith.addf %10, %11 : vector<8x32xf32>
    %c0_12 = arith.constant 0 : index
    %c0_13 = arith.constant 0 : index
    %c0_14 = arith.constant 0 : index
    %13 = vector.load %arg6[%c0_12, %c0_13, %c0_14] : memref<1x8x32xf32, #tpu.memory_space<vmem>>, vector<1x8x32xf32>
    %14 = vector.shape_cast %13 : vector<1x8x32xf32> to vector<8x32xf32>
    %15 = vector.shape_cast %12 : vector<8x32xf32> to vector<1x8x32xf32>
    tpu.vector_store %arg6[%c0_12, %c0_13, %c0_14], %15 {strides = array<i32>} : memref<1x8x32xf32, #tpu.memory_space<vmem>>, vector<1x8x32xf32>,
    return
  }
  func.func @transform_0(%arg0: i32) -> (i32, i32, i32) {
    %c0_i32 = arith.constant 0 : i32
    %c0_i32_0 = arith.constant 0 : i32
    %c0_i32_1 = arith.constant 0 : i32
    return %arg0, %c0_i32, %c0_i32_0 : i32, i32, i32
  }
  func.func @transform_1(%arg0: i32) -> (i32, i32, i32) {
    %c0_i32 = arith.constant 0 : i32
    %c0_i32_0 = arith.constant 0 : i32
    %c0_i32_1 = arith.constant 0 : i32
    return %arg0, %c0_i32, %c0_i32_0 : i32, i32, i32
  }
  func.func @transform_2(%arg0: i32) -> (i32, i32) {
    %c0_i32 = arith.constant 0 : i32
    %c0_i32_0 = arith.constant 0 : i32
    %c0_i32_1 = arith.constant 0 : i32
    return %c0_i32, %c0_i32_0 : i32, i32
  }
  func.func @transform_3(%arg0: i32) -> (i32, i32) {
    %c0_i32 = arith.constant 0 : i32
    %c0_i32_0 = arith.constant 0 : i32
    %c0_i32_1 = arith.constant 0 : i32
    return %c0_i32, %c0_i32_0 : i32, i32
  }
  func.func @transform_4(%arg0: i32) -> (i32, i32) {
    %c0_i32 = arith.constant 0 : i32
    %c0_i32_0 = arith.constant 0 : i32
    %c0_i32_1 = arith.constant 0 : i32
    return %c0_i32, %c0_i32_0 : i32, i32
  }
  func.func @transform_5(%arg0: i32) -> (i32, i32, i32) {
    %c0_i32 = arith.constant 0 : i32
    %c0_i32_0 = arith.constant 0 : i32
    %c0_i32_1 = arith.constant 0 : i32
    return %arg0, %c0_i32, %c0_i32_0 : i32, i32, i32
  }
}

module attributes {stable_mosaic.version = 11 : i64} {
  func.func @_ln_kernel(%arg0: i32, %arg1: memref<1x8x32xf32, #tpu.memory_space<vmem>>, %arg2: memref<1x32xf32, #tpu.memory_space<vmem>>, %arg3: memref<1x32xf32, #tpu.memory_space<vmem>>, %arg4: memref<1x8x32xf32, #tpu.memory_space<vmem>>) attributes {dimension_semantics = [#tpu.dimension_semantics<parallel>], iteration_bounds = array<i64: 2>, scalar_prefetch = 0 : i64, scratch_operands = 0 : i64, tpu.core_type = #tpu.core_type<tc>, window_params = [{transform_indices = @transform_0, window_bounds = array<i64: 1, 8, 32>}, {pipeline_mode = #tpu.pipeline_mode<synchronous>, transform_indices = @transform_1, window_bounds = array<i64: 1, 32>}, {pipeline_mode = #tpu.pipeline_mode<synchronous>, transform_indices = @transform_2, window_bounds = array<i64: 1, 32>}, {transform_indices = @transform_3, window_bounds = array<i64: 1, 8, 32>}]} {
    %c0 = arith.constant 0 : index
    %c0_0 = arith.constant 0 : index
    %c0_1 = arith.constant 0 : index
    %0 = vector.load %arg1[%c0, %c0_0, %c0_1] : memref<1x8x32xf32, #tpu.memory_space<vmem>>, vector<1x8x32xf32>
    %1 = vector.shape_cast %0 : vector<1x8x32xf32> to vector<8x32xf32>
    %c0_2 = arith.constant 0 : index
    %c0_3 = arith.constant 0 : index
    %2 = vector.load %arg2[%c0_2, %c0_3] : memref<1x32xf32, #tpu.memory_space<vmem>>, vector<1x32xf32>
    %c0_4 = arith.constant 0 : index
    %c0_5 = arith.constant 0 : index
    %3 = vector.load %arg3[%c0_4, %c0_5] : memref<1x32xf32, #tpu.memory_space<vmem>>, vector<1x32xf32>
    %cst = arith.constant dense<0.000000e+00> : vector<8xf32>
    %4 = vector.multi_reduction <add>, %1, %cst [1] : vector<8x32xf32> to vector<8xf32>
    %5 = vector.shape_cast %4 : vector<8xf32> to vector<8x1xf32>
    %cst_6 = arith.constant 3.200000e+01 : f32
    %6 = vector.broadcast %cst_6 : f32 to vector<8x1xf32>
    %7 = arith.divf %5, %6 : vector<8x1xf32>
    %8 = vector.broadcast %7 : vector<8x1xf32> to vector<8x32xf32>
    %9 = arith.subf %1, %8 : vector<8x32xf32>
    %10 = arith.mulf %9, %9 : vector<8x32xf32>
    %cst_7 = arith.constant dense<0.000000e+00> : vector<8xf32>
    %11 = vector.multi_reduction <add>, %10, %cst_7 [1] : vector<8x32xf32> to vector<8xf32>
    %12 = vector.shape_cast %11 : vector<8xf32> to vector<8x1xf32>
    %cst_8 = arith.constant 3.200000e+01 : f32
    %13 = vector.broadcast %cst_8 : f32 to vector<8x1xf32>
    %14 = arith.divf %12, %13 : vector<8x1xf32>
    %cst_9 = arith.constant 9.99999974E-6 : f32
    %15 = vector.broadcast %cst_9 : f32 to vector<8x1xf32>
    %16 = arith.addf %14, %15 : vector<8x1xf32>
    %17 = math.rsqrt %16 : vector<8x1xf32>
    %18 = vector.broadcast %17 : vector<8x1xf32> to vector<8x32xf32>
    %19 = arith.mulf %9, %18 : vector<8x32xf32>
    %20 = vector.broadcast %2 : vector<1x32xf32> to vector<8x32xf32>
    %21 = arith.mulf %19, %20 : vector<8x32xf32>
    %22 = vector.broadcast %3 : vector<1x32xf32> to vector<8x32xf32>
    %23 = arith.addf %21, %22 : vector<8x32xf32>
    %c0_10 = arith.constant 0 : index
    %c0_11 = arith.constant 0 : index
    %c0_12 = arith.constant 0 : index
    %24 = vector.load %arg4[%c0_10, %c0_11, %c0_12] : memref<1x8x32xf32, #tpu.memory_space<vmem>>, vector<1x8x32xf32>
    %25 = vector.shape_cast %24 : vector<1x8x32xf32> to vector<8x32xf32>
    %26 = vector.shape_cast %23 : vector<8x32xf32> to vector<1x8x32xf32>
    tpu.vector_store %arg4[%c0_10, %c0_11, %c0_12], %26 {strides = array<i32>} : memref<1x8x32xf32, #tpu.memory_space<vmem>>, vector<1x8x32xf32>,
    return
  }
  func.func @transform_0(%arg0: i32) -> (i32, i32, i32) {
    %c0_i32 = arith.constant 0 : i32
    %c0_i32_0 = arith.constant 0 : i32
    %c0_i32_1 = arith.constant 0 : i32
    return %arg0, %c0_i32, %c0_i32_0 : i32, i32, i32
  }
  func.func @transform_1(%arg0: i32) -> (i32, i32) {
    %c0_i32 = arith.constant 0 : i32
    %c0_i32_0 = arith.constant 0 : i32
    %c0_i32_1 = arith.constant 0 : i32
    return %c0_i32, %c0_i32_0 : i32, i32
  }
  func.func @transform_2(%arg0: i32) -> (i32, i32) {
    %c0_i32 = arith.constant 0 : i32
    %c0_i32_0 = arith.constant 0 : i32
    %c0_i32_1 = arith.constant 0 : i32
    return %c0_i32, %c0_i32_0 : i32, i32
  }
  func.func @transform_3(%arg0: i32) -> (i32, i32, i32) {
    %c0_i32 = arith.constant 0 : i32
    %c0_i32_0 = arith.constant 0 : i32
    %c0_i32_1 = arith.constant 0 : i32
    return %arg0, %c0_i32, %c0_i32_0 : i32, i32, i32
  }
}

module attributes {stable_mosaic.version = 11 : i64} {
  func.func @_ffn_block_kernel(%arg0: i32, %arg1: memref<1x8x32xf32, #tpu.memory_space<vmem>>, %arg2: memref<32x64xbf16, #tpu.memory_space<vmem>>, %arg3: memref<1x64xf32, #tpu.memory_space<vmem>>, %arg4: memref<64x32xbf16, #tpu.memory_space<vmem>>, %arg5: memref<1x32xf32, #tpu.memory_space<vmem>>, %arg6: memref<1x32xf32, #tpu.memory_space<vmem>>, %arg7: memref<1x32xf32, #tpu.memory_space<vmem>>, %arg8: memref<1x8x32xf32, #tpu.memory_space<vmem>>) attributes {dimension_semantics = [#tpu.dimension_semantics<parallel>], iteration_bounds = array<i64: 2>, scalar_prefetch = 0 : i64, scratch_operands = 0 : i64, tpu.core_type = #tpu.core_type<tc>, window_params = [{transform_indices = @transform_0, window_bounds = array<i64: 1, 8, 32>}, {pipeline_mode = #tpu.pipeline_mode<synchronous>, transform_indices = @transform_1, window_bounds = array<i64: 32, 64>}, {pipeline_mode = #tpu.pipeline_mode<synchronous>, transform_indices = @transform_2, window_bounds = array<i64: 1, 64>}, {pipeline_mode = #tpu.pipeline_mode<synchronous>, transform_indices = @transform_3, window_bounds = array<i64: 64, 32>}, {pipeline_mode = #tpu.pipeline_mode<synchronous>, transform_indices = @transform_4, window_bounds = array<i64: 1, 32>}, {pipeline_mode = #tpu.pipeline_mode<synchronous>, transform_indices = @transform_5, window_bounds = array<i64: 1, 32>}, {pipeline_mode = #tpu.pipeline_mode<synchronous>, transform_indices = @transform_6, window_bounds = array<i64: 1, 32>}, {transform_indices = @transform_7, window_bounds = array<i64: 1, 8, 32>}]} {
    %c0 = arith.constant 0 : index
    %c0_0 = arith.constant 0 : index
    %c0_1 = arith.constant 0 : index
    %0 = vector.load %arg1[%c0, %c0_0, %c0_1] : memref<1x8x32xf32, #tpu.memory_space<vmem>>, vector<1x8x32xf32>
    %1 = vector.shape_cast %0 : vector<1x8x32xf32> to vector<8x32xf32>
    %c0_2 = arith.constant 0 : index
    %c0_3 = arith.constant 0 : index
    %2 = vector.load %arg2[%c0_2, %c0_3] : memref<32x64xbf16, #tpu.memory_space<vmem>>, vector<32x64xbf16>
    %3 = arith.truncf %1 : vector<8x32xf32> to vector<8x32xbf16>
    %cst = arith.constant dense<0.000000e+00> : vector<8x64xf32>
    %4 = tpu.matmul %3, %2, %cst {dimension_numbers = #tpu.dot_dimension_numbers<[1], [0], [0], [1], [0, 0, 1, 1], [], []>} : vector<8x32xbf16>, vector<32x64xbf16>, vector<8x64xf32> -> vector<8x64xf32>
    %c0_4 = arith.constant 0 : index
    %c0_5 = arith.constant 0 : index
    %5 = vector.load %arg3[%c0_4, %c0_5] : memref<1x64xf32, #tpu.memory_space<vmem>>, vector<1x64xf32>
    %6 = vector.broadcast %5 : vector<1x64xf32> to vector<8x64xf32>
    %7 = arith.addf %4, %6 : vector<8x64xf32>
    %cst_6 = arith.constant 0.000000e+00 : f32
    %8 = vector.broadcast %cst_6 : f32 to vector<8x64xf32>
    %9 = arith.maximumf %7, %8 : vector<8x64xf32>
    %c0_7 = arith.constant 0 : index
    %c0_8 = arith.constant 0 : index
    %10 = vector.load %arg4[%c0_7, %c0_8] : memref<64x32xbf16, #tpu.memory_space<vmem>>, vector<64x32xbf16>
    %11 = arith.truncf %9 : vector<8x64xf32> to vector<8x64xbf16>
    %cst_9 = arith.constant dense<0.000000e+00> : vector<8x32xf32>
    %12 = tpu.matmul %11, %10, %cst_9 {dimension_numbers = #tpu.dot_dimension_numbers<[1], [0], [0], [1], [0, 0, 1, 1], [], []>} : vector<8x64xbf16>, vector<64x32xbf16>, vector<8x32xf32> -> vector<8x32xf32>
    %c0_10 = arith.constant 0 : index
    %c0_11 = arith.constant 0 : index
    %13 = vector.load %arg5[%c0_10, %c0_11] : memref<1x32xf32, #tpu.memory_space<vmem>>, vector<1x32xf32>
    %14 = vector.broadcast %13 : vector<1x32xf32> to vector<8x32xf32>
    %15 = arith.addf %12, %14 : vector<8x32xf32>
    %16 = arith.addf %1, %15 : vector<8x32xf32>
    %c0_12 = arith.constant 0 : index
    %c0_13 = arith.constant 0 : index
    %17 = vector.load %arg6[%c0_12, %c0_13] : memref<1x32xf32, #tpu.memory_space<vmem>>, vector<1x32xf32>
    %c0_14 = arith.constant 0 : index
    %c0_15 = arith.constant 0 : index
    %18 = vector.load %arg7[%c0_14, %c0_15] : memref<1x32xf32, #tpu.memory_space<vmem>>, vector<1x32xf32>
    %cst_16 = arith.constant dense<0.000000e+00> : vector<8xf32>
    %19 = vector.multi_reduction <add>, %16, %cst_16 [1] : vector<8x32xf32> to vector<8xf32>
    %20 = vector.shape_cast %19 : vector<8xf32> to vector<8x1xf32>
    %cst_17 = arith.constant 3.200000e+01 : f32
    %21 = vector.broadcast %cst_17 : f32 to vector<8x1xf32>
    %22 = arith.divf %20, %21 : vector<8x1xf32>
    %23 = vector.broadcast %22 : vector<8x1xf32> to vector<8x32xf32>
    %24 = arith.subf %16, %23 : vector<8x32xf32>
    %25 = arith.mulf %24, %24 : vector<8x32xf32>
    %cst_18 = arith.constant dense<0.000000e+00> : vector<8xf32>
    %26 = vector.multi_reduction <add>, %25, %cst_18 [1] : vector<8x32xf32> to vector<8xf32>
    %27 = vector.shape_cast %26 : vector<8xf32> to vector<8x1xf32>
    %cst_19 = arith.constant 3.200000e+01 : f32
    %28 = vector.broadcast %cst_19 : f32 to vector<8x1xf32>
    %29 = arith.divf %27, %28 : vector<8x1xf32>
    %cst_20 = arith.constant 9.99999974E-6 : f32
    %30 = vector.broadcast %cst_20 : f32 to vector<8x1xf32>
    %31 = arith.addf %29, %30 : vector<8x1xf32>
    %32 = math.rsqrt %31 : vector<8x1xf32>
    %33 = vector.broadcast %32 : vector<8x1xf32> to vector<8x32xf32>
    %34 = arith.mulf %24, %33 : vector<8x32xf32>
    %35 = vector.broadcast %17 : vector<1x32xf32> to vector<8x32xf32>
    %36 = arith.mulf %34, %35 : vector<8x32xf32>
    %37 = vector.broadcast %18 : vector<1x32xf32> to vector<8x32xf32>
    %38 = arith.addf %36, %37 : vector<8x32xf32>
    %c0_21 = arith.constant 0 : index
    %c0_22 = arith.constant 0 : index
    %c0_23 = arith.constant 0 : index
    %39 = vector.load %arg8[%c0_21, %c0_22, %c0_23] : memref<1x8x32xf32, #tpu.memory_space<vmem>>, vector<1x8x32xf32>
    %40 = vector.shape_cast %39 : vector<1x8x32xf32> to vector<8x32xf32>
    %41 = vector.shape_cast %38 : vector<8x32xf32> to vector<1x8x32xf32>
    tpu.vector_store %arg8[%c0_21, %c0_22, %c0_23], %41 {strides = array<i32>} : memref<1x8x32xf32, #tpu.memory_space<vmem>>, vector<1x8x32xf32>,
    return
  }
  func.func @transform_0(%arg0: i32) -> (i32, i32, i32) {
    %c0_i32 = arith.constant 0 : i32
    %c0_i32_0 = arith.constant 0 : i32
    %c0_i32_1 = arith.constant 0 : i32
    return %arg0, %c0_i32, %c0_i32_0 : i32, i32, i32
  }
  func.func @transform_1(%arg0: i32) -> (i32, i32) {
    %c0_i32 = arith.constant 0 : i32
    %c0_i32_0 = arith.constant 0 : i32
    %c0_i32_1 = arith.constant 0 : i32
    return %c0_i32, %c0_i32_0 : i32, i32
  }
  func.func @transform_2(%arg0: i32) -> (i32, i32) {
    %c0_i32 = arith.constant 0 : i32
    %c0_i32_0 = arith.constant 0 : i32
    %c0_i32_1 = arith.constant 0 : i32
    return %c0_i32, %c0_i32_0 : i32, i32
  }
  func.func @transform_3(%arg0: i32) -> (i32, i32) {
    %c0_i32 = arith.constant 0 : i32
    %c0_i32_0 = arith.constant 0 : i32
    %c0_i32_1 = arith.constant 0 : i32
    return %c0_i32, %c0_i32_0 : i32, i32
  }
  func.func @transform_4(%arg0: i32) -> (i32, i32) {
    %c0_i32 = arith.constant 0 : i32
    %c0_i32_0 = arith.constant 0 : i32
    %c0_i32_1 = arith.constant 0 : i32
    return %c0_i32, %c0_i32_0 : i32, i32
  }
  func.func @transform_5(%arg0: i32) -> (i32, i32) {
    %c0_i32 = arith.constant 0 : i32
    %c0_i32_0 = arith.constant 0 : i32
    %c0_i32_1 = arith.constant 0 : i32
    return %c0_i32, %c0_i32_0 : i32, i32
  }
  func.func @transform_6(%arg0: i32) -> (i32, i32) {
    %c0_i32 = arith.constant 0 : i32
    %c0_i32_0 = arith.constant 0 : i32
    %c0_i32_1 = arith.constant 0 : i32
    return %c0_i32, %c0_i32_0 : i32, i32
  }
  func.func @transform_7(%arg0: i32) -> (i32, i32, i32) {
    %c0_i32 = arith.constant 0 : i32
    %c0_i32_0 = arith.constant 0 : i32
    %c0_i32_1 = arith.constant 0 : i32
    return %arg0, %c0_i32, %c0_i32_0 : i32, i32, i32
  }
}

module attributes {stable_mosaic.version = 11 : i64} {
  func.func @_self_attn_kernel(%arg0: i32, %arg1: memref<1x8x32xf32, #tpu.memory_space<vmem>>, %arg2: memref<32x32xbf16, #tpu.memory_space<vmem>>, %arg3: memref<1x32xf32, #tpu.memory_space<vmem>>, %arg4: memref<32x64xbf16, #tpu.memory_space<vmem>>, %arg5: memref<1x64xf32, #tpu.memory_space<vmem>>, %arg6: memref<32x32xbf16, #tpu.memory_space<vmem>>, %arg7: memref<1x32xf32, #tpu.memory_space<vmem>>, %arg8: memref<1x32xf32, #tpu.memory_space<vmem>>, %arg9: memref<1x32xf32, #tpu.memory_space<vmem>>, %arg10: memref<1x8x32xf32, #tpu.memory_space<vmem>>) attributes {dimension_semantics = [#tpu.dimension_semantics<parallel>], iteration_bounds = array<i64: 2>, scalar_prefetch = 0 : i64, scratch_operands = 0 : i64, tpu.core_type = #tpu.core_type<tc>, window_params = [{transform_indices = @transform_0, window_bounds = array<i64: 1, 8, 32>}, {pipeline_mode = #tpu.pipeline_mode<synchronous>, transform_indices = @transform_1, window_bounds = array<i64: 32, 32>}, {pipeline_mode = #tpu.pipeline_mode<synchronous>, transform_indices = @transform_2, window_bounds = array<i64: 1, 32>}, {pipeline_mode = #tpu.pipeline_mode<synchronous>, transform_indices = @transform_3, window_bounds = array<i64: 32, 64>}, {pipeline_mode = #tpu.pipeline_mode<synchronous>, transform_indices = @transform_4, window_bounds = array<i64: 1, 64>}, {pipeline_mode = #tpu.pipeline_mode<synchronous>, transform_indices = @transform_5, window_bounds = array<i64: 32, 32>}, {pipeline_mode = #tpu.pipeline_mode<synchronous>, transform_indices = @transform_6, window_bounds = array<i64: 1, 32>}, {pipeline_mode = #tpu.pipeline_mode<synchronous>, transform_indices = @transform_7, window_bounds = array<i64: 1, 32>}, {pipeline_mode = #tpu.pipeline_mode<synchronous>, transform_indices = @transform_8, window_bounds = array<i64: 1, 32>}, {transform_indices = @transform_9, window_bounds = array<i64: 1, 8, 32>}]} {
    %c0 = arith.constant 0 : index
    %c0_0 = arith.constant 0 : index
    %c0_1 = arith.constant 0 : index
    %0 = vector.load %arg1[%c0, %c0_0, %c0_1] : memref<1x8x32xf32, #tpu.memory_space<vmem>>, vector<1x8x32xf32>
    %1 = vector.shape_cast %0 : vector<1x8x32xf32> to vector<8x32xf32>
    %c0_2 = arith.constant 0 : index
    %c0_3 = arith.constant 0 : index
    %2 = vector.load %arg2[%c0_2, %c0_3] : memref<32x32xbf16, #tpu.memory_space<vmem>>, vector<32x32xbf16>
    %3 = arith.truncf %1 : vector<8x32xf32> to vector<8x32xbf16>
    %cst = arith.constant dense<0.000000e+00> : vector<8x32xf32>
    %4 = tpu.matmul %3, %2, %cst {dimension_numbers = #tpu.dot_dimension_numbers<[1], [0], [0], [1], [0, 0, 1, 1], [], []>} : vector<8x32xbf16>, vector<32x32xbf16>, vector<8x32xf32> -> vector<8x32xf32>
    %c0_4 = arith.constant 0 : index
    %c0_5 = arith.constant 0 : index
    %5 = vector.load %arg3[%c0_4, %c0_5] : memref<1x32xf32, #tpu.memory_space<vmem>>, vector<1x32xf32>
    %6 = vector.broadcast %5 : vector<1x32xf32> to vector<8x32xf32>
    %7 = arith.addf %4, %6 : vector<8x32xf32>
    %c0_6 = arith.constant 0 : index
    %c0_7 = arith.constant 0 : index
    %8 = vector.load %arg4[%c0_6, %c0_7] : memref<32x64xbf16, #tpu.memory_space<vmem>>, vector<32x64xbf16>
    %9 = arith.truncf %1 : vector<8x32xf32> to vector<8x32xbf16>
    %cst_8 = arith.constant dense<0.000000e+00> : vector<8x64xf32>
    %10 = tpu.matmul %9, %8, %cst_8 {dimension_numbers = #tpu.dot_dimension_numbers<[1], [0], [0], [1], [0, 0, 1, 1], [], []>} : vector<8x32xbf16>, vector<32x64xbf16>, vector<8x64xf32> -> vector<8x64xf32>
    %c0_9 = arith.constant 0 : index
    %c0_10 = arith.constant 0 : index
    %11 = vector.load %arg5[%c0_9, %c0_10] : memref<1x64xf32, #tpu.memory_space<vmem>>, vector<1x64xf32>
    %12 = vector.broadcast %11 : vector<1x64xf32> to vector<8x64xf32>
    %13 = arith.addf %10, %12 : vector<8x64xf32>
    %14 = vector.extract_strided_slice %13 {offsets = [0, 0], sizes = [8, 32], strides = [1, 1]} : vector<8x64xf32> to vector<8x32xf32>
    %15 = vector.extract_strided_slice %13 {offsets = [0, 32], sizes = [8, 32], strides = [1, 1]} : vector<8x64xf32> to vector<8x32xf32>
    %16 = vector.shape_cast %7 : vector<8x32xf32> to vector<8x4x8xf32>
    %17 = tpu.transpose %16, [1, 0, 2] : vector<8x4x8xf32> -> vector<4x8x8xf32>
    %18 = arith.truncf %17 : vector<4x8x8xf32> to vector<4x8x8xbf16>
    %19 = vector.shape_cast %14 : vector<8x32xf32> to vector<8x4x8xf32>
    %20 = tpu.transpose %19, [1, 0, 2] : vector<8x4x8xf32> -> vector<4x8x8xf32>
    %21 = arith.truncf %20 : vector<4x8x8xf32> to vector<4x8x8xbf16>
    %22 = vector.shape_cast %15 : vector<8x32xf32> to vector<8x4x8xf32>
    %23 = tpu.transpose %22, [1, 0, 2] : vector<8x4x8xf32> -> vector<4x8x8xf32>
    %24 = arith.truncf %23 : vector<4x8x8xf32> to vector<4x8x8xbf16>
    "tpu.trace_start"() <{level = 10 : i32, message = "hle,hse->hls"}> : () -> ()
    %cst_11 = arith.constant dense<0.000000e+00> : vector<4x8x8xf32>
    %25 = tpu.matmul %18, %21, %cst_11 {dimension_numbers = #tpu.dot_dimension_numbers<[2], [2], [1], [1], [0, 0, 0, 1, 1, 1], [0], [0]>} : vector<4x8x8xbf16>, vector<4x8x8xbf16>, vector<4x8x8xf32> -> vector<4x8x8xf32>
    "tpu.trace_stop"() : () -> ()
    %cst_12 = arith.constant 0.353553385 : f32
    %26 = vector.broadcast %cst_12 : f32 to vector<4x8x8xf32>
    %27 = arith.mulf %25, %26 : vector<4x8x8xf32>
    %cst_13 = arith.constant dense<0xFF800000> : vector<4x8xf32>
    %28 = vector.multi_reduction <maximumf>, %27, %cst_13 [2] : vector<4x8x8xf32> to vector<4x8xf32>
    %29 = vector.shape_cast %28 : vector<4x8xf32> to vector<4x8x1xf32>
    %30 = vector.broadcast %29 : vector<4x8x1xf32> to vector<4x8x8xf32>
    %31 = arith.subf %27, %30 : vector<4x8x8xf32>
    %32 = math.exp %31 : vector<4x8x8xf32>
    %cst_14 = arith.constant dense<0.000000e+00> : vector<4x8xf32>
    %33 = vector.multi_reduction <add>, %32, %cst_14 [2] : vector<4x8x8xf32> to vector<4x8xf32>
    %34 = vector.shape_cast %33 : vector<4x8xf32> to vector<4x8x1xf32>
    %35 = vector.broadcast %34 : vector<4x8x1xf32> to vector<4x8x8xf32>
    %36 = arith.divf %32, %35 : vector<4x8x8xf32>
    %37 = arith.truncf %36 : vector<4x8x8xf32> to vector<4x8x8xbf16>
    "tpu.trace_start"() <{level = 10 : i32, message = "hls,hse->hle"}> : () -> ()
    %cst_15 = arith.constant dense<0.000000e+00> : vector<4x8x8xf32>
    %38 = tpu.matmul %37, %24, %cst_15 {dimension_numbers = #tpu.dot_dimension_numbers<[2], [1], [1], [2], [0, 0, 0, 1, 1, 2], [0], [0]>} : vector<4x8x8xbf16>, vector<4x8x8xbf16>, vector<4x8x8xf32> -> vector<4x8x8xf32>
    "tpu.trace_stop"() : () -> ()
    %39 = tpu.transpose %38, [1, 0, 2] : vector<4x8x8xf32> -> vector<8x4x8xf32>
    %40 = vector.shape_cast %39 : vector<8x4x8xf32> to vector<8x32xf32>
    %c0_16 = arith.constant 0 : index
    %c0_17 = arith.constant 0 : index
    %41 = vector.load %arg6[%c0_16, %c0_17] : memref<32x32xbf16, #tpu.memory_space<vmem>>, vector<32x32xbf16>
    %42 = arith.truncf %40 : vector<8x32xf32> to vector<8x32xbf16>
    %cst_18 = arith.constant dense<0.000000e+00> : vector<8x32xf32>
    %43 = tpu.matmul %42, %41, %cst_18 {dimension_numbers = #tpu.dot_dimension_numbers<[1], [0], [0], [1], [0, 0, 1, 1], [], []>} : vector<8x32xbf16>, vector<32x32xbf16>, vector<8x32xf32> -> vector<8x32xf32>
    %c0_19 = arith.constant 0 : index
    %c0_20 = arith.constant 0 : index
    %44 = vector.load %arg7[%c0_19, %c0_20] : memref<1x32xf32, #tpu.memory_space<vmem>>, vector<1x32xf32>
    %45 = vector.broadcast %44 : vector<1x32xf32> to vector<8x32xf32>
    %46 = arith.addf %43, %45 : vector<8x32xf32>
    %47 = arith.addf %1, %46 : vector<8x32xf32>
    %c0_21 = arith.constant 0 : index
    %c0_22 = arith.constant 0 : index
    %48 = vector.load %arg8[%c0_21, %c0_22] : memref<1x32xf32, #tpu.memory_space<vmem>>, vector<1x32xf32>
    %c0_23 = arith.constant 0 : index
    %c0_24 = arith.constant 0 : index
    %49 = vector.load %arg9[%c0_23, %c0_24] : memref<1x32xf32, #tpu.memory_space<vmem>>, vector<1x32xf32>
    %cst_25 = arith.constant dense<0.000000e+00> : vector<8xf32>
    %50 = vector.multi_reduction <add>, %47, %cst_25 [1] : vector<8x32xf32> to vector<8xf32>
    %51 = vector.shape_cast %50 : vector<8xf32> to vector<8x1xf32>
    %cst_26 = arith.constant 3.200000e+01 : f32
    %52 = vector.broadcast %cst_26 : f32 to vector<8x1xf32>
    %53 = arith.divf %51, %52 : vector<8x1xf32>
    %54 = vector.broadcast %53 : vector<8x1xf32> to vector<8x32xf32>
    %55 = arith.subf %47, %54 : vector<8x32xf32>
    %56 = arith.mulf %55, %55 : vector<8x32xf32>
    %cst_27 = arith.constant dense<0.000000e+00> : vector<8xf32>
    %57 = vector.multi_reduction <add>, %56, %cst_27 [1] : vector<8x32xf32> to vector<8xf32>
    %58 = vector.shape_cast %57 : vector<8xf32> to vector<8x1xf32>
    %cst_28 = arith.constant 3.200000e+01 : f32
    %59 = vector.broadcast %cst_28 : f32 to vector<8x1xf32>
    %60 = arith.divf %58, %59 : vector<8x1xf32>
    %cst_29 = arith.constant 9.99999974E-6 : f32
    %61 = vector.broadcast %cst_29 : f32 to vector<8x1xf32>
    %62 = arith.addf %60, %61 : vector<8x1xf32>
    %63 = math.rsqrt %62 : vector<8x1xf32>
    %64 = vector.broadcast %63 : vector<8x1xf32> to vector<8x32xf32>
    %65 = arith.mulf %55, %64 : vector<8x32xf32>
    %66 = vector.broadcast %48 : vector<1x32xf32> to vector<8x32xf32>
    %67 = arith.mulf %65, %66 : vector<8x32xf32>
    %68 = vector.broadcast %49 : vector<1x32xf32> to vector<8x32xf32>
    %69 = arith.addf %67, %68 : vector<8x32xf32>
    %c0_30 = arith.constant 0 : index
    %c0_31 = arith.constant 0 : index
    %c0_32 = arith.constant 0 : index
    %70 = vector.load %arg10[%c0_30, %c0_31, %c0_32] : memref<1x8x32xf32, #tpu.memory_space<vmem>>, vector<1x8x32xf32>
    %71 = vector.shape_cast %70 : vector<1x8x32xf32> to vector<8x32xf32>
    %72 = vector.shape_cast %69 : vector<8x32xf32> to vector<1x8x32xf32>
    tpu.vector_store %arg10[%c0_30, %c0_31, %c0_32], %72 {strides = array<i32>} : memref<1x8x32xf32, #tpu.memory_space<vmem>>, vector<1x8x32xf32>,
    return
  }
  func.func @transform_0(%arg0: i32) -> (i32, i32, i32) {
    %c0_i32 = arith.constant 0 : i32
    %c0_i32_0 = arith.constant 0 : i32
    %c0_i32_1 = arith.constant 0 : i32
    return %arg0, %c0_i32, %c0_i32_0 : i32, i32, i32
  }
  func.func @transform_1(%arg0: i32) -> (i32, i32) {
    %c0_i32 = arith.constant 0 : i32
    %c0_i32_0 = arith.constant 0 : i32
    %c0_i32_1 = arith.constant 0 : i32
    return %c0_i32, %c0_i32_0 : i32, i32
  }
  func.func @transform_2(%arg0: i32) -> (i32, i32) {
    %c0_i32 = arith.constant 0 : i32
    %c0_i32_0 = arith.constant 0 : i32
    %c0_i32_1 = arith.constant 0 : i32
    return %c0_i32, %c0_i32_0 : i32, i32
  }
  func.func @transform_3(%arg0: i32) -> (i32, i32) {
    %c0_i32 = arith.constant 0 : i32
    %c0_i32_0 = arith.constant 0 : i32
    %c0_i32_1 = arith.constant 0 : i32
    return %c0_i32, %c0_i32_0 : i32, i32
  }
  func.func @transform_4(%arg0: i32) -> (i32, i32) {
    %c0_i32 = arith.constant 0 : i32
    %c0_i32_0 = arith.constant 0 : i32
    %c0_i32_1 = arith.constant 0 : i32
    return %c0_i32, %c0_i32_0 : i32, i32
  }
  func.func @transform_5(%arg0: i32) -> (i32, i32) {
    %c0_i32 = arith.constant 0 : i32
    %c0_i32_0 = arith.constant 0 : i32
    %c0_i32_1 = arith.constant 0 : i32
    return %c0_i32, %c0_i32_0 : i32, i32
  }
  func.func @transform_6(%arg0: i32) -> (i32, i32) {
    %c0_i32 = arith.constant 0 : i32
    %c0_i32_0 = arith.constant 0 : i32
    %c0_i32_1 = arith.constant 0 : i32
    return %c0_i32, %c0_i32_0 : i32, i32
  }
  func.func @transform_7(%arg0: i32) -> (i32, i32) {
    %c0_i32 = arith.constant 0 : i32
    %c0_i32_0 = arith.constant 0 : i32
    %c0_i32_1 = arith.constant 0 : i32
    return %c0_i32, %c0_i32_0 : i32, i32
  }
  func.func @transform_8(%arg0: i32) -> (i32, i32) {
    %c0_i32 = arith.constant 0 : i32
    %c0_i32_0 = arith.constant 0 : i32
    %c0_i32_1 = arith.constant 0 : i32
    return %c0_i32, %c0_i32_0 : i32, i32
  }
  func.func @transform_9(%arg0: i32) -> (i32, i32, i32) {
    %c0_i32 = arith.constant 0 : i32
    %c0_i32_0 = arith.constant 0 : i32
    %c0_i32_1 = arith.constant 0 : i32
    return %arg0, %c0_i32, %c0_i32_0 : i32, i32, i32
  }
}

module attributes {stable_mosaic.version = 11 : i64} {
  func.func @_self_attn_kernel(%arg0: i32, %arg1: memref<1x8x32xf32, #tpu.memory_space<vmem>>, %arg2: memref<32x32xbf16, #tpu.memory_space<vmem>>, %arg3: memref<1x32xf32, #tpu.memory_space<vmem>>, %arg4: memref<32x64xbf16, #tpu.memory_space<vmem>>, %arg5: memref<1x64xf32, #tpu.memory_space<vmem>>, %arg6: memref<32x32xbf16, #tpu.memory_space<vmem>>, %arg7: memref<1x32xf32, #tpu.memory_space<vmem>>, %arg8: memref<1x32xf32, #tpu.memory_space<vmem>>, %arg9: memref<1x32xf32, #tpu.memory_space<vmem>>, %arg10: memref<1x8x32xf32, #tpu.memory_space<vmem>>) attributes {dimension_semantics = [#tpu.dimension_semantics<parallel>], iteration_bounds = array<i64: 2>, scalar_prefetch = 0 : i64, scratch_operands = 0 : i64, tpu.core_type = #tpu.core_type<tc>, window_params = [{transform_indices = @transform_0, window_bounds = array<i64: 1, 8, 32>}, {pipeline_mode = #tpu.pipeline_mode<synchronous>, transform_indices = @transform_1, window_bounds = array<i64: 32, 32>}, {pipeline_mode = #tpu.pipeline_mode<synchronous>, transform_indices = @transform_2, window_bounds = array<i64: 1, 32>}, {pipeline_mode = #tpu.pipeline_mode<synchronous>, transform_indices = @transform_3, window_bounds = array<i64: 32, 64>}, {pipeline_mode = #tpu.pipeline_mode<synchronous>, transform_indices = @transform_4, window_bounds = array<i64: 1, 64>}, {pipeline_mode = #tpu.pipeline_mode<synchronous>, transform_indices = @transform_5, window_bounds = array<i64: 32, 32>}, {pipeline_mode = #tpu.pipeline_mode<synchronous>, transform_indices = @transform_6, window_bounds = array<i64: 1, 32>}, {pipeline_mode = #tpu.pipeline_mode<synchronous>, transform_indices = @transform_7, window_bounds = array<i64: 1, 32>}, {pipeline_mode = #tpu.pipeline_mode<synchronous>, transform_indices = @transform_8, window_bounds = array<i64: 1, 32>}, {transform_indices = @transform_9, window_bounds = array<i64: 1, 8, 32>}]} {
    %c0 = arith.constant 0 : index
    %c0_0 = arith.constant 0 : index
    %c0_1 = arith.constant 0 : index
    %0 = vector.load %arg1[%c0, %c0_0, %c0_1] : memref<1x8x32xf32, #tpu.memory_space<vmem>>, vector<1x8x32xf32>
    %1 = vector.shape_cast %0 : vector<1x8x32xf32> to vector<8x32xf32>
    %c0_2 = arith.constant 0 : index
    %c0_3 = arith.constant 0 : index
    %2 = vector.load %arg2[%c0_2, %c0_3] : memref<32x32xbf16, #tpu.memory_space<vmem>>, vector<32x32xbf16>
    %3 = arith.truncf %1 : vector<8x32xf32> to vector<8x32xbf16>
    %cst = arith.constant dense<0.000000e+00> : vector<8x32xf32>
    %4 = tpu.matmul %3, %2, %cst {dimension_numbers = #tpu.dot_dimension_numbers<[1], [0], [0], [1], [0, 0, 1, 1], [], []>} : vector<8x32xbf16>, vector<32x32xbf16>, vector<8x32xf32> -> vector<8x32xf32>
    %c0_4 = arith.constant 0 : index
    %c0_5 = arith.constant 0 : index
    %5 = vector.load %arg3[%c0_4, %c0_5] : memref<1x32xf32, #tpu.memory_space<vmem>>, vector<1x32xf32>
    %6 = vector.broadcast %5 : vector<1x32xf32> to vector<8x32xf32>
    %7 = arith.addf %4, %6 : vector<8x32xf32>
    %c0_6 = arith.constant 0 : index
    %c0_7 = arith.constant 0 : index
    %8 = vector.load %arg4[%c0_6, %c0_7] : memref<32x64xbf16, #tpu.memory_space<vmem>>, vector<32x64xbf16>
    %9 = arith.truncf %1 : vector<8x32xf32> to vector<8x32xbf16>
    %cst_8 = arith.constant dense<0.000000e+00> : vector<8x64xf32>
    %10 = tpu.matmul %9, %8, %cst_8 {dimension_numbers = #tpu.dot_dimension_numbers<[1], [0], [0], [1], [0, 0, 1, 1], [], []>} : vector<8x32xbf16>, vector<32x64xbf16>, vector<8x64xf32> -> vector<8x64xf32>
    %c0_9 = arith.constant 0 : index
    %c0_10 = arith.constant 0 : index
    %11 = vector.load %arg5[%c0_9, %c0_10] : memref<1x64xf32, #tpu.memory_space<vmem>>, vector<1x64xf32>
    %12 = vector.broadcast %11 : vector<1x64xf32> to vector<8x64xf32>
    %13 = arith.addf %10, %12 : vector<8x64xf32>
    %14 = vector.extract_strided_slice %13 {offsets = [0, 0], sizes = [8, 32], strides = [1, 1]} : vector<8x64xf32> to vector<8x32xf32>
    %15 = vector.extract_strided_slice %13 {offsets = [0, 32], sizes = [8, 32], strides = [1, 1]} : vector<8x64xf32> to vector<8x32xf32>
    %16 = vector.shape_cast %7 : vector<8x32xf32> to vector<8x4x8xf32>
    %17 = tpu.transpose %16, [1, 0, 2] : vector<8x4x8xf32> -> vector<4x8x8xf32>
    %18 = arith.truncf %17 : vector<4x8x8xf32> to vector<4x8x8xbf16>
    %19 = vector.shape_cast %14 : vector<8x32xf32> to vector<8x4x8xf32>
    %20 = tpu.transpose %19, [1, 0, 2] : vector<8x4x8xf32> -> vector<4x8x8xf32>
    %21 = arith.truncf %20 : vector<4x8x8xf32> to vector<4x8x8xbf16>
    %22 = vector.shape_cast %15 : vector<8x32xf32> to vector<8x4x8xf32>
    %23 = tpu.transpose %22, [1, 0, 2] : vector<8x4x8xf32> -> vector<4x8x8xf32>
    %24 = arith.truncf %23 : vector<4x8x8xf32> to vector<4x8x8xbf16>
    "tpu.trace_start"() <{level = 10 : i32, message = "hle,hse->hls"}> : () -> ()
    %cst_11 = arith.constant dense<0.000000e+00> : vector<4x8x8xf32>
    %25 = tpu.matmul %18, %21, %cst_11 {dimension_numbers = #tpu.dot_dimension_numbers<[2], [2], [1], [1], [0, 0, 0, 1, 1, 1], [0], [0]>} : vector<4x8x8xbf16>, vector<4x8x8xbf16>, vector<4x8x8xf32> -> vector<4x8x8xf32>
    "tpu.trace_stop"() : () -> ()
    %cst_12 = arith.constant 0.353553385 : f32
    %26 = vector.broadcast %cst_12 : f32 to vector<4x8x8xf32>
    %27 = arith.mulf %25, %26 : vector<4x8x8xf32>
    %28 = tpu.iota {dimensions = array<i32: 0>} : vector<8x8xi32>
    %29 = tpu.iota {dimensions = array<i32: 1>} : vector<8x8xi32>
    %30 = arith.cmpi sgt, %29, %28 : vector<8x8xi32>
    %31 = vector.shape_cast %30 : vector<8x8xi1> to vector<1x8x8xi1>
    %cst_13 = arith.constant -1.000000e+30 : f32
    %32 = vector.shape_cast %31 : vector<1x8x8xi1> to vector<1x8x8xi1>
    %33 = vector.broadcast %32 : vector<1x8x8xi1> to vector<4x8x8xi1>
    %34 = vector.broadcast %cst_13 : f32 to vector<4x8x8xf32>
    %35 = arith.select %33, %34, %27 : vector<4x8x8xi1>, vector<4x8x8xf32>
    %cst_14 = arith.constant dense<0xFF800000> : vector<4x8xf32>
    %36 = vector.multi_reduction <maximumf>, %35, %cst_14 [2] : vector<4x8x8xf32> to vector<4x8xf32>
    %37 = vector.shape_cast %36 : vector<4x8xf32> to vector<4x8x1xf32>
    %38 = vector.broadcast %37 : vector<4x8x1xf32> to vector<4x8x8xf32>
    %39 = arith.subf %35, %38 : vector<4x8x8xf32>
    %40 = math.exp %39 : vector<4x8x8xf32>
    %cst_15 = arith.constant dense<0.000000e+00> : vector<4x8xf32>
    %41 = vector.multi_reduction <add>, %40, %cst_15 [2] : vector<4x8x8xf32> to vector<4x8xf32>
    %42 = vector.shape_cast %41 : vector<4x8xf32> to vector<4x8x1xf32>
    %43 = vector.broadcast %42 : vector<4x8x1xf32> to vector<4x8x8xf32>
    %44 = arith.divf %40, %43 : vector<4x8x8xf32>
    %45 = arith.truncf %44 : vector<4x8x8xf32> to vector<4x8x8xbf16>
    "tpu.trace_start"() <{level = 10 : i32, message = "hls,hse->hle"}> : () -> ()
    %cst_16 = arith.constant dense<0.000000e+00> : vector<4x8x8xf32>
    %46 = tpu.matmul %45, %24, %cst_16 {dimension_numbers = #tpu.dot_dimension_numbers<[2], [1], [1], [2], [0, 0, 0, 1, 1, 2], [0], [0]>} : vector<4x8x8xbf16>, vector<4x8x8xbf16>, vector<4x8x8xf32> -> vector<4x8x8xf32>
    "tpu.trace_stop"() : () -> ()
    %47 = tpu.transpose %46, [1, 0, 2] : vector<4x8x8xf32> -> vector<8x4x8xf32>
    %48 = vector.shape_cast %47 : vector<8x4x8xf32> to vector<8x32xf32>
    %c0_17 = arith.constant 0 : index
    %c0_18 = arith.constant 0 : index
    %49 = vector.load %arg6[%c0_17, %c0_18] : memref<32x32xbf16, #tpu.memory_space<vmem>>, vector<32x32xbf16>
    %50 = arith.truncf %48 : vector<8x32xf32> to vector<8x32xbf16>
    %cst_19 = arith.constant dense<0.000000e+00> : vector<8x32xf32>
    %51 = tpu.matmul %50, %49, %cst_19 {dimension_numbers = #tpu.dot_dimension_numbers<[1], [0], [0], [1], [0, 0, 1, 1], [], []>} : vector<8x32xbf16>, vector<32x32xbf16>, vector<8x32xf32> -> vector<8x32xf32>
    %c0_20 = arith.constant 0 : index
    %c0_21 = arith.constant 0 : index
    %52 = vector.load %arg7[%c0_20, %c0_21] : memref<1x32xf32, #tpu.memory_space<vmem>>, vector<1x32xf32>
    %53 = vector.broadcast %52 : vector<1x32xf32> to vector<8x32xf32>
    %54 = arith.addf %51, %53 : vector<8x32xf32>
    %55 = arith.addf %1, %54 : vector<8x32xf32>
    %c0_22 = arith.constant 0 : index
    %c0_23 = arith.constant 0 : index
    %56 = vector.load %arg8[%c0_22, %c0_23] : memref<1x32xf32, #tpu.memory_space<vmem>>, vector<1x32xf32>
    %c0_24 = arith.constant 0 : index
    %c0_25 = arith.constant 0 : index
    %57 = vector.load %arg9[%c0_24, %c0_25] : memref<1x32xf32, #tpu.memory_space<vmem>>, vector<1x32xf32>
    %cst_26 = arith.constant dense<0.000000e+00> : vector<8xf32>
    %58 = vector.multi_reduction <add>, %55, %cst_26 [1] : vector<8x32xf32> to vector<8xf32>
    %59 = vector.shape_cast %58 : vector<8xf32> to vector<8x1xf32>
    %cst_27 = arith.constant 3.200000e+01 : f32
    %60 = vector.broadcast %cst_27 : f32 to vector<8x1xf32>
    %61 = arith.divf %59, %60 : vector<8x1xf32>
    %62 = vector.broadcast %61 : vector<8x1xf32> to vector<8x32xf32>
    %63 = arith.subf %55, %62 : vector<8x32xf32>
    %64 = arith.mulf %63, %63 : vector<8x32xf32>
    %cst_28 = arith.constant dense<0.000000e+00> : vector<8xf32>
    %65 = vector.multi_reduction <add>, %64, %cst_28 [1] : vector<8x32xf32> to vector<8xf32>
    %66 = vector.shape_cast %65 : vector<8xf32> to vector<8x1xf32>
    %cst_29 = arith.constant 3.200000e+01 : f32
    %67 = vector.broadcast %cst_29 : f32 to vector<8x1xf32>
    %68 = arith.divf %66, %67 : vector<8x1xf32>
    %cst_30 = arith.constant 9.99999974E-6 : f32
    %69 = vector.broadcast %cst_30 : f32 to vector<8x1xf32>
    %70 = arith.addf %68, %69 : vector<8x1xf32>
    %71 = math.rsqrt %70 : vector<8x1xf32>
    %72 = vector.broadcast %71 : vector<8x1xf32> to vector<8x32xf32>
    %73 = arith.mulf %63, %72 : vector<8x32xf32>
    %74 = vector.broadcast %56 : vector<1x32xf32> to vector<8x32xf32>
    %75 = arith.mulf %73, %74 : vector<8x32xf32>
    %76 = vector.broadcast %57 : vector<1x32xf32> to vector<8x32xf32>
    %77 = arith.addf %75, %76 : vector<8x32xf32>
    %c0_31 = arith.constant 0 : index
    %c0_32 = arith.constant 0 : index
    %c0_33 = arith.constant 0 : index
    %78 = vector.load %arg10[%c0_31, %c0_32, %c0_33] : memref<1x8x32xf32, #tpu.memory_space<vmem>>, vector<1x8x32xf32>
    %79 = vector.shape_cast %78 : vector<1x8x32xf32> to vector<8x32xf32>
    %80 = vector.shape_cast %77 : vector<8x32xf32> to vector<1x8x32xf32>
    tpu.vector_store %arg10[%c0_31, %c0_32, %c0_33], %80 {strides = array<i32>} : memref<1x8x32xf32, #tpu.memory_space<vmem>>, vector<1x8x32xf32>,
    return
  }
  func.func @transform_0(%arg0: i32) -> (i32, i32, i32) {
    %c0_i32 = arith.constant 0 : i32
    %c0_i32_0 = arith.constant 0 : i32
    %c0_i32_1 = arith.constant 0 : i32
    return %arg0, %c0_i32, %c0_i32_0 : i32, i32, i32
  }
  func.func @transform_1(%arg0: i32) -> (i32, i32) {
    %c0_i32 = arith.constant 0 : i32
    %c0_i32_0 = arith.constant 0 : i32
    %c0_i32_1 = arith.constant 0 : i32
    return %c0_i32, %c0_i32_0 : i32, i32
  }
  func.func @transform_2(%arg0: i32) -> (i32, i32) {
    %c0_i32 = arith.constant 0 : i32
    %c0_i32_0 = arith.constant 0 : i32
    %c0_i32_1 = arith.constant 0 : i32
    return %c0_i32, %c0_i32_0 : i32, i32
  }
  func.func @transform_3(%arg0: i32) -> (i32, i32) {
    %c0_i32 = arith.constant 0 : i32
    %c0_i32_0 = arith.constant 0 : i32
    %c0_i32_1 = arith.constant 0 : i32
    return %c0_i32, %c0_i32_0 : i32, i32
  }
  func.func @transform_4(%arg0: i32) -> (i32, i32) {
    %c0_i32 = arith.constant 0 : i32
    %c0_i32_0 = arith.constant 0 : i32
    %c0_i32_1 = arith.constant 0 : i32
    return %c0_i32, %c0_i32_0 : i32, i32
  }
  func.func @transform_5(%arg0: i32) -> (i32, i32) {
    %c0_i32 = arith.constant 0 : i32
    %c0_i32_0 = arith.constant 0 : i32
    %c0_i32_1 = arith.constant 0 : i32
    return %c0_i32, %c0_i32_0 : i32, i32
  }
  func.func @transform_6(%arg0: i32) -> (i32, i32) {
    %c0_i32 = arith.constant 0 : i32
    %c0_i32_0 = arith.constant 0 : i32
    %c0_i32_1 = arith.constant 0 : i32
    return %c0_i32, %c0_i32_0 : i32, i32
  }
  func.func @transform_7(%arg0: i32) -> (i32, i32) {
    %c0_i32 = arith.constant 0 : i32
    %c0_i32_0 = arith.constant 0 : i32
    %c0_i32_1 = arith.constant 0 : i32
    return %c0_i32, %c0_i32_0 : i32, i32
  }
  func.func @transform_8(%arg0: i32) -> (i32, i32) {
    %c0_i32 = arith.constant 0 : i32
    %c0_i32_0 = arith.constant 0 : i32
    %c0_i32_1 = arith.constant 0 : i32
    return %c0_i32, %c0_i32_0 : i32, i32
  }
  func.func @transform_9(%arg0: i32) -> (i32, i32, i32) {
    %c0_i32 = arith.constant 0 : i32
    %c0_i32_0 = arith.constant 0 : i32
    %c0_i32_1 = arith.constant 0 : i32
    return %arg0, %c0_i32, %c0_i32_0 : i32, i32, i32
  }
}

module attributes {stable_mosaic.version = 11 : i64} {
  func.func @_ln_proj_kernel(%arg0: i32, %arg1: memref<1x4x32xf32, #tpu.memory_space<vmem>>, %arg2: memref<1x32xf32, #tpu.memory_space<vmem>>, %arg3: memref<1x32xf32, #tpu.memory_space<vmem>>, %arg4: memref<32x4xbf16, #tpu.memory_space<vmem>>, %arg5: memref<1x4xf32, #tpu.memory_space<vmem>>, %arg6: memref<1x4x4xf32, #tpu.memory_space<vmem>>) attributes {dimension_semantics = [#tpu.dimension_semantics<parallel>], iteration_bounds = array<i64: 2>, scalar_prefetch = 0 : i64, scratch_operands = 0 : i64, tpu.core_type = #tpu.core_type<tc>, window_params = [{transform_indices = @transform_0, window_bounds = array<i64: 1, 4, 32>}, {pipeline_mode = #tpu.pipeline_mode<synchronous>, transform_indices = @transform_1, window_bounds = array<i64: 1, 32>}, {pipeline_mode = #tpu.pipeline_mode<synchronous>, transform_indices = @transform_2, window_bounds = array<i64: 1, 32>}, {pipeline_mode = #tpu.pipeline_mode<synchronous>, transform_indices = @transform_3, window_bounds = array<i64: 32, 4>}, {pipeline_mode = #tpu.pipeline_mode<synchronous>, transform_indices = @transform_4, window_bounds = array<i64: 1, 4>}, {transform_indices = @transform_5, window_bounds = array<i64: 1, 4, 4>}]} {
    %c0 = arith.constant 0 : index
    %c0_0 = arith.constant 0 : index
    %c0_1 = arith.constant 0 : index
    %0 = vector.load %arg1[%c0, %c0_0, %c0_1] : memref<1x4x32xf32, #tpu.memory_space<vmem>>, vector<1x4x32xf32>
    %1 = vector.shape_cast %0 : vector<1x4x32xf32> to vector<4x32xf32>
    %c0_2 = arith.constant 0 : index
    %c0_3 = arith.constant 0 : index
    %2 = vector.load %arg2[%c0_2, %c0_3] : memref<1x32xf32, #tpu.memory_space<vmem>>, vector<1x32xf32>
    %c0_4 = arith.constant 0 : index
    %c0_5 = arith.constant 0 : index
    %3 = vector.load %arg3[%c0_4, %c0_5] : memref<1x32xf32, #tpu.memory_space<vmem>>, vector<1x32xf32>
    %cst = arith.constant dense<0.000000e+00> : vector<4xf32>
    %4 = vector.multi_reduction <add>, %1, %cst [1] : vector<4x32xf32> to vector<4xf32>
    %5 = vector.shape_cast %4 : vector<4xf32> to vector<4x1xf32>
    %cst_6 = arith.constant 3.200000e+01 : f32
    %6 = vector.broadcast %cst_6 : f32 to vector<4x1xf32>
    %7 = arith.divf %5, %6 : vector<4x1xf32>
    %8 = vector.broadcast %7 : vector<4x1xf32> to vector<4x32xf32>
    %9 = arith.subf %1, %8 : vector<4x32xf32>
    %10 = arith.mulf %9, %9 : vector<4x32xf32>
    %cst_7 = arith.constant dense<0.000000e+00> : vector<4xf32>
    %11 = vector.multi_reduction <add>, %10, %cst_7 [1] : vector<4x32xf32> to vector<4xf32>
    %12 = vector.shape_cast %11 : vector<4xf32> to vector<4x1xf32>
    %cst_8 = arith.constant 3.200000e+01 : f32
    %13 = vector.broadcast %cst_8 : f32 to vector<4x1xf32>
    %14 = arith.divf %12, %13 : vector<4x1xf32>
    %cst_9 = arith.constant 9.99999974E-6 : f32
    %15 = vector.broadcast %cst_9 : f32 to vector<4x1xf32>
    %16 = arith.addf %14, %15 : vector<4x1xf32>
    %17 = math.rsqrt %16 : vector<4x1xf32>
    %18 = vector.broadcast %17 : vector<4x1xf32> to vector<4x32xf32>
    %19 = arith.mulf %9, %18 : vector<4x32xf32>
    %20 = vector.broadcast %2 : vector<1x32xf32> to vector<4x32xf32>
    %21 = arith.mulf %19, %20 : vector<4x32xf32>
    %22 = vector.broadcast %3 : vector<1x32xf32> to vector<4x32xf32>
    %23 = arith.addf %21, %22 : vector<4x32xf32>
    %c0_10 = arith.constant 0 : index
    %c0_11 = arith.constant 0 : index
    %24 = vector.load %arg4[%c0_10, %c0_11] : memref<32x4xbf16, #tpu.memory_space<vmem>>, vector<32x4xbf16>
    %25 = arith.truncf %23 : vector<4x32xf32> to vector<4x32xbf16>
    %cst_12 = arith.constant dense<0.000000e+00> : vector<4x4xf32>
    %26 = tpu.matmul %25, %24, %cst_12 {dimension_numbers = #tpu.dot_dimension_numbers<[1], [0], [0], [1], [0, 0, 1, 1], [], []>} : vector<4x32xbf16>, vector<32x4xbf16>, vector<4x4xf32> -> vector<4x4xf32>
    %c0_13 = arith.constant 0 : index
    %c0_14 = arith.constant 0 : index
    %27 = vector.load %arg5[%c0_13, %c0_14] : memref<1x4xf32, #tpu.memory_space<vmem>>, vector<1x4xf32>
    %28 = vector.broadcast %27 : vector<1x4xf32> to vector<4x4xf32>
    %29 = arith.addf %26, %28 : vector<4x4xf32>
    %c0_15 = arith.constant 0 : index
    %c0_16 = arith.constant 0 : index
    %c0_17 = arith.constant 0 : index
    %30 = vector.load %arg6[%c0_15, %c0_16, %c0_17] : memref<1x4x4xf32, #tpu.memory_space<vmem>>, vector<1x4x4xf32>
    %31 = vector.shape_cast %30 : vector<1x4x4xf32> to vector<4x4xf32>
    %32 = vector.shape_cast %29 : vector<4x4xf32> to vector<1x4x4xf32>
    tpu.vector_store %arg6[%c0_15, %c0_16, %c0_17], %32 {strides = array<i32>} : memref<1x4x4xf32, #tpu.memory_space<vmem>>, vector<1x4x4xf32>,
    return
  }
  func.func @transform_0(%arg0: i32) -> (i32, i32, i32) {
    %c0_i32 = arith.constant 0 : i32
    %c0_i32_0 = arith.constant 0 : i32
    %c0_i32_1 = arith.constant 0 : i32
    return %arg0, %c0_i32, %c0_i32_0 : i32, i32, i32
  }
  func.func @transform_1(%arg0: i32) -> (i32, i32) {
    %c0_i32 = arith.constant 0 : i32
    %c0_i32_0 = arith.constant 0 : i32
    %c0_i32_1 = arith.constant 0 : i32
    return %c0_i32, %c0_i32_0 : i32, i32
  }
  func.func @transform_2(%arg0: i32) -> (i32, i32) {
    %c0_i32 = arith.constant 0 : i32
    %c0_i32_0 = arith.constant 0 : i32
    %c0_i32_1 = arith.constant 0 : i32
    return %c0_i32, %c0_i32_0 : i32, i32
  }
  func.func @transform_3(%arg0: i32) -> (i32, i32) {
    %c0_i32 = arith.constant 0 : i32
    %c0_i32_0 = arith.constant 0 : i32
    %c0_i32_1 = arith.constant 0 : i32
    return %c0_i32, %c0_i32_0 : i32, i32
  }
  func.func @transform_4(%arg0: i32) -> (i32, i32) {
    %c0_i32 = arith.constant 0 : i32
    %c0_i32_0 = arith.constant 0 : i32
    %c0_i32_1 = arith.constant 0 : i32
    return %c0_i32, %c0_i32_0 : i32, i32
  }
  func.func @transform_5(%arg0: i32) -> (i32, i32, i32) {
    %c0_i32 = arith.constant 0 : i32
    %c0_i32_0 = arith.constant 0 : i32
    %c0_i32_1 = arith.constant 0 : i32
    return %arg0, %c0_i32, %c0_i32_0 : i32, i32, i32
  }
}

module attributes {stable_mosaic.version = 11 : i64} {
  func.func @_cross_attn_kernel(%arg0: i32, %arg1: memref<1x8x32xf32, #tpu.memory_space<vmem>>, %arg2: memref<1x8x32xf32, #tpu.memory_space<vmem>>, %arg3: memref<32x32xbf16, #tpu.memory_space<vmem>>, %arg4: memref<1x32xf32, #tpu.memory_space<vmem>>, %arg5: memref<32x64xbf16, #tpu.memory_space<vmem>>, %arg6: memref<1x64xf32, #tpu.memory_space<vmem>>, %arg7: memref<32x32xbf16, #tpu.memory_space<vmem>>, %arg8: memref<1x32xf32, #tpu.memory_space<vmem>>, %arg9: memref<1x32xf32, #tpu.memory_space<vmem>>, %arg10: memref<1x32xf32, #tpu.memory_space<vmem>>, %arg11: memref<1x8x32xf32, #tpu.memory_space<vmem>>) attributes {dimension_semantics = [#tpu.dimension_semantics<parallel>], iteration_bounds = array<i64: 2>, scalar_prefetch = 0 : i64, scratch_operands = 0 : i64, tpu.core_type = #tpu.core_type<tc>, window_params = [{transform_indices = @transform_0, window_bounds = array<i64: 1, 8, 32>}, {transform_indices = @transform_1, window_bounds = array<i64: 1, 8, 32>}, {pipeline_mode = #tpu.pipeline_mode<synchronous>, transform_indices = @transform_2, window_bounds = array<i64: 32, 32>}, {pipeline_mode = #tpu.pipeline_mode<synchronous>, transform_indices = @transform_3, window_bounds = array<i64: 1, 32>}, {pipeline_mode = #tpu.pipeline_mode<synchronous>, transform_indices = @transform_4, window_bounds = array<i64: 32, 64>}, {pipeline_mode = #tpu.pipeline_mode<synchronous>, transform_indices = @transform_5, window_bounds = array<i64: 1, 64>}, {pipeline_mode = #tpu.pipeline_mode<synchronous>, transform_indices = @transform_6, window_bounds = array<i64: 32, 32>}, {pipeline_mode = #tpu.pipeline_mode<synchronous>, transform_indices = @transform_7, window_bounds = array<i64: 1, 32>}, {pipeline_mode = #tpu.pipeline_mode<synchronous>, transform_indices = @transform_8, window_bounds = array<i64: 1, 32>}, {pipeline_mode = #tpu.pipeline_mode<synchronous>, transform_indices = @transform_9, window_bounds = array<i64: 1, 32>}, {transform_indices = @transform_10, window_bounds = array<i64: 1, 8, 32>}]} {
    %c0 = arith.constant 0 : index
    %c0_0 = arith.constant 0 : index
    %c0_1 = arith.constant 0 : index
    %0 = vector.load %arg1[%c0, %c0_0, %c0_1] : memref<1x8x32xf32, #tpu.memory_space<vmem>>, vector<1x8x32xf32>
    %1 = vector.shape_cast %0 : vector<1x8x32xf32> to vector<8x32xf32>
    %c0_2 = arith.constant 0 : index
    %c0_3 = arith.constant 0 : index
    %c0_4 = arith.constant 0 : index
    %2 = vector.load %arg2[%c0_2, %c0_3, %c0_4] : memref<1x8x32xf32, #tpu.memory_space<vmem>>, vector<1x8x32xf32>
    %3 = vector.shape_cast %2 : vector<1x8x32xf32> to vector<8x32xf32>
    %c0_5 = arith.constant 0 : index
    %c0_6 = arith.constant 0 : index
    %4 = vector.load %arg3[%c0_5, %c0_6] : memref<32x32xbf16, #tpu.memory_space<vmem>>, vector<32x32xbf16>
    %5 = arith.truncf %1 : vector<8x32xf32> to vector<8x32xbf16>
    %cst = arith.constant dense<0.000000e+00> : vector<8x32xf32>
    %6 = tpu.matmul %5, %4, %cst {dimension_numbers = #tpu.dot_dimension_numbers<[1], [0], [0], [1], [0, 0, 1, 1], [], []>} : vector<8x32xbf16>, vector<32x32xbf16>, vector<8x32xf32> -> vector<8x32xf32>
    %c0_7 = arith.constant 0 : index
    %c0_8 = arith.constant 0 : index
    %7 = vector.load %arg4[%c0_7, %c0_8] : memref<1x32xf32, #tpu.memory_space<vmem>>, vector<1x32xf32>
    %8 = vector.broadcast %7 : vector<1x32xf32> to vector<8x32xf32>
    %9 = arith.addf %6, %8 : vector<8x32xf32>
    %c0_9 = arith.constant 0 : index
    %c0_10 = arith.constant 0 : index
    %10 = vector.load %arg5[%c0_9, %c0_10] : memref<32x64xbf16, #tpu.memory_space<vmem>>, vector<32x64xbf16>
    %11 = arith.truncf %3 : vector<8x32xf32> to vector<8x32xbf16>
    %cst_11 = arith.constant dense<0.000000e+00> : vector<8x64xf32>
    %12 = tpu.matmul %11, %10, %cst_11 {dimension_numbers = #tpu.dot_dimension_numbers<[1], [0], [0], [1], [0, 0, 1, 1], [], []>} : vector<8x32xbf16>, vector<32x64xbf16>, vector<8x64xf32> -> vector<8x64xf32>
    %c0_12 = arith.constant 0 : index
    %c0_13 = arith.constant 0 : index
    %13 = vector.load %arg6[%c0_12, %c0_13] : memref<1x64xf32, #tpu.memory_space<vmem>>, vector<1x64xf32>
    %14 = vector.broadcast %13 : vector<1x64xf32> to vector<8x64xf32>
    %15 = arith.addf %12, %14 : vector<8x64xf32>
    %16 = vector.extract_strided_slice %15 {offsets = [0, 0], sizes = [8, 32], strides = [1, 1]} : vector<8x64xf32> to vector<8x32xf32>
    %17 = vector.extract_strided_slice %15 {offsets = [0, 32], sizes = [8, 32], strides = [1, 1]} : vector<8x64xf32> to vector<8x32xf32>
    %18 = vector.shape_cast %9 : vector<8x32xf32> to vector<8x4x8xf32>
    %19 = tpu.transpose %18, [1, 0, 2] : vector<8x4x8xf32> -> vector<4x8x8xf32>
    %20 = arith.truncf %19 : vector<4x8x8xf32> to vector<4x8x8xbf16>
    %21 = vector.shape_cast %16 : vector<8x32xf32> to vector<8x4x8xf32>
    %22 = tpu.transpose %21, [1, 0, 2] : vector<8x4x8xf32> -> vector<4x8x8xf32>
    %23 = arith.truncf %22 : vector<4x8x8xf32> to vector<4x8x8xbf16>
    %24 = vector.shape_cast %17 : vector<8x32xf32> to vector<8x4x8xf32>
    %25 = tpu.transpose %24, [1, 0, 2] : vector<8x4x8xf32> -> vector<4x8x8xf32>
    %26 = arith.truncf %25 : vector<4x8x8xf32> to vector<4x8x8xbf16>
    "tpu.trace_start"() <{level = 10 : i32, message = "hle,hse->hls"}> : () -> ()
    %cst_14 = arith.constant dense<0.000000e+00> : vector<4x8x8xf32>
    %27 = tpu.matmul %20, %23, %cst_14 {dimension_numbers = #tpu.dot_dimension_numbers<[2], [2], [1], [1], [0, 0, 0, 1, 1, 1], [0], [0]>} : vector<4x8x8xbf16>, vector<4x8x8xbf16>, vector<4x8x8xf32> -> vector<4x8x8xf32>
    "tpu.trace_stop"() : () -> ()
    %cst_15 = arith.constant 0.353553385 : f32
    %28 = vector.broadcast %cst_15 : f32 to vector<4x8x8xf32>
    %29 = arith.mulf %27, %28 : vector<4x8x8xf32>
    %cst_16 = arith.constant dense<0xFF800000> : vector<4x8xf32>
    %30 = vector.multi_reduction <maximumf>, %29, %cst_16 [2] : vector<4x8x8xf32> to vector<4x8xf32>
    %31 = vector.shape_cast %30 : vector<4x8xf32> to vector<4x8x1xf32>
    %32 = vector.broadcast %31 : vector<4x8x1xf32> to vector<4x8x8xf32>
    %33 = arith.subf %29, %32 : vector<4x8x8xf32>
    %34 = math.exp %33 : vector<4x8x8xf32>
    %cst_17 = arith.constant dense<0.000000e+00> : vector<4x8xf32>
    %35 = vector.multi_reduction <add>, %34, %cst_17 [2] : vector<4x8x8xf32> to vector<4x8xf32>
    %36 = vector.shape_cast %35 : vector<4x8xf32> to vector<4x8x1xf32>
    %37 = vector.broadcast %36 : vector<4x8x1xf32> to vector<4x8x8xf32>
    %38 = arith.divf %34, %37 : vector<4x8x8xf32>
    %39 = arith.truncf %38 : vector<4x8x8xf32> to vector<4x8x8xbf16>
    "tpu.trace_start"() <{level = 10 : i32, message = "hls,hse->hle"}> : () -> ()
    %cst_18 = arith.constant dense<0.000000e+00> : vector<4x8x8xf32>
    %40 = tpu.matmul %39, %26, %cst_18 {dimension_numbers = #tpu.dot_dimension_numbers<[2], [1], [1], [2], [0, 0, 0, 1, 1, 2], [0], [0]>} : vector<4x8x8xbf16>, vector<4x8x8xbf16>, vector<4x8x8xf32> -> vector<4x8x8xf32>
    "tpu.trace_stop"() : () -> ()
    %41 = tpu.transpose %40, [1, 0, 2] : vector<4x8x8xf32> -> vector<8x4x8xf32>
    %42 = vector.shape_cast %41 : vector<8x4x8xf32> to vector<8x32xf32>
    %c0_19 = arith.constant 0 : index
    %c0_20 = arith.constant 0 : index
    %43 = vector.load %arg7[%c0_19, %c0_20] : memref<32x32xbf16, #tpu.memory_space<vmem>>, vector<32x32xbf16>
    %44 = arith.truncf %42 : vector<8x32xf32> to vector<8x32xbf16>
    %cst_21 = arith.constant dense<0.000000e+00> : vector<8x32xf32>
    %45 = tpu.matmul %44, %43, %cst_21 {dimension_numbers = #tpu.dot_dimension_numbers<[1], [0], [0], [1], [0, 0, 1, 1], [], []>} : vector<8x32xbf16>, vector<32x32xbf16>, vector<8x32xf32> -> vector<8x32xf32>
    %c0_22 = arith.constant 0 : index
    %c0_23 = arith.constant 0 : index
    %46 = vector.load %arg8[%c0_22, %c0_23] : memref<1x32xf32, #tpu.memory_space<vmem>>, vector<1x32xf32>
    %47 = vector.broadcast %46 : vector<1x32xf32> to vector<8x32xf32>
    %48 = arith.addf %45, %47 : vector<8x32xf32>
    %49 = arith.addf %1, %48 : vector<8x32xf32>
    %c0_24 = arith.constant 0 : index
    %c0_25 = arith.constant 0 : index
    %50 = vector.load %arg9[%c0_24, %c0_25] : memref<1x32xf32, #tpu.memory_space<vmem>>, vector<1x32xf32>
    %c0_26 = arith.constant 0 : index
    %c0_27 = arith.constant 0 : index
    %51 = vector.load %arg10[%c0_26, %c0_27] : memref<1x32xf32, #tpu.memory_space<vmem>>, vector<1x32xf32>
    %cst_28 = arith.constant dense<0.000000e+00> : vector<8xf32>
    %52 = vector.multi_reduction <add>, %49, %cst_28 [1] : vector<8x32xf32> to vector<8xf32>
    %53 = vector.shape_cast %52 : vector<8xf32> to vector<8x1xf32>
    %cst_29 = arith.constant 3.200000e+01 : f32
    %54 = vector.broadcast %cst_29 : f32 to vector<8x1xf32>
    %55 = arith.divf %53, %54 : vector<8x1xf32>
    %56 = vector.broadcast %55 : vector<8x1xf32> to vector<8x32xf32>
    %57 = arith.subf %49, %56 : vector<8x32xf32>
    %58 = arith.mulf %57, %57 : vector<8x32xf32>
    %cst_30 = arith.constant dense<0.000000e+00> : vector<8xf32>
    %59 = vector.multi_reduction <add>, %58, %cst_30 [1] : vector<8x32xf32> to vector<8xf32>
    %60 = vector.shape_cast %59 : vector<8xf32> to vector<8x1xf32>
    %cst_31 = arith.constant 3.200000e+01 : f32
    %61 = vector.broadcast %cst_31 : f32 to vector<8x1xf32>
    %62 = arith.divf %60, %61 : vector<8x1xf32>
    %cst_32 = arith.constant 9.99999974E-6 : f32
    %63 = vector.broadcast %cst_32 : f32 to vector<8x1xf32>
    %64 = arith.addf %62, %63 : vector<8x1xf32>
    %65 = math.rsqrt %64 : vector<8x1xf32>
    %66 = vector.broadcast %65 : vector<8x1xf32> to vector<8x32xf32>
    %67 = arith.mulf %57, %66 : vector<8x32xf32>
    %68 = vector.broadcast %50 : vector<1x32xf32> to vector<8x32xf32>
    %69 = arith.mulf %67, %68 : vector<8x32xf32>
    %70 = vector.broadcast %51 : vector<1x32xf32> to vector<8x32xf32>
    %71 = arith.addf %69, %70 : vector<8x32xf32>
    %c0_33 = arith.constant 0 : index
    %c0_34 = arith.constant 0 : index
    %c0_35 = arith.constant 0 : index
    %72 = vector.load %arg11[%c0_33, %c0_34, %c0_35] : memref<1x8x32xf32, #tpu.memory_space<vmem>>, vector<1x8x32xf32>
    %73 = vector.shape_cast %72 : vector<1x8x32xf32> to vector<8x32xf32>
    %74 = vector.shape_cast %71 : vector<8x32xf32> to vector<1x8x32xf32>
    tpu.vector_store %arg11[%c0_33, %c0_34, %c0_35], %74 {strides = array<i32>} : memref<1x8x32xf32, #tpu.memory_space<vmem>>, vector<1x8x32xf32>,
    return
  }
  func.func @transform_0(%arg0: i32) -> (i32, i32, i32) {
    %c0_i32 = arith.constant 0 : i32
    %c0_i32_0 = arith.constant 0 : i32
    %c0_i32_1 = arith.constant 0 : i32
    return %arg0, %c0_i32, %c0_i32_0 : i32, i32, i32
  }
  func.func @transform_1(%arg0: i32) -> (i32, i32, i32) {
    %c0_i32 = arith.constant 0 : i32
    %c0_i32_0 = arith.constant 0 : i32
    %c0_i32_1 = arith.constant 0 : i32
    return %arg0, %c0_i32, %c0_i32_0 : i32, i32, i32
  }
  func.func @transform_2(%arg0: i32) -> (i32, i32) {
    %c0_i32 = arith.constant 0 : i32
    %c0_i32_0 = arith.constant 0 : i32
    %c0_i32_1 = arith.constant 0 : i32
    return %c0_i32, %c0_i32_0 : i32, i32
  }
  func.func @transform_3(%arg0: i32) -> (i32, i32) {
    %c0_i32 = arith.constant 0 : i32
    %c0_i32_0 = arith.constant 0 : i32
    %c0_i32_1 = arith.constant 0 : i32
    return %c0_i32, %c0_i32_0 : i32, i32
  }
  func.func @transform_4(%arg0: i32) -> (i32, i32) {
    %c0_i32 = arith.constant 0 : i32
    %c0_i32_0 = arith.constant 0 : i32
    %c0_i32_1 = arith.constant 0 : i32
    return %c0_i32, %c0_i32_0 : i32, i32
  }
  func.func @transform_5(%arg0: i32) -> (i32, i32) {
    %c0_i32 = arith.constant 0 : i32
    %c0_i32_0 = arith.constant 0 : i32
    %c0_i32_1 = arith.constant 0 : i32
    return %c0_i32, %c0_i32_0 : i32, i32
  }
  func.func @transform_6(%arg0: i32) -> (i32, i32) {
    %c0_i32 = arith.constant 0 : i32
    %c0_i32_0 = arith.constant 0 : i32
    %c0_i32_1 = arith.constant 0 : i32
    return %c0_i32, %c0_i32_0 : i32, i32
  }
  func.func @transform_7(%arg0: i32) -> (i32, i32) {
    %c0_i32 = arith.constant 0 : i32
    %c0_i32_0 = arith.constant 0 : i32
    %c0_i32_1 = arith.constant 0 : i32
    return %c0_i32, %c0_i32_0 : i32, i32
  }
  func.func @transform_8(%arg0: i32) -> (i32, i32) {
    %c0_i32 = arith.constant 0 : i32
    %c0_i32_0 = arith.constant 0 : i32
    %c0_i32_1 = arith.constant 0 : i32
    return %c0_i32, %c0_i32_0 : i32, i32
  }
  func.func @transform_9(%arg0: i32) -> (i32, i32) {
    %c0_i32 = arith.constant 0 : i32
    %c0_i32_0 = arith.constant 0 : i32
    %c0_i32_1 = arith.constant 0 : i32
    return %c0_i32, %c0_i32_0 : i32, i32
  }
  func.func @transform_10(%arg0: i32) -> (i32, i32, i32) {
    %c0_i32 = arith.constant 0 : i32
    %c0_i32_0 = arith.constant 0 : i32
    %c0_i32_1 = arith.constant 0 : i32
    return %arg0, %c0_i32, %c0_i32_0 : i32, i32, i32
  }
}

</mosaic_0001>

<llo_original>
// kernel: vanilla_transformer_forward.16
$region0: #{vanilla_transformer_forward.16}
  #allocation0 [shape = 'u32[]', space=smem, size = 0x4, offset = 0x4, fixed_abs, tag = 'smem constant byte address 0x4 - core index']
  #allocation1 [shape = 'u32[144,128]{1,0:T(1,128)}', space=vmem, size = 0x12000, scoped, tag = 'internal scratch']
  %s0 = inlined_call_operand.vmem [shape: f32[2,8,32], index: 0, kind: input, shape index: {}]
  %s1 = inlined_call_operand.vmem [shape: f32[1,32], index: 1, kind: input, shape index: {}]
  %s2 = inlined_call_operand.vmem [shape: f32[1,32], index: 2, kind: input, shape index: {}]
  %s3 = inlined_call_operand.vmem [shape: f32[2,8,32], index: 3, kind: output, shape index: {}]
  %s4 = sld [smem:[#allocation0]]
  $region45: #{vanilla_transformer_forward.16} parent=0
    _
  %s6 = ssub.s32 1, %s4
  %s7 = scalar_select 0, %s6, %s4
  loop: start=0, step=1, limit=4
  $region2: #{vanilla_transformer_forward.16} parent=0 // loop_pre_header
    _
  $region3: #{vanilla_transformer_forward.16} parent=0 // loop_header
    %s9 = sphi 0, %s13
    %p10 = scmp.ge.s32.totalorder %s9, 4
    %s19 = sphi 0, %s21
    %s22 = sphi 0, %s19
    %s23 = sphi 0, %s22
    %s39 = sphi 0, %s23
    %s43 = sphi 0, %s43
    %s45 = sphi 0, %s43
    %s46 = sphi 0, %s45
    %s60 = sphi 0, %s46
    %s64 = sphi 0, %s64
    %s66 = sphi 0, %s64
    %s67 = sphi 0, %s66
    %s81 = sphi 0, %s67
    %s87 = sphi 0, %s89
    %s90 = sphi 0, %s87
    %s91 = sphi 0, %s90
    %s107 = sphi 0, %s91
  $region4: #{vanilla_transformer_forward.16} parent=0 // loop_header_branch
    %12 = sbr.rel (%p10) target = $region8
  $region5: #{vanilla_transformer_forward.16} parent=0 // loop_body
    %s14 = ssub.s32 %s9, 1
    %s15 = ssub.s32 %s9, 2
    %s16 = sadd.s32 %s9, 1
    %s17 = ssub.s32 %s9, %s16
    %p18 = scmp.eq.s32.totalorder %s17, 0
    %s20 = sadd.s32 %s19, 1
    %s21 = scalar_select %p18, %s19, %s20
    %p24 = pneg %p18
    %p25 = scmp.eq.s32.totalorder %s9, 1
    %p26 = por %p24, %p25
    %p27 = scmp.ne.s32.totalorder %s19, %s22
    %p28 = scmp.eq.s32.totalorder %s9, 0
    %p29 = por %p27, %p28
    %p30 = scmp.ne.s32.totalorder %s19, %s22
    %p31 = scmp.eq.s32.totalorder %s14, 1
    %p32 = por %p30, %p31
    %p33 = scmp.ne.s32.totalorder %s22, %s23
    %p34 = scmp.eq.s32.totalorder %s14, 0
    %p35 = por %p33, %p34
    %p36 = scmp.ne.s32.totalorder %s22, %s23
    %p37 = scmp.eq.s32.totalorder %s15, 1
    %p38 = por %p36, %p37
    %p40 = scmp.ne.s32.totalorder %s23, %s39
    %p41 = scmp.eq.s32.totalorder %s15, 0
    %p42 = por %p40, %p41
    %s44 = sadd.s32 %s43, 1
    %p47 = scmp.eq.s32.totalorder %s9, 1
    %p48 = scmp.ne.s32.totalorder %s43, %s45
    %p49 = scmp.eq.s32.totalorder %s9, 0
    %p50 = por %p48, %p49
    %p51 = scmp.ne.s32.totalorder %s43, %s45
    %p52 = scmp.eq.s32.totalorder %s14, 1
    %p53 = por %p51, %p52
    %p54 = scmp.ne.s32.totalorder %s45, %s46
    %p55 = scmp.eq.s32.totalorder %s14, 0
    %p56 = por %p54, %p55
    %p57 = scmp.ne.s32.totalorder %s45, %s46
    %p58 = scmp.eq.s32.totalorder %s15, 1
    %p59 = por %p57, %p58
    %p61 = scmp.ne.s32.totalorder %s46, %s60
    %p62 = scmp.eq.s32.totalorder %s15, 0
    %p63 = por %p61, %p62
    %s65 = sadd.s32 %s64, 1
    %p68 = scmp.eq.s32.totalorder %s9, 1
    %p69 = scmp.ne.s32.totalorder %s64, %s66
    %p70 = scmp.eq.s32.totalorder %s9, 0
    %p71 = por %p69, %p70
    %p72 = scmp.ne.s32.totalorder %s64, %s66
    %p73 = scmp.eq.s32.totalorder %s14, 1
    %p74 = por %p72, %p73
    %p75 = scmp.ne.s32.totalorder %s66, %s67
    %p76 = scmp.eq.s32.totalorder %s14, 0
    %p77 = por %p75, %p76
    %p78 = scmp.ne.s32.totalorder %s66, %s67
    %p79 = scmp.eq.s32.totalorder %s15, 1
    %p80 = por %p78, %p79
    %p82 = scmp.ne.s32.totalorder %s67, %s81
    %p83 = scmp.eq.s32.totalorder %s15, 0
    %p84 = por %p82, %p83
    %s85 = ssub.s32 %s9, %s16
    %p86 = scmp.eq.s32.totalorder %s85, 0
    %s88 = sadd.s32 %s87, 1
    %s89 = scalar_select %p86, %s87, %s88
    %p92 = pneg %p86
    %p93 = scmp.eq.s32.totalorder %s9, 1
    %p94 = por %p92, %p93
    %p95 = scmp.ne.s32.totalorder %s87, %s90
    %p96 = scmp.eq.s32.totalorder %s9, 0
    %p97 = por %p95, %p96
    %p98 = scmp.ne.s32.totalorder %s87, %s90
    %p99 = scmp.eq.s32.totalorder %s14, 1
    %p100 = por %p98, %p99
    %p101 = scmp.ne.s32.totalorder %s90, %s91
    %p102 = scmp.eq.s32.totalorder %s14, 0
    %p103 = por %p101, %p102
    %p104 = scmp.ne.s32.totalorder %s90, %s91
    %p105 = scmp.eq.s32.totalorder %s15, 1
    %p106 = por %p104, %p105
    %p108 = scmp.ne.s32.totalorder %s91, %s107
    %p109 = scmp.eq.s32.totalorder %s15, 0
    %p110 = por %p108, %p109
    %p111 = scmp.le.s32.totalorder 1, %s9
    %p112 = scmp.lt.s32.totalorder %s9, 3
    %p113 = pnand %p111, %p112
    %p114 = pneg %p113
    // Predicated region
    $region9: #{vanilla_transformer_forward.16} parent=5 // pred_check
      _
    $region10: #{vanilla_transformer_forward.16} parent=5 // pred_check_branch
      %116 = sbr.rel (%p113) target = $region12
    $region11: #{vanilla_transformer_forward.16} parent=5 // pred_region
      %s117 = ssub.s32 %s9, 1
      // Predicated region
      $region13: #{vanilla_transformer_forward.16} parent=11 // pred_check
        %p118 = pneg %p56
      $region14: #{vanilla_transformer_forward.16} parent=11 // pred_check_branch
        %120 = sbr.rel (%p118) target = $region16
      $region15: #{vanilla_transformer_forward.16} parent=11 // pred_region
        _
      $region16: #{vanilla_transformer_forward.16} parent=11 // pred_fallthru
        _
      // Predicated region
      $region17: #{vanilla_transformer_forward.16} parent=11 // pred_check
        %p121 = pneg %p77
      $region18: #{vanilla_transformer_forward.16} parent=11 // pred_check_branch
        %123 = sbr.rel (%p121) target = $region20
      $region19: #{vanilla_transformer_forward.16} parent=11 // pred_region
        _
      $region20: #{vanilla_transformer_forward.16} parent=11 // pred_fallthru
        _
    $region12: #{vanilla_transformer_forward.16} parent=5 // pred_fallthru
      _
    %p124 = scmp.lt.s32.totalorder %s9, 2
    // Predicated region
    $region21: #{vanilla_transformer_forward.16} parent=5 // pred_check
      %p125 = pneg %p124
    $region22: #{vanilla_transformer_forward.16} parent=5 // pred_check_branch
      %127 = sbr.rel (%p125) target = $region24
    $region23: #{vanilla_transformer_forward.16} parent=5 // pred_region
      // Predicated region
      $region25: #{vanilla_transformer_forward.16} parent=23 // pred_check
        %p128 = pneg %p29
      $region26: #{vanilla_transformer_forward.16} parent=23 // pred_check_branch
        %130 = sbr.rel (%p128) target = $region28
      $region27: #{vanilla_transformer_forward.16} parent=23 // pred_region
        %p131 = scmp.lt.s32.totalorder %s9, 1
        %s132 = scalar_select %p131, %s9, 1
        %s133 = smul.addr %s132, 8
        %s134 = scalar_lea.vmem %s0, %s133
      $region28: #{vanilla_transformer_forward.16} parent=23 // pred_fallthru
        _
    $region24: #{vanilla_transformer_forward.16} parent=5 // pred_fallthru
      _
    %p135 = scmp.le.s32.totalorder 1, %s9
    %p136 = scmp.lt.s32.totalorder %s9, 3
    %p137 = pnand %p135, %p136
    %p138 = pneg %p137
    // Predicated region
    $region29: #{vanilla_transformer_forward.16} parent=5 // pred_check
      _
    $region30: #{vanilla_transformer_forward.16} parent=5 // pred_check_branch
      %140 = sbr.rel (%p137) target = $region32
    $region31: #{vanilla_transformer_forward.16} parent=5 // pred_region
      %s141 = ssub.s32 %s9, 1
      %p142 = scmp.lt.s32.totalorder %s14, 1
      %s143 = scalar_select %p142, %s14, 1
      %s144 = smul.addr %s143, 8
      %s145 = scalar_lea.vmem %s0, %s144
      %p146 = pneg %p35
      %p147 = pneg %p32
      %p148 = pneg %p56
      %p149 = pneg %p53
      %p150 = pneg %p77
      %p151 = pneg %p74
      %p152 = pneg %p103
      %p153 = pneg %p100
      %p154 = scmp.lt.s32.totalorder %s14, 1
      %s155 = scalar_select %p154, %s14, 1
      %s156 = smul.addr %s155, 8
      %s157 = scalar_lea.vmem %s3, %s156
      %p158 = scmp.lt.s32.totalorder %s14, 1
      %s159 = scalar_select %p158, %s14, 1
      %s160 = smul.addr %s159, 8
      %s161 = scalar_lea.vmem %s0, %s160
      %p162 = scmp.lt.s32.totalorder %s14, 1
      %s163 = scalar_select %p162, %s14, 1
      %s164 = smul.addr %s163, 8
      %s165 = scalar_lea.vmem %s3, %s164
      %v166 = vld [vmem:[%s161] sm:$0xff]
      %v167 = vld [vmem:[%s1] sm:$0x1]
      %v168 = vld [vmem:[%s2] sm:$0x1]
      %vm169 = vcmask 261120
      %v170 = vsel %vm169, %v166, 0.0
      %171 = vadd.xlane.f32.xlu0 %v170
      %v172 = vpop.xlane.xlu0 %171
      %v173 = vrcp.pop 32.0
      %v174 = vmul.f32 %v172, %v173
      %v175 = vsub.f32 %v166, %v174
      %v176 = vmul.f32 %v175, %v175
      %v177 = vsel %vm169, %v176, 0.0
      %178 = vadd.xlane.f32.xlu0 %v177
      %v179 = vpop.xlane.xlu0 %178
      %v180 = vmul.f32 %v179, %v173
      %v181 = vadd.f32 %v180, 1e-05
      %v182 = vrsqrt.pop %v181
      %v183 = vmul.f32 %v175, %v182
      %v185 = vlaneseq
      %v186 = vshrl.u32 %v185, 7
      %v187 = vsub.s32 0, %v186
      %v188 = vrot.slane %v167, %v187
      %v190 = vmul.f32 %v183, %v188
      %v192 = vlaneseq
      %v193 = vshrl.u32 %v192, 7
      %v194 = vsub.s32 0, %v193
      %v195 = vrot.slane %v168, %v194
      %v197 = vadd.f32 %v190, %v195
      %198 = vst.msk [vmem:[%s165] sm:$0xff] %vm169, %v197
      %p199 = scmp.lt.s32.totalorder %s14, 1
      %s200 = scalar_select %p199, %s14, 1
      %s201 = smul.addr %s200, 8
      %s202 = scalar_lea.vmem %s3, %s201
      // Predicated region
      $region33: #{vanilla_transformer_forward.16} parent=31 // pred_check
        %p203 = pneg %p100
      $region34: #{vanilla_transformer_forward.16} parent=31 // pred_check_branch
        %205 = sbr.rel (%p203) target = $region36
      $region35: #{vanilla_transformer_forward.16} parent=31 // pred_region
        _
      $region36: #{vanilla_transformer_forward.16} parent=31 // pred_fallthru
        _
    $region32: #{vanilla_transformer_forward.16} parent=5 // pred_fallthru
      _
    %p206 = scmp.le.s32.totalorder 2, %s9
    // Predicated region
    $region37: #{vanilla_transformer_forward.16} parent=5 // pred_check
      %p207 = pneg %p206
    $region38: #{vanilla_transformer_forward.16} parent=5 // pred_check_branch
      %209 = sbr.rel (%p207) target = $region40
    $region39: #{vanilla_transformer_forward.16} parent=5 // pred_region
      %s210 = ssub.s32 %s9, 2
      // Predicated region
      $region41: #{vanilla_transformer_forward.16} parent=39 // pred_check
        %p211 = pneg %p106
      $region42: #{vanilla_transformer_forward.16} parent=39 // pred_check_branch
        %213 = sbr.rel (%p211) target = $region44
      $region43: #{vanilla_transformer_forward.16} parent=39 // pred_region
        %p214 = scmp.lt.s32.totalorder %s15, 1
        %s215 = scalar_select %p214, %s15, 1
        %s216 = smul.addr %s215, 8
        %s217 = scalar_lea.vmem %s3, %s216
      $region44: #{vanilla_transformer_forward.16} parent=39 // pred_fallthru
        _
    $region40: #{vanilla_transformer_forward.16} parent=5 // pred_fallthru
      _
  $region6: #{vanilla_transformer_forward.16} parent=0 // loop_footer
    %s13 = sadd.s32 1, %s9
  $region7: #{vanilla_transformer_forward.16} parent=0 // loop_footer_branch
    %8 = sbr.rel target = $region3
  $region8: #{vanilla_transformer_forward.16} parent=0 // loop_exit
    _

// kernel: vanilla_transformer_forward.11
$region0: #{vanilla_transformer_forward.11}
  #allocation0 [shape = 'u32[]', space=smem, size = 0x4, offset = 0x4, fixed_abs, tag = 'smem constant byte address 0x4 - core index']
  #allocation1 [shape = 'u32[144,128]{1,0:T(1,128)}', space=vmem, size = 0x12000, scoped, tag = 'internal scratch']
  %s0 = inlined_call_operand.vmem [shape: f32[2,8,12], index: 0, kind: input, shape index: {}]
  %s1 = inlined_call_operand.vmem [shape: f32[2,8,4], index: 1, kind: input, shape index: {}]
  %s2 = inlined_call_operand.vmem [shape: bf16[12,32], index: 2, kind: input, shape index: {}]
  %s3 = inlined_call_operand.vmem [shape: bf16[4,32], index: 3, kind: input, shape index: {}]
  %s4 = inlined_call_operand.vmem [shape: f32[8,32], index: 4, kind: input, shape index: {}]
  %s5 = inlined_call_operand.vmem [shape: f32[2,8,32], index: 5, kind: output, shape index: {}]
  %s6 = sld [smem:[#allocation0]]
  $region53: #{vanilla_transformer_forward.11} parent=0
    _
  %s8 = ssub.s32 1, %s6
  %s9 = scalar_select 0, %s8, %s6
  loop: start=0, step=1, limit=4
  $region2: #{vanilla_transformer_forward.11} parent=0 // loop_pre_header
    _
  $region3: #{vanilla_transformer_forward.11} parent=0 // loop_header
    %s11 = sphi 0, %s15
    %p12 = scmp.ge.s32.totalorder %s11, 4
    %s21 = sphi 0, %s23
    %s24 = sphi 0, %s21
    %s25 = sphi 0, %s24
    %s41 = sphi 0, %s25
    %s47 = sphi 0, %s49
    %s50 = sphi 0, %s47
    %s51 = sphi 0, %s50
    %s67 = sphi 0, %s51
    %s71 = sphi 0, %s71
    %s73 = sphi 0, %s71
    %s74 = sphi 0, %s73
    %s88 = sphi 0, %s74
    %s92 = sphi 0, %s92
    %s94 = sphi 0, %s92
    %s95 = sphi 0, %s94
    %s109 = sphi 0, %s95
    %s113 = sphi 0, %s113
    %s115 = sphi 0, %s113
    %s116 = sphi 0, %s115
    %s130 = sphi 0, %s116
    %s136 = sphi 0, %s138
    %s139 = sphi 0, %s136
    %s140 = sphi 0, %s139
    %s156 = sphi 0, %s140
  $region4: #{vanilla_transformer_forward.11} parent=0 // loop_header_branch
    %14 = sbr.rel (%p12) target = $region8
  $region5: #{vanilla_transformer_forward.11} parent=0 // loop_body
    %s16 = ssub.s32 %s11, 1
    %s17 = ssub.s32 %s11, 2
    %s18 = sadd.s32 %s11, 1
    %s19 = ssub.s32 %s11, %s18
    %p20 = scmp.eq.s32.totalorder %s19, 0
    %s22 = sadd.s32 %s21, 1
    %s23 = scalar_select %p20, %s21, %s22
    %p26 = pneg %p20
    %p27 = scmp.eq.s32.totalorder %s11, 1
    %p28 = por %p26, %p27
    %p29 = scmp.ne.s32.totalorder %s21, %s24
    %p30 = scmp.eq.s32.totalorder %s11, 0
    %p31 = por %p29, %p30
    %p32 = scmp.ne.s32.totalorder %s21, %s24
    %p33 = scmp.eq.s32.totalorder %s16, 1
    %p34 = por %p32, %p33
    %p35 = scmp.ne.s32.totalorder %s24, %s25
    %p36 = scmp.eq.s32.totalorder %s16, 0
    %p37 = por %p35, %p36
    %p38 = scmp.ne.s32.totalorder %s24, %s25
    %p39 = scmp.eq.s32.totalorder %s17, 1
    %p40 = por %p38, %p39
    %p42 = scmp.ne.s32.totalorder %s25, %s41
    %p43 = scmp.eq.s32.totalorder %s17, 0
    %p44 = por %p42, %p43
    %s45 = ssub.s32 %s11, %s18
    %p46 = scmp.eq.s32.totalorder %s45, 0
    %s48 = sadd.s32 %s47, 1
    %s49 = scalar_select %p46, %s47, %s48
    %p52 = pneg %p46
    %p53 = scmp.eq.s32.totalorder %s11, 1
    %p54 = por %p52, %p53
    %p55 = scmp.ne.s32.totalorder %s47, %s50
    %p56 = scmp.eq.s32.totalorder %s11, 0
    %p57 = por %p55, %p56
    %p58 = scmp.ne.s32.totalorder %s47, %s50
    %p59 = scmp.eq.s32.totalorder %s16, 1
    %p60 = por %p58, %p59
    %p61 = scmp.ne.s32.totalorder %s50, %s51
    %p62 = scmp.eq.s32.totalorder %s16, 0
    %p63 = por %p61, %p62
    %p64 = scmp.ne.s32.totalorder %s50, %s51
    %p65 = scmp.eq.s32.totalorder %s17, 1
    %p66 = por %p64, %p65
    %p68 = scmp.ne.s32.totalorder %s51, %s67
    %p69 = scmp.eq.s32.totalorder %s17, 0
    %p70 = por %p68, %p69
    %s72 = sadd.s32 %s71, 1
    %p75 = scmp.eq.s32.totalorder %s11, 1
    %p76 = scmp.ne.s32.totalorder %s71, %s73
    %p77 = scmp.eq.s32.totalorder %s11, 0
    %p78 = por %p76, %p77
    %p79 = scmp.ne.s32.totalorder %s71, %s73
    %p80 = scmp.eq.s32.totalorder %s16, 1
    %p81 = por %p79, %p80
    %p82 = scmp.ne.s32.totalorder %s73, %s74
    %p83 = scmp.eq.s32.totalorder %s16, 0
    %p84 = por %p82, %p83
    %p85 = scmp.ne.s32.totalorder %s73, %s74
    %p86 = scmp.eq.s32.totalorder %s17, 1
    %p87 = por %p85, %p86
    %p89 = scmp.ne.s32.totalorder %s74, %s88
    %p90 = scmp.eq.s32.totalorder %s17, 0
    %p91 = por %p89, %p90
    %s93 = sadd.s32 %s92, 1
    %p96 = scmp.eq.s32.totalorder %s11, 1
    %p97 = scmp.ne.s32.totalorder %s92, %s94
    %p98 = scmp.eq.s32.totalorder %s11, 0
    %p99 = por %p97, %p98
    %p100 = scmp.ne.s32.totalorder %s92, %s94
    %p101 = scmp.eq.s32.totalorder %s16, 1
    %p102 = por %p100, %p101
    %p103 = scmp.ne.s32.totalorder %s94, %s95
    %p104 = scmp.eq.s32.totalorder %s16, 0
    %p105 = por %p103, %p104
    %p106 = scmp.ne.s32.totalorder %s94, %s95
    %p107 = scmp.eq.s32.totalorder %s17, 1
    %p108 = por %p106, %p107
    %p110 = scmp.ne.s32.totalorder %s95, %s109
    %p111 = scmp.eq.s32.totalorder %s17, 0
    %p112 = por %p110, %p111
    %s114 = sadd.s32 %s113, 1
    %p117 = scmp.eq.s32.totalorder %s11, 1
    %p118 = scmp.ne.s32.totalorder %s113, %s115
    %p119 = scmp.eq.s32.totalorder %s11, 0
    %p120 = por %p118, %p119
    %p121 = scmp.ne.s32.totalorder %s113, %s115
    %p122 = scmp.eq.s32.totalorder %s16, 1
    %p123 = por %p121, %p122
    %p124 = scmp.ne.s32.totalorder %s115, %s116
    %p125 = scmp.eq.s32.totalorder %s16, 0
    %p126 = por %p124, %p125
    %p127 = scmp.ne.s32.totalorder %s115, %s116
    %p128 = scmp.eq.s32.totalorder %s17, 1
    %p129 = por %p127, %p128
    %p131 = scmp.ne.s32.totalorder %s116, %s130
    %p132 = scmp.eq.s32.totalorder %s17, 0
    %p133 = por %p131, %p132
    %s134 = ssub.s32 %s11, %s18
    %p135 = scmp.eq.s32.totalorder %s134, 0
    %s137 = sadd.s32 %s136, 1
    %s138 = scalar_select %p135, %s136, %s137
    %p141 = pneg %p135
    %p142 = scmp.eq.s32.totalorder %s11, 1
    %p143 = por %p141, %p142
    %p144 = scmp.ne.s32.totalorder %s136, %s139
    %p145 = scmp.eq.s32.totalorder %s11, 0
    %p146 = por %p144, %p145
    %p147 = scmp.ne.s32.totalorder %s136, %s139
    %p148 = scmp.eq.s32.totalorder %s16, 1
    %p149 = por %p147, %p148
    %p150 = scmp.ne.s32.totalorder %s139, %s140
    %p151 = scmp.eq.s32.totalorder %s16, 0
    %p152 = por %p150, %p151
    %p153 = scmp.ne.s32.totalorder %s139, %s140
    %p154 = scmp.eq.s32.totalorder %s17, 1
    %p155 = por %p153, %p154
    %p157 = scmp.ne.s32.totalorder %s140, %s156
    %p158 = scmp.eq.s32.totalorder %s17, 0
    %p159 = por %p157, %p158
    %p160 = scmp.le.s32.totalorder 1, %s11
    %p161 = scmp.lt.s32.totalorder %s11, 3
    %p162 = pnand %p160, %p161
    %p163 = pneg %p162
    // Predicated region
    $region9: #{vanilla_transformer_forward.11} parent=5 // pred_check
      _
    $region10: #{vanilla_transformer_forward.11} parent=5 // pred_check_branch
      %165 = sbr.rel (%p162) target = $region12
    $region11: #{vanilla_transformer_forward.11} parent=5 // pred_region
      %s166 = ssub.s32 %s11, 1
      // Predicated region
      $region13: #{vanilla_transformer_forward.11} parent=11 // pred_check
        %p167 = pneg %p84
      $region14: #{vanilla_transformer_forward.11} parent=11 // pred_check_branch
        %169 = sbr.rel (%p167) target = $region16
      $region15: #{vanilla_transformer_forward.11} parent=11 // pred_region
        _
      $region16: #{vanilla_transformer_forward.11} parent=11 // pred_fallthru
        _
      // Predicated region
      $region17: #{vanilla_transformer_forward.11} parent=11 // pred_check
        %p170 = pneg %p105
      $region18: #{vanilla_transformer_forward.11} parent=11 // pred_check_branch
        %172 = sbr.rel (%p170) target = $region20
      $region19: #{vanilla_transformer_forward.11} parent=11 // pred_region
        _
      $region20: #{vanilla_transformer_forward.11} parent=11 // pred_fallthru
        _
      // Predicated region
      $region21: #{vanilla_transformer_forward.11} parent=11 // pred_check
        %p173 = pneg %p126
      $region22: #{vanilla_transformer_forward.11} parent=11 // pred_check_branch
        %175 = sbr.rel (%p173) target = $region24
      $region23: #{vanilla_transformer_forward.11} parent=11 // pred_region
        _
      $region24: #{vanilla_transformer_forward.11} parent=11 // pred_fallthru
        _
    $region12: #{vanilla_transformer_forward.11} parent=5 // pred_fallthru
      _
    %p176 = scmp.lt.s32.totalorder %s11, 2
    // Predicated region
    $region25: #{vanilla_transformer_forward.11} parent=5 // pred_check
      %p177 = pneg %p176
    $region26: #{vanilla_transformer_forward.11} parent=5 // pred_check_branch
      %179 = sbr.rel (%p177) target = $region28
    $region27: #{vanilla_transformer_forward.11} parent=5 // pred_region
      // Predicated region
      $region29: #{vanilla_transformer_forward.11} parent=27 // pred_check
        %p180 = pneg %p31
      $region30: #{vanilla_transformer_forward.11} parent=27 // pred_check_branch
        %182 = sbr.rel (%p180) target = $region32
      $region31: #{vanilla_transformer_forward.11} parent=27 // pred_region
        %p183 = scmp.lt.s32.totalorder %s11, 1
        %s184 = scalar_select %p183, %s11, 1
        %s185 = smul.addr %s184, 8
        %s186 = scalar_lea.vmem %s0, %s185
      $region32: #{vanilla_transformer_forward.11} parent=27 // pred_fallthru
        _
      // Predicated region
      $region33: #{vanilla_transformer_forward.11} parent=27 // pred_check
        %p187 = pneg %p57
      $region34: #{vanilla_transformer_forward.11} parent=27 // pred_check_branch
        %189 = sbr.rel (%p187) target = $region36
      $region35: #{vanilla_transformer_forward.11} parent=27 // pred_region
        %p190 = scmp.lt.s32.totalorder %s11, 1
        %s191 = scalar_select %p190, %s11, 1
        %s192 = smul.addr %s191, 8
        %s193 = scalar_lea.vmem %s1, %s192
      $region36: #{vanilla_transformer_forward.11} parent=27 // pred_fallthru
        _
    $region28: #{vanilla_transformer_forward.11} parent=5 // pred_fallthru
      _
    %p194 = scmp.le.s32.totalorder 1, %s11
    %p195 = scmp.lt.s32.totalorder %s11, 3
    %p196 = pnand %p194, %p195
    %p197 = pneg %p196
    // Predicated region
    $region37: #{vanilla_transformer_forward.11} parent=5 // pred_check
      _
    $region38: #{vanilla_transformer_forward.11} parent=5 // pred_check_branch
      %199 = sbr.rel (%p196) target = $region40
    $region39: #{vanilla_transformer_forward.11} parent=5 // pred_region
      %s200 = ssub.s32 %s11, 1
      %p201 = scmp.lt.s32.totalorder %s16, 1
      %s202 = scalar_select %p201, %s16, 1
      %s203 = smul.addr %s202, 8
      %s204 = scalar_lea.vmem %s0, %s203
      %p205 = pneg %p37
      %p206 = pneg %p34
      %p207 = scmp.lt.s32.totalorder %s16, 1
      %s208 = scalar_select %p207, %s16, 1
      %s209 = smul.addr %s208, 8
      %s210 = scalar_lea.vmem %s1, %s209
      %p211 = pneg %p63
      %p212 = pneg %p60
      %p213 = pneg %p84
      %p214 = pneg %p81
      %p215 = pneg %p105
      %p216 = pneg %p102
      %p217 = pneg %p126
      %p218 = pneg %p123
      %p219 = pneg %p152
      %p220 = pneg %p149
      %p221 = scmp.lt.s32.totalorder %s16, 1
      %s222 = scalar_select %p221, %s16, 1
      %s223 = smul.addr %s222, 8
      %s224 = scalar_lea.vmem %s5, %s223
      %p225 = scmp.lt.s32.totalorder %s16, 1
      %s226 = scalar_select %p225, %s16, 1
      %s227 = smul.addr %s226, 8
      %s228 = scalar_lea.vmem %s0, %s227
      %p229 = scmp.lt.s32.totalorder %s16, 1
      %s230 = scalar_select %p229, %s16, 1
      %s231 = smul.addr %s230, 8
      %s232 = scalar_lea.vmem %s1, %s231
      %p233 = scmp.lt.s32.totalorder %s16, 1
      %s234 = scalar_select %p233, %s16, 1
      %s235 = smul.addr %s234, 8
      %s236 = scalar_lea.vmem %s5, %s235
      %v238 = vld [vmem:[%s228] sm:$0xff]
      %v239 = vld [vmem:[%s2] sm:$0xf]
      %v240 = vld [vmem:[%s2 + $0x4] sm:$0x3]
      %v241 = vpack.c.bf16 %v238, %v238
      %v242 = vld [vmem:[%s232] sm:$0xff]
      %v243 = vld [vmem:[%s3] sm:$0x3]
      %v244 = vpack.c.bf16 %v242, %v242
      %vm245 = vcmask 31744
      %v247 = vsel %vm245, %v244, 0
      %vm249 = vcmask 1041408
      %v251 = vsel %vm249, %v243, 0
      %253 = vmatprep.subr.bf16.mxu0 0
      %254 = vmatpush1.bf16.msra.mxu0 %v251
      %255 = vmatprep.subr.bf16.mxu0 0
      %256 = vmatpush1.bf16.msra.mxu0 0
      %257 = vmatprep.subr.bf16.mxu0 0
      %258 = vmatpush1.bf16.msra.mxu0 0
      %259 = vmatprep.subr.bf16.mxu0 0
      %260 = vmatpush1.bf16.msra.mxu0 0
      %261 = vmatprep.subr.bf16.mxu0 0
      %262 = vmatpush1.bf16.msra.mxu0 0
      %263 = vmatprep.subr.bf16.mxu0 0
      %264 = vmatpush1.bf16.msra.mxu0 0
      %265 = vmatprep.subr.bf16.mxu0 0
      %266 = vmatpush1.bf16.msra.mxu0 0
      %267 = vmatprep.subr.bf16.mxu0 0
      %268 = vmatpush1.bf16.msra.mxu0 0
      %269 = vmatprep.subr.bf16.mxu0 0
      %270 = vmatpush1.bf16.msra.mxu0 0
      %271 = vmatprep.subr.bf16.mxu0 0
      %272 = vmatpush1.bf16.msra.mxu0 0
      %273 = vmatprep.subr.bf16.mxu0 0
      %274 = vmatpush1.bf16.msra.mxu0 0
      %275 = vmatprep.subr.bf16.mxu0 0
      %276 = vmatpush1.bf16.msra.mxu0 0
      %277 = vmatprep.subr.bf16.mxu0 0
      %278 = vmatpush1.bf16.msra.mxu0 0
      %279 = vmatprep.subr.bf16.mxu0 0
      %280 = vmatpush1.bf16.msra.mxu0 0
      %281 = vmatprep.subr.bf16.mxu0 0
      %282 = vmatpush1.bf16.msra.mxu0 0
      %283 = vmatprep.subr.bf16.mxu0 0
      %284 = vmatpush1.bf16.msra.mxu0 0
      %285 = vmatprep.mubr.bf16.mxu0 0
      %286 = vmatmul.mubr.bf16.gmra.mrb[0].mxu0 %v247
      %v287 = vpop.f32.mrb[0].mxu0
      %v288 = vadd.f32 0.0, %v287
      %v289 = vpop.f32.mrb[0].mxu0
      %v290 = vpop.f32.mrb[0].mxu0
      %v291 = vpop.f32.mrb[0].mxu0
      %292 = vdwg.mxu0
      %v295 = vunpack.c.l.b16 %v239
      %v296 = vunpack.c.l.b16 %v240
      %v297 = vpack.c.b16 %v296, %v295
      %vm298 = vcmask 97280
      %v300 = vsel %vm298, %v241, 0
      %vm302 = vcmask 1045504
      %v304 = vsel %vm302, %v297, 0
      %306 = vmatprep.subr.bf16.mxu0 0
      %307 = vmatpush1.bf16.msra.mxu0 %v304
      %308 = vmatprep.subr.bf16.mxu0 0
      %309 = vmatpush1.bf16.msra.mxu0 0
      %310 = vmatprep.subr.bf16.mxu0 0
      %311 = vmatpush1.bf16.msra.mxu0 0
      %312 = vmatprep.subr.bf16.mxu0 0
      %313 = vmatpush1.bf16.msra.mxu0 0
      %314 = vmatprep.subr.bf16.mxu0 0
      %315 = vmatpush1.bf16.msra.mxu0 0
      %316 = vmatprep.subr.bf16.mxu0 0
      %317 = vmatpush1.bf16.msra.mxu0 0
      %318 = vmatprep.subr.bf16.mxu0 0
      %319 = vmatpush1.bf16.msra.mxu0 0
      %320 = vmatprep.subr.bf16.mxu0 0
      %321 = vmatpush1.bf16.msra.mxu0 0
      %322 = vmatprep.subr.bf16.mxu0 0
      %323 = vmatpush1.bf16.msra.mxu0 0
      %324 = vmatprep.subr.bf16.mxu0 0
      %325 = vmatpush1.bf16.msra.mxu0 0
      %326 = vmatprep.subr.bf16.mxu0 0
      %327 = vmatpush1.bf16.msra.mxu0 0
      %328 = vmatprep.subr.bf16.mxu0 0
      %329 = vmatpush1.bf16.msra.mxu0 0
      %330 = vmatprep.subr.bf16.mxu0 0
      %331 = vmatpush1.bf16.msra.mxu0 0
      %332 = vmatprep.subr.bf16.mxu0 0
      %333 = vmatpush1.bf16.msra.mxu0 0
      %334 = vmatprep.subr.bf16.mxu0 0
      %335 = vmatpush1.bf16.msra.mxu0 0
      %336 = vmatprep.subr.bf16.mxu0 0
      %337 = vmatpush1.bf16.msra.mxu0 0
      %338 = vmatprep.mubr.bf16.mxu0 0
      %339 = vmatmul.mubr.bf16.gmra.mrb[0].mxu0 %v300
      %v340 = vpop.f32.mrb[0].mxu0
      %v341 = vadd.f32 %v288, %v340
      %v342 = vpop.f32.mrb[0].mxu0
      %v343 = vpop.f32.mrb[0].mxu0
      %v344 = vpop.f32.mrb[0].mxu0
      %345 = vdwg.mxu0
      %v346 = vld [vmem:[%s4] sm:$0xff]
      %v347 = vadd.f32 %v341, %v346
      %vm348 = vcmask 261120
      %349 = vst.msk [vmem:[%s236] sm:$0xff] %vm348, %v347
      %p350 = scmp.lt.s32.totalorder %s16, 1
      %s351 = scalar_select %p350, %s16, 1
      %s352 = smul.addr %s351, 8
      %s353 = scalar_lea.vmem %s5, %s352
      // Predicated region
      $region41: #{vanilla_transformer_forward.11} parent=39 // pred_check
        %p354 = pneg %p149
      $region42: #{vanilla_transformer_forward.11} parent=39 // pred_check_branch
        %356 = sbr.rel (%p354) target = $region44
      $region43: #{vanilla_transformer_forward.11} parent=39 // pred_region
        _
      $region44: #{vanilla_transformer_forward.11} parent=39 // pred_fallthru
        _
    $region40: #{vanilla_transformer_forward.11} parent=5 // pred_fallthru
      _
    %p357 = scmp.le.s32.totalorder 2, %s11
    // Predicated region
    $region45: #{vanilla_transformer_forward.11} parent=5 // pred_check
      %p358 = pneg %p357
    $region46: #{vanilla_transformer_forward.11} parent=5 // pred_check_branch
      %360 = sbr.rel (%p358) target = $region48
    $region47: #{vanilla_transformer_forward.11} parent=5 // pred_region
      %s361 = ssub.s32 %s11, 2
      // Predicated region
      $region49: #{vanilla_transformer_forward.11} parent=47 // pred_check
        %p362 = pneg %p155
      $region50: #{vanilla_transformer_forward.11} parent=47 // pred_check_branch
        %364 = sbr.rel (%p362) target = $region52
      $region51: #{vanilla_transformer_forward.11} parent=47 // pred_region
        %p365 = scmp.lt.s32.totalorder %s17, 1
        %s366 = scalar_select %p365, %s17, 1
        %s367 = smul.addr %s366, 8
        %s368 = scalar_lea.vmem %s5, %s367
      $region52: #{vanilla_transformer_forward.11} parent=47 // pred_fallthru
        _
    $region48: #{vanilla_transformer_forward.11} parent=5 // pred_fallthru
      _
  $region6: #{vanilla_transformer_forward.11} parent=0 // loop_footer
    %s15 = sadd.s32 1, %s11
  $region7: #{vanilla_transformer_forward.11} parent=0 // loop_footer_branch
    %10 = sbr.rel target = $region3
  $region8: #{vanilla_transformer_forward.11} parent=0 // loop_exit
    _

// kernel: vanilla_transformer_forward.13
$region0: #{vanilla_transformer_forward.13}
  #allocation0 [shape = 'u32[]', space=smem, size = 0x4, offset = 0x4, fixed_abs, tag = 'smem constant byte address 0x4 - core index']
  #allocation1 [shape = 'u32[144,128]{1,0:T(1,128)}', space=vmem, size = 0x12000, scoped, tag = 'internal scratch']
  %s0 = inlined_call_operand.vmem [shape: f32[2,8,32], index: 0, kind: input, shape index: {}, may-alias: {0,7}]
  %s1 = inlined_call_operand.vmem [shape: bf16[32,64], index: 1, kind: input, shape index: {}]
  %s2 = inlined_call_operand.vmem [shape: f32[1,64], index: 2, kind: input, shape index: {}]
  %s3 = inlined_call_operand.vmem [shape: bf16[64,32], index: 3, kind: input, shape index: {}]
  %s4 = inlined_call_operand.vmem [shape: f32[1,32], index: 4, kind: input, shape index: {}]
  %s5 = inlined_call_operand.vmem [shape: f32[1,32], index: 5, kind: input, shape index: {}]
  %s6 = inlined_call_operand.vmem [shape: f32[1,32], index: 6, kind: input, shape index: {}]
  %s7 = inlined_call_operand.vmem [shape: f32[2,8,32], index: 7, kind: output, shape index: {}, may-alias: {0,7}]
  %s8 = sld [smem:[#allocation0]]
  $region61: #{vanilla_transformer_forward.13} parent=0
    _
  %s10 = ssub.s32 1, %s8
  %s11 = scalar_select 0, %s10, %s8
  loop: start=0, step=1, limit=4
  $region2: #{vanilla_transformer_forward.13} parent=0 // loop_pre_header
    _
  $region3: #{vanilla_transformer_forward.13} parent=0 // loop_header
    %s13 = sphi 0, %s17
    %p14 = scmp.ge.s32.totalorder %s13, 4
    %s23 = sphi 0, %s25
    %s26 = sphi 0, %s23
    %s27 = sphi 0, %s26
    %s43 = sphi 0, %s27
    %s47 = sphi 0, %s47
    %s49 = sphi 0, %s47
    %s50 = sphi 0, %s49
    %s64 = sphi 0, %s50
    %s68 = sphi 0, %s68
    %s70 = sphi 0, %s68
    %s71 = sphi 0, %s70
    %s85 = sphi 0, %s71
    %s89 = sphi 0, %s89
    %s91 = sphi 0, %s89
    %s92 = sphi 0, %s91
    %s106 = sphi 0, %s92
    %s110 = sphi 0, %s110
    %s112 = sphi 0, %s110
    %s113 = sphi 0, %s112
    %s127 = sphi 0, %s113
    %s131 = sphi 0, %s131
    %s133 = sphi 0, %s131
    %s134 = sphi 0, %s133
    %s148 = sphi 0, %s134
    %s152 = sphi 0, %s152
    %s154 = sphi 0, %s152
    %s155 = sphi 0, %s154
    %s169 = sphi 0, %s155
    %s175 = sphi 0, %s177
    %s178 = sphi 0, %s175
    %s179 = sphi 0, %s178
    %s195 = sphi 0, %s179
  $region4: #{vanilla_transformer_forward.13} parent=0 // loop_header_branch
    %16 = sbr.rel (%p14) target = $region8
  $region5: #{vanilla_transformer_forward.13} parent=0 // loop_body
    %s18 = ssub.s32 %s13, 1
    %s19 = ssub.s32 %s13, 2
    %s20 = sadd.s32 %s13, 1
    %s21 = ssub.s32 %s13, %s20
    %p22 = scmp.eq.s32.totalorder %s21, 0
    %s24 = sadd.s32 %s23, 1
    %s25 = scalar_select %p22, %s23, %s24
    %p28 = pneg %p22
    %p29 = scmp.eq.s32.totalorder %s13, 1
    %p30 = por %p28, %p29
    %p31 = scmp.ne.s32.totalorder %s23, %s26
    %p32 = scmp.eq.s32.totalorder %s13, 0
    %p33 = por %p31, %p32
    %p34 = scmp.ne.s32.totalorder %s23, %s26
    %p35 = scmp.eq.s32.totalorder %s18, 1
    %p36 = por %p34, %p35
    %p37 = scmp.ne.s32.totalorder %s26, %s27
    %p38 = scmp.eq.s32.totalorder %s18, 0
    %p39 = por %p37, %p38
    %p40 = scmp.ne.s32.totalorder %s26, %s27
    %p41 = scmp.eq.s32.totalorder %s19, 1
    %p42 = por %p40, %p41
    %p44 = scmp.ne.s32.totalorder %s27, %s43
    %p45 = scmp.eq.s32.totalorder %s19, 0
    %p46 = por %p44, %p45
    %s48 = sadd.s32 %s47, 1
    %p51 = scmp.eq.s32.totalorder %s13, 1
    %p52 = scmp.ne.s32.totalorder %s47, %s49
    %p53 = scmp.eq.s32.totalorder %s13, 0
    %p54 = por %p52, %p53
    %p55 = scmp.ne.s32.totalorder %s47, %s49
    %p56 = scmp.eq.s32.totalorder %s18, 1
    %p57 = por %p55, %p56
    %p58 = scmp.ne.s32.totalorder %s49, %s50
    %p59 = scmp.eq.s32.totalorder %s18, 0
    %p60 = por %p58, %p59
    %p61 = scmp.ne.s32.totalorder %s49, %s50
    %p62 = scmp.eq.s32.totalorder %s19, 1
    %p63 = por %p61, %p62
    %p65 = scmp.ne.s32.totalorder %s50, %s64
    %p66 = scmp.eq.s32.totalorder %s19, 0
    %p67 = por %p65, %p66
    %s69 = sadd.s32 %s68, 1
    %p72 = scmp.eq.s32.totalorder %s13, 1
    %p73 = scmp.ne.s32.totalorder %s68, %s70
    %p74 = scmp.eq.s32.totalorder %s13, 0
    %p75 = por %p73, %p74
    %p76 = scmp.ne.s32.totalorder %s68, %s70
    %p77 = scmp.eq.s32.totalorder %s18, 1
    %p78 = por %p76, %p77
    %p79 = scmp.ne.s32.totalorder %s70, %s71
    %p80 = scmp.eq.s32.totalorder %s18, 0
    %p81 = por %p79, %p80
    %p82 = scmp.ne.s32.totalorder %s70, %s71
    %p83 = scmp.eq.s32.totalorder %s19, 1
    %p84 = por %p82, %p83
    %p86 = scmp.ne.s32.totalorder %s71, %s85
    %p87 = scmp.eq.s32.totalorder %s19, 0
    %p88 = por %p86, %p87
    %s90 = sadd.s32 %s89, 1
    %p93 = scmp.eq.s32.totalorder %s13, 1
    %p94 = scmp.ne.s32.totalorder %s89, %s91
    %p95 = scmp.eq.s32.totalorder %s13, 0
    %p96 = por %p94, %p95
    %p97 = scmp.ne.s32.totalorder %s89, %s91
    %p98 = scmp.eq.s32.totalorder %s18, 1
    %p99 = por %p97, %p98
    %p100 = scmp.ne.s32.totalorder %s91, %s92
    %p101 = scmp.eq.s32.totalorder %s18, 0
    %p102 = por %p100, %p101
    %p103 = scmp.ne.s32.totalorder %s91, %s92
    %p104 = scmp.eq.s32.totalorder %s19, 1
    %p105 = por %p103, %p104
    %p107 = scmp.ne.s32.totalorder %s92, %s106
    %p108 = scmp.eq.s32.totalorder %s19, 0
    %p109 = por %p107, %p108
    %s111 = sadd.s32 %s110, 1
    %p114 = scmp.eq.s32.totalorder %s13, 1
    %p115 = scmp.ne.s32.totalorder %s110, %s112
    %p116 = scmp.eq.s32.totalorder %s13, 0
    %p117 = por %p115, %p116
    %p118 = scmp.ne.s32.totalorder %s110, %s112
    %p119 = scmp.eq.s32.totalorder %s18, 1
    %p120 = por %p118, %p119
    %p121 = scmp.ne.s32.totalorder %s112, %s113
    %p122 = scmp.eq.s32.totalorder %s18, 0
    %p123 = por %p121, %p122
    %p124 = scmp.ne.s32.totalorder %s112, %s113
    %p125 = scmp.eq.s32.totalorder %s19, 1
    %p126 = por %p124, %p125
    %p128 = scmp.ne.s32.totalorder %s113, %s127
    %p129 = scmp.eq.s32.totalorder %s19, 0
    %p130 = por %p128, %p129
    %s132 = sadd.s32 %s131, 1
    %p135 = scmp.eq.s32.totalorder %s13, 1
    %p136 = scmp.ne.s32.totalorder %s131, %s133
    %p137 = scmp.eq.s32.totalorder %s13, 0
    %p138 = por %p136, %p137
    %p139 = scmp.ne.s32.totalorder %s131, %s133
    %p140 = scmp.eq.s32.totalorder %s18, 1
    %p141 = por %p139, %p140
    %p142 = scmp.ne.s32.totalorder %s133, %s134
    %p143 = scmp.eq.s32.totalorder %s18, 0
    %p144 = por %p142, %p143
    %p145 = scmp.ne.s32.totalorder %s133, %s134
    %p146 = scmp.eq.s32.totalorder %s19, 1
    %p147 = por %p145, %p146
    %p149 = scmp.ne.s32.totalorder %s134, %s148
    %p150 = scmp.eq.s32.totalorder %s19, 0
    %p151 = por %p149, %p150
    %s153 = sadd.s32 %s152, 1
    %p156 = scmp.eq.s32.totalorder %s13, 1
    %p157 = scmp.ne.s32.totalorder %s152, %s154
    %p158 = scmp.eq.s32.totalorder %s13, 0
    %p159 = por %p157, %p158
    %p160 = scmp.ne.s32.totalorder %s152, %s154
    %p161 = scmp.eq.s32.totalorder %s18, 1
    %p162 = por %p160, %p161
    %p163 = scmp.ne.s32.totalorder %s154, %s155
    %p164 = scmp.eq.s32.totalorder %s18, 0
    %p165 = por %p163, %p164
    %p166 = scmp.ne.s32.totalorder %s154, %s155
    %p167 = scmp.eq.s32.totalorder %s19, 1
    %p168 = por %p166, %p167
    %p170 = scmp.ne.s32.totalorder %s155, %s169
    %p171 = scmp.eq.s32.totalorder %s19, 0
    %p172 = por %p170, %p171
    %s173 = ssub.s32 %s13, %s20
    %p174 = scmp.eq.s32.totalorder %s173, 0
    %s176 = sadd.s32 %s175, 1
    %s177 = scalar_select %p174, %s175, %s176
    %p180 = pneg %p174
    %p181 = scmp.eq.s32.totalorder %s13, 1
    %p182 = por %p180, %p181
    %p183 = scmp.ne.s32.totalorder %s175, %s178
    %p184 = scmp.eq.s32.totalorder %s13, 0
    %p185 = por %p183, %p184
    %p186 = scmp.ne.s32.totalorder %s175, %s178
    %p187 = scmp.eq.s32.totalorder %s18, 1
    %p188 = por %p186, %p187
    %p189 = scmp.ne.s32.totalorder %s178, %s179
    %p190 = scmp.eq.s32.totalorder %s18, 0
    %p191 = por %p189, %p190
    %p192 = scmp.ne.s32.totalorder %s178, %s179
    %p193 = scmp.eq.s32.totalorder %s19, 1
    %p194 = por %p192, %p193
    %p196 = scmp.ne.s32.totalorder %s179, %s195
    %p197 = scmp.eq.s32.totalorder %s19, 0
    %p198 = por %p196, %p197
    %p199 = scmp.le.s32.totalorder 1, %s13
    %p200 = scmp.lt.s32.totalorder %s13, 3
    %p201 = pnand %p199, %p200
    %p202 = pneg %p201
    // Predicated region
    $region9: #{vanilla_transformer_forward.13} parent=5 // pred_check
      _
    $region10: #{vanilla_transformer_forward.13} parent=5 // pred_check_branch
      %204 = sbr.rel (%p201) target = $region12
    $region11: #{vanilla_transformer_forward.13} parent=5 // pred_region
      %s205 = ssub.s32 %s13, 1
      // Predicated region
      $region13: #{vanilla_transformer_forward.13} parent=11 // pred_check
        %p206 = pneg %p60
      $region14: #{vanilla_transformer_forward.13} parent=11 // pred_check_branch
        %208 = sbr.rel (%p206) target = $region16
      $region15: #{vanilla_transformer_forward.13} parent=11 // pred_region
        _
      $region16: #{vanilla_transformer_forward.13} parent=11 // pred_fallthru
        _
      // Predicated region
      $region17: #{vanilla_transformer_forward.13} parent=11 // pred_check
        %p209 = pneg %p81
      $region18: #{vanilla_transformer_forward.13} parent=11 // pred_check_branch
        %211 = sbr.rel (%p209) target = $region20
      $region19: #{vanilla_transformer_forward.13} parent=11 // pred_region
        _
      $region20: #{vanilla_transformer_forward.13} parent=11 // pred_fallthru
        _
      // Predicated region
      $region21: #{vanilla_transformer_forward.13} parent=11 // pred_check
        %p212 = pneg %p102
      $region22: #{vanilla_transformer_forward.13} parent=11 // pred_check_branch
        %214 = sbr.rel (%p212) target = $region24
      $region23: #{vanilla_transformer_forward.13} parent=11 // pred_region
        _
      $region24: #{vanilla_transformer_forward.13} parent=11 // pred_fallthru
        _
      // Predicated region
      $region25: #{vanilla_transformer_forward.13} parent=11 // pred_check
        %p215 = pneg %p123
      $region26: #{vanilla_transformer_forward.13} parent=11 // pred_check_branch
        %217 = sbr.rel (%p215) target = $region28
      $region27: #{vanilla_transformer_forward.13} parent=11 // pred_region
        _
      $region28: #{vanilla_transformer_forward.13} parent=11 // pred_fallthru
        _
      // Predicated region
      $region29: #{vanilla_transformer_forward.13} parent=11 // pred_check
        %p218 = pneg %p144
      $region30: #{vanilla_transformer_forward.13} parent=11 // pred_check_branch
        %220 = sbr.rel (%p218) target = $region32
      $region31: #{vanilla_transformer_forward.13} parent=11 // pred_region
        _
      $region32: #{vanilla_transformer_forward.13} parent=11 // pred_fallthru
        _
      // Predicated region
      $region33: #{vanilla_transformer_forward.13} parent=11 // pred_check
        %p221 = pneg %p165
      $region34: #{vanilla_transformer_forward.13} parent=11 // pred_check_branch
        %223 = sbr.rel (%p221) target = $region36
      $region35: #{vanilla_transformer_forward.13} parent=11 // pred_region
        _
      $region36: #{vanilla_transformer_forward.13} parent=11 // pred_fallthru
        _
    $region12: #{vanilla_transformer_forward.13} parent=5 // pred_fallthru
      _
    %p224 = scmp.lt.s32.totalorder %s13, 2
    // Predicated region
    $region37: #{vanilla_transformer_forward.13} parent=5 // pred_check
      %p225 = pneg %p224
    $region38: #{vanilla_transformer_forward.13} parent=5 // pred_check_branch
      %227 = sbr.rel (%p225) target = $region40
    $region39: #{vanilla_transformer_forward.13} parent=5 // pred_region
      // Predicated region
      $region41: #{vanilla_transformer_forward.13} parent=39 // pred_check
        %p228 = pneg %p33
      $region42: #{vanilla_transformer_forward.13} parent=39 // pred_check_branch
        %230 = sbr.rel (%p228) target = $region44
      $region43: #{vanilla_transformer_forward.13} parent=39 // pred_region
        %p231 = scmp.lt.s32.totalorder %s13, 1
        %s232 = scalar_select %p231, %s13, 1
        %s233 = smul.addr %s232, 8
        %s234 = scalar_lea.vmem %s0, %s233
      $region44: #{vanilla_transformer_forward.13} parent=39 // pred_fallthru
        _
    $region40: #{vanilla_transformer_forward.13} parent=5 // pred_fallthru
      _
    %p235 = scmp.le.s32.totalorder 1, %s13
    %p236 = scmp.lt.s32.totalorder %s13, 3
    %p237 = pnand %p235, %p236
    %p238 = pneg %p237
    // Predicated region
    $region45: #{vanilla_transformer_forward.13} parent=5 // pred_check
      _
    $region46: #{vanilla_transformer_forward.13} parent=5 // pred_check_branch
      %240 = sbr.rel (%p237) target = $region48
    $region47: #{vanilla_transformer_forward.13} parent=5 // pred_region
      %s241 = ssub.s32 %s13, 1
      %p242 = scmp.lt.s32.totalorder %s18, 1
      %s243 = scalar_select %p242, %s18, 1
      %s244 = smul.addr %s243, 8
      %s245 = scalar_lea.vmem %s0, %s244
      %p246 = pneg %p39
      %p247 = pneg %p36
      %p248 = pneg %p60
      %p249 = pneg %p57
      %p250 = pneg %p81
      %p251 = pneg %p78
      %p252 = pneg %p102
      %p253 = pneg %p99
      %p254 = pneg %p123
      %p255 = pneg %p120
      %p256 = pneg %p144
      %p257 = pneg %p141
      %p258 = pneg %p165
      %p259 = pneg %p162
      %p260 = pneg %p191
      %p261 = pneg %p188
      %p262 = scmp.lt.s32.totalorder %s18, 1
      %s263 = scalar_select %p262, %s18, 1
      %s264 = smul.addr %s263, 8
      %s265 = scalar_lea.vmem %s7, %s264
      %p266 = scmp.lt.s32.totalorder %s18, 1
      %s267 = scalar_select %p266, %s18, 1
      %s268 = smul.addr %s267, 8
      %s269 = scalar_lea.vmem %s0, %s268
      %p270 = scmp.lt.s32.totalorder %s18, 1
      %s271 = scalar_select %p270, %s18, 1
      %s272 = smul.addr %s271, 8
      %s273 = scalar_lea.vmem %s7, %s272
      %v275 = vld [vmem:[%s269] sm:$0xff]
      %v276 = vld [vmem:[%s1] sm:$0xf]
      %v277 = vld [vmem:[%s1 + $0x4] sm:$0xf]
      %v278 = vld [vmem:[%s1 + $0x8] sm:$0xf]
      %v279 = vld [vmem:[%s1 + $0xc] sm:$0xf]
      %v280 = vpack.c.bf16 %v275, %v275
      %v281 = vld [vmem:[%s2] sm:$0x1]
      %v283 = vlaneseq
      %v284 = vshrl.u32 %v283, 7
      %v285 = vsub.s32 0, %v284
      %v286 = vrot.slane %v281, %v285
      %v292 = vunpack.c.l.b16 %v276
      %v293 = vunpack.c.l.b16 %v277
      %v294 = vunpack.c.l.b16 %v278
      %v295 = vunpack.c.l.b16 %v279
      %v296 = vpack.c.b16 %v293, %v292
      %v297 = vpack.c.b16 %v295, %v294
      %vm300 = vcmask 261120
      %v302 = vsel %vm300, %v280, 0
      %304 = vmatprep.subr.bf16.mxu0 0
      %305 = vmatpush1.bf16.msra.mxu0 %v296
      %306 = vmatprep.subr.bf16.mxu0 0
      %307 = vmatpush1.bf16.msra.mxu0 %v297
      %308 = vmatprep.subr.bf16.mxu0 0
      %309 = vmatpush1.bf16.msra.mxu0 0
      %310 = vmatprep.subr.bf16.mxu0 0
      %311 = vmatpush1.bf16.msra.mxu0 0
      %312 = vmatprep.subr.bf16.mxu0 0
      %313 = vmatpush1.bf16.msra.mxu0 0
      %314 = vmatprep.subr.bf16.mxu0 0
      %315 = vmatpush1.bf16.msra.mxu0 0
      %316 = vmatprep.subr.bf16.mxu0 0
      %317 = vmatpush1.bf16.msra.mxu0 0
      %318 = vmatprep.subr.bf16.mxu0 0
      %319 = vmatpush1.bf16.msra.mxu0 0
      %320 = vmatprep.subr.bf16.mxu0 0
      %321 = vmatpush1.bf16.msra.mxu0 0
      %322 = vmatprep.subr.bf16.mxu0 0
      %323 = vmatpush1.bf16.msra.mxu0 0
      %324 = vmatprep.subr.bf16.mxu0 0
      %325 = vmatpush1.bf16.msra.mxu0 0
      %326 = vmatprep.subr.bf16.mxu0 0
      %327 = vmatpush1.bf16.msra.mxu0 0
      %328 = vmatprep.subr.bf16.mxu0 0
      %329 = vmatpush1.bf16.msra.mxu0 0
      %330 = vmatprep.subr.bf16.mxu0 0
      %331 = vmatpush1.bf16.msra.mxu0 0
      %332 = vmatprep.subr.bf16.mxu0 0
      %333 = vmatpush1.bf16.msra.mxu0 0
      %334 = vmatprep.subr.bf16.mxu0 0
      %335 = vmatpush1.bf16.msra.mxu0 0
      %336 = vmatprep.mubr.bf16.mxu0 0
      %337 = vmatmul.mubr.bf16.gmra.mrb[0].mxu0 %v302
      %v338 = vpop.f32.mrb[0].mxu0
      %v339 = vadd.f32 %v286, %v338
      %v340 = vpop.f32.mrb[0].mxu0
      %v341 = vpop.f32.mrb[0].mxu0
      %v342 = vpop.f32.mrb[0].mxu0
      %343 = vdwg.mxu0
      %v344 = vmax.f32 %v339, 0.0
      %v345 = vld [vmem:[%s3] sm:$0xf]
      %v346 = vld [vmem:[%s3 + $0x4] sm:$0xf]
      %v347 = vld [vmem:[%s3 + $0x8] sm:$0xf]
      %v348 = vld [vmem:[%s3 + $0xc] sm:$0xf]
      %v349 = vld [vmem:[%s3 + $0x10] sm:$0xf]
      %v350 = vld [vmem:[%s3 + $0x14] sm:$0xf]
      %v351 = vld [vmem:[%s3 + $0x18] sm:$0xf]
      %v352 = vld [vmem:[%s3 + $0x1c] sm:$0xf]
      %v353 = vpack.c.bf16 %v344, %v344
      %v354 = vld [vmem:[%s4] sm:$0x1]
      %v356 = vlaneseq
      %v357 = vshrl.u32 %v356, 7
      %v358 = vsub.s32 0, %v357
      %v359 = vrot.slane %v354, %v358
      %v369 = vunpack.c.l.b16 %v345
      %v370 = vunpack.c.l.b16 %v346
      %v371 = vunpack.c.l.b16 %v347
      %v372 = vunpack.c.l.b16 %v348
      %v373 = vunpack.c.l.b16 %v349
      %v374 = vunpack.c.l.b16 %v350
      %v375 = vunpack.c.l.b16 %v351
      %v376 = vunpack.c.l.b16 %v352
      %v377 = vpack.c.b16 %v370, %v369
      %v378 = vpack.c.b16 %v372, %v371
      %v379 = vpack.c.b16 %v374, %v373
      %v380 = vpack.c.b16 %v376, %v375
      %vm385 = vcmask 523264
      %v387 = vsel %vm385, %v353, 0
      %389 = vmatprep.subr.bf16.mxu0 0
      %390 = vmatpush1.bf16.msra.mxu0 %v377
      %391 = vmatprep.subr.bf16.mxu0 0
      %392 = vmatpush1.bf16.msra.mxu0 %v378
      %393 = vmatprep.subr.bf16.mxu0 0
      %394 = vmatpush1.bf16.msra.mxu0 %v379
      %395 = vmatprep.subr.bf16.mxu0 0
      %396 = vmatpush1.bf16.msra.mxu0 %v380
      %397 = vmatprep.subr.bf16.mxu0 0
      %398 = vmatpush1.bf16.msra.mxu0 0
      %399 = vmatprep.subr.bf16.mxu0 0
      %400 = vmatpush1.bf16.msra.mxu0 0
      %401 = vmatprep.subr.bf16.mxu0 0
      %402 = vmatpush1.bf16.msra.mxu0 0
      %403 = vmatprep.subr.bf16.mxu0 0
      %404 = vmatpush1.bf16.msra.mxu0 0
      %405 = vmatprep.subr.bf16.mxu0 0
      %406 = vmatpush1.bf16.msra.mxu0 0
      %407 = vmatprep.subr.bf16.mxu0 0
      %408 = vmatpush1.bf16.msra.mxu0 0
      %409 = vmatprep.subr.bf16.mxu0 0
      %410 = vmatpush1.bf16.msra.mxu0 0
      %411 = vmatprep.subr.bf16.mxu0 0
      %412 = vmatpush1.bf16.msra.mxu0 0
      %413 = vmatprep.subr.bf16.mxu0 0
      %414 = vmatpush1.bf16.msra.mxu0 0
      %415 = vmatprep.subr.bf16.mxu0 0
      %416 = vmatpush1.bf16.msra.mxu0 0
      %417 = vmatprep.subr.bf16.mxu0 0
      %418 = vmatpush1.bf16.msra.mxu0 0
      %419 = vmatprep.subr.bf16.mxu0 0
      %420 = vmatpush1.bf16.msra.mxu0 0
      %421 = vmatprep.mubr.bf16.mxu0 0
      %422 = vmatmul.mubr.bf16.gmra.mrb[0].mxu0 %v387
      %v423 = vpop.f32.mrb[0].mxu0
      %v424 = vadd.f32 %v359, %v423
      %v425 = vpop.f32.mrb[0].mxu0
      %v426 = vpop.f32.mrb[0].mxu0
      %v427 = vpop.f32.mrb[0].mxu0
      %428 = vdwg.mxu0
      %v429 = vadd.f32 %v275, %v424
      %v430 = vld [vmem:[%s5] sm:$0x1]
      %v431 = vld [vmem:[%s6] sm:$0x1]
      %v432 = vsel %vm300, %v429, 0.0
      %433 = vadd.xlane.f32.xlu0 %v432
      %v434 = vpop.xlane.xlu0 %433
      %v435 = vrcp.pop 32.0
      %v436 = vmul.f32 %v434, %v435
      %v437 = vsub.f32 %v429, %v436
      %v438 = vmul.f32 %v437, %v437
      %v439 = vsel %vm300, %v438, 0.0
      %440 = vadd.xlane.f32.xlu0 %v439
      %v441 = vpop.xlane.xlu0 %440
      %v442 = vmul.f32 %v441, %v435
      %v443 = vadd.f32 %v442, 1e-05
      %v444 = vrsqrt.pop %v443
      %v445 = vmul.f32 %v437, %v444
      %v447 = vlaneseq
      %v448 = vshrl.u32 %v447, 7
      %v449 = vsub.s32 0, %v448
      %v450 = vrot.slane %v430, %v449
      %v452 = vmul.f32 %v445, %v450
      %v454 = vlaneseq
      %v455 = vshrl.u32 %v454, 7
      %v456 = vsub.s32 0, %v455
      %v457 = vrot.slane %v431, %v456
      %v459 = vadd.f32 %v452, %v457
      %460 = vst.msk [vmem:[%s273] sm:$0xff] %vm300, %v459
      %p461 = scmp.lt.s32.totalorder %s18, 1
      %s462 = scalar_select %p461, %s18, 1
      %s463 = smul.addr %s462, 8
      %s464 = scalar_lea.vmem %s7, %s463
      // Predicated region
      $region49: #{vanilla_transformer_forward.13} parent=47 // pred_check
        %p465 = pneg %p188
      $region50: #{vanilla_transformer_forward.13} parent=47 // pred_check_branch
        %467 = sbr.rel (%p465) target = $region52
      $region51: #{vanilla_transformer_forward.13} parent=47 // pred_region
        _
      $region52: #{vanilla_transformer_forward.13} parent=47 // pred_fallthru
        _
    $region48: #{vanilla_transformer_forward.13} parent=5 // pred_fallthru
      _
    %p468 = scmp.le.s32.totalorder 2, %s13
    // Predicated region
    $region53: #{vanilla_transformer_forward.13} parent=5 // pred_check
      %p469 = pneg %p468
    $region54: #{vanilla_transformer_forward.13} parent=5 // pred_check_branch
      %471 = sbr.rel (%p469) target = $region56
    $region55: #{vanilla_transformer_forward.13} parent=5 // pred_region
      %s472 = ssub.s32 %s13, 2
      // Predicated region
      $region57: #{vanilla_transformer_forward.13} parent=55 // pred_check
        %p473 = pneg %p194
      $region58: #{vanilla_transformer_forward.13} parent=55 // pred_check_branch
        %475 = sbr.rel (%p473) target = $region60
      $region59: #{vanilla_transformer_forward.13} parent=55 // pred_region
        %p476 = scmp.lt.s32.totalorder %s19, 1
        %s477 = scalar_select %p476, %s19, 1
        %s478 = smul.addr %s477, 8
        %s479 = scalar_lea.vmem %s7, %s478
      $region60: #{vanilla_transformer_forward.13} parent=55 // pred_fallthru
        _
    $region56: #{vanilla_transformer_forward.13} parent=5 // pred_fallthru
      _
  $region6: #{vanilla_transformer_forward.13} parent=0 // loop_footer
    %s17 = sadd.s32 1, %s13
  $region7: #{vanilla_transformer_forward.13} parent=0 // loop_footer_branch
    %12 = sbr.rel target = $region3
  $region8: #{vanilla_transformer_forward.13} parent=0 // loop_exit
    _

// kernel: vanilla_transformer_forward.12
$region0: #{vanilla_transformer_forward.12}
  #allocation0 [shape = 'u32[]', space=smem, size = 0x4, offset = 0x4, fixed_abs, tag = 'smem constant byte address 0x4 - core index']
  #allocation1 [shape = 'u32[144,128]{1,0:T(1,128)}', space=vmem, size = 0x12000, scoped, tag = 'internal scratch']
  %s0 = inlined_call_operand.vmem [shape: f32[2,8,32], index: 0, kind: input, shape index: {}, may-alias: {0,9}]
  %s1 = inlined_call_operand.vmem [shape: bf16[32,32], index: 1, kind: input, shape index: {}]
  %s2 = inlined_call_operand.vmem [shape: f32[1,32], index: 2, kind: input, shape index: {}]
  %s3 = inlined_call_operand.vmem [shape: bf16[32,64], index: 3, kind: input, shape index: {}]
  %s4 = inlined_call_operand.vmem [shape: f32[1,64], index: 4, kind: input, shape index: {}]
  %s5 = inlined_call_operand.vmem [shape: bf16[32,32], index: 5, kind: input, shape index: {}]
  %s6 = inlined_call_operand.vmem [shape: f32[1,32], index: 6, kind: input, shape index: {}]
  %s7 = inlined_call_operand.vmem [shape: f32[1,32], index: 7, kind: input, shape index: {}]
  %s8 = inlined_call_operand.vmem [shape: f32[1,32], index: 8, kind: input, shape index: {}]
  %s9 = inlined_call_operand.vmem [shape: f32[2,8,32], index: 9, kind: output, shape index: {}, may-alias: {0,9}]
  %s10 = sld [smem:[#allocation0]]
  $region69: #{vanilla_transformer_forward.12} parent=0
    _
  %s12 = ssub.s32 1, %s10
  %s13 = scalar_select 0, %s12, %s10
  loop: start=0, step=1, limit=4
  $region2: #{vanilla_transformer_forward.12} parent=0 // loop_pre_header
    _
  $region3: #{vanilla_transformer_forward.12} parent=0 // loop_header
    %s15 = sphi 0, %s19
    %p16 = scmp.ge.s32.totalorder %s15, 4
    %s25 = sphi 0, %s27
    %s28 = sphi 0, %s25
    %s29 = sphi 0, %s28
    %s45 = sphi 0, %s29
    %s49 = sphi 0, %s49
    %s51 = sphi 0, %s49
    %s52 = sphi 0, %s51
    %s66 = sphi 0, %s52
    %s70 = sphi 0, %s70
    %s72 = sphi 0, %s70
    %s73 = sphi 0, %s72
    %s87 = sphi 0, %s73
    %s91 = sphi 0, %s91
    %s93 = sphi 0, %s91
    %s94 = sphi 0, %s93
    %s108 = sphi 0, %s94
    %s112 = sphi 0, %s112
    %s114 = sphi 0, %s112
    %s115 = sphi 0, %s114
    %s129 = sphi 0, %s115
    %s133 = sphi 0, %s133
    %s135 = sphi 0, %s133
    %s136 = sphi 0, %s135
    %s150 = sphi 0, %s136
    %s154 = sphi 0, %s154
    %s156 = sphi 0, %s154
    %s157 = sphi 0, %s156
    %s171 = sphi 0, %s157
    %s175 = sphi 0, %s175
    %s177 = sphi 0, %s175
    %s178 = sphi 0, %s177
    %s192 = sphi 0, %s178
    %s196 = sphi 0, %s196
    %s198 = sphi 0, %s196
    %s199 = sphi 0, %s198
    %s213 = sphi 0, %s199
    %s219 = sphi 0, %s221
    %s222 = sphi 0, %s219
    %s223 = sphi 0, %s222
    %s239 = sphi 0, %s223
  $region4: #{vanilla_transformer_forward.12} parent=0 // loop_header_branch
    %18 = sbr.rel (%p16) target = $region8
  $region5: #{vanilla_transformer_forward.12} parent=0 // loop_body
    %s20 = ssub.s32 %s15, 1
    %s21 = ssub.s32 %s15, 2
    %s22 = sadd.s32 %s15, 1
    %s23 = ssub.s32 %s15, %s22
    %p24 = scmp.eq.s32.totalorder %s23, 0
    %s26 = sadd.s32 %s25, 1
    %s27 = scalar_select %p24, %s25, %s26
    %p30 = pneg %p24
    %p31 = scmp.eq.s32.totalorder %s15, 1
    %p32 = por %p30, %p31
    %p33 = scmp.ne.s32.totalorder %s25, %s28
    %p34 = scmp.eq.s32.totalorder %s15, 0
    %p35 = por %p33, %p34
    %p36 = scmp.ne.s32.totalorder %s25, %s28
    %p37 = scmp.eq.s32.totalorder %s20, 1
    %p38 = por %p36, %p37
    %p39 = scmp.ne.s32.totalorder %s28, %s29
    %p40 = scmp.eq.s32.totalorder %s20, 0
    %p41 = por %p39, %p40
    %p42 = scmp.ne.s32.totalorder %s28, %s29
    %p43 = scmp.eq.s32.totalorder %s21, 1
    %p44 = por %p42, %p43
    %p46 = scmp.ne.s32.totalorder %s29, %s45
    %p47 = scmp.eq.s32.totalorder %s21, 0
    %p48 = por %p46, %p47
    %s50 = sadd.s32 %s49, 1
    %p53 = scmp.eq.s32.totalorder %s15, 1
    %p54 = scmp.ne.s32.totalorder %s49, %s51
    %p55 = scmp.eq.s32.totalorder %s15, 0
    %p56 = por %p54, %p55
    %p57 = scmp.ne.s32.totalorder %s49, %s51
    %p58 = scmp.eq.s32.totalorder %s20, 1
    %p59 = por %p57, %p58
    %p60 = scmp.ne.s32.totalorder %s51, %s52
    %p61 = scmp.eq.s32.totalorder %s20, 0
    %p62 = por %p60, %p61
    %p63 = scmp.ne.s32.totalorder %s51, %s52
    %p64 = scmp.eq.s32.totalorder %s21, 1
    %p65 = por %p63, %p64
    %p67 = scmp.ne.s32.totalorder %s52, %s66
    %p68 = scmp.eq.s32.totalorder %s21, 0
    %p69 = por %p67, %p68
    %s71 = sadd.s32 %s70, 1
    %p74 = scmp.eq.s32.totalorder %s15, 1
    %p75 = scmp.ne.s32.totalorder %s70, %s72
    %p76 = scmp.eq.s32.totalorder %s15, 0
    %p77 = por %p75, %p76
    %p78 = scmp.ne.s32.totalorder %s70, %s72
    %p79 = scmp.eq.s32.totalorder %s20, 1
    %p80 = por %p78, %p79
    %p81 = scmp.ne.s32.totalorder %s72, %s73
    %p82 = scmp.eq.s32.totalorder %s20, 0
    %p83 = por %p81, %p82
    %p84 = scmp.ne.s32.totalorder %s72, %s73
    %p85 = scmp.eq.s32.totalorder %s21, 1
    %p86 = por %p84, %p85
    %p88 = scmp.ne.s32.totalorder %s73, %s87
    %p89 = scmp.eq.s32.totalorder %s21, 0
    %p90 = por %p88, %p89
    %s92 = sadd.s32 %s91, 1
    %p95 = scmp.eq.s32.totalorder %s15, 1
    %p96 = scmp.ne.s32.totalorder %s91, %s93
    %p97 = scmp.eq.s32.totalorder %s15, 0
    %p98 = por %p96, %p97
    %p99 = scmp.ne.s32.totalorder %s91, %s93
    %p100 = scmp.eq.s32.totalorder %s20, 1
    %p101 = por %p99, %p100
    %p102 = scmp.ne.s32.totalorder %s93, %s94
    %p103 = scmp.eq.s32.totalorder %s20, 0
    %p104 = por %p102, %p103
    %p105 = scmp.ne.s32.totalorder %s93, %s94
    %p106 = scmp.eq.s32.totalorder %s21, 1
    %p107 = por %p105, %p106
    %p109 = scmp.ne.s32.totalorder %s94, %s108
    %p110 = scmp.eq.s32.totalorder %s21, 0
    %p111 = por %p109, %p110
    %s113 = sadd.s32 %s112, 1
    %p116 = scmp.eq.s32.totalorder %s15, 1
    %p117 = scmp.ne.s32.totalorder %s112, %s114
    %p118 = scmp.eq.s32.totalorder %s15, 0
    %p119 = por %p117, %p118
    %p120 = scmp.ne.s32.totalorder %s112, %s114
    %p121 = scmp.eq.s32.totalorder %s20, 1
    %p122 = por %p120, %p121
    %p123 = scmp.ne.s32.totalorder %s114, %s115
    %p124 = scmp.eq.s32.totalorder %s20, 0
    %p125 = por %p123, %p124
    %p126 = scmp.ne.s32.totalorder %s114, %s115
    %p127 = scmp.eq.s32.totalorder %s21, 1
    %p128 = por %p126, %p127
    %p130 = scmp.ne.s32.totalorder %s115, %s129
    %p131 = scmp.eq.s32.totalorder %s21, 0
    %p132 = por %p130, %p131
    %s134 = sadd.s32 %s133, 1
    %p137 = scmp.eq.s32.totalorder %s15, 1
    %p138 = scmp.ne.s32.totalorder %s133, %s135
    %p139 = scmp.eq.s32.totalorder %s15, 0
    %p140 = por %p138, %p139
    %p141 = scmp.ne.s32.totalorder %s133, %s135
    %p142 = scmp.eq.s32.totalorder %s20, 1
    %p143 = por %p141, %p142
    %p144 = scmp.ne.s32.totalorder %s135, %s136
    %p145 = scmp.eq.s32.totalorder %s20, 0
    %p146 = por %p144, %p145
    %p147 = scmp.ne.s32.totalorder %s135, %s136
    %p148 = scmp.eq.s32.totalorder %s21, 1
    %p149 = por %p147, %p148
    %p151 = scmp.ne.s32.totalorder %s136, %s150
    %p152 = scmp.eq.s32.totalorder %s21, 0
    %p153 = por %p151, %p152
    %s155 = sadd.s32 %s154, 1
    %p158 = scmp.eq.s32.totalorder %s15, 1
    %p159 = scmp.ne.s32.totalorder %s154, %s156
    %p160 = scmp.eq.s32.totalorder %s15, 0
    %p161 = por %p159, %p160
    %p162 = scmp.ne.s32.totalorder %s154, %s156
    %p163 = scmp.eq.s32.totalorder %s20, 1
    %p164 = por %p162, %p163
    %p165 = scmp.ne.s32.totalorder %s156, %s157
    %p166 = scmp.eq.s32.totalorder %s20, 0
    %p167 = por %p165, %p166
    %p168 = scmp.ne.s32.totalorder %s156, %s157
    %p169 = scmp.eq.s32.totalorder %s21, 1
    %p170 = por %p168, %p169
    %p172 = scmp.ne.s32.totalorder %s157, %s171
    %p173 = scmp.eq.s32.totalorder %s21, 0
    %p174 = por %p172, %p173
    %s176 = sadd.s32 %s175, 1
    %p179 = scmp.eq.s32.totalorder %s15, 1
    %p180 = scmp.ne.s32.totalorder %s175, %s177
    %p181 = scmp.eq.s32.totalorder %s15, 0
    %p182 = por %p180, %p181
    %p183 = scmp.ne.s32.totalorder %s175, %s177
    %p184 = scmp.eq.s32.totalorder %s20, 1
    %p185 = por %p183, %p184
    %p186 = scmp.ne.s32.totalorder %s177, %s178
    %p187 = scmp.eq.s32.totalorder %s20, 0
    %p188 = por %p186, %p187
    %p189 = scmp.ne.s32.totalorder %s177, %s178
    %p190 = scmp.eq.s32.totalorder %s21, 1
    %p191 = por %p189, %p190
    %p193 = scmp.ne.s32.totalorder %s178, %s192
    %p194 = scmp.eq.s32.totalorder %s21, 0
    %p195 = por %p193, %p194
    %s197 = sadd.s32 %s196, 1
    %p200 = scmp.eq.s32.totalorder %s15, 1
    %p201 = scmp.ne.s32.totalorder %s196, %s198
    %p202 = scmp.eq.s32.totalorder %s15, 0
    %p203 = por %p201, %p202
    %p204 = scmp.ne.s32.totalorder %s196, %s198
    %p205 = scmp.eq.s32.totalorder %s20, 1
    %p206 = por %p204, %p205
    %p207 = scmp.ne.s32.totalorder %s198, %s199
    %p208 = scmp.eq.s32.totalorder %s20, 0
    %p209 = por %p207, %p208
    %p210 = scmp.ne.s32.totalorder %s198, %s199
    %p211 = scmp.eq.s32.totalorder %s21, 1
    %p212 = por %p210, %p211
    %p214 = scmp.ne.s32.totalorder %s199, %s213
    %p215 = scmp.eq.s32.totalorder %s21, 0
    %p216 = por %p214, %p215
    %s217 = ssub.s32 %s15, %s22
    %p218 = scmp.eq.s32.totalorder %s217, 0
    %s220 = sadd.s32 %s219, 1
    %s221 = scalar_select %p218, %s219, %s220
    %p224 = pneg %p218
    %p225 = scmp.eq.s32.totalorder %s15, 1
    %p226 = por %p224, %p225
    %p227 = scmp.ne.s32.totalorder %s219, %s222
    %p228 = scmp.eq.s32.totalorder %s15, 0
    %p229 = por %p227, %p228
    %p230 = scmp.ne.s32.totalorder %s219, %s222
    %p231 = scmp.eq.s32.totalorder %s20, 1
    %p232 = por %p230, %p231
    %p233 = scmp.ne.s32.totalorder %s222, %s223
    %p234 = scmp.eq.s32.totalorder %s20, 0
    %p235 = por %p233, %p234
    %p236 = scmp.ne.s32.totalorder %s222, %s223
    %p237 = scmp.eq.s32.totalorder %s21, 1
    %p238 = por %p236, %p237
    %p240 = scmp.ne.s32.totalorder %s223, %s239
    %p241 = scmp.eq.s32.totalorder %s21, 0
    %p242 = por %p240, %p241
    %p243 = scmp.le.s32.totalorder 1, %s15
    %p244 = scmp.lt.s32.totalorder %s15, 3
    %p245 = pnand %p243, %p244
    %p246 = pneg %p245
    // Predicated region
    $region9: #{vanilla_transformer_forward.12} parent=5 // pred_check
      _
    $region10: #{vanilla_transformer_forward.12} parent=5 // pred_check_branch
      %248 = sbr.rel (%p245) target = $region12
    $region11: #{vanilla_transformer_forward.12} parent=5 // pred_region
      %s249 = ssub.s32 %s15, 1
      // Predicated region
      $region13: #{vanilla_transformer_forward.12} parent=11 // pred_check
        %p250 = pneg %p62
      $region14: #{vanilla_transformer_forward.12} parent=11 // pred_check_branch
        %252 = sbr.rel (%p250) target = $region16
      $region15: #{vanilla_transformer_forward.12} parent=11 // pred_region
        _
      $region16: #{vanilla_transformer_forward.12} parent=11 // pred_fallthru
        _
      // Predicated region
      $region17: #{vanilla_transformer_forward.12} parent=11 // pred_check
        %p253 = pneg %p83
      $region18: #{vanilla_transformer_forward.12} parent=11 // pred_check_branch
        %255 = sbr.rel (%p253) target = $region20
      $region19: #{vanilla_transformer_forward.12} parent=11 // pred_region
        _
      $region20: #{vanilla_transformer_forward.12} parent=11 // pred_fallthru
        _
      // Predicated region
      $region21: #{vanilla_transformer_forward.12} parent=11 // pred_check
        %p256 = pneg %p104
      $region22: #{vanilla_transformer_forward.12} parent=11 // pred_check_branch
        %258 = sbr.rel (%p256) target = $region24
      $region23: #{vanilla_transformer_forward.12} parent=11 // pred_region
        _
      $region24: #{vanilla_transformer_forward.12} parent=11 // pred_fallthru
        _
      // Predicated region
      $region25: #{vanilla_transformer_forward.12} parent=11 // pred_check
        %p259 = pneg %p125
      $region26: #{vanilla_transformer_forward.12} parent=11 // pred_check_branch
        %261 = sbr.rel (%p259) target = $region28
      $region27: #{vanilla_transformer_forward.12} parent=11 // pred_region
        _
      $region28: #{vanilla_transformer_forward.12} parent=11 // pred_fallthru
        _
      // Predicated region
      $region29: #{vanilla_transformer_forward.12} parent=11 // pred_check
        %p262 = pneg %p146
      $region30: #{vanilla_transformer_forward.12} parent=11 // pred_check_branch
        %264 = sbr.rel (%p262) target = $region32
      $region31: #{vanilla_transformer_forward.12} parent=11 // pred_region
        _
      $region32: #{vanilla_transformer_forward.12} parent=11 // pred_fallthru
        _
      // Predicated region
      $region33: #{vanilla_transformer_forward.12} parent=11 // pred_check
        %p265 = pneg %p167
      $region34: #{vanilla_transformer_forward.12} parent=11 // pred_check_branch
        %267 = sbr.rel (%p265) target = $region36
      $region35: #{vanilla_transformer_forward.12} parent=11 // pred_region
        _
      $region36: #{vanilla_transformer_forward.12} parent=11 // pred_fallthru
        _
      // Predicated region
      $region37: #{vanilla_transformer_forward.12} parent=11 // pred_check
        %p268 = pneg %p188
      $region38: #{vanilla_transformer_forward.12} parent=11 // pred_check_branch
        %270 = sbr.rel (%p268) target = $region40
      $region39: #{vanilla_transformer_forward.12} parent=11 // pred_region
        _
      $region40: #{vanilla_transformer_forward.12} parent=11 // pred_fallthru
        _
      // Predicated region
      $region41: #{vanilla_transformer_forward.12} parent=11 // pred_check
        %p271 = pneg %p209
      $region42: #{vanilla_transformer_forward.12} parent=11 // pred_check_branch
        %273 = sbr.rel (%p271) target = $region44
      $region43: #{vanilla_transformer_forward.12} parent=11 // pred_region
        _
      $region44: #{vanilla_transformer_forward.12} parent=11 // pred_fallthru
        _
    $region12: #{vanilla_transformer_forward.12} parent=5 // pred_fallthru
      _
    %p274 = scmp.lt.s32.totalorder %s15, 2
    // Predicated region
    $region45: #{vanilla_transformer_forward.12} parent=5 // pred_check
      %p275 = pneg %p274
    $region46: #{vanilla_transformer_forward.12} parent=5 // pred_check_branch
      %277 = sbr.rel (%p275) target = $region48
    $region47: #{vanilla_transformer_forward.12} parent=5 // pred_region
      // Predicated region
      $region49: #{vanilla_transformer_forward.12} parent=47 // pred_check
        %p278 = pneg %p35
      $region50: #{vanilla_transformer_forward.12} parent=47 // pred_check_branch
        %280 = sbr.rel (%p278) target = $region52
      $region51: #{vanilla_transformer_forward.12} parent=47 // pred_region
        %p281 = scmp.lt.s32.totalorder %s15, 1
        %s282 = scalar_select %p281, %s15, 1
        %s283 = smul.addr %s282, 8
        %s284 = scalar_lea.vmem %s0, %s283
      $region52: #{vanilla_transformer_forward.12} parent=47 // pred_fallthru
        _
    $region48: #{vanilla_transformer_forward.12} parent=5 // pred_fallthru
      _
    %p285 = scmp.le.s32.totalorder 1, %s15
    %p286 = scmp.lt.s32.totalorder %s15, 3
    %p287 = pnand %p285, %p286
    %p288 = pneg %p287
    // Predicated region
    $region53: #{vanilla_transformer_forward.12} parent=5 // pred_check
      _
    $region54: #{vanilla_transformer_forward.12} parent=5 // pred_check_branch
      %290 = sbr.rel (%p287) target = $region56
    $region55: #{vanilla_transformer_forward.12} parent=5 // pred_region
      %s291 = ssub.s32 %s15, 1
      %p292 = scmp.lt.s32.totalorder %s20, 1
      %s293 = scalar_select %p292, %s20, 1
      %s294 = smul.addr %s293, 8
      %s295 = scalar_lea.vmem %s0, %s294
      %p296 = pneg %p41
      %p297 = pneg %p38
      %p298 = pneg %p62
      %p299 = pneg %p59
      %p300 = pneg %p83
      %p301 = pneg %p80
      %p302 = pneg %p104
      %p303 = pneg %p101
      %p304 = pneg %p125
      %p305 = pneg %p122
      %p306 = pneg %p146
      %p307 = pneg %p143
      %p308 = pneg %p167
      %p309 = pneg %p164
      %p310 = pneg %p188
      %p311 = pneg %p185
      %p312 = pneg %p209
      %p313 = pneg %p206
      %p314 = pneg %p235
      %p315 = pneg %p232
      %p316 = scmp.lt.s32.totalorder %s20, 1
      %s317 = scalar_select %p316, %s20, 1
      %s318 = smul.addr %s317, 8
      %s319 = scalar_lea.vmem %s9, %s318
      %p320 = scmp.lt.s32.totalorder %s20, 1
      %s321 = scalar_select %p320, %s20, 1
      %s322 = smul.addr %s321, 8
      %s323 = scalar_lea.vmem %s0, %s322
      %p324 = scmp.lt.s32.totalorder %s20, 1
      %s325 = scalar_select %p324, %s20, 1
      %s326 = smul.addr %s325, 8
      %s327 = scalar_lea.vmem %s9, %s326
      %v329 = vld [vmem:[%s323] sm:$0xff]
      %v330 = vld [vmem:[%s1] sm:$0xf]
      %v331 = vld [vmem:[%s1 + $0x4] sm:$0xf]
      %v332 = vld [vmem:[%s1 + $0x8] sm:$0xf]
      %v333 = vld [vmem:[%s1 + $0xc] sm:$0xf]
      %v334 = vpack.c.bf16 %v329, %v329
      %v335 = vld [vmem:[%s2] sm:$0x1]
      %v337 = vlaneseq
      %v338 = vshrl.u32 %v337, 7
      %v339 = vsub.s32 0, %v338
      %v340 = vrot.slane %v335, %v339
      %v346 = vunpack.c.l.b16 %v330
      %v347 = vunpack.c.l.b16 %v331
      %v348 = vunpack.c.l.b16 %v332
      %v349 = vunpack.c.l.b16 %v333
      %v350 = vpack.c.b16 %v347, %v346
      %v351 = vpack.c.b16 %v349, %v348
      %vm354 = vcmask 261120
      %v356 = vsel %vm354, %v334, 0
      %358 = vmatprep.subr.bf16.mxu0 0
      %359 = vmatpush1.bf16.msra.mxu0 %v350
      %360 = vmatprep.subr.bf16.mxu0 0
      %361 = vmatpush1.bf16.msra.mxu0 %v351
      %362 = vmatprep.subr.bf16.mxu0 0
      %363 = vmatpush1.bf16.msra.mxu0 0
      %364 = vmatprep.subr.bf16.mxu0 0
      %365 = vmatpush1.bf16.msra.mxu0 0
      %366 = vmatprep.subr.bf16.mxu0 0
      %367 = vmatpush1.bf16.msra.mxu0 0
      %368 = vmatprep.subr.bf16.mxu0 0
      %369 = vmatpush1.bf16.msra.mxu0 0
      %370 = vmatprep.subr.bf16.mxu0 0
      %371 = vmatpush1.bf16.msra.mxu0 0
      %372 = vmatprep.subr.bf16.mxu0 0
      %373 = vmatpush1.bf16.msra.mxu0 0
      %374 = vmatprep.subr.bf16.mxu0 0
      %375 = vmatpush1.bf16.msra.mxu0 0
      %376 = vmatprep.subr.bf16.mxu0 0
      %377 = vmatpush1.bf16.msra.mxu0 0
      %378 = vmatprep.subr.bf16.mxu0 0
      %379 = vmatpush1.bf16.msra.mxu0 0
      %380 = vmatprep.subr.bf16.mxu0 0
      %381 = vmatpush1.bf16.msra.mxu0 0
      %382 = vmatprep.subr.bf16.mxu0 0
      %383 = vmatpush1.bf16.msra.mxu0 0
      %384 = vmatprep.subr.bf16.mxu0 0
      %385 = vmatpush1.bf16.msra.mxu0 0
      %386 = vmatprep.subr.bf16.mxu0 0
      %387 = vmatpush1.bf16.msra.mxu0 0
      %388 = vmatprep.subr.bf16.mxu0 0
      %389 = vmatpush1.bf16.msra.mxu0 0
      %390 = vmatprep.mubr.bf16.mxu0 0
      %391 = vmatmul.mubr.bf16.gmra.mrb[0].mxu0 %v356
      %v392 = vpop.f32.mrb[0].mxu0
      %v393 = vadd.f32 %v340, %v392
      %v394 = vpop.f32.mrb[0].mxu0
      %v395 = vpop.f32.mrb[0].mxu0
      %v396 = vpop.f32.mrb[0].mxu0
      %397 = vdwg.mxu0
      %v398 = vld [vmem:[%s3] sm:$0xf]
      %v399 = vld [vmem:[%s3 + $0x4] sm:$0xf]
      %v400 = vld [vmem:[%s3 + $0x8] sm:$0xf]
      %v401 = vld [vmem:[%s3 + $0xc] sm:$0xf]
      %v402 = vld [vmem:[%s4] sm:$0x1]
      %v404 = vlaneseq
      %v405 = vshrl.u32 %v404, 7
      %v406 = vsub.s32 0, %v405
      %v407 = vrot.slane %v402, %v406
      %v413 = vunpack.c.l.b16 %v398
      %v414 = vunpack.c.l.b16 %v399
      %v415 = vunpack.c.l.b16 %v400
      %v416 = vunpack.c.l.b16 %v401
      %v417 = vpack.c.b16 %v414, %v413
      %v418 = vpack.c.b16 %v416, %v415
      %421 = vmatprep.subr.bf16.mxu0 0
      %422 = vmatpush1.bf16.msra.mxu0 %v417
      %423 = vmatprep.subr.bf16.mxu0 0
      %424 = vmatpush1.bf16.msra.mxu0 %v418
      %425 = vmatprep.subr.bf16.mxu0 0
      %426 = vmatpush1.bf16.msra.mxu0 0
      %427 = vmatprep.subr.bf16.mxu0 0
      %428 = vmatpush1.bf16.msra.mxu0 0
      %429 = vmatprep.subr.bf16.mxu0 0
      %430 = vmatpush1.bf16.msra.mxu0 0
      %431 = vmatprep.subr.bf16.mxu0 0
      %432 = vmatpush1.bf16.msra.mxu0 0
      %433 = vmatprep.subr.bf16.mxu0 0
      %434 = vmatpush1.bf16.msra.mxu0 0
      %435 = vmatprep.subr.bf16.mxu0 0
      %436 = vmatpush1.bf16.msra.mxu0 0
      %437 = vmatprep.subr.bf16.mxu0 0
      %438 = vmatpush1.bf16.msra.mxu0 0
      %439 = vmatprep.subr.bf16.mxu0 0
      %440 = vmatpush1.bf16.msra.mxu0 0
      %441 = vmatprep.subr.bf16.mxu0 0
      %442 = vmatpush1.bf16.msra.mxu0 0
      %443 = vmatprep.subr.bf16.mxu0 0
      %444 = vmatpush1.bf16.msra.mxu0 0
      %445 = vmatprep.subr.bf16.mxu0 0
      %446 = vmatpush1.bf16.msra.mxu0 0
      %447 = vmatprep.subr.bf16.mxu0 0
      %448 = vmatpush1.bf16.msra.mxu0 0
      %449 = vmatprep.subr.bf16.mxu0 0
      %450 = vmatpush1.bf16.msra.mxu0 0
      %451 = vmatprep.subr.bf16.mxu0 0
      %452 = vmatpush1.bf16.msra.mxu0 0
      %453 = vmatprep.mubr.bf16.mxu0 0
      %454 = vmatmul.mubr.bf16.gmra.mrb[0].mxu0 %v356
      %v455 = vpop.f32.mrb[0].mxu0
      %v456 = vadd.f32 %v407, %v455
      %v457 = vpop.f32.mrb[0].mxu0
      %v458 = vpop.f32.mrb[0].mxu0
      %v459 = vpop.f32.mrb[0].mxu0
      %460 = vdwg.mxu0
      %462 = vrot.lane.b32.xlu0 %v393, 120
      %v463 = vpop.permute.xlu0 %462
      %465 = vrot.lane.b32.xlu0 %v393, 112
      %v466 = vpop.permute.xlu0 %465
      %468 = vrot.lane.b32.xlu0 %v393, 104
      %v469 = vpop.permute.xlu0 %468
      %v471 = vcombine.low %v393, %v466
      %v472 = vcombine.high %v393, %v466
      %v474 = vunpack.c.l.s4 1983009808
      %v475 = vunpack.c.0.s8 %v474
      %v476 = vlaneseq
      %v477 = vshrl.u32 %v476, 7
      %v478 = vsub.s32 %v475, %v477
      %v479 = vrot.slane %v471, %v478
      %v481 = vunpack.c.l.s4 1983009808
      %v482 = vunpack.c.0.s8 %v481
      %v483 = vlaneseq
      %v484 = vshrl.u32 %v483, 7
      %v485 = vsub.s32 %v482, %v484
      %v486 = vrot.slane %v472, %v485
      %v487 = vcombine.low %v463, %v469
      %v488 = vcombine.high %v463, %v469
      %v490 = vunpack.c.l.s4 1983009808
      %v491 = vunpack.c.0.s8 %v490
      %v492 = vlaneseq
      %v493 = vshrl.u32 %v492, 7
      %v494 = vsub.s32 %v491, %v493
      %v495 = vrot.slane %v487, %v494
      %v497 = vunpack.c.l.s4 1983009808
      %v498 = vunpack.c.0.s8 %v497
      %v499 = vlaneseq
      %v500 = vshrl.u32 %v499, 7
      %v501 = vsub.s32 %v498, %v500
      %v502 = vrot.slane %v488, %v501
      %v503 = vcombine.low %v479, %v495
      %v504 = vcombine.high %v479, %v495
      %v506 = vunpack.c.l.s4 1934713408
      %v507 = vunpack.c.0.s8 %v506
      %v508 = vlaneseq
      %v509 = vshrl.u32 %v508, 7
      %v510 = vsub.s32 %v507, %v509
      %v511 = vrot.slane %v503, %v510
      %v513 = vunpack.c.l.s4 1934713408
      %v514 = vunpack.c.0.s8 %v513
      %v515 = vlaneseq
      %v516 = vshrl.u32 %v515, 7
      %v517 = vsub.s32 %v514, %v516
      %v518 = vrot.slane %v504, %v517
      %v519 = vcombine.low %v486, %v502
      %v520 = vcombine.high %v486, %v502
      %v522 = vunpack.c.l.s4 1934713408
      %v523 = vunpack.c.0.s8 %v522
      %v524 = vlaneseq
      %v525 = vshrl.u32 %v524, 7
      %v526 = vsub.s32 %v523, %v525
      %v527 = vrot.slane %v519, %v526
      %v529 = vunpack.c.l.s4 1934713408
      %v530 = vunpack.c.0.s8 %v529
      %v531 = vlaneseq
      %v532 = vshrl.u32 %v531, 7
      %v533 = vsub.s32 %v530, %v532
      %v534 = vrot.slane %v520, %v533
      %v535 = vcombine.high %v511, 0.0
      %v536 = vcombine.high %v518, 0.0
      %v537 = vcombine.high %v527, 0.0
      %v538 = vcombine.high %v534, 0.0
      %v539 = vcombine.low %v511, %v518
      %v541 = vunpack.c.l.s4 1983009808
      %v542 = vunpack.c.0.s8 %v541
      %v543 = vlaneseq
      %v544 = vshrl.u32 %v543, 7
      %v545 = vsub.s32 %v542, %v544
      %v546 = vrot.slane %v539, %v545
      %v547 = vcombine.low %v535, %v536
      %v549 = vunpack.c.l.s4 1983009808
      %v550 = vunpack.c.0.s8 %v549
      %v551 = vlaneseq
      %v552 = vshrl.u32 %v551, 7
      %v553 = vsub.s32 %v550, %v552
      %v554 = vrot.slane %v547, %v553
      %v555 = vcombine.low %v527, %v534
      %v557 = vunpack.c.l.s4 1983009808
      %v558 = vunpack.c.0.s8 %v557
      %v559 = vlaneseq
      %v560 = vshrl.u32 %v559, 7
      %v561 = vsub.s32 %v558, %v560
      %v562 = vrot.slane %v555, %v561
      %v563 = vcombine.low %v537, %v538
      %v565 = vunpack.c.l.s4 1983009808
      %v566 = vunpack.c.0.s8 %v565
      %v567 = vlaneseq
      %v568 = vshrl.u32 %v567, 7
      %v569 = vsub.s32 %v566, %v568
      %v570 = vrot.slane %v563, %v569
      %v571 = vcombine.low %v546, %v554
      %v572 = vcombine.high %v546, %v554
      %v574 = vunpack.c.l.s4 1934713408
      %v575 = vunpack.c.0.s8 %v574
      %v576 = vlaneseq
      %v577 = vshrl.u32 %v576, 7
      %v578 = vsub.s32 %v575, %v577
      %v579 = vrot.slane %v571, %v578
      %v581 = vunpack.c.l.s4 1934713408
      %v582 = vunpack.c.0.s8 %v581
      %v583 = vlaneseq
      %v584 = vshrl.u32 %v583, 7
      %v585 = vsub.s32 %v582, %v584
      %v586 = vrot.slane %v572, %v585
      %v587 = vcombine.low %v562, %v570
      %v588 = vcombine.high %v562, %v570
      %v590 = vunpack.c.l.s4 1934713408
      %v591 = vunpack.c.0.s8 %v590
      %v592 = vlaneseq
      %v593 = vshrl.u32 %v592, 7
      %v594 = vsub.s32 %v591, %v593
      %v595 = vrot.slane %v587, %v594
      %v597 = vunpack.c.l.s4 1934713408
      %v598 = vunpack.c.0.s8 %v597
      %v599 = vlaneseq
      %v600 = vshrl.u32 %v599, 7
      %v601 = vsub.s32 %v598, %v600
      %v602 = vrot.slane %v588, %v601
      %v603 = vcombine.low %v579, %v595
      %v604 = vcombine.high %v579, %v595
      %v605 = vcombine.low %v586, %v602
      %v606 = vcombine.high %v586, %v602
      %v607 = vpack.c.bf16 %v603, %v603
      %v608 = vpack.c.bf16 %v604, %v604
      %v609 = vpack.c.bf16 %v605, %v605
      %v610 = vpack.c.bf16 %v606, %v606
      %612 = vrot.lane.b32.xlu0 %v456, 120
      %v613 = vpop.permute.xlu0 %612
      %615 = vrot.lane.b32.xlu0 %v456, 112
      %v616 = vpop.permute.xlu0 %615
      %618 = vrot.lane.b32.xlu0 %v456, 104
      %v619 = vpop.permute.xlu0 %618
      %v621 = vcombine.low %v456, %v616
      %v622 = vcombine.high %v456, %v616
      %v624 = vunpack.c.l.s4 1983009808
      %v625 = vunpack.c.0.s8 %v624
      %v626 = vlaneseq
      %v627 = vshrl.u32 %v626, 7
      %v628 = vsub.s32 %v625, %v627
      %v629 = vrot.slane %v621, %v628
      %v631 = vunpack.c.l.s4 1983009808
      %v632 = vunpack.c.0.s8 %v631
      %v633 = vlaneseq
      %v634 = vshrl.u32 %v633, 7
      %v635 = vsub.s32 %v632, %v634
      %v636 = vrot.slane %v622, %v635
      %v637 = vcombine.low %v613, %v619
      %v638 = vcombine.high %v613, %v619
      %v640 = vunpack.c.l.s4 1983009808
      %v641 = vunpack.c.0.s8 %v640
      %v642 = vlaneseq
      %v643 = vshrl.u32 %v642, 7
      %v644 = vsub.s32 %v641, %v643
      %v645 = vrot.slane %v637, %v644
      %v647 = vunpack.c.l.s4 1983009808
      %v648 = vunpack.c.0.s8 %v647
      %v649 = vlaneseq
      %v650 = vshrl.u32 %v649, 7
      %v651 = vsub.s32 %v648, %v650
      %v652 = vrot.slane %v638, %v651
      %v653 = vcombine.low %v629, %v645
      %v654 = vcombine.high %v629, %v645
      %v656 = vunpack.c.l.s4 1934713408
      %v657 = vunpack.c.0.s8 %v656
      %v658 = vlaneseq
      %v659 = vshrl.u32 %v658, 7
      %v660 = vsub.s32 %v657, %v659
      %v661 = vrot.slane %v653, %v660
      %v663 = vunpack.c.l.s4 1934713408
      %v664 = vunpack.c.0.s8 %v663
      %v665 = vlaneseq
      %v666 = vshrl.u32 %v665, 7
      %v667 = vsub.s32 %v664, %v666
      %v668 = vrot.slane %v654, %v667
      %v669 = vcombine.low %v636, %v652
      %v670 = vcombine.high %v636, %v652
      %v672 = vunpack.c.l.s4 1934713408
      %v673 = vunpack.c.0.s8 %v672
      %v674 = vlaneseq
      %v675 = vshrl.u32 %v674, 7
      %v676 = vsub.s32 %v673, %v675
      %v677 = vrot.slane %v669, %v676
      %v679 = vunpack.c.l.s4 1934713408
      %v680 = vunpack.c.0.s8 %v679
      %v681 = vlaneseq
      %v682 = vshrl.u32 %v681, 7
      %v683 = vsub.s32 %v680, %v682
      %v684 = vrot.slane %v670, %v683
      %v685 = vcombine.high %v661, 0.0
      %v686 = vcombine.high %v668, 0.0
      %v687 = vcombine.high %v677, 0.0
      %v688 = vcombine.high %v684, 0.0
      %v689 = vcombine.low %v661, %v668
      %v691 = vunpack.c.l.s4 1983009808
      %v692 = vunpack.c.0.s8 %v691
      %v693 = vlaneseq
      %v694 = vshrl.u32 %v693, 7
      %v695 = vsub.s32 %v692, %v694
      %v696 = vrot.slane %v689, %v695
      %v697 = vcombine.low %v685, %v686
      %v699 = vunpack.c.l.s4 1983009808
      %v700 = vunpack.c.0.s8 %v699
      %v701 = vlaneseq
      %v702 = vshrl.u32 %v701, 7
      %v703 = vsub.s32 %v700, %v702
      %v704 = vrot.slane %v697, %v703
      %v705 = vcombine.low %v677, %v684
      %v707 = vunpack.c.l.s4 1983009808
      %v708 = vunpack.c.0.s8 %v707
      %v709 = vlaneseq
      %v710 = vshrl.u32 %v709, 7
      %v711 = vsub.s32 %v708, %v710
      %v712 = vrot.slane %v705, %v711
      %v713 = vcombine.low %v687, %v688
      %v715 = vunpack.c.l.s4 1983009808
      %v716 = vunpack.c.0.s8 %v715
      %v717 = vlaneseq
      %v718 = vshrl.u32 %v717, 7
      %v719 = vsub.s32 %v716, %v718
      %v720 = vrot.slane %v713, %v719
      %v721 = vcombine.low %v696, %v704
      %v722 = vcombine.high %v696, %v704
      %v724 = vunpack.c.l.s4 1934713408
      %v725 = vunpack.c.0.s8 %v724
      %v726 = vlaneseq
      %v727 = vshrl.u32 %v726, 7
      %v728 = vsub.s32 %v725, %v727
      %v729 = vrot.slane %v721, %v728
      %v731 = vunpack.c.l.s4 1934713408
      %v732 = vunpack.c.0.s8 %v731
      %v733 = vlaneseq
      %v734 = vshrl.u32 %v733, 7
      %v735 = vsub.s32 %v732, %v734
      %v736 = vrot.slane %v722, %v735
      %v737 = vcombine.low %v712, %v720
      %v738 = vcombine.high %v712, %v720
      %v740 = vunpack.c.l.s4 1934713408
      %v741 = vunpack.c.0.s8 %v740
      %v742 = vlaneseq
      %v743 = vshrl.u32 %v742, 7
      %v744 = vsub.s32 %v741, %v743
      %v745 = vrot.slane %v737, %v744
      %v747 = vunpack.c.l.s4 1934713408
      %v748 = vunpack.c.0.s8 %v747
      %v749 = vlaneseq
      %v750 = vshrl.u32 %v749, 7
      %v751 = vsub.s32 %v748, %v750
      %v752 = vrot.slane %v738, %v751
      %v753 = vcombine.low %v729, %v745
      %v754 = vcombine.high %v729, %v745
      %v755 = vcombine.low %v736, %v752
      %v756 = vcombine.high %v736, %v752
      %v757 = vpack.c.bf16 %v753, %v753
      %v758 = vpack.c.bf16 %v754, %v754
      %v759 = vpack.c.bf16 %v755, %v755
      %v760 = vpack.c.bf16 %v756, %v756
      %761 = vrot.lane.b32.xlu0 %v456, 96
      %v762 = vpop.permute.xlu0 %761
      %763 = vrot.lane.b32.xlu0 %v613, 96
      %v764 = vpop.permute.xlu0 %763
      %765 = vrot.lane.b32.xlu0 %v616, 96
      %v766 = vpop.permute.xlu0 %765
      %767 = vrot.lane.b32.xlu0 %v619, 96
      %v768 = vpop.permute.xlu0 %767
      %v773 = vcombine.low %v762, %v766
      %v774 = vcombine.high %v762, %v766
      %v776 = vunpack.c.l.s4 1983009808
      %v777 = vunpack.c.0.s8 %v776
      %v778 = vlaneseq
      %v779 = vshrl.u32 %v778, 7
      %v780 = vsub.s32 %v777, %v779
      %v781 = vrot.slane %v773, %v780
      %v783 = vunpack.c.l.s4 1983009808
      %v784 = vunpack.c.0.s8 %v783
      %v785 = vlaneseq
      %v786 = vshrl.u32 %v785, 7
      %v787 = vsub.s32 %v784, %v786
      %v788 = vrot.slane %v774, %v787
      %v789 = vcombine.low %v764, %v768
      %v790 = vcombine.high %v764, %v768
      %v792 = vunpack.c.l.s4 1983009808
      %v793 = vunpack.c.0.s8 %v792
      %v794 = vlaneseq
      %v795 = vshrl.u32 %v794, 7
      %v796 = vsub.s32 %v793, %v795
      %v797 = vrot.slane %v789, %v796
      %v799 = vunpack.c.l.s4 1983009808
      %v800 = vunpack.c.0.s8 %v799
      %v801 = vlaneseq
      %v802 = vshrl.u32 %v801, 7
      %v803 = vsub.s32 %v800, %v802
      %v804 = vrot.slane %v790, %v803
      %v805 = vcombine.low %v781, %v797
      %v806 = vcombine.high %v781, %v797
      %v808 = vunpack.c.l.s4 1934713408
      %v809 = vunpack.c.0.s8 %v808
      %v810 = vlaneseq
      %v811 = vshrl.u32 %v810, 7
      %v812 = vsub.s32 %v809, %v811
      %v813 = vrot.slane %v805, %v812
      %v815 = vunpack.c.l.s4 1934713408
      %v816 = vunpack.c.0.s8 %v815
      %v817 = vlaneseq
      %v818 = vshrl.u32 %v817, 7
      %v819 = vsub.s32 %v816, %v818
      %v820 = vrot.slane %v806, %v819
      %v821 = vcombine.low %v788, %v804
      %v822 = vcombine.high %v788, %v804
      %v824 = vunpack.c.l.s4 1934713408
      %v825 = vunpack.c.0.s8 %v824
      %v826 = vlaneseq
      %v827 = vshrl.u32 %v826, 7
      %v828 = vsub.s32 %v825, %v827
      %v829 = vrot.slane %v821, %v828
      %v831 = vunpack.c.l.s4 1934713408
      %v832 = vunpack.c.0.s8 %v831
      %v833 = vlaneseq
      %v834 = vshrl.u32 %v833, 7
      %v835 = vsub.s32 %v832, %v834
      %v836 = vrot.slane %v822, %v835
      %v837 = vcombine.high %v813, 0.0
      %v838 = vcombine.high %v820, 0.0
      %v839 = vcombine.high %v829, 0.0
      %v840 = vcombine.high %v836, 0.0
      %v841 = vcombine.low %v813, %v820
      %v843 = vunpack.c.l.s4 1983009808
      %v844 = vunpack.c.0.s8 %v843
      %v845 = vlaneseq
      %v846 = vshrl.u32 %v845, 7
      %v847 = vsub.s32 %v844, %v846
      %v848 = vrot.slane %v841, %v847
      %v849 = vcombine.low %v837, %v838
      %v851 = vunpack.c.l.s4 1983009808
      %v852 = vunpack.c.0.s8 %v851
      %v853 = vlaneseq
      %v854 = vshrl.u32 %v853, 7
      %v855 = vsub.s32 %v852, %v854
      %v856 = vrot.slane %v849, %v855
      %v857 = vcombine.low %v829, %v836
      %v859 = vunpack.c.l.s4 1983009808
      %v860 = vunpack.c.0.s8 %v859
      %v861 = vlaneseq
      %v862 = vshrl.u32 %v861, 7
      %v863 = vsub.s32 %v860, %v862
      %v864 = vrot.slane %v857, %v863
      %v865 = vcombine.low %v839, %v840
      %v867 = vunpack.c.l.s4 1983009808
      %v868 = vunpack.c.0.s8 %v867
      %v869 = vlaneseq
      %v870 = vshrl.u32 %v869, 7
      %v871 = vsub.s32 %v868, %v870
      %v872 = vrot.slane %v865, %v871
      %v873 = vcombine.low %v848, %v856
      %v874 = vcombine.high %v848, %v856
      %v876 = vunpack.c.l.s4 1934713408
      %v877 = vunpack.c.0.s8 %v876
      %v878 = vlaneseq
      %v879 = vshrl.u32 %v878, 7
      %v880 = vsub.s32 %v877, %v879
      %v881 = vrot.slane %v873, %v880
      %v883 = vunpack.c.l.s4 1934713408
      %v884 = vunpack.c.0.s8 %v883
      %v885 = vlaneseq
      %v886 = vshrl.u32 %v885, 7
      %v887 = vsub.s32 %v884, %v886
      %v888 = vrot.slane %v874, %v887
      %v889 = vcombine.low %v864, %v872
      %v890 = vcombine.high %v864, %v872
      %v892 = vunpack.c.l.s4 1934713408
      %v893 = vunpack.c.0.s8 %v892
      %v894 = vlaneseq
      %v895 = vshrl.u32 %v894, 7
      %v896 = vsub.s32 %v893, %v895
      %v897 = vrot.slane %v889, %v896
      %v899 = vunpack.c.l.s4 1934713408
      %v900 = vunpack.c.0.s8 %v899
      %v901 = vlaneseq
      %v902 = vshrl.u32 %v901, 7
      %v903 = vsub.s32 %v900, %v902
      %v904 = vrot.slane %v890, %v903
      %v905 = vcombine.low %v881, %v897
      %v906 = vcombine.high %v881, %v897
      %v907 = vcombine.low %v888, %v904
      %v908 = vcombine.high %v888, %v904
      %v909 = vpack.c.bf16 %v905, %v905
      %v910 = vpack.c.bf16 %v906, %v906
      %v911 = vpack.c.bf16 %v907, %v907
      %v912 = vpack.c.bf16 %v908, %v908
      %vm913 = vcmask 64512
      %v915 = vsel %vm913, %v607, 0
      %v918 = vsel %vm913, %v757, 0
      %920 = vmatprep.subr.bf16.mxu0 0
      %921 = vmatpush1.bf16.xpose.msra.mxu0 %v918
      %922 = vmatprep.subr.bf16.mxu0 0
      %923 = vmatpush1.bf16.xpose.msra.mxu0 0
      %924 = vmatprep.subr.bf16.mxu0 0
      %925 = vmatpush1.bf16.xpose.msra.mxu0 0
      %926 = vmatprep.subr.bf16.mxu0 0
      %927 = vmatpush1.bf16.xpose.msra.mxu0 0
      %928 = vmatprep.subr.bf16.mxu0 0
      %929 = vmatpush1.bf16.xpose.msra.mxu0 0
      %930 = vmatprep.subr.bf16.mxu0 0
      %931 = vmatpush1.bf16.xpose.msra.mxu0 0
      %932 = vmatprep.subr.bf16.mxu0 0
      %933 = vmatpush1.bf16.xpose.msra.mxu0 0
      %934 = vmatprep.subr.bf16.mxu0 0
      %935 = vmatpush1.bf16.xpose.msra.mxu0 0
      %936 = vmatprep.subr.bf16.mxu0 0
      %937 = vmatpush1.bf16.xpose.msra.mxu0 0
      %938 = vmatprep.subr.bf16.mxu0 0
      %939 = vmatpush1.bf16.xpose.msra.mxu0 0
      %940 = vmatprep.subr.bf16.mxu0 0
      %941 = vmatpush1.bf16.xpose.msra.mxu0 0
      %942 = vmatprep.subr.bf16.mxu0 0
      %943 = vmatpush1.bf16.xpose.msra.mxu0 0
      %944 = vmatprep.subr.bf16.mxu0 0
      %945 = vmatpush1.bf16.xpose.msra.mxu0 0
      %946 = vmatprep.subr.bf16.mxu0 0
      %947 = vmatpush1.bf16.xpose.msra.mxu0 0
      %948 = vmatprep.subr.bf16.mxu0 0
      %949 = vmatpush1.bf16.xpose.msra.mxu0 0
      %950 = vmatprep.subr.bf16.mxu0 0
      %951 = vmatpush1.bf16.xpose.msra.mxu0 0
      %952 = vmatprep.mubr.bf16.mxu0 0
      %953 = vmatmul.mubr.bf16.gmra.mrb[0].mxu0 %v915
      %v954 = vpop.f32.mrb[0].mxu0
      %v955 = vadd.f32 0.0, %v954
      %v956 = vpop.f32.mrb[0].mxu0
      %v957 = vpop.f32.mrb[0].mxu0
      %v958 = vpop.f32.mrb[0].mxu0
      %959 = vdwg.mxu0
      %v961 = vsel %vm913, %v608, 0
      %v964 = vsel %vm913, %v758, 0
      %966 = vmatprep.subr.bf16.mxu0 0
      %967 = vmatpush1.bf16.xpose.msra.mxu0 %v964
      %968 = vmatprep.subr.bf16.mxu0 0
      %969 = vmatpush1.bf16.xpose.msra.mxu0 0
      %970 = vmatprep.subr.bf16.mxu0 0
      %971 = vmatpush1.bf16.xpose.msra.mxu0 0
      %972 = vmatprep.subr.bf16.mxu0 0
      %973 = vmatpush1.bf16.xpose.msra.mxu0 0
      %974 = vmatprep.subr.bf16.mxu0 0
      %975 = vmatpush1.bf16.xpose.msra.mxu0 0
      %976 = vmatprep.subr.bf16.mxu0 0
      %977 = vmatpush1.bf16.xpose.msra.mxu0 0
      %978 = vmatprep.subr.bf16.mxu0 0
      %979 = vmatpush1.bf16.xpose.msra.mxu0 0
      %980 = vmatprep.subr.bf16.mxu0 0
      %981 = vmatpush1.bf16.xpose.msra.mxu0 0
      %982 = vmatprep.subr.bf16.mxu0 0
      %983 = vmatpush1.bf16.xpose.msra.mxu0 0
      %984 = vmatprep.subr.bf16.mxu0 0
      %985 = vmatpush1.bf16.xpose.msra.mxu0 0
      %986 = vmatprep.subr.bf16.mxu0 0
      %987 = vmatpush1.bf16.xpose.msra.mxu0 0
      %988 = vmatprep.subr.bf16.mxu0 0
      %989 = vmatpush1.bf16.xpose.msra.mxu0 0
      %990 = vmatprep.subr.bf16.mxu0 0
      %991 = vmatpush1.bf16.xpose.msra.mxu0 0
      %992 = vmatprep.subr.bf16.mxu0 0
      %993 = vmatpush1.bf16.xpose.msra.mxu0 0
      %994 = vmatprep.subr.bf16.mxu0 0
      %995 = vmatpush1.bf16.xpose.msra.mxu0 0
      %996 = vmatprep.subr.bf16.mxu0 0
      %997 = vmatpush1.bf16.xpose.msra.mxu0 0
      %998 = vmatprep.mubr.bf16.mxu0 0
      %999 = vmatmul.mubr.bf16.gmra.mrb[0].mxu0 %v961
      %v1000 = vpop.f32.mrb[0].mxu0
      %v1001 = vadd.f32 0.0, %v1000
      %v1002 = vpop.f32.mrb[0].mxu0
      %v1003 = vpop.f32.mrb[0].mxu0
      %v1004 = vpop.f32.mrb[0].mxu0
      %1005 = vdwg.mxu0
      %v1007 = vsel %vm913, %v609, 0
      %v1010 = vsel %vm913, %v759, 0
      %1012 = vmatprep.subr.bf16.mxu0 0
      %1013 = vmatpush1.bf16.xpose.msra.mxu0 %v1010
      %1014 = vmatprep.subr.bf16.mxu0 0
      %1015 = vmatpush1.bf16.xpose.msra.mxu0 0
      %1016 = vmatprep.subr.bf16.mxu0 0
      %1017 = vmatpush1.bf16.xpose.msra.mxu0 0
      %1018 = vmatprep.subr.bf16.mxu0 0
      %1019 = vmatpush1.bf16.xpose.msra.mxu0 0
      %1020 = vmatprep.subr.bf16.mxu0 0
      %1021 = vmatpush1.bf16.xpose.msra.mxu0 0
      %1022 = vmatprep.subr.bf16.mxu0 0
      %1023 = vmatpush1.bf16.xpose.msra.mxu0 0
      %1024 = vmatprep.subr.bf16.mxu0 0
      %1025 = vmatpush1.bf16.xpose.msra.mxu0 0
      %1026 = vmatprep.subr.bf16.mxu0 0
      %1027 = vmatpush1.bf16.xpose.msra.mxu0 0
      %1028 = vmatprep.subr.bf16.mxu0 0
      %1029 = vmatpush1.bf16.xpose.msra.mxu0 0
      %1030 = vmatprep.subr.bf16.mxu0 0
      %1031 = vmatpush1.bf16.xpose.msra.mxu0 0
      %1032 = vmatprep.subr.bf16.mxu0 0
      %1033 = vmatpush1.bf16.xpose.msra.mxu0 0
      %1034 = vmatprep.subr.bf16.mxu0 0
      %1035 = vmatpush1.bf16.xpose.msra.mxu0 0
      %1036 = vmatprep.subr.bf16.mxu0 0
      %1037 = vmatpush1.bf16.xpose.msra.mxu0 0
      %1038 = vmatprep.subr.bf16.mxu0 0
      %1039 = vmatpush1.bf16.xpose.msra.mxu0 0
      %1040 = vmatprep.subr.bf16.mxu0 0
      %1041 = vmatpush1.bf16.xpose.msra.mxu0 0
      %1042 = vmatprep.subr.bf16.mxu0 0
      %1043 = vmatpush1.bf16.xpose.msra.mxu0 0
      %1044 = vmatprep.mubr.bf16.mxu0 0
      %1045 = vmatmul.mubr.bf16.gmra.mrb[0].mxu0 %v1007
      %v1046 = vpop.f32.mrb[0].mxu0
      %v1047 = vadd.f32 0.0, %v1046
      %v1048 = vpop.f32.mrb[0].mxu0
      %v1049 = vpop.f32.mrb[0].mxu0
      %v1050 = vpop.f32.mrb[0].mxu0
      %1051 = vdwg.mxu0
      %v1053 = vsel %vm913, %v610, 0
      %v1056 = vsel %vm913, %v760, 0
      %1058 = vmatprep.subr.bf16.mxu0 0
      %1059 = vmatpush1.bf16.xpose.msra.mxu0 %v1056
      %1060 = vmatprep.subr.bf16.mxu0 0
      %1061 = vmatpush1.bf16.xpose.msra.mxu0 0
      %1062 = vmatprep.subr.bf16.mxu0 0
      %1063 = vmatpush1.bf16.xpose.msra.mxu0 0
      %1064 = vmatprep.subr.bf16.mxu0 0
      %1065 = vmatpush1.bf16.xpose.msra.mxu0 0
      %1066 = vmatprep.subr.bf16.mxu0 0
      %1067 = vmatpush1.bf16.xpose.msra.mxu0 0
      %1068 = vmatprep.subr.bf16.mxu0 0
      %1069 = vmatpush1.bf16.xpose.msra.mxu0 0
      %1070 = vmatprep.subr.bf16.mxu0 0
      %1071 = vmatpush1.bf16.xpose.msra.mxu0 0
      %1072 = vmatprep.subr.bf16.mxu0 0
      %1073 = vmatpush1.bf16.xpose.msra.mxu0 0
      %1074 = vmatprep.subr.bf16.mxu0 0
      %1075 = vmatpush1.bf16.xpose.msra.mxu0 0
      %1076 = vmatprep.subr.bf16.mxu0 0
      %1077 = vmatpush1.bf16.xpose.msra.mxu0 0
      %1078 = vmatprep.subr.bf16.mxu0 0
      %1079 = vmatpush1.bf16.xpose.msra.mxu0 0
      %1080 = vmatprep.subr.bf16.mxu0 0
      %1081 = vmatpush1.bf16.xpose.msra.mxu0 0
      %1082 = vmatprep.subr.bf16.mxu0 0
      %1083 = vmatpush1.bf16.xpose.msra.mxu0 0
      %1084 = vmatprep.subr.bf16.mxu0 0
      %1085 = vmatpush1.bf16.xpose.msra.mxu0 0
      %1086 = vmatprep.subr.bf16.mxu0 0
      %1087 = vmatpush1.bf16.xpose.msra.mxu0 0
      %1088 = vmatprep.subr.bf16.mxu0 0
      %1089 = vmatpush1.bf16.xpose.msra.mxu0 0
      %1090 = vmatprep.mubr.bf16.mxu0 0
      %1091 = vmatmul.mubr.bf16.gmra.mrb[0].mxu0 %v1053
      %v1092 = vpop.f32.mrb[0].mxu0
      %v1093 = vadd.f32 0.0, %v1092
      %v1094 = vpop.f32.mrb[0].mxu0
      %v1095 = vpop.f32.mrb[0].mxu0
      %v1096 = vpop.f32.mrb[0].mxu0
      %1097 = vdwg.mxu0
      %v1098 = vmul.f32 %v955, 0.35355338
      %v1099 = vmul.f32 %v1001, 0.35355338
      %v1100 = vmul.f32 %v1047, 0.35355338
      %v1101 = vmul.f32 %v1093, 0.35355338
      %v1102 = vsel %vm913, %v1098, -inf
      %1103 = vmax.xlane.f32.xlu0 %v1102
      %v1104 = vpop.xlane.xlu0 %1103
      %v1105 = vsel %vm913, %v1099, -inf
      %1106 = vmax.xlane.f32.xlu0 %v1105
      %v1107 = vpop.xlane.xlu0 %1106
      %v1108 = vsel %vm913, %v1100, -inf
      %1109 = vmax.xlane.f32.xlu0 %v1108
      %v1110 = vpop.xlane.xlu0 %1109
      %v1111 = vsel %vm913, %v1101, -inf
      %1112 = vmax.xlane.f32.xlu0 %v1111
      %v1113 = vpop.xlane.xlu0 %1112
      %v1114 = vsub.f32 %v1098, %v1104
      %v1115 = vsub.f32 %v1099, %v1107
      %v1116 = vsub.f32 %v1100, %v1110
      %v1117 = vsub.f32 %v1101, %v1113
      %v1118 = vmul.f32 %v1114, 1.442695
      %v1119 = vpow.pop %v1118
      %v1120 = vmul.f32 %v1115, 1.442695
      %v1121 = vpow.pop %v1120
      %v1122 = vmul.f32 %v1116, 1.442695
      %v1123 = vpow.pop %v1122
      %v1124 = vmul.f32 %v1117, 1.442695
      %v1125 = vpow.pop %v1124
      %v1126 = vsel %vm913, %v1119, 0.0
      %1127 = vadd.xlane.f32.xlu0 %v1126
      %v1128 = vpop.xlane.xlu0 %1127
      %v1129 = vsel %vm913, %v1121, 0.0
      %1130 = vadd.xlane.f32.xlu0 %v1129
      %v1131 = vpop.xlane.xlu0 %1130
      %v1132 = vsel %vm913, %v1123, 0.0
      %1133 = vadd.xlane.f32.xlu0 %v1132
      %v1134 = vpop.xlane.xlu0 %1133
      %v1135 = vsel %vm913, %v1125, 0.0
      %1136 = vadd.xlane.f32.xlu0 %v1135
      %v1137 = vpop.xlane.xlu0 %1136
      %v1138 = vrcp.pop %v1128
      %v1139 = vmul.f32 %v1119, %v1138
      %v1140 = vrcp.pop %v1131
      %v1141 = vmul.f32 %v1121, %v1140
      %v1142 = vrcp.pop %v1134
      %v1143 = vmul.f32 %v1123, %v1142
      %v1144 = vrcp.pop %v1137
      %v1145 = vmul.f32 %v1125, %v1144
      %v1146 = vpack.c.bf16 %v1139, %v1139
      %v1147 = vpack.c.bf16 %v1141, %v1141
      %v1148 = vpack.c.bf16 %v1143, %v1143
      %v1149 = vpack.c.bf16 %v1145, %v1145
      %v1151 = vsel %vm913, %v1146, 0
      %vm1153 = vcmask 1043456
      %v1155 = vsel %vm1153, %v909, 0
      %1157 = vmatprep.subr.bf16.mxu0 0
      %1158 = vmatpush1.bf16.msra.mxu0 %v1155
      %1159 = vmatprep.subr.bf16.mxu0 0
      %1160 = vmatpush1.bf16.msra.mxu0 0
      %1161 = vmatprep.subr.bf16.mxu0 0
      %1162 = vmatpush1.bf16.msra.mxu0 0
      %1163 = vmatprep.subr.bf16.mxu0 0
      %1164 = vmatpush1.bf16.msra.mxu0 0
      %1165 = vmatprep.subr.bf16.mxu0 0
      %1166 = vmatpush1.bf16.msra.mxu0 0
      %1167 = vmatprep.subr.bf16.mxu0 0
      %1168 = vmatpush1.bf16.msra.mxu0 0
      %1169 = vmatprep.subr.bf16.mxu0 0
      %1170 = vmatpush1.bf16.msra.mxu0 0
      %1171 = vmatprep.subr.bf16.mxu0 0
      %1172 = vmatpush1.bf16.msra.mxu0 0
      %1173 = vmatprep.subr.bf16.mxu0 0
      %1174 = vmatpush1.bf16.msra.mxu0 0
      %1175 = vmatprep.subr.bf16.mxu0 0
      %1176 = vmatpush1.bf16.msra.mxu0 0
      %1177 = vmatprep.subr.bf16.mxu0 0
      %1178 = vmatpush1.bf16.msra.mxu0 0
      %1179 = vmatprep.subr.bf16.mxu0 0
      %1180 = vmatpush1.bf16.msra.mxu0 0
      %1181 = vmatprep.subr.bf16.mxu0 0
      %1182 = vmatpush1.bf16.msra.mxu0 0
      %1183 = vmatprep.subr.bf16.mxu0 0
      %1184 = vmatpush1.bf16.msra.mxu0 0
      %1185 = vmatprep.subr.bf16.mxu0 0
      %1186 = vmatpush1.bf16.msra.mxu0 0
      %1187 = vmatprep.subr.bf16.mxu0 0
      %1188 = vmatpush1.bf16.msra.mxu0 0
      %1189 = vmatprep.mubr.bf16.mxu0 0
      %1190 = vmatmul.mubr.bf16.gmra.mrb[0].mxu0 %v1151
      %v1191 = vpop.f32.mrb[0].mxu0
      %v1192 = vadd.f32 0.0, %v1191
      %v1193 = vpop.f32.mrb[0].mxu0
      %v1194 = vpop.f32.mrb[0].mxu0
      %v1195 = vpop.f32.mrb[0].mxu0
      %1196 = vdwg.mxu0
      %v1198 = vsel %vm913, %v1147, 0
      %v1201 = vsel %vm1153, %v910, 0
      %1203 = vmatprep.subr.bf16.mxu0 0
      %1204 = vmatpush1.bf16.msra.mxu0 %v1201
      %1205 = vmatprep.subr.bf16.mxu0 0
      %1206 = vmatpush1.bf16.msra.mxu0 0
      %1207 = vmatprep.subr.bf16.mxu0 0
      %1208 = vmatpush1.bf16.msra.mxu0 0
      %1209 = vmatprep.subr.bf16.mxu0 0
      %1210 = vmatpush1.bf16.msra.mxu0 0
      %1211 = vmatprep.subr.bf16.mxu0 0
      %1212 = vmatpush1.bf16.msra.mxu0 0
      %1213 = vmatprep.subr.bf16.mxu0 0
      %1214 = vmatpush1.bf16.msra.mxu0 0
      %1215 = vmatprep.subr.bf16.mxu0 0
      %1216 = vmatpush1.bf16.msra.mxu0 0
      %1217 = vmatprep.subr.bf16.mxu0 0
      %1218 = vmatpush1.bf16.msra.mxu0 0
      %1219 = vmatprep.subr.bf16.mxu0 0
      %1220 = vmatpush1.bf16.msra.mxu0 0
      %1221 = vmatprep.subr.bf16.mxu0 0
      %1222 = vmatpush1.bf16.msra.mxu0 0
      %1223 = vmatprep.subr.bf16.mxu0 0
      %1224 = vmatpush1.bf16.msra.mxu0 0
      %1225 = vmatprep.subr.bf16.mxu0 0
      %1226 = vmatpush1.bf16.msra.mxu0 0
      %1227 = vmatprep.subr.bf16.mxu0 0
      %1228 = vmatpush1.bf16.msra.mxu0 0
      %1229 = vmatprep.subr.bf16.mxu0 0
      %1230 = vmatpush1.bf16.msra.mxu0 0
      %1231 = vmatprep.subr.bf16.mxu0 0
      %1232 = vmatpush1.bf16.msra.mxu0 0
      %1233 = vmatprep.subr.bf16.mxu0 0
      %1234 = vmatpush1.bf16.msra.mxu0 0
      %1235 = vmatprep.mubr.bf16.mxu0 0
      %1236 = vmatmul.mubr.bf16.gmra.mrb[0].mxu0 %v1198
      %v1237 = vpop.f32.mrb[0].mxu0
      %v1238 = vadd.f32 0.0, %v1237
      %v1239 = vpop.f32.mrb[0].mxu0
      %v1240 = vpop.f32.mrb[0].mxu0
      %v1241 = vpop.f32.mrb[0].mxu0
      %1242 = vdwg.mxu0
      %v1244 = vsel %vm913, %v1148, 0
      %v1247 = vsel %vm1153, %v911, 0
      %1249 = vmatprep.subr.bf16.mxu0 0
      %1250 = vmatpush1.bf16.msra.mxu0 %v1247
      %1251 = vmatprep.subr.bf16.mxu0 0
      %1252 = vmatpush1.bf16.msra.mxu0 0
      %1253 = vmatprep.subr.bf16.mxu0 0
      %1254 = vmatpush1.bf16.msra.mxu0 0
      %1255 = vmatprep.subr.bf16.mxu0 0
      %1256 = vmatpush1.bf16.msra.mxu0 0
      %1257 = vmatprep.subr.bf16.mxu0 0
      %1258 = vmatpush1.bf16.msra.mxu0 0
      %1259 = vmatprep.subr.bf16.mxu0 0
      %1260 = vmatpush1.bf16.msra.mxu0 0
      %1261 = vmatprep.subr.bf16.mxu0 0
      %1262 = vmatpush1.bf16.msra.mxu0 0
      %1263 = vmatprep.subr.bf16.mxu0 0
      %1264 = vmatpush1.bf16.msra.mxu0 0
      %1265 = vmatprep.subr.bf16.mxu0 0
      %1266 = vmatpush1.bf16.msra.mxu0 0
      %1267 = vmatprep.subr.bf16.mxu0 0
      %1268 = vmatpush1.bf16.msra.mxu0 0
      %1269 = vmatprep.subr.bf16.mxu0 0
      %1270 = vmatpush1.bf16.msra.mxu0 0
      %1271 = vmatprep.subr.bf16.mxu0 0
      %1272 = vmatpush1.bf16.msra.mxu0 0
      %1273 = vmatprep.subr.bf16.mxu0 0
      %1274 = vmatpush1.bf16.msra.mxu0 0
      %1275 = vmatprep.subr.bf16.mxu0 0
      %1276 = vmatpush1.bf16.msra.mxu0 0
      %1277 = vmatprep.subr.bf16.mxu0 0
      %1278 = vmatpush1.bf16.msra.mxu0 0
      %1279 = vmatprep.subr.bf16.mxu0 0
      %1280 = vmatpush1.bf16.msra.mxu0 0
      %1281 = vmatprep.mubr.bf16.mxu0 0
      %1282 = vmatmul.mubr.bf16.gmra.mrb[0].mxu0 %v1244
      %v1283 = vpop.f32.mrb[0].mxu0
      %v1284 = vadd.f32 0.0, %v1283
      %v1285 = vpop.f32.mrb[0].mxu0
      %v1286 = vpop.f32.mrb[0].mxu0
      %v1287 = vpop.f32.mrb[0].mxu0
      %1288 = vdwg.mxu0
      %v1290 = vsel %vm913, %v1149, 0
      %v1293 = vsel %vm1153, %v912, 0
      %1295 = vmatprep.subr.bf16.mxu0 0
      %1296 = vmatpush1.bf16.msra.mxu0 %v1293
      %1297 = vmatprep.subr.bf16.mxu0 0
      %1298 = vmatpush1.bf16.msra.mxu0 0
      %1299 = vmatprep.subr.bf16.mxu0 0
      %1300 = vmatpush1.bf16.msra.mxu0 0
      %1301 = vmatprep.subr.bf16.mxu0 0
      %1302 = vmatpush1.bf16.msra.mxu0 0
      %1303 = vmatprep.subr.bf16.mxu0 0
      %1304 = vmatpush1.bf16.msra.mxu0 0
      %1305 = vmatprep.subr.bf16.mxu0 0
      %1306 = vmatpush1.bf16.msra.mxu0 0
      %1307 = vmatprep.subr.bf16.mxu0 0
      %1308 = vmatpush1.bf16.msra.mxu0 0
      %1309 = vmatprep.subr.bf16.mxu0 0
      %1310 = vmatpush1.bf16.msra.mxu0 0
      %1311 = vmatprep.subr.bf16.mxu0 0
      %1312 = vmatpush1.bf16.msra.mxu0 0
      %1313 = vmatprep.subr.bf16.mxu0 0
      %1314 = vmatpush1.bf16.msra.mxu0 0
      %1315 = vmatprep.subr.bf16.mxu0 0
      %1316 = vmatpush1.bf16.msra.mxu0 0
      %1317 = vmatprep.subr.bf16.mxu0 0
      %1318 = vmatpush1.bf16.msra.mxu0 0
      %1319 = vmatprep.subr.bf16.mxu0 0
      %1320 = vmatpush1.bf16.msra.mxu0 0
      %1321 = vmatprep.subr.bf16.mxu0 0
      %1322 = vmatpush1.bf16.msra.mxu0 0
      %1323 = vmatprep.subr.bf16.mxu0 0
      %1324 = vmatpush1.bf16.msra.mxu0 0
      %1325 = vmatprep.subr.bf16.mxu0 0
      %1326 = vmatpush1.bf16.msra.mxu0 0
      %1327 = vmatprep.mubr.bf16.mxu0 0
      %1328 = vmatmul.mubr.bf16.gmra.mrb[0].mxu0 %v1290
      %v1329 = vpop.f32.mrb[0].mxu0
      %v1330 = vadd.f32 0.0, %v1329
      %v1331 = vpop.f32.mrb[0].mxu0
      %v1332 = vpop.f32.mrb[0].mxu0
      %v1333 = vpop.f32.mrb[0].mxu0
      %1334 = vdwg.mxu0
      %v1335 = vcombine.low %v1192, %v1284
      %v1336 = vcombine.high %v1192, %v1284
      %v1338 = vunpack.c.l.s4 1983009808
      %v1339 = vunpack.c.0.s8 %v1338
      %v1340 = vlaneseq
      %v1341 = vshrl.u32 %v1340, 7
      %v1342 = vsub.s32 %v1339, %v1341
      %v1343 = vrot.slane %v1335, %v1342
      %v1345 = vunpack.c.l.s4 1983009808
      %v1346 = vunpack.c.0.s8 %v1345
      %v1347 = vlaneseq
      %v1348 = vshrl.u32 %v1347, 7
      %v1349 = vsub.s32 %v1346, %v1348
      %v1350 = vrot.slane %v1336, %v1349
      %v1351 = vcombine.low %v1238, %v1330
      %v1352 = vcombine.high %v1238, %v1330
      %v1354 = vunpack.c.l.s4 1983009808
      %v1355 = vunpack.c.0.s8 %v1354
      %v1356 = vlaneseq
      %v1357 = vshrl.u32 %v1356, 7
      %v1358 = vsub.s32 %v1355, %v1357
      %v1359 = vrot.slane %v1351, %v1358
      %v1361 = vunpack.c.l.s4 1983009808
      %v1362 = vunpack.c.0.s8 %v1361
      %v1363 = vlaneseq
      %v1364 = vshrl.u32 %v1363, 7
      %v1365 = vsub.s32 %v1362, %v1364
      %v1366 = vrot.slane %v1352, %v1365
      %v1367 = vcombine.low %v1343, %v1359
      %v1368 = vcombine.high %v1343, %v1359
      %v1370 = vunpack.c.l.s4 1934713408
      %v1371 = vunpack.c.0.s8 %v1370
      %v1372 = vlaneseq
      %v1373 = vshrl.u32 %v1372, 7
      %v1374 = vsub.s32 %v1371, %v1373
      %v1375 = vrot.slane %v1367, %v1374
      %v1377 = vunpack.c.l.s4 1934713408
      %v1378 = vunpack.c.0.s8 %v1377
      %v1379 = vlaneseq
      %v1380 = vshrl.u32 %v1379, 7
      %v1381 = vsub.s32 %v1378, %v1380
      %v1382 = vrot.slane %v1368, %v1381
      %v1383 = vcombine.low %v1350, %v1366
      %v1384 = vcombine.high %v1350, %v1366
      %v1386 = vunpack.c.l.s4 1934713408
      %v1387 = vunpack.c.0.s8 %v1386
      %v1388 = vlaneseq
      %v1389 = vshrl.u32 %v1388, 7
      %v1390 = vsub.s32 %v1387, %v1389
      %v1391 = vrot.slane %v1383, %v1390
      %v1393 = vunpack.c.l.s4 1934713408
      %v1394 = vunpack.c.0.s8 %v1393
      %v1395 = vlaneseq
      %v1396 = vshrl.u32 %v1395, 7
      %v1397 = vsub.s32 %v1394, %v1396
      %v1398 = vrot.slane %v1384, %v1397
      %v1399 = vcombine.high %v1375, 0.0
      %v1400 = vcombine.high %v1382, 0.0
      %v1401 = vcombine.high %v1391, 0.0
      %v1402 = vcombine.high %v1398, 0.0
      %v1403 = vcombine.low %v1375, %v1382
      %v1405 = vunpack.c.l.s4 1983009808
      %v1406 = vunpack.c.0.s8 %v1405
      %v1407 = vlaneseq
      %v1408 = vshrl.u32 %v1407, 7
      %v1409 = vsub.s32 %v1406, %v1408
      %v1410 = vrot.slane %v1403, %v1409
      %v1411 = vcombine.low %v1399, %v1400
      %v1413 = vunpack.c.l.s4 1983009808
      %v1414 = vunpack.c.0.s8 %v1413
      %v1415 = vlaneseq
      %v1416 = vshrl.u32 %v1415, 7
      %v1417 = vsub.s32 %v1414, %v1416
      %v1418 = vrot.slane %v1411, %v1417
      %v1419 = vcombine.low %v1391, %v1398
      %v1421 = vunpack.c.l.s4 1983009808
      %v1422 = vunpack.c.0.s8 %v1421
      %v1423 = vlaneseq
      %v1424 = vshrl.u32 %v1423, 7
      %v1425 = vsub.s32 %v1422, %v1424
      %v1426 = vrot.slane %v1419, %v1425
      %v1427 = vcombine.low %v1401, %v1402
      %v1429 = vunpack.c.l.s4 1983009808
      %v1430 = vunpack.c.0.s8 %v1429
      %v1431 = vlaneseq
      %v1432 = vshrl.u32 %v1431, 7
      %v1433 = vsub.s32 %v1430, %v1432
      %v1434 = vrot.slane %v1427, %v1433
      %v1435 = vcombine.low %v1410, %v1418
      %v1436 = vcombine.high %v1410, %v1418
      %v1438 = vunpack.c.l.s4 1934713408
      %v1439 = vunpack.c.0.s8 %v1438
      %v1440 = vlaneseq
      %v1441 = vshrl.u32 %v1440, 7
      %v1442 = vsub.s32 %v1439, %v1441
      %v1443 = vrot.slane %v1435, %v1442
      %v1445 = vunpack.c.l.s4 1934713408
      %v1446 = vunpack.c.0.s8 %v1445
      %v1447 = vlaneseq
      %v1448 = vshrl.u32 %v1447, 7
      %v1449 = vsub.s32 %v1446, %v1448
      %v1450 = vrot.slane %v1436, %v1449
      %v1451 = vcombine.low %v1426, %v1434
      %v1452 = vcombine.high %v1426, %v1434
      %v1454 = vunpack.c.l.s4 1934713408
      %v1455 = vunpack.c.0.s8 %v1454
      %v1456 = vlaneseq
      %v1457 = vshrl.u32 %v1456, 7
      %v1458 = vsub.s32 %v1455, %v1457
      %v1459 = vrot.slane %v1451, %v1458
      %v1461 = vunpack.c.l.s4 1934713408
      %v1462 = vunpack.c.0.s8 %v1461
      %v1463 = vlaneseq
      %v1464 = vshrl.u32 %v1463, 7
      %v1465 = vsub.s32 %v1462, %v1464
      %v1466 = vrot.slane %v1452, %v1465
      %v1467 = vcombine.low %v1443, %v1459
      %v1468 = vcombine.high %v1443, %v1459
      %v1469 = vcombine.low %v1450, %v1466
      %v1470 = vcombine.high %v1450, %v1466
      %1472 = vrot.lane.b32.xlu0 %v1468, 8
      %v1473 = vpop.permute.xlu0 %1472
      %1476 = vrot.lane.b32.xlu0 %v1469, 16
      %v1477 = vpop.permute.xlu0 %1476
      %1480 = vrot.lane.b32.xlu0 %v1470, 24
      %v1481 = vpop.permute.xlu0 %1480
      %v1483 = vsel %vm913, %v1467, %v1473
      %vm1484 = vcmask 130048
      %v1485 = vsel %vm1484, %v1483, %v1477
      %vm1486 = vcmask 195584
      %v1487 = vsel %vm1486, %v1485, %v1481
      %v1488 = vld [vmem:[%s5] sm:$0xf]
      %v1489 = vld [vmem:[%s5 + $0x4] sm:$0xf]
      %v1490 = vld [vmem:[%s5 + $0x8] sm:$0xf]
      %v1491 = vld [vmem:[%s5 + $0xc] sm:$0xf]
      %v1492 = vpack.c.bf16 %v1487, %v1487
      %v1493 = vld [vmem:[%s6] sm:$0x1]
      %v1495 = vlaneseq
      %v1496 = vshrl.u32 %v1495, 7
      %v1497 = vsub.s32 0, %v1496
      %v1498 = vrot.slane %v1493, %v1497
      %v1504 = vunpack.c.l.b16 %v1488
      %v1505 = vunpack.c.l.b16 %v1489
      %v1506 = vunpack.c.l.b16 %v1490
      %v1507 = vunpack.c.l.b16 %v1491
      %v1508 = vpack.c.b16 %v1505, %v1504
      %v1509 = vpack.c.b16 %v1507, %v1506
      %v1513 = vsel %vm354, %v1492, 0
      %1515 = vmatprep.subr.bf16.mxu0 0
      %1516 = vmatpush1.bf16.msra.mxu0 %v1508
      %1517 = vmatprep.subr.bf16.mxu0 0
      %1518 = vmatpush1.bf16.msra.mxu0 %v1509
      %1519 = vmatprep.subr.bf16.mxu0 0
      %1520 = vmatpush1.bf16.msra.mxu0 0
      %1521 = vmatprep.subr.bf16.mxu0 0
      %1522 = vmatpush1.bf16.msra.mxu0 0
      %1523 = vmatprep.subr.bf16.mxu0 0
      %1524 = vmatpush1.bf16.msra.mxu0 0
      %1525 = vmatprep.subr.bf16.mxu0 0
      %1526 = vmatpush1.bf16.msra.mxu0 0
      %1527 = vmatprep.subr.bf16.mxu0 0
      %1528 = vmatpush1.bf16.msra.mxu0 0
      %1529 = vmatprep.subr.bf16.mxu0 0
      %1530 = vmatpush1.bf16.msra.mxu0 0
      %1531 = vmatprep.subr.bf16.mxu0 0
      %1532 = vmatpush1.bf16.msra.mxu0 0
      %1533 = vmatprep.subr.bf16.mxu0 0
      %1534 = vmatpush1.bf16.msra.mxu0 0
      %1535 = vmatprep.subr.bf16.mxu0 0
      %1536 = vmatpush1.bf16.msra.mxu0 0
      %1537 = vmatprep.subr.bf16.mxu0 0
      %1538 = vmatpush1.bf16.msra.mxu0 0
      %1539 = vmatprep.subr.bf16.mxu0 0
      %1540 = vmatpush1.bf16.msra.mxu0 0
      %1541 = vmatprep.subr.bf16.mxu0 0
      %1542 = vmatpush1.bf16.msra.mxu0 0
      %1543 = vmatprep.subr.bf16.mxu0 0
      %1544 = vmatpush1.bf16.msra.mxu0 0
      %1545 = vmatprep.subr.bf16.mxu0 0
      %1546 = vmatpush1.bf16.msra.mxu0 0
      %1547 = vmatprep.mubr.bf16.mxu0 0
      %1548 = vmatmul.mubr.bf16.gmra.mrb[0].mxu0 %v1513
      %v1549 = vpop.f32.mrb[0].mxu0
      %v1550 = vadd.f32 %v1498, %v1549
      %v1551 = vpop.f32.mrb[0].mxu0
      %v1552 = vpop.f32.mrb[0].mxu0
      %v1553 = vpop.f32.mrb[0].mxu0
      %1554 = vdwg.mxu0
      %v1555 = vadd.f32 %v329, %v1550
      %v1556 = vld [vmem:[%s7] sm:$0x1]
      %v1557 = vld [vmem:[%s8] sm:$0x1]
      %v1558 = vsel %vm354, %v1555, 0.0
      %1559 = vadd.xlane.f32.xlu0 %v1558
      %v1560 = vpop.xlane.xlu0 %1559
      %v1561 = vrcp.pop 32.0
      %v1562 = vmul.f32 %v1560, %v1561
      %v1563 = vsub.f32 %v1555, %v1562
      %v1564 = vmul.f32 %v1563, %v1563
      %v1565 = vsel %vm354, %v1564, 0.0
      %1566 = vadd.xlane.f32.xlu0 %v1565
      %v1567 = vpop.xlane.xlu0 %1566
      %v1568 = vmul.f32 %v1567, %v1561
      %v1569 = vadd.f32 %v1568, 1e-05
      %v1570 = vrsqrt.pop %v1569
      %v1571 = vmul.f32 %v1563, %v1570
      %v1573 = vlaneseq
      %v1574 = vshrl.u32 %v1573, 7
      %v1575 = vsub.s32 0, %v1574
      %v1576 = vrot.slane %v1556, %v1575
      %v1578 = vmul.f32 %v1571, %v1576
      %v1580 = vlaneseq
      %v1581 = vshrl.u32 %v1580, 7
      %v1582 = vsub.s32 0, %v1581
      %v1583 = vrot.slane %v1557, %v1582
      %v1585 = vadd.f32 %v1578, %v1583
      %1586 = vst.msk [vmem:[%s327] sm:$0xff] %vm354, %v1585
      %p1587 = scmp.lt.s32.totalorder %s20, 1
      %s1588 = scalar_select %p1587, %s20, 1
      %s1589 = smul.addr %s1588, 8
      %s1590 = scalar_lea.vmem %s9, %s1589
      // Predicated region
      $region57: #{vanilla_transformer_forward.12} parent=55 // pred_check
        %p1591 = pneg %p232
      $region58: #{vanilla_transformer_forward.12} parent=55 // pred_check_branch
        %1593 = sbr.rel (%p1591) target = $region60
      $region59: #{vanilla_transformer_forward.12} parent=55 // pred_region
        _
      $region60: #{vanilla_transformer_forward.12} parent=55 // pred_fallthru
        _
    $region56: #{vanilla_transformer_forward.12} parent=5 // pred_fallthru
      _
    %p1594 = scmp.le.s32.totalorder 2, %s15
    // Predicated region
    $region61: #{vanilla_transformer_forward.12} parent=5 // pred_check
      %p1595 = pneg %p1594
    $region62: #{vanilla_transformer_forward.12} parent=5 // pred_check_branch
      %1597 = sbr.rel (%p1595) target = $region64
    $region63: #{vanilla_transformer_forward.12} parent=5 // pred_region
      %s1598 = ssub.s32 %s15, 2
      // Predicated region
      $region65: #{vanilla_transformer_forward.12} parent=63 // pred_check
        %p1599 = pneg %p238
      $region66: #{vanilla_transformer_forward.12} parent=63 // pred_check_branch
        %1601 = sbr.rel (%p1599) target = $region68
      $region67: #{vanilla_transformer_forward.12} parent=63 // pred_region
        %p1602 = scmp.lt.s32.totalorder %s21, 1
        %s1603 = scalar_select %p1602, %s21, 1
        %s1604 = smul.addr %s1603, 8
        %s1605 = scalar_lea.vmem %s9, %s1604
      $region68: #{vanilla_transformer_forward.12} parent=63 // pred_fallthru
        _
    $region64: #{vanilla_transformer_forward.12} parent=5 // pred_fallthru
      _
  $region6: #{vanilla_transformer_forward.12} parent=0 // loop_footer
    %s19 = sadd.s32 1, %s15
  $region7: #{vanilla_transformer_forward.12} parent=0 // loop_footer_branch
    %14 = sbr.rel target = $region3
  $region8: #{vanilla_transformer_forward.12} parent=0 // loop_exit
    _

// kernel: vanilla_transformer_forward.21
$region0: #{vanilla_transformer_forward.21}
  #allocation0 [shape = 'u32[]', space=smem, size = 0x4, offset = 0x4, fixed_abs, tag = 'smem constant byte address 0x4 - core index']
  #allocation1 [shape = 'u32[144,128]{1,0:T(1,128)}', space=vmem, size = 0x12000, scoped, tag = 'internal scratch']
  %s0 = inlined_call_operand.vmem [shape: f32[2,4,32], index: 0, kind: input, shape index: {}]
  %s1 = inlined_call_operand.vmem [shape: f32[1,32], index: 1, kind: input, shape index: {}]
  %s2 = inlined_call_operand.vmem [shape: f32[1,32], index: 2, kind: input, shape index: {}]
  %s3 = inlined_call_operand.vmem [shape: bf16[32,4], index: 3, kind: input, shape index: {}]
  %s4 = inlined_call_operand.vmem [shape: f32[1,4], index: 4, kind: input, shape index: {}]
  %s5 = inlined_call_operand.hbm [shape: f32[2,4,4], index: 5, kind: output, shape index: {}]
  %s6 = sld [smem:[#allocation0]]
  $region53: #{vanilla_transformer_forward.21} parent=0
    _
  %s8 = ssub.s32 1, %s6
  %s9 = scalar_select 0, %s8, %s6
  $region1: #{vanilla_transformer_forward.21} parent=0
    #allocation2 [shape = 'u8[4096]{0}', space=vmem, size = 0x1000, scoped, tag = 'output window, operand 0']
    #allocation3 [shape = 's32[2]{0}', space=sflag, size = 0x8, scoped, tag = 'scoped memory for vanilla_transformer_forward.21']
    %10 = vsyncpa [#allocation3], 0
    %s11 = scalar_lea.sflag [#allocation3], 1
    %12 = vsyncpa %s11, 0
    loop: start=0, step=1, limit=4
    $region2: #{vanilla_transformer_forward.21} parent=1 // loop_pre_header
      _
    $region3: #{vanilla_transformer_forward.21} parent=1 // loop_header
      %s14 = sphi 0, %s18
      %p15 = scmp.ge.s32.totalorder %s14, 4
      %s24 = sphi 0, %s26
      %s27 = sphi 0, %s24
      %s28 = sphi 0, %s27
      %s44 = sphi 0, %s28
      %s48 = sphi 0, %s48
      %s50 = sphi 0, %s48
      %s51 = sphi 0, %s50
      %s65 = sphi 0, %s51
      %s69 = sphi 0, %s69
      %s71 = sphi 0, %s69
      %s72 = sphi 0, %s71
      %s86 = sphi 0, %s72
      %s90 = sphi 0, %s90
      %s92 = sphi 0, %s90
      %s93 = sphi 0, %s92
      %s107 = sphi 0, %s93
      %s111 = sphi 0, %s111
      %s113 = sphi 0, %s111
      %s114 = sphi 0, %s113
      %s128 = sphi 0, %s114
      %s134 = sphi 0, %s136
      %s137 = sphi 0, %s134
      %s138 = sphi 0, %s137
      %s154 = sphi 0, %s138
    $region4: #{vanilla_transformer_forward.21} parent=1 // loop_header_branch
      %17 = sbr.rel (%p15) target = $region8
    $region5: #{vanilla_transformer_forward.21} parent=1 // loop_body
      %s19 = ssub.s32 %s14, 1
      %s20 = ssub.s32 %s14, 2
      %s21 = sadd.s32 %s14, 1
      %s22 = ssub.s32 %s14, %s21
      %p23 = scmp.eq.s32.totalorder %s22, 0
      %s25 = sadd.s32 %s24, 1
      %s26 = scalar_select %p23, %s24, %s25
      %p29 = pneg %p23
      %p30 = scmp.eq.s32.totalorder %s14, 1
      %p31 = por %p29, %p30
      %p32 = scmp.ne.s32.totalorder %s24, %s27
      %p33 = scmp.eq.s32.totalorder %s14, 0
      %p34 = por %p32, %p33
      %p35 = scmp.ne.s32.totalorder %s24, %s27
      %p36 = scmp.eq.s32.totalorder %s19, 1
      %p37 = por %p35, %p36
      %p38 = scmp.ne.s32.totalorder %s27, %s28
      %p39 = scmp.eq.s32.totalorder %s19, 0
      %p40 = por %p38, %p39
      %p41 = scmp.ne.s32.totalorder %s27, %s28
      %p42 = scmp.eq.s32.totalorder %s20, 1
      %p43 = por %p41, %p42
      %p45 = scmp.ne.s32.totalorder %s28, %s44
      %p46 = scmp.eq.s32.totalorder %s20, 0
      %p47 = por %p45, %p46
      %s49 = sadd.s32 %s48, 1
      %p52 = scmp.eq.s32.totalorder %s14, 1
      %p53 = scmp.ne.s32.totalorder %s48, %s50
      %p54 = scmp.eq.s32.totalorder %s14, 0
      %p55 = por %p53, %p54
      %p56 = scmp.ne.s32.totalorder %s48, %s50
      %p57 = scmp.eq.s32.totalorder %s19, 1
      %p58 = por %p56, %p57
      %p59 = scmp.ne.s32.totalorder %s50, %s51
      %p60 = scmp.eq.s32.totalorder %s19, 0
      %p61 = por %p59, %p60
      %p62 = scmp.ne.s32.totalorder %s50, %s51
      %p63 = scmp.eq.s32.totalorder %s20, 1
      %p64 = por %p62, %p63
      %p66 = scmp.ne.s32.totalorder %s51, %s65
      %p67 = scmp.eq.s32.totalorder %s20, 0
      %p68 = por %p66, %p67
      %s70 = sadd.s32 %s69, 1
      %p73 = scmp.eq.s32.totalorder %s14, 1
      %p74 = scmp.ne.s32.totalorder %s69, %s71
      %p75 = scmp.eq.s32.totalorder %s14, 0
      %p76 = por %p74, %p75
      %p77 = scmp.ne.s32.totalorder %s69, %s71
      %p78 = scmp.eq.s32.totalorder %s19, 1
      %p79 = por %p77, %p78
      %p80 = scmp.ne.s32.totalorder %s71, %s72
      %p81 = scmp.eq.s32.totalorder %s19, 0
      %p82 = por %p80, %p81
      %p83 = scmp.ne.s32.totalorder %s71, %s72
      %p84 = scmp.eq.s32.totalorder %s20, 1
      %p85 = por %p83, %p84
      %p87 = scmp.ne.s32.totalorder %s72, %s86
      %p88 = scmp.eq.s32.totalorder %s20, 0
      %p89 = por %p87, %p88
      %s91 = sadd.s32 %s90, 1
      %p94 = scmp.eq.s32.totalorder %s14, 1
      %p95 = scmp.ne.s32.totalorder %s90, %s92
      %p96 = scmp.eq.s32.totalorder %s14, 0
      %p97 = por %p95, %p96
      %p98 = scmp.ne.s32.totalorder %s90, %s92
      %p99 = scmp.eq.s32.totalorder %s19, 1
      %p100 = por %p98, %p99
      %p101 = scmp.ne.s32.totalorder %s92, %s93
      %p102 = scmp.eq.s32.totalorder %s19, 0
      %p103 = por %p101, %p102
      %p104 = scmp.ne.s32.totalorder %s92, %s93
      %p105 = scmp.eq.s32.totalorder %s20, 1
      %p106 = por %p104, %p105
      %p108 = scmp.ne.s32.totalorder %s93, %s107
      %p109 = scmp.eq.s32.totalorder %s20, 0
      %p110 = por %p108, %p109
      %s112 = sadd.s32 %s111, 1
      %p115 = scmp.eq.s32.totalorder %s14, 1
      %p116 = scmp.ne.s32.totalorder %s111, %s113
      %p117 = scmp.eq.s32.totalorder %s14, 0
      %p118 = por %p116, %p117
      %p119 = scmp.ne.s32.totalorder %s111, %s113
      %p120 = scmp.eq.s32.totalorder %s19, 1
      %p121 = por %p119, %p120
      %p122 = scmp.ne.s32.totalorder %s113, %s114
      %p123 = scmp.eq.s32.totalorder %s19, 0
      %p124 = por %p122, %p123
      %p125 = scmp.ne.s32.totalorder %s113, %s114
      %p126 = scmp.eq.s32.totalorder %s20, 1
      %p127 = por %p125, %p126
      %p129 = scmp.ne.s32.totalorder %s114, %s128
      %p130 = scmp.eq.s32.totalorder %s20, 0
      %p131 = por %p129, %p130
      %s132 = ssub.s32 %s14, %s21
      %p133 = scmp.eq.s32.totalorder %s132, 0
      %s135 = sadd.s32 %s134, 1
      %s136 = scalar_select %p133, %s134, %s135
      %p139 = pneg %p133
      %p140 = scmp.eq.s32.totalorder %s14, 1
      %p141 = por %p139, %p140
      %p142 = scmp.ne.s32.totalorder %s134, %s137
      %p143 = scmp.eq.s32.totalorder %s14, 0
      %p144 = por %p142, %p143
      %p145 = scmp.ne.s32.totalorder %s134, %s137
      %p146 = scmp.eq.s32.totalorder %s19, 1
      %p147 = por %p145, %p146
      %p148 = scmp.ne.s32.totalorder %s137, %s138
      %p149 = scmp.eq.s32.totalorder %s19, 0
      %p150 = por %p148, %p149
      %p151 = scmp.ne.s32.totalorder %s137, %s138
      %p152 = scmp.eq.s32.totalorder %s20, 1
      %p153 = por %p151, %p152
      %p155 = scmp.ne.s32.totalorder %s138, %s154
      %p156 = scmp.eq.s32.totalorder %s20, 0
      %p157 = por %p155, %p156
      %p158 = scmp.le.s32.totalorder 1, %s14
      %p159 = scmp.lt.s32.totalorder %s14, 3
      %p160 = pnand %p158, %p159
      %p161 = pneg %p160
      // Predicated region
      $region9: #{vanilla_transformer_forward.21} parent=5 // pred_check
        _
      $region10: #{vanilla_transformer_forward.21} parent=5 // pred_check_branch
        %163 = sbr.rel (%p160) target = $region12
      $region11: #{vanilla_transformer_forward.21} parent=5 // pred_region
        %s164 = ssub.s32 %s14, 1
        // Predicated region
        $region13: #{vanilla_transformer_forward.21} parent=11 // pred_check
          %p165 = pneg %p61
        $region14: #{vanilla_transformer_forward.21} parent=11 // pred_check_branch
          %167 = sbr.rel (%p165) target = $region16
        $region15: #{vanilla_transformer_forward.21} parent=11 // pred_region
          _
        $region16: #{vanilla_transformer_forward.21} parent=11 // pred_fallthru
          _
        // Predicated region
        $region17: #{vanilla_transformer_forward.21} parent=11 // pred_check
          %p168 = pneg %p82
        $region18: #{vanilla_transformer_forward.21} parent=11 // pred_check_branch
          %170 = sbr.rel (%p168) target = $region20
        $region19: #{vanilla_transformer_forward.21} parent=11 // pred_region
          _
        $region20: #{vanilla_transformer_forward.21} parent=11 // pred_fallthru
          _
        // Predicated region
        $region21: #{vanilla_transformer_forward.21} parent=11 // pred_check
          %p171 = pneg %p103
        $region22: #{vanilla_transformer_forward.21} parent=11 // pred_check_branch
          %173 = sbr.rel (%p171) target = $region24
        $region23: #{vanilla_transformer_forward.21} parent=11 // pred_region
          _
        $region24: #{vanilla_transformer_forward.21} parent=11 // pred_fallthru
          _
        // Predicated region
        $region25: #{vanilla_transformer_forward.21} parent=11 // pred_check
          %p174 = pneg %p124
        $region26: #{vanilla_transformer_forward.21} parent=11 // pred_check_branch
          %176 = sbr.rel (%p174) target = $region28
        $region27: #{vanilla_transformer_forward.21} parent=11 // pred_region
          _
        $region28: #{vanilla_transformer_forward.21} parent=11 // pred_fallthru
          _
      $region12: #{vanilla_transformer_forward.21} parent=5 // pred_fallthru
        _
      %p177 = scmp.lt.s32.totalorder %s14, 2
      // Predicated region
      $region29: #{vanilla_transformer_forward.21} parent=5 // pred_check
        %p178 = pneg %p177
      $region30: #{vanilla_transformer_forward.21} parent=5 // pred_check_branch
        %180 = sbr.rel (%p178) target = $region32
      $region31: #{vanilla_transformer_forward.21} parent=5 // pred_region
        // Predicated region
        $region33: #{vanilla_transformer_forward.21} parent=31 // pred_check
          %p181 = pneg %p34
        $region34: #{vanilla_transformer_forward.21} parent=31 // pred_check_branch
          %183 = sbr.rel (%p181) target = $region36
        $region35: #{vanilla_transformer_forward.21} parent=31 // pred_region
          %p184 = scmp.lt.s32.totalorder %s14, 1
          %s185 = scalar_select %p184, %s14, 1
          %s186 = smul.addr %s185, 4
          %s187 = scalar_lea.vmem %s0, %s186
        $region36: #{vanilla_transformer_forward.21} parent=31 // pred_fallthru
          _
      $region32: #{vanilla_transformer_forward.21} parent=5 // pred_fallthru
        _
      %p188 = scmp.le.s32.totalorder 1, %s14
      %p189 = scmp.lt.s32.totalorder %s14, 3
      %p190 = pnand %p188, %p189
      %p191 = pneg %p190
      // Predicated region
      $region37: #{vanilla_transformer_forward.21} parent=5 // pred_check
        _
      $region38: #{vanilla_transformer_forward.21} parent=5 // pred_check_branch
        %193 = sbr.rel (%p190) target = $region40
      $region39: #{vanilla_transformer_forward.21} parent=5 // pred_region
        %s194 = ssub.s32 %s14, 1
        %p195 = scmp.lt.s32.totalorder %s19, 1
        %s196 = scalar_select %p195, %s19, 1
        %s197 = smul.addr %s196, 4
        %s198 = scalar_lea.vmem %s0, %s197
        %p199 = pneg %p40
        %p200 = pneg %p37
        %p201 = pneg %p61
        %p202 = pneg %p58
        %p203 = pneg %p82
        %p204 = pneg %p79
        %p205 = pneg %p103
        %p206 = pneg %p100
        %p207 = pneg %p124
        %p208 = pneg %p121
        %p209 = pneg %p150
        %p210 = pneg %p147
        %s211 = sand.u32 %s137, 1
        %s212 = scalar_lea.sflag [#allocation3], %s211
        %s213 = sand.u32 %s137, 1
        %s214 = smul.addr %s213, 4
        %s215 = scalar_lea.vmem [#allocation2], %s214
        %p216 = scmp.lt.s32.totalorder %s19, 1
        %s217 = scalar_select %p216, %s19, 1
        %s218 = smul.addr %s217, 4
        %s219 = scalar_lea.vmem %s0, %s218
        %v221 = vld [vmem:[%s219] sm:$0xf]
        %v222 = vld [vmem:[%s1] sm:$0x1]
        %v223 = vld [vmem:[%s2] sm:$0x1]
        %vm224 = vcmask 257024
        %v225 = vsel %vm224, %v221, 0.0
        %226 = vadd.xlane.f32.xlu0 %v225
        %v227 = vpop.xlane.xlu0 %226
        %v228 = vrcp.pop 32.0
        %v229 = vmul.f32 %v227, %v228
        %v230 = vsub.f32 %v221, %v229
        %v231 = vmul.f32 %v230, %v230
        %v232 = vsel %vm224, %v231, 0.0
        %233 = vadd.xlane.f32.xlu0 %v232
        %v234 = vpop.xlane.xlu0 %233
        %v235 = vmul.f32 %v234, %v228
        %v236 = vadd.f32 %v235, 1e-05
        %v237 = vrsqrt.pop %v236
        %v238 = vmul.f32 %v230, %v237
        %v240 = vlaneseq
        %v241 = vshrl.u32 %v240, 7
        %v242 = vsub.s32 0, %v241
        %v243 = vrot.slane %v222, %v242
        %v245 = vmul.f32 %v238, %v243
        %v247 = vlaneseq
        %v248 = vshrl.u32 %v247, 7
        %v249 = vsub.s32 0, %v248
        %v250 = vrot.slane %v223, %v249
        %v252 = vadd.f32 %v245, %v250
        %v253 = vld [vmem:[%s3] sm:$0xf]
        %v254 = vld [vmem:[%s3 + $0x4] sm:$0xf]
        %v255 = vld [vmem:[%s3 + $0x8] sm:$0xf]
        %v256 = vld [vmem:[%s3 + $0xc] sm:$0xf]
        %v257 = vpack.c.bf16 %v252, %v252
        %v258 = vld [vmem:[%s4] sm:$0x1]
        %v260 = vlaneseq
        %v261 = vshrl.u32 %v260, 7
        %v262 = vsub.s32 0, %v261
        %v263 = vrot.slane %v258, %v262
        %v269 = vunpack.c.l.b16 %v253
        %v270 = vunpack.c.l.b16 %v254
        %v271 = vunpack.c.l.b16 %v255
        %v272 = vunpack.c.l.b16 %v256
        %v273 = vpack.c.b16 %v270, %v269
        %v274 = vpack.c.b16 %v272, %v271
        %vm277 = vcmask 261120
        %v279 = vsel %vm277, %v257, 0
        %281 = vmatprep.subr.bf16.mxu0 0
        %282 = vmatpush1.bf16.msra.mxu0 %v273
        %283 = vmatprep.subr.bf16.mxu0 0
        %284 = vmatpush1.bf16.msra.mxu0 %v274
        %285 = vmatprep.subr.bf16.mxu0 0
        %286 = vmatpush1.bf16.msra.mxu0 0
        %287 = vmatprep.subr.bf16.mxu0 0
        %288 = vmatpush1.bf16.msra.mxu0 0
        %289 = vmatprep.subr.bf16.mxu0 0
        %290 = vmatpush1.bf16.msra.mxu0 0
        %291 = vmatprep.subr.bf16.mxu0 0
        %292 = vmatpush1.bf16.msra.mxu0 0
        %293 = vmatprep.subr.bf16.mxu0 0
        %294 = vmatpush1.bf16.msra.mxu0 0
        %295 = vmatprep.subr.bf16.mxu0 0
        %296 = vmatpush1.bf16.msra.mxu0 0
        %297 = vmatprep.subr.bf16.mxu0 0
        %298 = vmatpush1.bf16.msra.mxu0 0
        %299 = vmatprep.subr.bf16.mxu0 0
        %300 = vmatpush1.bf16.msra.mxu0 0
        %301 = vmatprep.subr.bf16.mxu0 0
        %302 = vmatpush1.bf16.msra.mxu0 0
        %303 = vmatprep.subr.bf16.mxu0 0
        %304 = vmatpush1.bf16.msra.mxu0 0
        %305 = vmatprep.subr.bf16.mxu0 0
        %306 = vmatpush1.bf16.msra.mxu0 0
        %307 = vmatprep.subr.bf16.mxu0 0
        %308 = vmatpush1.bf16.msra.mxu0 0
        %309 = vmatprep.subr.bf16.mxu0 0
        %310 = vmatpush1.bf16.msra.mxu0 0
        %311 = vmatprep.subr.bf16.mxu0 0
        %312 = vmatpush1.bf16.msra.mxu0 0
        %313 = vmatprep.mubr.bf16.mxu0 0
        %314 = vmatmul.mubr.bf16.gmra.mrb[0].mxu0 %v279
        %v315 = vpop.f32.mrb[0].mxu0
        %v316 = vadd.f32 %v263, %v315
        %v317 = vpop.f32.mrb[0].mxu0
        %v318 = vpop.f32.mrb[0].mxu0
        %v319 = vpop.f32.mrb[0].mxu0
        %320 = vdwg.mxu0
        %vm321 = vcmask 27648
        %322 = vst.msk [vmem:[%s215] sm:$0xf] %vm321, %v316
        %s323 = sand.u32 %s137, 1
        %s324 = scalar_lea.sflag [#allocation3], %s323
        %s325 = sand.u32 %s137, 1
        %s326 = smul.addr %s325, 4
        %s327 = scalar_lea.vmem [#allocation2], %s326
        // Predicated region
        $region41: #{vanilla_transformer_forward.21} parent=39 // pred_check
          %p328 = pneg %p147
        $region42: #{vanilla_transformer_forward.21} parent=39 // pred_check_branch
          %330 = sbr.rel (%p328) target = $region44
        $region43: #{vanilla_transformer_forward.21} parent=39 // pred_region
          %s332 = ssub.s32 64, 64
          %333 = vsyncadd %s324, %s332
          %s334 = smul.addr %s19, 64
          %s335 = scalar_lea.hbm %s5, %s334
          %s337 = sshll.u32 %s327, 4
          %s338 = int_to_ptr.vmem [resolvable:$true] %s337
          %340 = dma.vmem_to_hbm [thread:$0]  %s338, 64, %s335, %s324
        $region44: #{vanilla_transformer_forward.21} parent=39 // pred_fallthru
          _
      $region40: #{vanilla_transformer_forward.21} parent=5 // pred_fallthru
        _
      %p341 = scmp.le.s32.totalorder 2, %s14
      // Predicated region
      $region45: #{vanilla_transformer_forward.21} parent=5 // pred_check
        %p342 = pneg %p341
      $region46: #{vanilla_transformer_forward.21} parent=5 // pred_check_branch
        %344 = sbr.rel (%p342) target = $region48
      $region47: #{vanilla_transformer_forward.21} parent=5 // pred_region
        %s345 = ssub.s32 %s14, 2
        // Predicated region
        $region49: #{vanilla_transformer_forward.21} parent=47 // pred_check
          %p346 = pneg %p153
        $region50: #{vanilla_transformer_forward.21} parent=47 // pred_check_branch
          %348 = sbr.rel (%p346) target = $region52
        $region51: #{vanilla_transformer_forward.21} parent=47 // pred_region
          %s349 = sand.u32 %s138, 1
          %s350 = scalar_lea.sflag [#allocation3], %s349
          %s351 = sand.u32 %s138, 1
          %s352 = smul.addr %s351, 4
          %s353 = scalar_lea.vmem [#allocation2], %s352
          %354 = dma.done %s350, 64
        $region52: #{vanilla_transformer_forward.21} parent=47 // pred_fallthru
          _
      $region48: #{vanilla_transformer_forward.21} parent=5 // pred_fallthru
        _
    $region6: #{vanilla_transformer_forward.21} parent=1 // loop_footer
      %s18 = sadd.s32 1, %s14
    $region7: #{vanilla_transformer_forward.21} parent=1 // loop_footer_branch
      %13 = sbr.rel target = $region3
    $region8: #{vanilla_transformer_forward.21} parent=1 // loop_exit
      _
    %355 = vsyncpa [#allocation3], 1
    %s356 = scalar_lea.sflag [#allocation3], 1
    %357 = vsyncpa %s356, 1

// kernel: vanilla_transformer_forward.18
$region0: #{vanilla_transformer_forward.18}
  #allocation0 [shape = 'u32[]', space=smem, size = 0x4, offset = 0x4, fixed_abs, tag = 'smem constant byte address 0x4 - core index']
  #allocation1 [shape = 'u32[144,128]{1,0:T(1,128)}', space=vmem, size = 0x12000, scoped, tag = 'internal scratch']
  %s0 = inlined_call_operand.vmem [shape: f32[2,8,32], index: 0, kind: input, shape index: {}, may-alias: {0,9}]
  %s1 = inlined_call_operand.vmem [shape: bf16[32,32], index: 1, kind: input, shape index: {}]
  %s2 = inlined_call_operand.vmem [shape: f32[1,32], index: 2, kind: input, shape index: {}]
  %s3 = inlined_call_operand.vmem [shape: bf16[32,64], index: 3, kind: input, shape index: {}]
  %s4 = inlined_call_operand.vmem [shape: f32[1,64], index: 4, kind: input, shape index: {}]
  %s5 = inlined_call_operand.vmem [shape: bf16[32,32], index: 5, kind: input, shape index: {}]
  %s6 = inlined_call_operand.vmem [shape: f32[1,32], index: 6, kind: input, shape index: {}]
  %s7 = inlined_call_operand.vmem [shape: f32[1,32], index: 7, kind: input, shape index: {}]
  %s8 = inlined_call_operand.vmem [shape: f32[1,32], index: 8, kind: input, shape index: {}]
  %s9 = inlined_call_operand.vmem [shape: f32[2,8,32], index: 9, kind: output, shape index: {}, may-alias: {0,9}]
  %s10 = sld [smem:[#allocation0]]
  $region69: #{vanilla_transformer_forward.18} parent=0
    _
  %s12 = ssub.s32 1, %s10
  %s13 = scalar_select 0, %s12, %s10
  loop: start=0, step=1, limit=4
  $region2: #{vanilla_transformer_forward.18} parent=0 // loop_pre_header
    _
  $region3: #{vanilla_transformer_forward.18} parent=0 // loop_header
    %s15 = sphi 0, %s19
    %p16 = scmp.ge.s32.totalorder %s15, 4
    %s25 = sphi 0, %s27
    %s28 = sphi 0, %s25
    %s29 = sphi 0, %s28
    %s45 = sphi 0, %s29
    %s49 = sphi 0, %s49
    %s51 = sphi 0, %s49
    %s52 = sphi 0, %s51
    %s66 = sphi 0, %s52
    %s70 = sphi 0, %s70
    %s72 = sphi 0, %s70
    %s73 = sphi 0, %s72
    %s87 = sphi 0, %s73
    %s91 = sphi 0, %s91
    %s93 = sphi 0, %s91
    %s94 = sphi 0, %s93
    %s108 = sphi 0, %s94
    %s112 = sphi 0, %s112
    %s114 = sphi 0, %s112
    %s115 = sphi 0, %s114
    %s129 = sphi 0, %s115
    %s133 = sphi 0, %s133
    %s135 = sphi 0, %s133
    %s136 = sphi 0, %s135
    %s150 = sphi 0, %s136
    %s154 = sphi 0, %s154
    %s156 = sphi 0, %s154
    %s157 = sphi 0, %s156
    %s171 = sphi 0, %s157
    %s175 = sphi 0, %s175
    %s177 = sphi 0, %s175
    %s178 = sphi 0, %s177
    %s192 = sphi 0, %s178
    %s196 = sphi 0, %s196
    %s198 = sphi 0, %s196
    %s199 = sphi 0, %s198
    %s213 = sphi 0, %s199
    %s219 = sphi 0, %s221
    %s222 = sphi 0, %s219
    %s223 = sphi 0, %s222
    %s239 = sphi 0, %s223
  $region4: #{vanilla_transformer_forward.18} parent=0 // loop_header_branch
    %18 = sbr.rel (%p16) target = $region8
  $region5: #{vanilla_transformer_forward.18} parent=0 // loop_body
    %s20 = ssub.s32 %s15, 1
    %s21 = ssub.s32 %s15, 2
    %s22 = sadd.s32 %s15, 1
    %s23 = ssub.s32 %s15, %s22
    %p24 = scmp.eq.s32.totalorder %s23, 0
    %s26 = sadd.s32 %s25, 1
    %s27 = scalar_select %p24, %s25, %s26
    %p30 = pneg %p24
    %p31 = scmp.eq.s32.totalorder %s15, 1
    %p32 = por %p30, %p31
    %p33 = scmp.ne.s32.totalorder %s25, %s28
    %p34 = scmp.eq.s32.totalorder %s15, 0
    %p35 = por %p33, %p34
    %p36 = scmp.ne.s32.totalorder %s25, %s28
    %p37 = scmp.eq.s32.totalorder %s20, 1
    %p38 = por %p36, %p37
    %p39 = scmp.ne.s32.totalorder %s28, %s29
    %p40 = scmp.eq.s32.totalorder %s20, 0
    %p41 = por %p39, %p40
    %p42 = scmp.ne.s32.totalorder %s28, %s29
    %p43 = scmp.eq.s32.totalorder %s21, 1
    %p44 = por %p42, %p43
    %p46 = scmp.ne.s32.totalorder %s29, %s45
    %p47 = scmp.eq.s32.totalorder %s21, 0
    %p48 = por %p46, %p47
    %s50 = sadd.s32 %s49, 1
    %p53 = scmp.eq.s32.totalorder %s15, 1
    %p54 = scmp.ne.s32.totalorder %s49, %s51
    %p55 = scmp.eq.s32.totalorder %s15, 0
    %p56 = por %p54, %p55
    %p57 = scmp.ne.s32.totalorder %s49, %s51
    %p58 = scmp.eq.s32.totalorder %s20, 1
    %p59 = por %p57, %p58
    %p60 = scmp.ne.s32.totalorder %s51, %s52
    %p61 = scmp.eq.s32.totalorder %s20, 0
    %p62 = por %p60, %p61
    %p63 = scmp.ne.s32.totalorder %s51, %s52
    %p64 = scmp.eq.s32.totalorder %s21, 1
    %p65 = por %p63, %p64
    %p67 = scmp.ne.s32.totalorder %s52, %s66
    %p68 = scmp.eq.s32.totalorder %s21, 0
    %p69 = por %p67, %p68
    %s71 = sadd.s32 %s70, 1
    %p74 = scmp.eq.s32.totalorder %s15, 1
    %p75 = scmp.ne.s32.totalorder %s70, %s72
    %p76 = scmp.eq.s32.totalorder %s15, 0
    %p77 = por %p75, %p76
    %p78 = scmp.ne.s32.totalorder %s70, %s72
    %p79 = scmp.eq.s32.totalorder %s20, 1
    %p80 = por %p78, %p79
    %p81 = scmp.ne.s32.totalorder %s72, %s73
    %p82 = scmp.eq.s32.totalorder %s20, 0
    %p83 = por %p81, %p82
    %p84 = scmp.ne.s32.totalorder %s72, %s73
    %p85 = scmp.eq.s32.totalorder %s21, 1
    %p86 = por %p84, %p85
    %p88 = scmp.ne.s32.totalorder %s73, %s87
    %p89 = scmp.eq.s32.totalorder %s21, 0
    %p90 = por %p88, %p89
    %s92 = sadd.s32 %s91, 1
    %p95 = scmp.eq.s32.totalorder %s15, 1
    %p96 = scmp.ne.s32.totalorder %s91, %s93
    %p97 = scmp.eq.s32.totalorder %s15, 0
    %p98 = por %p96, %p97
    %p99 = scmp.ne.s32.totalorder %s91, %s93
    %p100 = scmp.eq.s32.totalorder %s20, 1
    %p101 = por %p99, %p100
    %p102 = scmp.ne.s32.totalorder %s93, %s94
    %p103 = scmp.eq.s32.totalorder %s20, 0
    %p104 = por %p102, %p103
    %p105 = scmp.ne.s32.totalorder %s93, %s94
    %p106 = scmp.eq.s32.totalorder %s21, 1
    %p107 = por %p105, %p106
    %p109 = scmp.ne.s32.totalorder %s94, %s108
    %p110 = scmp.eq.s32.totalorder %s21, 0
    %p111 = por %p109, %p110
    %s113 = sadd.s32 %s112, 1
    %p116 = scmp.eq.s32.totalorder %s15, 1
    %p117 = scmp.ne.s32.totalorder %s112, %s114
    %p118 = scmp.eq.s32.totalorder %s15, 0
    %p119 = por %p117, %p118
    %p120 = scmp.ne.s32.totalorder %s112, %s114
    %p121 = scmp.eq.s32.totalorder %s20, 1
    %p122 = por %p120, %p121
    %p123 = scmp.ne.s32.totalorder %s114, %s115
    %p124 = scmp.eq.s32.totalorder %s20, 0
    %p125 = por %p123, %p124
    %p126 = scmp.ne.s32.totalorder %s114, %s115
    %p127 = scmp.eq.s32.totalorder %s21, 1
    %p128 = por %p126, %p127
    %p130 = scmp.ne.s32.totalorder %s115, %s129
    %p131 = scmp.eq.s32.totalorder %s21, 0
    %p132 = por %p130, %p131
    %s134 = sadd.s32 %s133, 1
    %p137 = scmp.eq.s32.totalorder %s15, 1
    %p138 = scmp.ne.s32.totalorder %s133, %s135
    %p139 = scmp.eq.s32.totalorder %s15, 0
    %p140 = por %p138, %p139
    %p141 = scmp.ne.s32.totalorder %s133, %s135
    %p142 = scmp.eq.s32.totalorder %s20, 1
    %p143 = por %p141, %p142
    %p144 = scmp.ne.s32.totalorder %s135, %s136
    %p145 = scmp.eq.s32.totalorder %s20, 0
    %p146 = por %p144, %p145
    %p147 = scmp.ne.s32.totalorder %s135, %s136
    %p148 = scmp.eq.s32.totalorder %s21, 1
    %p149 = por %p147, %p148
    %p151 = scmp.ne.s32.totalorder %s136, %s150
    %p152 = scmp.eq.s32.totalorder %s21, 0
    %p153 = por %p151, %p152
    %s155 = sadd.s32 %s154, 1
    %p158 = scmp.eq.s32.totalorder %s15, 1
    %p159 = scmp.ne.s32.totalorder %s154, %s156
    %p160 = scmp.eq.s32.totalorder %s15, 0
    %p161 = por %p159, %p160
    %p162 = scmp.ne.s32.totalorder %s154, %s156
    %p163 = scmp.eq.s32.totalorder %s20, 1
    %p164 = por %p162, %p163
    %p165 = scmp.ne.s32.totalorder %s156, %s157
    %p166 = scmp.eq.s32.totalorder %s20, 0
    %p167 = por %p165, %p166
    %p168 = scmp.ne.s32.totalorder %s156, %s157
    %p169 = scmp.eq.s32.totalorder %s21, 1
    %p170 = por %p168, %p169
    %p172 = scmp.ne.s32.totalorder %s157, %s171
    %p173 = scmp.eq.s32.totalorder %s21, 0
    %p174 = por %p172, %p173
    %s176 = sadd.s32 %s175, 1
    %p179 = scmp.eq.s32.totalorder %s15, 1
    %p180 = scmp.ne.s32.totalorder %s175, %s177
    %p181 = scmp.eq.s32.totalorder %s15, 0
    %p182 = por %p180, %p181
    %p183 = scmp.ne.s32.totalorder %s175, %s177
    %p184 = scmp.eq.s32.totalorder %s20, 1
    %p185 = por %p183, %p184
    %p186 = scmp.ne.s32.totalorder %s177, %s178
    %p187 = scmp.eq.s32.totalorder %s20, 0
    %p188 = por %p186, %p187
    %p189 = scmp.ne.s32.totalorder %s177, %s178
    %p190 = scmp.eq.s32.totalorder %s21, 1
    %p191 = por %p189, %p190
    %p193 = scmp.ne.s32.totalorder %s178, %s192
    %p194 = scmp.eq.s32.totalorder %s21, 0
    %p195 = por %p193, %p194
    %s197 = sadd.s32 %s196, 1
    %p200 = scmp.eq.s32.totalorder %s15, 1
    %p201 = scmp.ne.s32.totalorder %s196, %s198
    %p202 = scmp.eq.s32.totalorder %s15, 0
    %p203 = por %p201, %p202
    %p204 = scmp.ne.s32.totalorder %s196, %s198
    %p205 = scmp.eq.s32.totalorder %s20, 1
    %p206 = por %p204, %p205
    %p207 = scmp.ne.s32.totalorder %s198, %s199
    %p208 = scmp.eq.s32.totalorder %s20, 0
    %p209 = por %p207, %p208
    %p210 = scmp.ne.s32.totalorder %s198, %s199
    %p211 = scmp.eq.s32.totalorder %s21, 1
    %p212 = por %p210, %p211
    %p214 = scmp.ne.s32.totalorder %s199, %s213
    %p215 = scmp.eq.s32.totalorder %s21, 0
    %p216 = por %p214, %p215
    %s217 = ssub.s32 %s15, %s22
    %p218 = scmp.eq.s32.totalorder %s217, 0
    %s220 = sadd.s32 %s219, 1
    %s221 = scalar_select %p218, %s219, %s220
    %p224 = pneg %p218
    %p225 = scmp.eq.s32.totalorder %s15, 1
    %p226 = por %p224, %p225
    %p227 = scmp.ne.s32.totalorder %s219, %s222
    %p228 = scmp.eq.s32.totalorder %s15, 0
    %p229 = por %p227, %p228
    %p230 = scmp.ne.s32.totalorder %s219, %s222
    %p231 = scmp.eq.s32.totalorder %s20, 1
    %p232 = por %p230, %p231
    %p233 = scmp.ne.s32.totalorder %s222, %s223
    %p234 = scmp.eq.s32.totalorder %s20, 0
    %p235 = por %p233, %p234
    %p236 = scmp.ne.s32.totalorder %s222, %s223
    %p237 = scmp.eq.s32.totalorder %s21, 1
    %p238 = por %p236, %p237
    %p240 = scmp.ne.s32.totalorder %s223, %s239
    %p241 = scmp.eq.s32.totalorder %s21, 0
    %p242 = por %p240, %p241
    %p243 = scmp.le.s32.totalorder 1, %s15
    %p244 = scmp.lt.s32.totalorder %s15, 3
    %p245 = pnand %p243, %p244
    %p246 = pneg %p245
    // Predicated region
    $region9: #{vanilla_transformer_forward.18} parent=5 // pred_check
      _
    $region10: #{vanilla_transformer_forward.18} parent=5 // pred_check_branch
      %248 = sbr.rel (%p245) target = $region12
    $region11: #{vanilla_transformer_forward.18} parent=5 // pred_region
      %s249 = ssub.s32 %s15, 1
      // Predicated region
      $region13: #{vanilla_transformer_forward.18} parent=11 // pred_check
        %p250 = pneg %p62
      $region14: #{vanilla_transformer_forward.18} parent=11 // pred_check_branch
        %252 = sbr.rel (%p250) target = $region16
      $region15: #{vanilla_transformer_forward.18} parent=11 // pred_region
        _
      $region16: #{vanilla_transformer_forward.18} parent=11 // pred_fallthru
        _
      // Predicated region
      $region17: #{vanilla_transformer_forward.18} parent=11 // pred_check
        %p253 = pneg %p83
      $region18: #{vanilla_transformer_forward.18} parent=11 // pred_check_branch
        %255 = sbr.rel (%p253) target = $region20
      $region19: #{vanilla_transformer_forward.18} parent=11 // pred_region
        _
      $region20: #{vanilla_transformer_forward.18} parent=11 // pred_fallthru
        _
      // Predicated region
      $region21: #{vanilla_transformer_forward.18} parent=11 // pred_check
        %p256 = pneg %p104
      $region22: #{vanilla_transformer_forward.18} parent=11 // pred_check_branch
        %258 = sbr.rel (%p256) target = $region24
      $region23: #{vanilla_transformer_forward.18} parent=11 // pred_region
        _
      $region24: #{vanilla_transformer_forward.18} parent=11 // pred_fallthru
        _
      // Predicated region
      $region25: #{vanilla_transformer_forward.18} parent=11 // pred_check
        %p259 = pneg %p125
      $region26: #{vanilla_transformer_forward.18} parent=11 // pred_check_branch
        %261 = sbr.rel (%p259) target = $region28
      $region27: #{vanilla_transformer_forward.18} parent=11 // pred_region
        _
      $region28: #{vanilla_transformer_forward.18} parent=11 // pred_fallthru
        _
      // Predicated region
      $region29: #{vanilla_transformer_forward.18} parent=11 // pred_check
        %p262 = pneg %p146
      $region30: #{vanilla_transformer_forward.18} parent=11 // pred_check_branch
        %264 = sbr.rel (%p262) target = $region32
      $region31: #{vanilla_transformer_forward.18} parent=11 // pred_region
        _
      $region32: #{vanilla_transformer_forward.18} parent=11 // pred_fallthru
        _
      // Predicated region
      $region33: #{vanilla_transformer_forward.18} parent=11 // pred_check
        %p265 = pneg %p167
      $region34: #{vanilla_transformer_forward.18} parent=11 // pred_check_branch
        %267 = sbr.rel (%p265) target = $region36
      $region35: #{vanilla_transformer_forward.18} parent=11 // pred_region
        _
      $region36: #{vanilla_transformer_forward.18} parent=11 // pred_fallthru
        _
      // Predicated region
      $region37: #{vanilla_transformer_forward.18} parent=11 // pred_check
        %p268 = pneg %p188
      $region38: #{vanilla_transformer_forward.18} parent=11 // pred_check_branch
        %270 = sbr.rel (%p268) target = $region40
      $region39: #{vanilla_transformer_forward.18} parent=11 // pred_region
        _
      $region40: #{vanilla_transformer_forward.18} parent=11 // pred_fallthru
        _
      // Predicated region
      $region41: #{vanilla_transformer_forward.18} parent=11 // pred_check
        %p271 = pneg %p209
      $region42: #{vanilla_transformer_forward.18} parent=11 // pred_check_branch
        %273 = sbr.rel (%p271) target = $region44
      $region43: #{vanilla_transformer_forward.18} parent=11 // pred_region
        _
      $region44: #{vanilla_transformer_forward.18} parent=11 // pred_fallthru
        _
    $region12: #{vanilla_transformer_forward.18} parent=5 // pred_fallthru
      _
    %p274 = scmp.lt.s32.totalorder %s15, 2
    // Predicated region
    $region45: #{vanilla_transformer_forward.18} parent=5 // pred_check
      %p275 = pneg %p274
    $region46: #{vanilla_transformer_forward.18} parent=5 // pred_check_branch
      %277 = sbr.rel (%p275) target = $region48
    $region47: #{vanilla_transformer_forward.18} parent=5 // pred_region
      // Predicated region
      $region49: #{vanilla_transformer_forward.18} parent=47 // pred_check
        %p278 = pneg %p35
      $region50: #{vanilla_transformer_forward.18} parent=47 // pred_check_branch
        %280 = sbr.rel (%p278) target = $region52
      $region51: #{vanilla_transformer_forward.18} parent=47 // pred_region
        %p281 = scmp.lt.s32.totalorder %s15, 1
        %s282 = scalar_select %p281, %s15, 1
        %s283 = smul.addr %s282, 8
        %s284 = scalar_lea.vmem %s0, %s283
      $region52: #{vanilla_transformer_forward.18} parent=47 // pred_fallthru
        _
    $region48: #{vanilla_transformer_forward.18} parent=5 // pred_fallthru
      _
    %p285 = scmp.le.s32.totalorder 1, %s15
    %p286 = scmp.lt.s32.totalorder %s15, 3
    %p287 = pnand %p285, %p286
    %p288 = pneg %p287
    // Predicated region
    $region53: #{vanilla_transformer_forward.18} parent=5 // pred_check
      _
    $region54: #{vanilla_transformer_forward.18} parent=5 // pred_check_branch
      %290 = sbr.rel (%p287) target = $region56
    $region55: #{vanilla_transformer_forward.18} parent=5 // pred_region
      %s291 = ssub.s32 %s15, 1
      %p292 = scmp.lt.s32.totalorder %s20, 1
      %s293 = scalar_select %p292, %s20, 1
      %s294 = smul.addr %s293, 8
      %s295 = scalar_lea.vmem %s0, %s294
      %p296 = pneg %p41
      %p297 = pneg %p38
      %p298 = pneg %p62
      %p299 = pneg %p59
      %p300 = pneg %p83
      %p301 = pneg %p80
      %p302 = pneg %p104
      %p303 = pneg %p101
      %p304 = pneg %p125
      %p305 = pneg %p122
      %p306 = pneg %p146
      %p307 = pneg %p143
      %p308 = pneg %p167
      %p309 = pneg %p164
      %p310 = pneg %p188
      %p311 = pneg %p185
      %p312 = pneg %p209
      %p313 = pneg %p206
      %p314 = pneg %p235
      %p315 = pneg %p232
      %p316 = scmp.lt.s32.totalorder %s20, 1
      %s317 = scalar_select %p316, %s20, 1
      %s318 = smul.addr %s317, 8
      %s319 = scalar_lea.vmem %s9, %s318
      %p320 = scmp.lt.s32.totalorder %s20, 1
      %s321 = scalar_select %p320, %s20, 1
      %s322 = smul.addr %s321, 8
      %s323 = scalar_lea.vmem %s0, %s322
      %p324 = scmp.lt.s32.totalorder %s20, 1
      %s325 = scalar_select %p324, %s20, 1
      %s326 = smul.addr %s325, 8
      %s327 = scalar_lea.vmem %s9, %s326
      %v329 = vld [vmem:[%s323] sm:$0xff]
      %v330 = vld [vmem:[%s1] sm:$0xf]
      %v331 = vld [vmem:[%s1 + $0x4] sm:$0xf]
      %v332 = vld [vmem:[%s1 + $0x8] sm:$0xf]
      %v333 = vld [vmem:[%s1 + $0xc] sm:$0xf]
      %v334 = vpack.c.bf16 %v329, %v329
      %v335 = vld [vmem:[%s2] sm:$0x1]
      %v337 = vlaneseq
      %v338 = vshrl.u32 %v337, 7
      %v339 = vsub.s32 0, %v338
      %v340 = vrot.slane %v335, %v339
      %v346 = vunpack.c.l.b16 %v330
      %v347 = vunpack.c.l.b16 %v331
      %v348 = vunpack.c.l.b16 %v332
      %v349 = vunpack.c.l.b16 %v333
      %v350 = vpack.c.b16 %v347, %v346
      %v351 = vpack.c.b16 %v349, %v348
      %vm354 = vcmask 261120
      %v356 = vsel %vm354, %v334, 0
      %358 = vmatprep.subr.bf16.mxu0 0
      %359 = vmatpush1.bf16.msra.mxu0 %v350
      %360 = vmatprep.subr.bf16.mxu0 0
      %361 = vmatpush1.bf16.msra.mxu0 %v351
      %362 = vmatprep.subr.bf16.mxu0 0
      %363 = vmatpush1.bf16.msra.mxu0 0
      %364 = vmatprep.subr.bf16.mxu0 0
      %365 = vmatpush1.bf16.msra.mxu0 0
      %366 = vmatprep.subr.bf16.mxu0 0
      %367 = vmatpush1.bf16.msra.mxu0 0
      %368 = vmatprep.subr.bf16.mxu0 0
      %369 = vmatpush1.bf16.msra.mxu0 0
      %370 = vmatprep.subr.bf16.mxu0 0
      %371 = vmatpush1.bf16.msra.mxu0 0
      %372 = vmatprep.subr.bf16.mxu0 0
      %373 = vmatpush1.bf16.msra.mxu0 0
      %374 = vmatprep.subr.bf16.mxu0 0
      %375 = vmatpush1.bf16.msra.mxu0 0
      %376 = vmatprep.subr.bf16.mxu0 0
      %377 = vmatpush1.bf16.msra.mxu0 0
      %378 = vmatprep.subr.bf16.mxu0 0
      %379 = vmatpush1.bf16.msra.mxu0 0
      %380 = vmatprep.subr.bf16.mxu0 0
      %381 = vmatpush1.bf16.msra.mxu0 0
      %382 = vmatprep.subr.bf16.mxu0 0
      %383 = vmatpush1.bf16.msra.mxu0 0
      %384 = vmatprep.subr.bf16.mxu0 0
      %385 = vmatpush1.bf16.msra.mxu0 0
      %386 = vmatprep.subr.bf16.mxu0 0
      %387 = vmatpush1.bf16.msra.mxu0 0
      %388 = vmatprep.subr.bf16.mxu0 0
      %389 = vmatpush1.bf16.msra.mxu0 0
      %390 = vmatprep.mubr.bf16.mxu0 0
      %391 = vmatmul.mubr.bf16.gmra.mrb[0].mxu0 %v356
      %v392 = vpop.f32.mrb[0].mxu0
      %v393 = vadd.f32 %v340, %v392
      %v394 = vpop.f32.mrb[0].mxu0
      %v395 = vpop.f32.mrb[0].mxu0
      %v396 = vpop.f32.mrb[0].mxu0
      %397 = vdwg.mxu0
      %v398 = vld [vmem:[%s3] sm:$0xf]
      %v399 = vld [vmem:[%s3 + $0x4] sm:$0xf]
      %v400 = vld [vmem:[%s3 + $0x8] sm:$0xf]
      %v401 = vld [vmem:[%s3 + $0xc] sm:$0xf]
      %v402 = vld [vmem:[%s4] sm:$0x1]
      %v404 = vlaneseq
      %v405 = vshrl.u32 %v404, 7
      %v406 = vsub.s32 0, %v405
      %v407 = vrot.slane %v402, %v406
      %v413 = vunpack.c.l.b16 %v398
      %v414 = vunpack.c.l.b16 %v399
      %v415 = vunpack.c.l.b16 %v400
      %v416 = vunpack.c.l.b16 %v401
      %v417 = vpack.c.b16 %v414, %v413
      %v418 = vpack.c.b16 %v416, %v415
      %421 = vmatprep.subr.bf16.mxu0 0
      %422 = vmatpush1.bf16.msra.mxu0 %v417
      %423 = vmatprep.subr.bf16.mxu0 0
      %424 = vmatpush1.bf16.msra.mxu0 %v418
      %425 = vmatprep.subr.bf16.mxu0 0
      %426 = vmatpush1.bf16.msra.mxu0 0
      %427 = vmatprep.subr.bf16.mxu0 0
      %428 = vmatpush1.bf16.msra.mxu0 0
      %429 = vmatprep.subr.bf16.mxu0 0
      %430 = vmatpush1.bf16.msra.mxu0 0
      %431 = vmatprep.subr.bf16.mxu0 0
      %432 = vmatpush1.bf16.msra.mxu0 0
      %433 = vmatprep.subr.bf16.mxu0 0
      %434 = vmatpush1.bf16.msra.mxu0 0
      %435 = vmatprep.subr.bf16.mxu0 0
      %436 = vmatpush1.bf16.msra.mxu0 0
      %437 = vmatprep.subr.bf16.mxu0 0
      %438 = vmatpush1.bf16.msra.mxu0 0
      %439 = vmatprep.subr.bf16.mxu0 0
      %440 = vmatpush1.bf16.msra.mxu0 0
      %441 = vmatprep.subr.bf16.mxu0 0
      %442 = vmatpush1.bf16.msra.mxu0 0
      %443 = vmatprep.subr.bf16.mxu0 0
      %444 = vmatpush1.bf16.msra.mxu0 0
      %445 = vmatprep.subr.bf16.mxu0 0
      %446 = vmatpush1.bf16.msra.mxu0 0
      %447 = vmatprep.subr.bf16.mxu0 0
      %448 = vmatpush1.bf16.msra.mxu0 0
      %449 = vmatprep.subr.bf16.mxu0 0
      %450 = vmatpush1.bf16.msra.mxu0 0
      %451 = vmatprep.subr.bf16.mxu0 0
      %452 = vmatpush1.bf16.msra.mxu0 0
      %453 = vmatprep.mubr.bf16.mxu0 0
      %454 = vmatmul.mubr.bf16.gmra.mrb[0].mxu0 %v356
      %v455 = vpop.f32.mrb[0].mxu0
      %v456 = vadd.f32 %v407, %v455
      %v457 = vpop.f32.mrb[0].mxu0
      %v458 = vpop.f32.mrb[0].mxu0
      %v459 = vpop.f32.mrb[0].mxu0
      %460 = vdwg.mxu0
      %462 = vrot.lane.b32.xlu0 %v393, 120
      %v463 = vpop.permute.xlu0 %462
      %465 = vrot.lane.b32.xlu0 %v393, 112
      %v466 = vpop.permute.xlu0 %465
      %468 = vrot.lane.b32.xlu0 %v393, 104
      %v469 = vpop.permute.xlu0 %468
      %v471 = vcombine.low %v393, %v466
      %v472 = vcombine.high %v393, %v466
      %v474 = vunpack.c.l.s4 1983009808
      %v475 = vunpack.c.0.s8 %v474
      %v476 = vlaneseq
      %v477 = vshrl.u32 %v476, 7
      %v478 = vsub.s32 %v475, %v477
      %v479 = vrot.slane %v471, %v478
      %v481 = vunpack.c.l.s4 1983009808
      %v482 = vunpack.c.0.s8 %v481
      %v483 = vlaneseq
      %v484 = vshrl.u32 %v483, 7
      %v485 = vsub.s32 %v482, %v484
      %v486 = vrot.slane %v472, %v485
      %v487 = vcombine.low %v463, %v469
      %v488 = vcombine.high %v463, %v469
      %v490 = vunpack.c.l.s4 1983009808
      %v491 = vunpack.c.0.s8 %v490
      %v492 = vlaneseq
      %v493 = vshrl.u32 %v492, 7
      %v494 = vsub.s32 %v491, %v493
      %v495 = vrot.slane %v487, %v494
      %v497 = vunpack.c.l.s4 1983009808
      %v498 = vunpack.c.0.s8 %v497
      %v499 = vlaneseq
      %v500 = vshrl.u32 %v499, 7
      %v501 = vsub.s32 %v498, %v500
      %v502 = vrot.slane %v488, %v501
      %v503 = vcombine.low %v479, %v495
      %v504 = vcombine.high %v479, %v495
      %v506 = vunpack.c.l.s4 1934713408
      %v507 = vunpack.c.0.s8 %v506
      %v508 = vlaneseq
      %v509 = vshrl.u32 %v508, 7
      %v510 = vsub.s32 %v507, %v509
      %v511 = vrot.slane %v503, %v510
      %v513 = vunpack.c.l.s4 1934713408
      %v514 = vunpack.c.0.s8 %v513
      %v515 = vlaneseq
      %v516 = vshrl.u32 %v515, 7
      %v517 = vsub.s32 %v514, %v516
      %v518 = vrot.slane %v504, %v517
      %v519 = vcombine.low %v486, %v502
      %v520 = vcombine.high %v486, %v502
      %v522 = vunpack.c.l.s4 1934713408
      %v523 = vunpack.c.0.s8 %v522
      %v524 = vlaneseq
      %v525 = vshrl.u32 %v524, 7
      %v526 = vsub.s32 %v523, %v525
      %v527 = vrot.slane %v519, %v526
      %v529 = vunpack.c.l.s4 1934713408
      %v530 = vunpack.c.0.s8 %v529
      %v531 = vlaneseq
      %v532 = vshrl.u32 %v531, 7
      %v533 = vsub.s32 %v530, %v532
      %v534 = vrot.slane %v520, %v533
      %v535 = vcombine.high %v511, 0.0
      %v536 = vcombine.high %v518, 0.0
      %v537 = vcombine.high %v527, 0.0
      %v538 = vcombine.high %v534, 0.0
      %v539 = vcombine.low %v511, %v518
      %v541 = vunpack.c.l.s4 1983009808
      %v542 = vunpack.c.0.s8 %v541
      %v543 = vlaneseq
      %v544 = vshrl.u32 %v543, 7
      %v545 = vsub.s32 %v542, %v544
      %v546 = vrot.slane %v539, %v545
      %v547 = vcombine.low %v535, %v536
      %v549 = vunpack.c.l.s4 1983009808
      %v550 = vunpack.c.0.s8 %v549
      %v551 = vlaneseq
      %v552 = vshrl.u32 %v551, 7
      %v553 = vsub.s32 %v550, %v552
      %v554 = vrot.slane %v547, %v553
      %v555 = vcombine.low %v527, %v534
      %v557 = vunpack.c.l.s4 1983009808
      %v558 = vunpack.c.0.s8 %v557
      %v559 = vlaneseq
      %v560 = vshrl.u32 %v559, 7
      %v561 = vsub.s32 %v558, %v560
      %v562 = vrot.slane %v555, %v561
      %v563 = vcombine.low %v537, %v538
      %v565 = vunpack.c.l.s4 1983009808
      %v566 = vunpack.c.0.s8 %v565
      %v567 = vlaneseq
      %v568 = vshrl.u32 %v567, 7
      %v569 = vsub.s32 %v566, %v568
      %v570 = vrot.slane %v563, %v569
      %v571 = vcombine.low %v546, %v554
      %v572 = vcombine.high %v546, %v554
      %v574 = vunpack.c.l.s4 1934713408
      %v575 = vunpack.c.0.s8 %v574
      %v576 = vlaneseq
      %v577 = vshrl.u32 %v576, 7
      %v578 = vsub.s32 %v575, %v577
      %v579 = vrot.slane %v571, %v578
      %v581 = vunpack.c.l.s4 1934713408
      %v582 = vunpack.c.0.s8 %v581
      %v583 = vlaneseq
      %v584 = vshrl.u32 %v583, 7
      %v585 = vsub.s32 %v582, %v584
      %v586 = vrot.slane %v572, %v585
      %v587 = vcombine.low %v562, %v570
      %v588 = vcombine.high %v562, %v570
      %v590 = vunpack.c.l.s4 1934713408
      %v591 = vunpack.c.0.s8 %v590
      %v592 = vlaneseq
      %v593 = vshrl.u32 %v592, 7
      %v594 = vsub.s32 %v591, %v593
      %v595 = vrot.slane %v587, %v594
      %v597 = vunpack.c.l.s4 1934713408
      %v598 = vunpack.c.0.s8 %v597
      %v599 = vlaneseq
      %v600 = vshrl.u32 %v599, 7
      %v601 = vsub.s32 %v598, %v600
      %v602 = vrot.slane %v588, %v601
      %v603 = vcombine.low %v579, %v595
      %v604 = vcombine.high %v579, %v595
      %v605 = vcombine.low %v586, %v602
      %v606 = vcombine.high %v586, %v602
      %v607 = vpack.c.bf16 %v603, %v603
      %v608 = vpack.c.bf16 %v604, %v604
      %v609 = vpack.c.bf16 %v605, %v605
      %v610 = vpack.c.bf16 %v606, %v606
      %612 = vrot.lane.b32.xlu0 %v456, 120
      %v613 = vpop.permute.xlu0 %612
      %615 = vrot.lane.b32.xlu0 %v456, 112
      %v616 = vpop.permute.xlu0 %615
      %618 = vrot.lane.b32.xlu0 %v456, 104
      %v619 = vpop.permute.xlu0 %618
      %v621 = vcombine.low %v456, %v616
      %v622 = vcombine.high %v456, %v616
      %v624 = vunpack.c.l.s4 1983009808
      %v625 = vunpack.c.0.s8 %v624
      %v626 = vlaneseq
      %v627 = vshrl.u32 %v626, 7
      %v628 = vsub.s32 %v625, %v627
      %v629 = vrot.slane %v621, %v628
      %v631 = vunpack.c.l.s4 1983009808
      %v632 = vunpack.c.0.s8 %v631
      %v633 = vlaneseq
      %v634 = vshrl.u32 %v633, 7
      %v635 = vsub.s32 %v632, %v634
      %v636 = vrot.slane %v622, %v635
      %v637 = vcombine.low %v613, %v619
      %v638 = vcombine.high %v613, %v619
      %v640 = vunpack.c.l.s4 1983009808
      %v641 = vunpack.c.0.s8 %v640
      %v642 = vlaneseq
      %v643 = vshrl.u32 %v642, 7
      %v644 = vsub.s32 %v641, %v643
      %v645 = vrot.slane %v637, %v644
      %v647 = vunpack.c.l.s4 1983009808
      %v648 = vunpack.c.0.s8 %v647
      %v649 = vlaneseq
      %v650 = vshrl.u32 %v649, 7
      %v651 = vsub.s32 %v648, %v650
      %v652 = vrot.slane %v638, %v651
      %v653 = vcombine.low %v629, %v645
      %v654 = vcombine.high %v629, %v645
      %v656 = vunpack.c.l.s4 1934713408
      %v657 = vunpack.c.0.s8 %v656
      %v658 = vlaneseq
      %v659 = vshrl.u32 %v658, 7
      %v660 = vsub.s32 %v657, %v659
      %v661 = vrot.slane %v653, %v660
      %v663 = vunpack.c.l.s4 1934713408
      %v664 = vunpack.c.0.s8 %v663
      %v665 = vlaneseq
      %v666 = vshrl.u32 %v665, 7
      %v667 = vsub.s32 %v664, %v666
      %v668 = vrot.slane %v654, %v667
      %v669 = vcombine.low %v636, %v652
      %v670 = vcombine.high %v636, %v652
      %v672 = vunpack.c.l.s4 1934713408
      %v673 = vunpack.c.0.s8 %v672
      %v674 = vlaneseq
      %v675 = vshrl.u32 %v674, 7
      %v676 = vsub.s32 %v673, %v675
      %v677 = vrot.slane %v669, %v676
      %v679 = vunpack.c.l.s4 1934713408
      %v680 = vunpack.c.0.s8 %v679
      %v681 = vlaneseq
      %v682 = vshrl.u32 %v681, 7
      %v683 = vsub.s32 %v680, %v682
      %v684 = vrot.slane %v670, %v683
      %v685 = vcombine.high %v661, 0.0
      %v686 = vcombine.high %v668, 0.0
      %v687 = vcombine.high %v677, 0.0
      %v688 = vcombine.high %v684, 0.0
      %v689 = vcombine.low %v661, %v668
      %v691 = vunpack.c.l.s4 1983009808
      %v692 = vunpack.c.0.s8 %v691
      %v693 = vlaneseq
      %v694 = vshrl.u32 %v693, 7
      %v695 = vsub.s32 %v692, %v694
      %v696 = vrot.slane %v689, %v695
      %v697 = vcombine.low %v685, %v686
      %v699 = vunpack.c.l.s4 1983009808
      %v700 = vunpack.c.0.s8 %v699
      %v701 = vlaneseq
      %v702 = vshrl.u32 %v701, 7
      %v703 = vsub.s32 %v700, %v702
      %v704 = vrot.slane %v697, %v703
      %v705 = vcombine.low %v677, %v684
      %v707 = vunpack.c.l.s4 1983009808
      %v708 = vunpack.c.0.s8 %v707
      %v709 = vlaneseq
      %v710 = vshrl.u32 %v709, 7
      %v711 = vsub.s32 %v708, %v710
      %v712 = vrot.slane %v705, %v711
      %v713 = vcombine.low %v687, %v688
      %v715 = vunpack.c.l.s4 1983009808
      %v716 = vunpack.c.0.s8 %v715
      %v717 = vlaneseq
      %v718 = vshrl.u32 %v717, 7
      %v719 = vsub.s32 %v716, %v718
      %v720 = vrot.slane %v713, %v719
      %v721 = vcombine.low %v696, %v704
      %v722 = vcombine.high %v696, %v704
      %v724 = vunpack.c.l.s4 1934713408
      %v725 = vunpack.c.0.s8 %v724
      %v726 = vlaneseq
      %v727 = vshrl.u32 %v726, 7
      %v728 = vsub.s32 %v725, %v727
      %v729 = vrot.slane %v721, %v728
      %v731 = vunpack.c.l.s4 1934713408
      %v732 = vunpack.c.0.s8 %v731
      %v733 = vlaneseq
      %v734 = vshrl.u32 %v733, 7
      %v735 = vsub.s32 %v732, %v734
      %v736 = vrot.slane %v722, %v735
      %v737 = vcombine.low %v712, %v720
      %v738 = vcombine.high %v712, %v720
      %v740 = vunpack.c.l.s4 1934713408
      %v741 = vunpack.c.0.s8 %v740
      %v742 = vlaneseq
      %v743 = vshrl.u32 %v742, 7
      %v744 = vsub.s32 %v741, %v743
      %v745 = vrot.slane %v737, %v744
      %v747 = vunpack.c.l.s4 1934713408
      %v748 = vunpack.c.0.s8 %v747
      %v749 = vlaneseq
      %v750 = vshrl.u32 %v749, 7
      %v751 = vsub.s32 %v748, %v750
      %v752 = vrot.slane %v738, %v751
      %v753 = vcombine.low %v729, %v745
      %v754 = vcombine.high %v729, %v745
      %v755 = vcombine.low %v736, %v752
      %v756 = vcombine.high %v736, %v752
      %v757 = vpack.c.bf16 %v753, %v753
      %v758 = vpack.c.bf16 %v754, %v754
      %v759 = vpack.c.bf16 %v755, %v755
      %v760 = vpack.c.bf16 %v756, %v756
      %761 = vrot.lane.b32.xlu0 %v456, 96
      %v762 = vpop.permute.xlu0 %761
      %763 = vrot.lane.b32.xlu0 %v613, 96
      %v764 = vpop.permute.xlu0 %763
      %765 = vrot.lane.b32.xlu0 %v616, 96
      %v766 = vpop.permute.xlu0 %765
      %767 = vrot.lane.b32.xlu0 %v619, 96
      %v768 = vpop.permute.xlu0 %767
      %v773 = vcombine.low %v762, %v766
      %v774 = vcombine.high %v762, %v766
      %v776 = vunpack.c.l.s4 1983009808
      %v777 = vunpack.c.0.s8 %v776
      %v778 = vlaneseq
      %v779 = vshrl.u32 %v778, 7
      %v780 = vsub.s32 %v777, %v779
      %v781 = vrot.slane %v773, %v780
      %v783 = vunpack.c.l.s4 1983009808
      %v784 = vunpack.c.0.s8 %v783
      %v785 = vlaneseq
      %v786 = vshrl.u32 %v785, 7
      %v787 = vsub.s32 %v784, %v786
      %v788 = vrot.slane %v774, %v787
      %v789 = vcombine.low %v764, %v768
      %v790 = vcombine.high %v764, %v768
      %v792 = vunpack.c.l.s4 1983009808
      %v793 = vunpack.c.0.s8 %v792
      %v794 = vlaneseq
      %v795 = vshrl.u32 %v794, 7
      %v796 = vsub.s32 %v793, %v795
      %v797 = vrot.slane %v789, %v796
      %v799 = vunpack.c.l.s4 1983009808
      %v800 = vunpack.c.0.s8 %v799
      %v801 = vlaneseq
      %v802 = vshrl.u32 %v801, 7
      %v803 = vsub.s32 %v800, %v802
      %v804 = vrot.slane %v790, %v803
      %v805 = vcombine.low %v781, %v797
      %v806 = vcombine.high %v781, %v797
      %v808 = vunpack.c.l.s4 1934713408
      %v809 = vunpack.c.0.s8 %v808
      %v810 = vlaneseq
      %v811 = vshrl.u32 %v810, 7
      %v812 = vsub.s32 %v809, %v811
      %v813 = vrot.slane %v805, %v812
      %v815 = vunpack.c.l.s4 1934713408
      %v816 = vunpack.c.0.s8 %v815
      %v817 = vlaneseq
      %v818 = vshrl.u32 %v817, 7
      %v819 = vsub.s32 %v816, %v818
      %v820 = vrot.slane %v806, %v819
      %v821 = vcombine.low %v788, %v804
      %v822 = vcombine.high %v788, %v804
      %v824 = vunpack.c.l.s4 1934713408
      %v825 = vunpack.c.0.s8 %v824
      %v826 = vlaneseq
      %v827 = vshrl.u32 %v826, 7
      %v828 = vsub.s32 %v825, %v827
      %v829 = vrot.slane %v821, %v828
      %v831 = vunpack.c.l.s4 1934713408
      %v832 = vunpack.c.0.s8 %v831
      %v833 = vlaneseq
      %v834 = vshrl.u32 %v833, 7
      %v835 = vsub.s32 %v832, %v834
      %v836 = vrot.slane %v822, %v835
      %v837 = vcombine.high %v813, 0.0
      %v838 = vcombine.high %v820, 0.0
      %v839 = vcombine.high %v829, 0.0
      %v840 = vcombine.high %v836, 0.0
      %v841 = vcombine.low %v813, %v820
      %v843 = vunpack.c.l.s4 1983009808
      %v844 = vunpack.c.0.s8 %v843
      %v845 = vlaneseq
      %v846 = vshrl.u32 %v845, 7
      %v847 = vsub.s32 %v844, %v846
      %v848 = vrot.slane %v841, %v847
      %v849 = vcombine.low %v837, %v838
      %v851 = vunpack.c.l.s4 1983009808
      %v852 = vunpack.c.0.s8 %v851
      %v853 = vlaneseq
      %v854 = vshrl.u32 %v853, 7
      %v855 = vsub.s32 %v852, %v854
      %v856 = vrot.slane %v849, %v855
      %v857 = vcombine.low %v829, %v836
      %v859 = vunpack.c.l.s4 1983009808
      %v860 = vunpack.c.0.s8 %v859
      %v861 = vlaneseq
      %v862 = vshrl.u32 %v861, 7
      %v863 = vsub.s32 %v860, %v862
      %v864 = vrot.slane %v857, %v863
      %v865 = vcombine.low %v839, %v840
      %v867 = vunpack.c.l.s4 1983009808
      %v868 = vunpack.c.0.s8 %v867
      %v869 = vlaneseq
      %v870 = vshrl.u32 %v869, 7
      %v871 = vsub.s32 %v868, %v870
      %v872 = vrot.slane %v865, %v871
      %v873 = vcombine.low %v848, %v856
      %v874 = vcombine.high %v848, %v856
      %v876 = vunpack.c.l.s4 1934713408
      %v877 = vunpack.c.0.s8 %v876
      %v878 = vlaneseq
      %v879 = vshrl.u32 %v878, 7
      %v880 = vsub.s32 %v877, %v879
      %v881 = vrot.slane %v873, %v880
      %v883 = vunpack.c.l.s4 1934713408
      %v884 = vunpack.c.0.s8 %v883
      %v885 = vlaneseq
      %v886 = vshrl.u32 %v885, 7
      %v887 = vsub.s32 %v884, %v886
      %v888 = vrot.slane %v874, %v887
      %v889 = vcombine.low %v864, %v872
      %v890 = vcombine.high %v864, %v872
      %v892 = vunpack.c.l.s4 1934713408
      %v893 = vunpack.c.0.s8 %v892
      %v894 = vlaneseq
      %v895 = vshrl.u32 %v894, 7
      %v896 = vsub.s32 %v893, %v895
      %v897 = vrot.slane %v889, %v896
      %v899 = vunpack.c.l.s4 1934713408
      %v900 = vunpack.c.0.s8 %v899
      %v901 = vlaneseq
      %v902 = vshrl.u32 %v901, 7
      %v903 = vsub.s32 %v900, %v902
      %v904 = vrot.slane %v890, %v903
      %v905 = vcombine.low %v881, %v897
      %v906 = vcombine.high %v881, %v897
      %v907 = vcombine.low %v888, %v904
      %v908 = vcombine.high %v888, %v904
      %v909 = vpack.c.bf16 %v905, %v905
      %v910 = vpack.c.bf16 %v906, %v906
      %v911 = vpack.c.bf16 %v907, %v907
      %v912 = vpack.c.bf16 %v908, %v908
      %vm913 = vcmask 64512
      %v915 = vsel %vm913, %v607, 0
      %v918 = vsel %vm913, %v757, 0
      %920 = vmatprep.subr.bf16.mxu0 0
      %921 = vmatpush1.bf16.xpose.msra.mxu0 %v918
      %922 = vmatprep.subr.bf16.mxu0 0
      %923 = vmatpush1.bf16.xpose.msra.mxu0 0
      %924 = vmatprep.subr.bf16.mxu0 0
      %925 = vmatpush1.bf16.xpose.msra.mxu0 0
      %926 = vmatprep.subr.bf16.mxu0 0
      %927 = vmatpush1.bf16.xpose.msra.mxu0 0
      %928 = vmatprep.subr.bf16.mxu0 0
      %929 = vmatpush1.bf16.xpose.msra.mxu0 0
      %930 = vmatprep.subr.bf16.mxu0 0
      %931 = vmatpush1.bf16.xpose.msra.mxu0 0
      %932 = vmatprep.subr.bf16.mxu0 0
      %933 = vmatpush1.bf16.xpose.msra.mxu0 0
      %934 = vmatprep.subr.bf16.mxu0 0
      %935 = vmatpush1.bf16.xpose.msra.mxu0 0
      %936 = vmatprep.subr.bf16.mxu0 0
      %937 = vmatpush1.bf16.xpose.msra.mxu0 0
      %938 = vmatprep.subr.bf16.mxu0 0
      %939 = vmatpush1.bf16.xpose.msra.mxu0 0
      %940 = vmatprep.subr.bf16.mxu0 0
      %941 = vmatpush1.bf16.xpose.msra.mxu0 0
      %942 = vmatprep.subr.bf16.mxu0 0
      %943 = vmatpush1.bf16.xpose.msra.mxu0 0
      %944 = vmatprep.subr.bf16.mxu0 0
      %945 = vmatpush1.bf16.xpose.msra.mxu0 0
      %946 = vmatprep.subr.bf16.mxu0 0
      %947 = vmatpush1.bf16.xpose.msra.mxu0 0
      %948 = vmatprep.subr.bf16.mxu0 0
      %949 = vmatpush1.bf16.xpose.msra.mxu0 0
      %950 = vmatprep.subr.bf16.mxu0 0
      %951 = vmatpush1.bf16.xpose.msra.mxu0 0
      %952 = vmatprep.mubr.bf16.mxu0 0
      %953 = vmatmul.mubr.bf16.gmra.mrb[0].mxu0 %v915
      %v954 = vpop.f32.mrb[0].mxu0
      %v955 = vadd.f32 0.0, %v954
      %v956 = vpop.f32.mrb[0].mxu0
      %v957 = vpop.f32.mrb[0].mxu0
      %v958 = vpop.f32.mrb[0].mxu0
      %959 = vdwg.mxu0
      %v961 = vsel %vm913, %v608, 0
      %v964 = vsel %vm913, %v758, 0
      %966 = vmatprep.subr.bf16.mxu0 0
      %967 = vmatpush1.bf16.xpose.msra.mxu0 %v964
      %968 = vmatprep.subr.bf16.mxu0 0
      %969 = vmatpush1.bf16.xpose.msra.mxu0 0
      %970 = vmatprep.subr.bf16.mxu0 0
      %971 = vmatpush1.bf16.xpose.msra.mxu0 0
      %972 = vmatprep.subr.bf16.mxu0 0
      %973 = vmatpush1.bf16.xpose.msra.mxu0 0
      %974 = vmatprep.subr.bf16.mxu0 0
      %975 = vmatpush1.bf16.xpose.msra.mxu0 0
      %976 = vmatprep.subr.bf16.mxu0 0
      %977 = vmatpush1.bf16.xpose.msra.mxu0 0
      %978 = vmatprep.subr.bf16.mxu0 0
      %979 = vmatpush1.bf16.xpose.msra.mxu0 0
      %980 = vmatprep.subr.bf16.mxu0 0
      %981 = vmatpush1.bf16.xpose.msra.mxu0 0
      %982 = vmatprep.subr.bf16.mxu0 0
      %983 = vmatpush1.bf16.xpose.msra.mxu0 0
      %984 = vmatprep.subr.bf16.mxu0 0
      %985 = vmatpush1.bf16.xpose.msra.mxu0 0
      %986 = vmatprep.subr.bf16.mxu0 0
      %987 = vmatpush1.bf16.xpose.msra.mxu0 0
      %988 = vmatprep.subr.bf16.mxu0 0
      %989 = vmatpush1.bf16.xpose.msra.mxu0 0
      %990 = vmatprep.subr.bf16.mxu0 0
      %991 = vmatpush1.bf16.xpose.msra.mxu0 0
      %992 = vmatprep.subr.bf16.mxu0 0
      %993 = vmatpush1.bf16.xpose.msra.mxu0 0
      %994 = vmatprep.subr.bf16.mxu0 0
      %995 = vmatpush1.bf16.xpose.msra.mxu0 0
      %996 = vmatprep.subr.bf16.mxu0 0
      %997 = vmatpush1.bf16.xpose.msra.mxu0 0
      %998 = vmatprep.mubr.bf16.mxu0 0
      %999 = vmatmul.mubr.bf16.gmra.mrb[0].mxu0 %v961
      %v1000 = vpop.f32.mrb[0].mxu0
      %v1001 = vadd.f32 0.0, %v1000
      %v1002 = vpop.f32.mrb[0].mxu0
      %v1003 = vpop.f32.mrb[0].mxu0
      %v1004 = vpop.f32.mrb[0].mxu0
      %1005 = vdwg.mxu0
      %v1007 = vsel %vm913, %v609, 0
      %v1010 = vsel %vm913, %v759, 0
      %1012 = vmatprep.subr.bf16.mxu0 0
      %1013 = vmatpush1.bf16.xpose.msra.mxu0 %v1010
      %1014 = vmatprep.subr.bf16.mxu0 0
      %1015 = vmatpush1.bf16.xpose.msra.mxu0 0
      %1016 = vmatprep.subr.bf16.mxu0 0
      %1017 = vmatpush1.bf16.xpose.msra.mxu0 0
      %1018 = vmatprep.subr.bf16.mxu0 0
      %1019 = vmatpush1.bf16.xpose.msra.mxu0 0
      %1020 = vmatprep.subr.bf16.mxu0 0
      %1021 = vmatpush1.bf16.xpose.msra.mxu0 0
      %1022 = vmatprep.subr.bf16.mxu0 0
      %1023 = vmatpush1.bf16.xpose.msra.mxu0 0
      %1024 = vmatprep.subr.bf16.mxu0 0
      %1025 = vmatpush1.bf16.xpose.msra.mxu0 0
      %1026 = vmatprep.subr.bf16.mxu0 0
      %1027 = vmatpush1.bf16.xpose.msra.mxu0 0
      %1028 = vmatprep.subr.bf16.mxu0 0
      %1029 = vmatpush1.bf16.xpose.msra.mxu0 0
      %1030 = vmatprep.subr.bf16.mxu0 0
      %1031 = vmatpush1.bf16.xpose.msra.mxu0 0
      %1032 = vmatprep.subr.bf16.mxu0 0
      %1033 = vmatpush1.bf16.xpose.msra.mxu0 0
      %1034 = vmatprep.subr.bf16.mxu0 0
      %1035 = vmatpush1.bf16.xpose.msra.mxu0 0
      %1036 = vmatprep.subr.bf16.mxu0 0
      %1037 = vmatpush1.bf16.xpose.msra.mxu0 0
      %1038 = vmatprep.subr.bf16.mxu0 0
      %1039 = vmatpush1.bf16.xpose.msra.mxu0 0
      %1040 = vmatprep.subr.bf16.mxu0 0
      %1041 = vmatpush1.bf16.xpose.msra.mxu0 0
      %1042 = vmatprep.subr.bf16.mxu0 0
      %1043 = vmatpush1.bf16.xpose.msra.mxu0 0
      %1044 = vmatprep.mubr.bf16.mxu0 0
      %1045 = vmatmul.mubr.bf16.gmra.mrb[0].mxu0 %v1007
      %v1046 = vpop.f32.mrb[0].mxu0
      %v1047 = vadd.f32 0.0, %v1046
      %v1048 = vpop.f32.mrb[0].mxu0
      %v1049 = vpop.f32.mrb[0].mxu0
      %v1050 = vpop.f32.mrb[0].mxu0
      %1051 = vdwg.mxu0
      %v1053 = vsel %vm913, %v610, 0
      %v1056 = vsel %vm913, %v760, 0
      %1058 = vmatprep.subr.bf16.mxu0 0
      %1059 = vmatpush1.bf16.xpose.msra.mxu0 %v1056
      %1060 = vmatprep.subr.bf16.mxu0 0
      %1061 = vmatpush1.bf16.xpose.msra.mxu0 0
      %1062 = vmatprep.subr.bf16.mxu0 0
      %1063 = vmatpush1.bf16.xpose.msra.mxu0 0
      %1064 = vmatprep.subr.bf16.mxu0 0
      %1065 = vmatpush1.bf16.xpose.msra.mxu0 0
      %1066 = vmatprep.subr.bf16.mxu0 0
      %1067 = vmatpush1.bf16.xpose.msra.mxu0 0
      %1068 = vmatprep.subr.bf16.mxu0 0
      %1069 = vmatpush1.bf16.xpose.msra.mxu0 0
      %1070 = vmatprep.subr.bf16.mxu0 0
      %1071 = vmatpush1.bf16.xpose.msra.mxu0 0
      %1072 = vmatprep.subr.bf16.mxu0 0
      %1073 = vmatpush1.bf16.xpose.msra.mxu0 0
      %1074 = vmatprep.subr.bf16.mxu0 0
      %1075 = vmatpush1.bf16.xpose.msra.mxu0 0
      %1076 = vmatprep.subr.bf16.mxu0 0
      %1077 = vmatpush1.bf16.xpose.msra.mxu0 0
      %1078 = vmatprep.subr.bf16.mxu0 0
      %1079 = vmatpush1.bf16.xpose.msra.mxu0 0
      %1080 = vmatprep.subr.bf16.mxu0 0
      %1081 = vmatpush1.bf16.xpose.msra.mxu0 0
      %1082 = vmatprep.subr.bf16.mxu0 0
      %1083 = vmatpush1.bf16.xpose.msra.mxu0 0
      %1084 = vmatprep.subr.bf16.mxu0 0
      %1085 = vmatpush1.bf16.xpose.msra.mxu0 0
      %1086 = vmatprep.subr.bf16.mxu0 0
      %1087 = vmatpush1.bf16.xpose.msra.mxu0 0
      %1088 = vmatprep.subr.bf16.mxu0 0
      %1089 = vmatpush1.bf16.xpose.msra.mxu0 0
      %1090 = vmatprep.mubr.bf16.mxu0 0
      %1091 = vmatmul.mubr.bf16.gmra.mrb[0].mxu0 %v1053
      %v1092 = vpop.f32.mrb[0].mxu0
      %v1093 = vadd.f32 0.0, %v1092
      %v1094 = vpop.f32.mrb[0].mxu0
      %v1095 = vpop.f32.mrb[0].mxu0
      %v1096 = vpop.f32.mrb[0].mxu0
      %1097 = vdwg.mxu0
      %v1098 = vmul.f32 %v955, 0.35355338
      %v1099 = vmul.f32 %v1001, 0.35355338
      %v1100 = vmul.f32 %v1047, 0.35355338
      %v1101 = vmul.f32 %v1093, 0.35355338
      %v1102 = vlaneseq
      %v1103 = vshrl.u32 %v1102, 7
      %v1104 = vlaneseq
      %v1105 = vand.u32 %v1104, 127
      %vm1106 = vcmp.gt.s32.totalorder %v1105, %v1103
      %v1107 = vsel %vm1106, 1, 0
      %vm1108 = vcmp.eq.s32.totalorder %v1107, 1
      %v1109 = vsel %vm1108, -1e+30, %v1098
      %v1110 = vsel %vm1108, -1e+30, %v1099
      %v1111 = vsel %vm1108, -1e+30, %v1100
      %v1112 = vsel %vm1108, -1e+30, %v1101
      %v1113 = vsel %vm913, %v1109, -inf
      %1114 = vmax.xlane.f32.xlu0 %v1113
      %v1115 = vpop.xlane.xlu0 %1114
      %v1116 = vsel %vm913, %v1110, -inf
      %1117 = vmax.xlane.f32.xlu0 %v1116
      %v1118 = vpop.xlane.xlu0 %1117
      %v1119 = vsel %vm913, %v1111, -inf
      %1120 = vmax.xlane.f32.xlu0 %v1119
      %v1121 = vpop.xlane.xlu0 %1120
      %v1122 = vsel %vm913, %v1112, -inf
      %1123 = vmax.xlane.f32.xlu0 %v1122
      %v1124 = vpop.xlane.xlu0 %1123
      %v1125 = vsub.f32 %v1109, %v1115
      %v1126 = vsub.f32 %v1110, %v1118
      %v1127 = vsub.f32 %v1111, %v1121
      %v1128 = vsub.f32 %v1112, %v1124
      %v1129 = vmul.f32 %v1125, 1.442695
      %v1130 = vpow.pop %v1129
      %v1131 = vmul.f32 %v1126, 1.442695
      %v1132 = vpow.pop %v1131
      %v1133 = vmul.f32 %v1127, 1.442695
      %v1134 = vpow.pop %v1133
      %v1135 = vmul.f32 %v1128, 1.442695
      %v1136 = vpow.pop %v1135
      %v1137 = vsel %vm913, %v1130, 0.0
      %1138 = vadd.xlane.f32.xlu0 %v1137
      %v1139 = vpop.xlane.xlu0 %1138
      %v1140 = vsel %vm913, %v1132, 0.0
      %1141 = vadd.xlane.f32.xlu0 %v1140
      %v1142 = vpop.xlane.xlu0 %1141
      %v1143 = vsel %vm913, %v1134, 0.0
      %1144 = vadd.xlane.f32.xlu0 %v1143
      %v1145 = vpop.xlane.xlu0 %1144
      %v1146 = vsel %vm913, %v1136, 0.0
      %1147 = vadd.xlane.f32.xlu0 %v1146
      %v1148 = vpop.xlane.xlu0 %1147
      %v1149 = vrcp.pop %v1139
      %v1150 = vmul.f32 %v1130, %v1149
      %v1151 = vrcp.pop %v1142
      %v1152 = vmul.f32 %v1132, %v1151
      %v1153 = vrcp.pop %v1145
      %v1154 = vmul.f32 %v1134, %v1153
      %v1155 = vrcp.pop %v1148
      %v1156 = vmul.f32 %v1136, %v1155
      %v1157 = vpack.c.bf16 %v1150, %v1150
      %v1158 = vpack.c.bf16 %v1152, %v1152
      %v1159 = vpack.c.bf16 %v1154, %v1154
      %v1160 = vpack.c.bf16 %v1156, %v1156
      %v1162 = vsel %vm913, %v1157, 0
      %vm1164 = vcmask 1043456
      %v1166 = vsel %vm1164, %v909, 0
      %1168 = vmatprep.subr.bf16.mxu0 0
      %1169 = vmatpush1.bf16.msra.mxu0 %v1166
      %1170 = vmatprep.subr.bf16.mxu0 0
      %1171 = vmatpush1.bf16.msra.mxu0 0
      %1172 = vmatprep.subr.bf16.mxu0 0
      %1173 = vmatpush1.bf16.msra.mxu0 0
      %1174 = vmatprep.subr.bf16.mxu0 0
      %1175 = vmatpush1.bf16.msra.mxu0 0
      %1176 = vmatprep.subr.bf16.mxu0 0
      %1177 = vmatpush1.bf16.msra.mxu0 0
      %1178 = vmatprep.subr.bf16.mxu0 0
      %1179 = vmatpush1.bf16.msra.mxu0 0
      %1180 = vmatprep.subr.bf16.mxu0 0
      %1181 = vmatpush1.bf16.msra.mxu0 0
      %1182 = vmatprep.subr.bf16.mxu0 0
      %1183 = vmatpush1.bf16.msra.mxu0 0
      %1184 = vmatprep.subr.bf16.mxu0 0
      %1185 = vmatpush1.bf16.msra.mxu0 0
      %1186 = vmatprep.subr.bf16.mxu0 0
      %1187 = vmatpush1.bf16.msra.mxu0 0
      %1188 = vmatprep.subr.bf16.mxu0 0
      %1189 = vmatpush1.bf16.msra.mxu0 0
      %1190 = vmatprep.subr.bf16.mxu0 0
      %1191 = vmatpush1.bf16.msra.mxu0 0
      %1192 = vmatprep.subr.bf16.mxu0 0
      %1193 = vmatpush1.bf16.msra.mxu0 0
      %1194 = vmatprep.subr.bf16.mxu0 0
      %1195 = vmatpush1.bf16.msra.mxu0 0
      %1196 = vmatprep.subr.bf16.mxu0 0
      %1197 = vmatpush1.bf16.msra.mxu0 0
      %1198 = vmatprep.subr.bf16.mxu0 0
      %1199 = vmatpush1.bf16.msra.mxu0 0
      %1200 = vmatprep.mubr.bf16.mxu0 0
      %1201 = vmatmul.mubr.bf16.gmra.mrb[0].mxu0 %v1162
      %v1202 = vpop.f32.mrb[0].mxu0
      %v1203 = vadd.f32 0.0, %v1202
      %v1204 = vpop.f32.mrb[0].mxu0
      %v1205 = vpop.f32.mrb[0].mxu0
      %v1206 = vpop.f32.mrb[0].mxu0
      %1207 = vdwg.mxu0
      %v1209 = vsel %vm913, %v1158, 0
      %v1212 = vsel %vm1164, %v910, 0
      %1214 = vmatprep.subr.bf16.mxu0 0
      %1215 = vmatpush1.bf16.msra.mxu0 %v1212
      %1216 = vmatprep.subr.bf16.mxu0 0
      %1217 = vmatpush1.bf16.msra.mxu0 0
      %1218 = vmatprep.subr.bf16.mxu0 0
      %1219 = vmatpush1.bf16.msra.mxu0 0
      %1220 = vmatprep.subr.bf16.mxu0 0
      %1221 = vmatpush1.bf16.msra.mxu0 0
      %1222 = vmatprep.subr.bf16.mxu0 0
      %1223 = vmatpush1.bf16.msra.mxu0 0
      %1224 = vmatprep.subr.bf16.mxu0 0
      %1225 = vmatpush1.bf16.msra.mxu0 0
      %1226 = vmatprep.subr.bf16.mxu0 0
      %1227 = vmatpush1.bf16.msra.mxu0 0
      %1228 = vmatprep.subr.bf16.mxu0 0
      %1229 = vmatpush1.bf16.msra.mxu0 0
      %1230 = vmatprep.subr.bf16.mxu0 0
      %1231 = vmatpush1.bf16.msra.mxu0 0
      %1232 = vmatprep.subr.bf16.mxu0 0
      %1233 = vmatpush1.bf16.msra.mxu0 0
      %1234 = vmatprep.subr.bf16.mxu0 0
      %1235 = vmatpush1.bf16.msra.mxu0 0
      %1236 = vmatprep.subr.bf16.mxu0 0
      %1237 = vmatpush1.bf16.msra.mxu0 0
      %1238 = vmatprep.subr.bf16.mxu0 0
      %1239 = vmatpush1.bf16.msra.mxu0 0
      %1240 = vmatprep.subr.bf16.mxu0 0
      %1241 = vmatpush1.bf16.msra.mxu0 0
      %1242 = vmatprep.subr.bf16.mxu0 0
      %1243 = vmatpush1.bf16.msra.mxu0 0
      %1244 = vmatprep.subr.bf16.mxu0 0
      %1245 = vmatpush1.bf16.msra.mxu0 0
      %1246 = vmatprep.mubr.bf16.mxu0 0
      %1247 = vmatmul.mubr.bf16.gmra.mrb[0].mxu0 %v1209
      %v1248 = vpop.f32.mrb[0].mxu0
      %v1249 = vadd.f32 0.0, %v1248
      %v1250 = vpop.f32.mrb[0].mxu0
      %v1251 = vpop.f32.mrb[0].mxu0
      %v1252 = vpop.f32.mrb[0].mxu0
      %1253 = vdwg.mxu0
      %v1255 = vsel %vm913, %v1159, 0
      %v1258 = vsel %vm1164, %v911, 0
      %1260 = vmatprep.subr.bf16.mxu0 0
      %1261 = vmatpush1.bf16.msra.mxu0 %v1258
      %1262 = vmatprep.subr.bf16.mxu0 0
      %1263 = vmatpush1.bf16.msra.mxu0 0
      %1264 = vmatprep.subr.bf16.mxu0 0
      %1265 = vmatpush1.bf16.msra.mxu0 0
      %1266 = vmatprep.subr.bf16.mxu0 0
      %1267 = vmatpush1.bf16.msra.mxu0 0
      %1268 = vmatprep.subr.bf16.mxu0 0
      %1269 = vmatpush1.bf16.msra.mxu0 0
      %1270 = vmatprep.subr.bf16.mxu0 0
      %1271 = vmatpush1.bf16.msra.mxu0 0
      %1272 = vmatprep.subr.bf16.mxu0 0
      %1273 = vmatpush1.bf16.msra.mxu0 0
      %1274 = vmatprep.subr.bf16.mxu0 0
      %1275 = vmatpush1.bf16.msra.mxu0 0
      %1276 = vmatprep.subr.bf16.mxu0 0
      %1277 = vmatpush1.bf16.msra.mxu0 0
      %1278 = vmatprep.subr.bf16.mxu0 0
      %1279 = vmatpush1.bf16.msra.mxu0 0
      %1280 = vmatprep.subr.bf16.mxu0 0
      %1281 = vmatpush1.bf16.msra.mxu0 0
      %1282 = vmatprep.subr.bf16.mxu0 0
      %1283 = vmatpush1.bf16.msra.mxu0 0
      %1284 = vmatprep.subr.bf16.mxu0 0
      %1285 = vmatpush1.bf16.msra.mxu0 0
      %1286 = vmatprep.subr.bf16.mxu0 0
      %1287 = vmatpush1.bf16.msra.mxu0 0
      %1288 = vmatprep.subr.bf16.mxu0 0
      %1289 = vmatpush1.bf16.msra.mxu0 0
      %1290 = vmatprep.subr.bf16.mxu0 0
      %1291 = vmatpush1.bf16.msra.mxu0 0
      %1292 = vmatprep.mubr.bf16.mxu0 0
      %1293 = vmatmul.mubr.bf16.gmra.mrb[0].mxu0 %v1255
      %v1294 = vpop.f32.mrb[0].mxu0
      %v1295 = vadd.f32 0.0, %v1294
      %v1296 = vpop.f32.mrb[0].mxu0
      %v1297 = vpop.f32.mrb[0].mxu0
      %v1298 = vpop.f32.mrb[0].mxu0
      %1299 = vdwg.mxu0
      %v1301 = vsel %vm913, %v1160, 0
      %v1304 = vsel %vm1164, %v912, 0
      %1306 = vmatprep.subr.bf16.mxu0 0
      %1307 = vmatpush1.bf16.msra.mxu0 %v1304
      %1308 = vmatprep.subr.bf16.mxu0 0
      %1309 = vmatpush1.bf16.msra.mxu0 0
      %1310 = vmatprep.subr.bf16.mxu0 0
      %1311 = vmatpush1.bf16.msra.mxu0 0
      %1312 = vmatprep.subr.bf16.mxu0 0
      %1313 = vmatpush1.bf16.msra.mxu0 0
      %1314 = vmatprep.subr.bf16.mxu0 0
      %1315 = vmatpush1.bf16.msra.mxu0 0
      %1316 = vmatprep.subr.bf16.mxu0 0
      %1317 = vmatpush1.bf16.msra.mxu0 0
      %1318 = vmatprep.subr.bf16.mxu0 0
      %1319 = vmatpush1.bf16.msra.mxu0 0
      %1320 = vmatprep.subr.bf16.mxu0 0
      %1321 = vmatpush1.bf16.msra.mxu0 0
      %1322 = vmatprep.subr.bf16.mxu0 0
      %1323 = vmatpush1.bf16.msra.mxu0 0
      %1324 = vmatprep.subr.bf16.mxu0 0
      %1325 = vmatpush1.bf16.msra.mxu0 0
      %1326 = vmatprep.subr.bf16.mxu0 0
      %1327 = vmatpush1.bf16.msra.mxu0 0
      %1328 = vmatprep.subr.bf16.mxu0 0
      %1329 = vmatpush1.bf16.msra.mxu0 0
      %1330 = vmatprep.subr.bf16.mxu0 0
      %1331 = vmatpush1.bf16.msra.mxu0 0
      %1332 = vmatprep.subr.bf16.mxu0 0
      %1333 = vmatpush1.bf16.msra.mxu0 0
      %1334 = vmatprep.subr.bf16.mxu0 0
      %1335 = vmatpush1.bf16.msra.mxu0 0
      %1336 = vmatprep.subr.bf16.mxu0 0
      %1337 = vmatpush1.bf16.msra.mxu0 0
      %1338 = vmatprep.mubr.bf16.mxu0 0
      %1339 = vmatmul.mubr.bf16.gmra.mrb[0].mxu0 %v1301
      %v1340 = vpop.f32.mrb[0].mxu0
      %v1341 = vadd.f32 0.0, %v1340
      %v1342 = vpop.f32.mrb[0].mxu0
      %v1343 = vpop.f32.mrb[0].mxu0
      %v1344 = vpop.f32.mrb[0].mxu0
      %1345 = vdwg.mxu0
      %v1346 = vcombine.low %v1203, %v1295
      %v1347 = vcombine.high %v1203, %v1295
      %v1349 = vunpack.c.l.s4 1983009808
      %v1350 = vunpack.c.0.s8 %v1349
      %v1351 = vlaneseq
      %v1352 = vshrl.u32 %v1351, 7
      %v1353 = vsub.s32 %v1350, %v1352
      %v1354 = vrot.slane %v1346, %v1353
      %v1356 = vunpack.c.l.s4 1983009808
      %v1357 = vunpack.c.0.s8 %v1356
      %v1358 = vlaneseq
      %v1359 = vshrl.u32 %v1358, 7
      %v1360 = vsub.s32 %v1357, %v1359
      %v1361 = vrot.slane %v1347, %v1360
      %v1362 = vcombine.low %v1249, %v1341
      %v1363 = vcombine.high %v1249, %v1341
      %v1365 = vunpack.c.l.s4 1983009808
      %v1366 = vunpack.c.0.s8 %v1365
      %v1367 = vlaneseq
      %v1368 = vshrl.u32 %v1367, 7
      %v1369 = vsub.s32 %v1366, %v1368
      %v1370 = vrot.slane %v1362, %v1369
      %v1372 = vunpack.c.l.s4 1983009808
      %v1373 = vunpack.c.0.s8 %v1372
      %v1374 = vlaneseq
      %v1375 = vshrl.u32 %v1374, 7
      %v1376 = vsub.s32 %v1373, %v1375
      %v1377 = vrot.slane %v1363, %v1376
      %v1378 = vcombine.low %v1354, %v1370
      %v1379 = vcombine.high %v1354, %v1370
      %v1381 = vunpack.c.l.s4 1934713408
      %v1382 = vunpack.c.0.s8 %v1381
      %v1383 = vlaneseq
      %v1384 = vshrl.u32 %v1383, 7
      %v1385 = vsub.s32 %v1382, %v1384
      %v1386 = vrot.slane %v1378, %v1385
      %v1388 = vunpack.c.l.s4 1934713408
      %v1389 = vunpack.c.0.s8 %v1388
      %v1390 = vlaneseq
      %v1391 = vshrl.u32 %v1390, 7
      %v1392 = vsub.s32 %v1389, %v1391
      %v1393 = vrot.slane %v1379, %v1392
      %v1394 = vcombine.low %v1361, %v1377
      %v1395 = vcombine.high %v1361, %v1377
      %v1397 = vunpack.c.l.s4 1934713408
      %v1398 = vunpack.c.0.s8 %v1397
      %v1399 = vlaneseq
      %v1400 = vshrl.u32 %v1399, 7
      %v1401 = vsub.s32 %v1398, %v1400
      %v1402 = vrot.slane %v1394, %v1401
      %v1404 = vunpack.c.l.s4 1934713408
      %v1405 = vunpack.c.0.s8 %v1404
      %v1406 = vlaneseq
      %v1407 = vshrl.u32 %v1406, 7
      %v1408 = vsub.s32 %v1405, %v1407
      %v1409 = vrot.slane %v1395, %v1408
      %v1410 = vcombine.high %v1386, 0.0
      %v1411 = vcombine.high %v1393, 0.0
      %v1412 = vcombine.high %v1402, 0.0
      %v1413 = vcombine.high %v1409, 0.0
      %v1414 = vcombine.low %v1386, %v1393
      %v1416 = vunpack.c.l.s4 1983009808
      %v1417 = vunpack.c.0.s8 %v1416
      %v1418 = vlaneseq
      %v1419 = vshrl.u32 %v1418, 7
      %v1420 = vsub.s32 %v1417, %v1419
      %v1421 = vrot.slane %v1414, %v1420
      %v1422 = vcombine.low %v1410, %v1411
      %v1424 = vunpack.c.l.s4 1983009808
      %v1425 = vunpack.c.0.s8 %v1424
      %v1426 = vlaneseq
      %v1427 = vshrl.u32 %v1426, 7
      %v1428 = vsub.s32 %v1425, %v1427
      %v1429 = vrot.slane %v1422, %v1428
      %v1430 = vcombine.low %v1402, %v1409
      %v1432 = vunpack.c.l.s4 1983009808
      %v1433 = vunpack.c.0.s8 %v1432
      %v1434 = vlaneseq
      %v1435 = vshrl.u32 %v1434, 7
      %v1436 = vsub.s32 %v1433, %v1435
      %v1437 = vrot.slane %v1430, %v1436
      %v1438 = vcombine.low %v1412, %v1413
      %v1440 = vunpack.c.l.s4 1983009808
      %v1441 = vunpack.c.0.s8 %v1440
      %v1442 = vlaneseq
      %v1443 = vshrl.u32 %v1442, 7
      %v1444 = vsub.s32 %v1441, %v1443
      %v1445 = vrot.slane %v1438, %v1444
      %v1446 = vcombine.low %v1421, %v1429
      %v1447 = vcombine.high %v1421, %v1429
      %v1449 = vunpack.c.l.s4 1934713408
      %v1450 = vunpack.c.0.s8 %v1449
      %v1451 = vlaneseq
      %v1452 = vshrl.u32 %v1451, 7
      %v1453 = vsub.s32 %v1450, %v1452
      %v1454 = vrot.slane %v1446, %v1453
      %v1456 = vunpack.c.l.s4 1934713408
      %v1457 = vunpack.c.0.s8 %v1456
      %v1458 = vlaneseq
      %v1459 = vshrl.u32 %v1458, 7
      %v1460 = vsub.s32 %v1457, %v1459
      %v1461 = vrot.slane %v1447, %v1460
      %v1462 = vcombine.low %v1437, %v1445
      %v1463 = vcombine.high %v1437, %v1445
      %v1465 = vunpack.c.l.s4 1934713408
      %v1466 = vunpack.c.0.s8 %v1465
      %v1467 = vlaneseq
      %v1468 = vshrl.u32 %v1467, 7
      %v1469 = vsub.s32 %v1466, %v1468
      %v1470 = vrot.slane %v1462, %v1469
      %v1472 = vunpack.c.l.s4 1934713408
      %v1473 = vunpack.c.0.s8 %v1472
      %v1474 = vlaneseq
      %v1475 = vshrl.u32 %v1474, 7
      %v1476 = vsub.s32 %v1473, %v1475
      %v1477 = vrot.slane %v1463, %v1476
      %v1478 = vcombine.low %v1454, %v1470
      %v1479 = vcombine.high %v1454, %v1470
      %v1480 = vcombine.low %v1461, %v1477
      %v1481 = vcombine.high %v1461, %v1477
      %1483 = vrot.lane.b32.xlu0 %v1479, 8
      %v1484 = vpop.permute.xlu0 %1483
      %1487 = vrot.lane.b32.xlu0 %v1480, 16
      %v1488 = vpop.permute.xlu0 %1487
      %1491 = vrot.lane.b32.xlu0 %v1481, 24
      %v1492 = vpop.permute.xlu0 %1491
      %v1494 = vsel %vm913, %v1478, %v1484
      %vm1495 = vcmask 130048
      %v1496 = vsel %vm1495, %v1494, %v1488
      %vm1497 = vcmask 195584
      %v1498 = vsel %vm1497, %v1496, %v1492
      %v1499 = vld [vmem:[%s5] sm:$0xf]
      %v1500 = vld [vmem:[%s5 + $0x4] sm:$0xf]
      %v1501 = vld [vmem:[%s5 + $0x8] sm:$0xf]
      %v1502 = vld [vmem:[%s5 + $0xc] sm:$0xf]
      %v1503 = vpack.c.bf16 %v1498, %v1498
      %v1504 = vld [vmem:[%s6] sm:$0x1]
      %v1506 = vlaneseq
      %v1507 = vshrl.u32 %v1506, 7
      %v1508 = vsub.s32 0, %v1507
      %v1509 = vrot.slane %v1504, %v1508
      %v1515 = vunpack.c.l.b16 %v1499
      %v1516 = vunpack.c.l.b16 %v1500
      %v1517 = vunpack.c.l.b16 %v1501
      %v1518 = vunpack.c.l.b16 %v1502
      %v1519 = vpack.c.b16 %v1516, %v1515
      %v1520 = vpack.c.b16 %v1518, %v1517
      %v1524 = vsel %vm354, %v1503, 0
      %1526 = vmatprep.subr.bf16.mxu0 0
      %1527 = vmatpush1.bf16.msra.mxu0 %v1519
      %1528 = vmatprep.subr.bf16.mxu0 0
      %1529 = vmatpush1.bf16.msra.mxu0 %v1520
      %1530 = vmatprep.subr.bf16.mxu0 0
      %1531 = vmatpush1.bf16.msra.mxu0 0
      %1532 = vmatprep.subr.bf16.mxu0 0
      %1533 = vmatpush1.bf16.msra.mxu0 0
      %1534 = vmatprep.subr.bf16.mxu0 0
      %1535 = vmatpush1.bf16.msra.mxu0 0
      %1536 = vmatprep.subr.bf16.mxu0 0
      %1537 = vmatpush1.bf16.msra.mxu0 0
      %1538 = vmatprep.subr.bf16.mxu0 0
      %1539 = vmatpush1.bf16.msra.mxu0 0
      %1540 = vmatprep.subr.bf16.mxu0 0
      %1541 = vmatpush1.bf16.msra.mxu0 0
      %1542 = vmatprep.subr.bf16.mxu0 0
      %1543 = vmatpush1.bf16.msra.mxu0 0
      %1544 = vmatprep.subr.bf16.mxu0 0
      %1545 = vmatpush1.bf16.msra.mxu0 0
      %1546 = vmatprep.subr.bf16.mxu0 0
      %1547 = vmatpush1.bf16.msra.mxu0 0
      %1548 = vmatprep.subr.bf16.mxu0 0
      %1549 = vmatpush1.bf16.msra.mxu0 0
      %1550 = vmatprep.subr.bf16.mxu0 0
      %1551 = vmatpush1.bf16.msra.mxu0 0
      %1552 = vmatprep.subr.bf16.mxu0 0
      %1553 = vmatpush1.bf16.msra.mxu0 0
      %1554 = vmatprep.subr.bf16.mxu0 0
      %1555 = vmatpush1.bf16.msra.mxu0 0
      %1556 = vmatprep.subr.bf16.mxu0 0
      %1557 = vmatpush1.bf16.msra.mxu0 0
      %1558 = vmatprep.mubr.bf16.mxu0 0
      %1559 = vmatmul.mubr.bf16.gmra.mrb[0].mxu0 %v1524
      %v1560 = vpop.f32.mrb[0].mxu0
      %v1561 = vadd.f32 %v1509, %v1560
      %v1562 = vpop.f32.mrb[0].mxu0
      %v1563 = vpop.f32.mrb[0].mxu0
      %v1564 = vpop.f32.mrb[0].mxu0
      %1565 = vdwg.mxu0
      %v1566 = vadd.f32 %v329, %v1561
      %v1567 = vld [vmem:[%s7] sm:$0x1]
      %v1568 = vld [vmem:[%s8] sm:$0x1]
      %v1569 = vsel %vm354, %v1566, 0.0
      %1570 = vadd.xlane.f32.xlu0 %v1569
      %v1571 = vpop.xlane.xlu0 %1570
      %v1572 = vrcp.pop 32.0
      %v1573 = vmul.f32 %v1571, %v1572
      %v1574 = vsub.f32 %v1566, %v1573
      %v1575 = vmul.f32 %v1574, %v1574
      %v1576 = vsel %vm354, %v1575, 0.0
      %1577 = vadd.xlane.f32.xlu0 %v1576
      %v1578 = vpop.xlane.xlu0 %1577
      %v1579 = vmul.f32 %v1578, %v1572
      %v1580 = vadd.f32 %v1579, 1e-05
      %v1581 = vrsqrt.pop %v1580
      %v1582 = vmul.f32 %v1574, %v1581
      %v1584 = vlaneseq
      %v1585 = vshrl.u32 %v1584, 7
      %v1586 = vsub.s32 0, %v1585
      %v1587 = vrot.slane %v1567, %v1586
      %v1589 = vmul.f32 %v1582, %v1587
      %v1591 = vlaneseq
      %v1592 = vshrl.u32 %v1591, 7
      %v1593 = vsub.s32 0, %v1592
      %v1594 = vrot.slane %v1568, %v1593
      %v1596 = vadd.f32 %v1589, %v1594
      %1597 = vst.msk [vmem:[%s327] sm:$0xff] %vm354, %v1596
      %p1598 = scmp.lt.s32.totalorder %s20, 1
      %s1599 = scalar_select %p1598, %s20, 1
      %s1600 = smul.addr %s1599, 8
      %s1601 = scalar_lea.vmem %s9, %s1600
      // Predicated region
      $region57: #{vanilla_transformer_forward.18} parent=55 // pred_check
        %p1602 = pneg %p232
      $region58: #{vanilla_transformer_forward.18} parent=55 // pred_check_branch
        %1604 = sbr.rel (%p1602) target = $region60
      $region59: #{vanilla_transformer_forward.18} parent=55 // pred_region
        _
      $region60: #{vanilla_transformer_forward.18} parent=55 // pred_fallthru
        _
    $region56: #{vanilla_transformer_forward.18} parent=5 // pred_fallthru
      _
    %p1605 = scmp.le.s32.totalorder 2, %s15
    // Predicated region
    $region61: #{vanilla_transformer_forward.18} parent=5 // pred_check
      %p1606 = pneg %p1605
    $region62: #{vanilla_transformer_forward.18} parent=5 // pred_check_branch
      %1608 = sbr.rel (%p1606) target = $region64
    $region63: #{vanilla_transformer_forward.18} parent=5 // pred_region
      %s1609 = ssub.s32 %s15, 2
      // Predicated region
      $region65: #{vanilla_transformer_forward.18} parent=63 // pred_check
        %p1610 = pneg %p238
      $region66: #{vanilla_transformer_forward.18} parent=63 // pred_check_branch
        %1612 = sbr.rel (%p1610) target = $region68
      $region67: #{vanilla_transformer_forward.18} parent=63 // pred_region
        %p1613 = scmp.lt.s32.totalorder %s21, 1
        %s1614 = scalar_select %p1613, %s21, 1
        %s1615 = smul.addr %s1614, 8
        %s1616 = scalar_lea.vmem %s9, %s1615
      $region68: #{vanilla_transformer_forward.18} parent=63 // pred_fallthru
        _
    $region64: #{vanilla_transformer_forward.18} parent=5 // pred_fallthru
      _
  $region6: #{vanilla_transformer_forward.18} parent=0 // loop_footer
    %s19 = sadd.s32 1, %s15
  $region7: #{vanilla_transformer_forward.18} parent=0 // loop_footer_branch
    %14 = sbr.rel target = $region3
  $region8: #{vanilla_transformer_forward.18} parent=0 // loop_exit
    _

// kernel: vanilla_transformer_forward.19
$region0: #{vanilla_transformer_forward.19}
  #allocation0 [shape = 'u32[]', space=smem, size = 0x4, offset = 0x4, fixed_abs, tag = 'smem constant byte address 0x4 - core index']
  #allocation1 [shape = 'u32[144,128]{1,0:T(1,128)}', space=vmem, size = 0x12000, scoped, tag = 'internal scratch']
  %s0 = inlined_call_operand.vmem [shape: f32[2,8,32], index: 0, kind: input, shape index: {}, may-alias: {0,10}]
  %s1 = inlined_call_operand.vmem [shape: f32[2,8,32], index: 1, kind: input, shape index: {}]
  %s2 = inlined_call_operand.vmem [shape: bf16[32,32], index: 2, kind: input, shape index: {}]
  %s3 = inlined_call_operand.vmem [shape: f32[1,32], index: 3, kind: input, shape index: {}]
  %s4 = inlined_call_operand.vmem [shape: bf16[32,64], index: 4, kind: input, shape index: {}]
  %s5 = inlined_call_operand.vmem [shape: f32[1,64], index: 5, kind: input, shape index: {}]
  %s6 = inlined_call_operand.vmem [shape: bf16[32,32], index: 6, kind: input, shape index: {}]
  %s7 = inlined_call_operand.vmem [shape: f32[1,32], index: 7, kind: input, shape index: {}]
  %s8 = inlined_call_operand.vmem [shape: f32[1,32], index: 8, kind: input, shape index: {}]
  %s9 = inlined_call_operand.vmem [shape: f32[1,32], index: 9, kind: input, shape index: {}]
  %s10 = inlined_call_operand.vmem [shape: f32[2,8,32], index: 10, kind: output, shape index: {}, may-alias: {0,10}]
  %s11 = sld [smem:[#allocation0]]
  $region73: #{vanilla_transformer_forward.19} parent=0
    _
  %s13 = ssub.s32 1, %s11
  %s14 = scalar_select 0, %s13, %s11
  loop: start=0, step=1, limit=4
  $region2: #{vanilla_transformer_forward.19} parent=0 // loop_pre_header
    _
  $region3: #{vanilla_transformer_forward.19} parent=0 // loop_header
    %s16 = sphi 0, %s20
    %p17 = scmp.ge.s32.totalorder %s16, 4
    %s26 = sphi 0, %s28
    %s29 = sphi 0, %s26
    %s30 = sphi 0, %s29
    %s46 = sphi 0, %s30
    %s52 = sphi 0, %s54
    %s55 = sphi 0, %s52
    %s56 = sphi 0, %s55
    %s72 = sphi 0, %s56
    %s76 = sphi 0, %s76
    %s78 = sphi 0, %s76
    %s79 = sphi 0, %s78
    %s93 = sphi 0, %s79
    %s97 = sphi 0, %s97
    %s99 = sphi 0, %s97
    %s100 = sphi 0, %s99
    %s114 = sphi 0, %s100
    %s118 = sphi 0, %s118
    %s120 = sphi 0, %s118
    %s121 = sphi 0, %s120
    %s135 = sphi 0, %s121
    %s139 = sphi 0, %s139
    %s141 = sphi 0, %s139
    %s142 = sphi 0, %s141
    %s156 = sphi 0, %s142
    %s160 = sphi 0, %s160
    %s162 = sphi 0, %s160
    %s163 = sphi 0, %s162
    %s177 = sphi 0, %s163
    %s181 = sphi 0, %s181
    %s183 = sphi 0, %s181
    %s184 = sphi 0, %s183
    %s198 = sphi 0, %s184
    %s202 = sphi 0, %s202
    %s204 = sphi 0, %s202
    %s205 = sphi 0, %s204
    %s219 = sphi 0, %s205
    %s223 = sphi 0, %s223
    %s225 = sphi 0, %s223
    %s226 = sphi 0, %s225
    %s240 = sphi 0, %s226
    %s246 = sphi 0, %s248
    %s249 = sphi 0, %s246
    %s250 = sphi 0, %s249
    %s266 = sphi 0, %s250
  $region4: #{vanilla_transformer_forward.19} parent=0 // loop_header_branch
    %19 = sbr.rel (%p17) target = $region8
  $region5: #{vanilla_transformer_forward.19} parent=0 // loop_body
    %s21 = ssub.s32 %s16, 1
    %s22 = ssub.s32 %s16, 2
    %s23 = sadd.s32 %s16, 1
    %s24 = ssub.s32 %s16, %s23
    %p25 = scmp.eq.s32.totalorder %s24, 0
    %s27 = sadd.s32 %s26, 1
    %s28 = scalar_select %p25, %s26, %s27
    %p31 = pneg %p25
    %p32 = scmp.eq.s32.totalorder %s16, 1
    %p33 = por %p31, %p32
    %p34 = scmp.ne.s32.totalorder %s26, %s29
    %p35 = scmp.eq.s32.totalorder %s16, 0
    %p36 = por %p34, %p35
    %p37 = scmp.ne.s32.totalorder %s26, %s29
    %p38 = scmp.eq.s32.totalorder %s21, 1
    %p39 = por %p37, %p38
    %p40 = scmp.ne.s32.totalorder %s29, %s30
    %p41 = scmp.eq.s32.totalorder %s21, 0
    %p42 = por %p40, %p41
    %p43 = scmp.ne.s32.totalorder %s29, %s30
    %p44 = scmp.eq.s32.totalorder %s22, 1
    %p45 = por %p43, %p44
    %p47 = scmp.ne.s32.totalorder %s30, %s46
    %p48 = scmp.eq.s32.totalorder %s22, 0
    %p49 = por %p47, %p48
    %s50 = ssub.s32 %s16, %s23
    %p51 = scmp.eq.s32.totalorder %s50, 0
    %s53 = sadd.s32 %s52, 1
    %s54 = scalar_select %p51, %s52, %s53
    %p57 = pneg %p51
    %p58 = scmp.eq.s32.totalorder %s16, 1
    %p59 = por %p57, %p58
    %p60 = scmp.ne.s32.totalorder %s52, %s55
    %p61 = scmp.eq.s32.totalorder %s16, 0
    %p62 = por %p60, %p61
    %p63 = scmp.ne.s32.totalorder %s52, %s55
    %p64 = scmp.eq.s32.totalorder %s21, 1
    %p65 = por %p63, %p64
    %p66 = scmp.ne.s32.totalorder %s55, %s56
    %p67 = scmp.eq.s32.totalorder %s21, 0
    %p68 = por %p66, %p67
    %p69 = scmp.ne.s32.totalorder %s55, %s56
    %p70 = scmp.eq.s32.totalorder %s22, 1
    %p71 = por %p69, %p70
    %p73 = scmp.ne.s32.totalorder %s56, %s72
    %p74 = scmp.eq.s32.totalorder %s22, 0
    %p75 = por %p73, %p74
    %s77 = sadd.s32 %s76, 1
    %p80 = scmp.eq.s32.totalorder %s16, 1
    %p81 = scmp.ne.s32.totalorder %s76, %s78
    %p82 = scmp.eq.s32.totalorder %s16, 0
    %p83 = por %p81, %p82
    %p84 = scmp.ne.s32.totalorder %s76, %s78
    %p85 = scmp.eq.s32.totalorder %s21, 1
    %p86 = por %p84, %p85
    %p87 = scmp.ne.s32.totalorder %s78, %s79
    %p88 = scmp.eq.s32.totalorder %s21, 0
    %p89 = por %p87, %p88
    %p90 = scmp.ne.s32.totalorder %s78, %s79
    %p91 = scmp.eq.s32.totalorder %s22, 1
    %p92 = por %p90, %p91
    %p94 = scmp.ne.s32.totalorder %s79, %s93
    %p95 = scmp.eq.s32.totalorder %s22, 0
    %p96 = por %p94, %p95
    %s98 = sadd.s32 %s97, 1
    %p101 = scmp.eq.s32.totalorder %s16, 1
    %p102 = scmp.ne.s32.totalorder %s97, %s99
    %p103 = scmp.eq.s32.totalorder %s16, 0
    %p104 = por %p102, %p103
    %p105 = scmp.ne.s32.totalorder %s97, %s99
    %p106 = scmp.eq.s32.totalorder %s21, 1
    %p107 = por %p105, %p106
    %p108 = scmp.ne.s32.totalorder %s99, %s100
    %p109 = scmp.eq.s32.totalorder %s21, 0
    %p110 = por %p108, %p109
    %p111 = scmp.ne.s32.totalorder %s99, %s100
    %p112 = scmp.eq.s32.totalorder %s22, 1
    %p113 = por %p111, %p112
    %p115 = scmp.ne.s32.totalorder %s100, %s114
    %p116 = scmp.eq.s32.totalorder %s22, 0
    %p117 = por %p115, %p116
    %s119 = sadd.s32 %s118, 1
    %p122 = scmp.eq.s32.totalorder %s16, 1
    %p123 = scmp.ne.s32.totalorder %s118, %s120
    %p124 = scmp.eq.s32.totalorder %s16, 0
    %p125 = por %p123, %p124
    %p126 = scmp.ne.s32.totalorder %s118, %s120
    %p127 = scmp.eq.s32.totalorder %s21, 1
    %p128 = por %p126, %p127
    %p129 = scmp.ne.s32.totalorder %s120, %s121
    %p130 = scmp.eq.s32.totalorder %s21, 0
    %p131 = por %p129, %p130
    %p132 = scmp.ne.s32.totalorder %s120, %s121
    %p133 = scmp.eq.s32.totalorder %s22, 1
    %p134 = por %p132, %p133
    %p136 = scmp.ne.s32.totalorder %s121, %s135
    %p137 = scmp.eq.s32.totalorder %s22, 0
    %p138 = por %p136, %p137
    %s140 = sadd.s32 %s139, 1
    %p143 = scmp.eq.s32.totalorder %s16, 1
    %p144 = scmp.ne.s32.totalorder %s139, %s141
    %p145 = scmp.eq.s32.totalorder %s16, 0
    %p146 = por %p144, %p145
    %p147 = scmp.ne.s32.totalorder %s139, %s141
    %p148 = scmp.eq.s32.totalorder %s21, 1
    %p149 = por %p147, %p148
    %p150 = scmp.ne.s32.totalorder %s141, %s142
    %p151 = scmp.eq.s32.totalorder %s21, 0
    %p152 = por %p150, %p151
    %p153 = scmp.ne.s32.totalorder %s141, %s142
    %p154 = scmp.eq.s32.totalorder %s22, 1
    %p155 = por %p153, %p154
    %p157 = scmp.ne.s32.totalorder %s142, %s156
    %p158 = scmp.eq.s32.totalorder %s22, 0
    %p159 = por %p157, %p158
    %s161 = sadd.s32 %s160, 1
    %p164 = scmp.eq.s32.totalorder %s16, 1
    %p165 = scmp.ne.s32.totalorder %s160, %s162
    %p166 = scmp.eq.s32.totalorder %s16, 0
    %p167 = por %p165, %p166
    %p168 = scmp.ne.s32.totalorder %s160, %s162
    %p169 = scmp.eq.s32.totalorder %s21, 1
    %p170 = por %p168, %p169
    %p171 = scmp.ne.s32.totalorder %s162, %s163
    %p172 = scmp.eq.s32.totalorder %s21, 0
    %p173 = por %p171, %p172
    %p174 = scmp.ne.s32.totalorder %s162, %s163
    %p175 = scmp.eq.s32.totalorder %s22, 1
    %p176 = por %p174, %p175
    %p178 = scmp.ne.s32.totalorder %s163, %s177
    %p179 = scmp.eq.s32.totalorder %s22, 0
    %p180 = por %p178, %p179
    %s182 = sadd.s32 %s181, 1
    %p185 = scmp.eq.s32.totalorder %s16, 1
    %p186 = scmp.ne.s32.totalorder %s181, %s183
    %p187 = scmp.eq.s32.totalorder %s16, 0
    %p188 = por %p186, %p187
    %p189 = scmp.ne.s32.totalorder %s181, %s183
    %p190 = scmp.eq.s32.totalorder %s21, 1
    %p191 = por %p189, %p190
    %p192 = scmp.ne.s32.totalorder %s183, %s184
    %p193 = scmp.eq.s32.totalorder %s21, 0
    %p194 = por %p192, %p193
    %p195 = scmp.ne.s32.totalorder %s183, %s184
    %p196 = scmp.eq.s32.totalorder %s22, 1
    %p197 = por %p195, %p196
    %p199 = scmp.ne.s32.totalorder %s184, %s198
    %p200 = scmp.eq.s32.totalorder %s22, 0
    %p201 = por %p199, %p200
    %s203 = sadd.s32 %s202, 1
    %p206 = scmp.eq.s32.totalorder %s16, 1
    %p207 = scmp.ne.s32.totalorder %s202, %s204
    %p208 = scmp.eq.s32.totalorder %s16, 0
    %p209 = por %p207, %p208
    %p210 = scmp.ne.s32.totalorder %s202, %s204
    %p211 = scmp.eq.s32.totalorder %s21, 1
    %p212 = por %p210, %p211
    %p213 = scmp.ne.s32.totalorder %s204, %s205
    %p214 = scmp.eq.s32.totalorder %s21, 0
    %p215 = por %p213, %p214
    %p216 = scmp.ne.s32.totalorder %s204, %s205
    %p217 = scmp.eq.s32.totalorder %s22, 1
    %p218 = por %p216, %p217
    %p220 = scmp.ne.s32.totalorder %s205, %s219
    %p221 = scmp.eq.s32.totalorder %s22, 0
    %p222 = por %p220, %p221
    %s224 = sadd.s32 %s223, 1
    %p227 = scmp.eq.s32.totalorder %s16, 1
    %p228 = scmp.ne.s32.totalorder %s223, %s225
    %p229 = scmp.eq.s32.totalorder %s16, 0
    %p230 = por %p228, %p229
    %p231 = scmp.ne.s32.totalorder %s223, %s225
    %p232 = scmp.eq.s32.totalorder %s21, 1
    %p233 = por %p231, %p232
    %p234 = scmp.ne.s32.totalorder %s225, %s226
    %p235 = scmp.eq.s32.totalorder %s21, 0
    %p236 = por %p234, %p235
    %p237 = scmp.ne.s32.totalorder %s225, %s226
    %p238 = scmp.eq.s32.totalorder %s22, 1
    %p239 = por %p237, %p238
    %p241 = scmp.ne.s32.totalorder %s226, %s240
    %p242 = scmp.eq.s32.totalorder %s22, 0
    %p243 = por %p241, %p242
    %s244 = ssub.s32 %s16, %s23
    %p245 = scmp.eq.s32.totalorder %s244, 0
    %s247 = sadd.s32 %s246, 1
    %s248 = scalar_select %p245, %s246, %s247
    %p251 = pneg %p245
    %p252 = scmp.eq.s32.totalorder %s16, 1
    %p253 = por %p251, %p252
    %p254 = scmp.ne.s32.totalorder %s246, %s249
    %p255 = scmp.eq.s32.totalorder %s16, 0
    %p256 = por %p254, %p255
    %p257 = scmp.ne.s32.totalorder %s246, %s249
    %p258 = scmp.eq.s32.totalorder %s21, 1
    %p259 = por %p257, %p258
    %p260 = scmp.ne.s32.totalorder %s249, %s250
    %p261 = scmp.eq.s32.totalorder %s21, 0
    %p262 = por %p260, %p261
    %p263 = scmp.ne.s32.totalorder %s249, %s250
    %p264 = scmp.eq.s32.totalorder %s22, 1
    %p265 = por %p263, %p264
    %p267 = scmp.ne.s32.totalorder %s250, %s266
    %p268 = scmp.eq.s32.totalorder %s22, 0
    %p269 = por %p267, %p268
    %p270 = scmp.le.s32.totalorder 1, %s16
    %p271 = scmp.lt.s32.totalorder %s16, 3
    %p272 = pnand %p270, %p271
    %p273 = pneg %p272
    // Predicated region
    $region9: #{vanilla_transformer_forward.19} parent=5 // pred_check
      _
    $region10: #{vanilla_transformer_forward.19} parent=5 // pred_check_branch
      %275 = sbr.rel (%p272) target = $region12
    $region11: #{vanilla_transformer_forward.19} parent=5 // pred_region
      %s276 = ssub.s32 %s16, 1
      // Predicated region
      $region13: #{vanilla_transformer_forward.19} parent=11 // pred_check
        %p277 = pneg %p89
      $region14: #{vanilla_transformer_forward.19} parent=11 // pred_check_branch
        %279 = sbr.rel (%p277) target = $region16
      $region15: #{vanilla_transformer_forward.19} parent=11 // pred_region
        _
      $region16: #{vanilla_transformer_forward.19} parent=11 // pred_fallthru
        _
      // Predicated region
      $region17: #{vanilla_transformer_forward.19} parent=11 // pred_check
        %p280 = pneg %p110
      $region18: #{vanilla_transformer_forward.19} parent=11 // pred_check_branch
        %282 = sbr.rel (%p280) target = $region20
      $region19: #{vanilla_transformer_forward.19} parent=11 // pred_region
        _
      $region20: #{vanilla_transformer_forward.19} parent=11 // pred_fallthru
        _
      // Predicated region
      $region21: #{vanilla_transformer_forward.19} parent=11 // pred_check
        %p283 = pneg %p131
      $region22: #{vanilla_transformer_forward.19} parent=11 // pred_check_branch
        %285 = sbr.rel (%p283) target = $region24
      $region23: #{vanilla_transformer_forward.19} parent=11 // pred_region
        _
      $region24: #{vanilla_transformer_forward.19} parent=11 // pred_fallthru
        _
      // Predicated region
      $region25: #{vanilla_transformer_forward.19} parent=11 // pred_check
        %p286 = pneg %p152
      $region26: #{vanilla_transformer_forward.19} parent=11 // pred_check_branch
        %288 = sbr.rel (%p286) target = $region28
      $region27: #{vanilla_transformer_forward.19} parent=11 // pred_region
        _
      $region28: #{vanilla_transformer_forward.19} parent=11 // pred_fallthru
        _
      // Predicated region
      $region29: #{vanilla_transformer_forward.19} parent=11 // pred_check
        %p289 = pneg %p173
      $region30: #{vanilla_transformer_forward.19} parent=11 // pred_check_branch
        %291 = sbr.rel (%p289) target = $region32
      $region31: #{vanilla_transformer_forward.19} parent=11 // pred_region
        _
      $region32: #{vanilla_transformer_forward.19} parent=11 // pred_fallthru
        _
      // Predicated region
      $region33: #{vanilla_transformer_forward.19} parent=11 // pred_check
        %p292 = pneg %p194
      $region34: #{vanilla_transformer_forward.19} parent=11 // pred_check_branch
        %294 = sbr.rel (%p292) target = $region36
      $region35: #{vanilla_transformer_forward.19} parent=11 // pred_region
        _
      $region36: #{vanilla_transformer_forward.19} parent=11 // pred_fallthru
        _
      // Predicated region
      $region37: #{vanilla_transformer_forward.19} parent=11 // pred_check
        %p295 = pneg %p215
      $region38: #{vanilla_transformer_forward.19} parent=11 // pred_check_branch
        %297 = sbr.rel (%p295) target = $region40
      $region39: #{vanilla_transformer_forward.19} parent=11 // pred_region
        _
      $region40: #{vanilla_transformer_forward.19} parent=11 // pred_fallthru
        _
      // Predicated region
      $region41: #{vanilla_transformer_forward.19} parent=11 // pred_check
        %p298 = pneg %p236
      $region42: #{vanilla_transformer_forward.19} parent=11 // pred_check_branch
        %300 = sbr.rel (%p298) target = $region44
      $region43: #{vanilla_transformer_forward.19} parent=11 // pred_region
        _
      $region44: #{vanilla_transformer_forward.19} parent=11 // pred_fallthru
        _
    $region12: #{vanilla_transformer_forward.19} parent=5 // pred_fallthru
      _
    %p301 = scmp.lt.s32.totalorder %s16, 2
    // Predicated region
    $region45: #{vanilla_transformer_forward.19} parent=5 // pred_check
      %p302 = pneg %p301
    $region46: #{vanilla_transformer_forward.19} parent=5 // pred_check_branch
      %304 = sbr.rel (%p302) target = $region48
    $region47: #{vanilla_transformer_forward.19} parent=5 // pred_region
      // Predicated region
      $region49: #{vanilla_transformer_forward.19} parent=47 // pred_check
        %p305 = pneg %p36
      $region50: #{vanilla_transformer_forward.19} parent=47 // pred_check_branch
        %307 = sbr.rel (%p305) target = $region52
      $region51: #{vanilla_transformer_forward.19} parent=47 // pred_region
        %p308 = scmp.lt.s32.totalorder %s16, 1
        %s309 = scalar_select %p308, %s16, 1
        %s310 = smul.addr %s309, 8
        %s311 = scalar_lea.vmem %s0, %s310
      $region52: #{vanilla_transformer_forward.19} parent=47 // pred_fallthru
        _
      // Predicated region
      $region53: #{vanilla_transformer_forward.19} parent=47 // pred_check
        %p312 = pneg %p62
      $region54: #{vanilla_transformer_forward.19} parent=47 // pred_check_branch
        %314 = sbr.rel (%p312) target = $region56
      $region55: #{vanilla_transformer_forward.19} parent=47 // pred_region
        %p315 = scmp.lt.s32.totalorder %s16, 1
        %s316 = scalar_select %p315, %s16, 1
        %s317 = smul.addr %s316, 8
        %s318 = scalar_lea.vmem %s1, %s317
      $region56: #{vanilla_transformer_forward.19} parent=47 // pred_fallthru
        _
    $region48: #{vanilla_transformer_forward.19} parent=5 // pred_fallthru
      _
    %p319 = scmp.le.s32.totalorder 1, %s16
    %p320 = scmp.lt.s32.totalorder %s16, 3
    %p321 = pnand %p319, %p320
    %p322 = pneg %p321
    // Predicated region
    $region57: #{vanilla_transformer_forward.19} parent=5 // pred_check
      _
    $region58: #{vanilla_transformer_forward.19} parent=5 // pred_check_branch
      %324 = sbr.rel (%p321) target = $region60
    $region59: #{vanilla_transformer_forward.19} parent=5 // pred_region
      %s325 = ssub.s32 %s16, 1
      %p326 = scmp.lt.s32.totalorder %s21, 1
      %s327 = scalar_select %p326, %s21, 1
      %s328 = smul.addr %s327, 8
      %s329 = scalar_lea.vmem %s0, %s328
      %p330 = pneg %p42
      %p331 = pneg %p39
      %p332 = scmp.lt.s32.totalorder %s21, 1
      %s333 = scalar_select %p332, %s21, 1
      %s334 = smul.addr %s333, 8
      %s335 = scalar_lea.vmem %s1, %s334
      %p336 = pneg %p68
      %p337 = pneg %p65
      %p338 = pneg %p89
      %p339 = pneg %p86
      %p340 = pneg %p110
      %p341 = pneg %p107
      %p342 = pneg %p131
      %p343 = pneg %p128
      %p344 = pneg %p152
      %p345 = pneg %p149
      %p346 = pneg %p173
      %p347 = pneg %p170
      %p348 = pneg %p194
      %p349 = pneg %p191
      %p350 = pneg %p215
      %p351 = pneg %p212
      %p352 = pneg %p236
      %p353 = pneg %p233
      %p354 = pneg %p262
      %p355 = pneg %p259
      %p356 = scmp.lt.s32.totalorder %s21, 1
      %s357 = scalar_select %p356, %s21, 1
      %s358 = smul.addr %s357, 8
      %s359 = scalar_lea.vmem %s10, %s358
      %p360 = scmp.lt.s32.totalorder %s21, 1
      %s361 = scalar_select %p360, %s21, 1
      %s362 = smul.addr %s361, 8
      %s363 = scalar_lea.vmem %s0, %s362
      %p364 = scmp.lt.s32.totalorder %s21, 1
      %s365 = scalar_select %p364, %s21, 1
      %s366 = smul.addr %s365, 8
      %s367 = scalar_lea.vmem %s1, %s366
      %p368 = scmp.lt.s32.totalorder %s21, 1
      %s369 = scalar_select %p368, %s21, 1
      %s370 = smul.addr %s369, 8
      %s371 = scalar_lea.vmem %s10, %s370
      %v373 = vld [vmem:[%s363] sm:$0xff]
      %v374 = vld [vmem:[%s367] sm:$0xff]
      %v375 = vld [vmem:[%s2] sm:$0xf]
      %v376 = vld [vmem:[%s2 + $0x4] sm:$0xf]
      %v377 = vld [vmem:[%s2 + $0x8] sm:$0xf]
      %v378 = vld [vmem:[%s2 + $0xc] sm:$0xf]
      %v379 = vpack.c.bf16 %v373, %v373
      %v380 = vld [vmem:[%s3] sm:$0x1]
      %v382 = vlaneseq
      %v383 = vshrl.u32 %v382, 7
      %v384 = vsub.s32 0, %v383
      %v385 = vrot.slane %v380, %v384
      %v391 = vunpack.c.l.b16 %v375
      %v392 = vunpack.c.l.b16 %v376
      %v393 = vunpack.c.l.b16 %v377
      %v394 = vunpack.c.l.b16 %v378
      %v395 = vpack.c.b16 %v392, %v391
      %v396 = vpack.c.b16 %v394, %v393
      %vm399 = vcmask 261120
      %v401 = vsel %vm399, %v379, 0
      %403 = vmatprep.subr.bf16.mxu0 0
      %404 = vmatpush1.bf16.msra.mxu0 %v395
      %405 = vmatprep.subr.bf16.mxu0 0
      %406 = vmatpush1.bf16.msra.mxu0 %v396
      %407 = vmatprep.subr.bf16.mxu0 0
      %408 = vmatpush1.bf16.msra.mxu0 0
      %409 = vmatprep.subr.bf16.mxu0 0
      %410 = vmatpush1.bf16.msra.mxu0 0
      %411 = vmatprep.subr.bf16.mxu0 0
      %412 = vmatpush1.bf16.msra.mxu0 0
      %413 = vmatprep.subr.bf16.mxu0 0
      %414 = vmatpush1.bf16.msra.mxu0 0
      %415 = vmatprep.subr.bf16.mxu0 0
      %416 = vmatpush1.bf16.msra.mxu0 0
      %417 = vmatprep.subr.bf16.mxu0 0
      %418 = vmatpush1.bf16.msra.mxu0 0
      %419 = vmatprep.subr.bf16.mxu0 0
      %420 = vmatpush1.bf16.msra.mxu0 0
      %421 = vmatprep.subr.bf16.mxu0 0
      %422 = vmatpush1.bf16.msra.mxu0 0
      %423 = vmatprep.subr.bf16.mxu0 0
      %424 = vmatpush1.bf16.msra.mxu0 0
      %425 = vmatprep.subr.bf16.mxu0 0
      %426 = vmatpush1.bf16.msra.mxu0 0
      %427 = vmatprep.subr.bf16.mxu0 0
      %428 = vmatpush1.bf16.msra.mxu0 0
      %429 = vmatprep.subr.bf16.mxu0 0
      %430 = vmatpush1.bf16.msra.mxu0 0
      %431 = vmatprep.subr.bf16.mxu0 0
      %432 = vmatpush1.bf16.msra.mxu0 0
      %433 = vmatprep.subr.bf16.mxu0 0
      %434 = vmatpush1.bf16.msra.mxu0 0
      %435 = vmatprep.mubr.bf16.mxu0 0
      %436 = vmatmul.mubr.bf16.gmra.mrb[0].mxu0 %v401
      %v437 = vpop.f32.mrb[0].mxu0
      %v438 = vadd.f32 %v385, %v437
      %v439 = vpop.f32.mrb[0].mxu0
      %v440 = vpop.f32.mrb[0].mxu0
      %v441 = vpop.f32.mrb[0].mxu0
      %442 = vdwg.mxu0
      %v443 = vld [vmem:[%s4] sm:$0xf]
      %v444 = vld [vmem:[%s4 + $0x4] sm:$0xf]
      %v445 = vld [vmem:[%s4 + $0x8] sm:$0xf]
      %v446 = vld [vmem:[%s4 + $0xc] sm:$0xf]
      %v447 = vpack.c.bf16 %v374, %v374
      %v448 = vld [vmem:[%s5] sm:$0x1]
      %v450 = vlaneseq
      %v451 = vshrl.u32 %v450, 7
      %v452 = vsub.s32 0, %v451
      %v453 = vrot.slane %v448, %v452
      %v459 = vunpack.c.l.b16 %v443
      %v460 = vunpack.c.l.b16 %v444
      %v461 = vunpack.c.l.b16 %v445
      %v462 = vunpack.c.l.b16 %v446
      %v463 = vpack.c.b16 %v460, %v459
      %v464 = vpack.c.b16 %v462, %v461
      %v468 = vsel %vm399, %v447, 0
      %470 = vmatprep.subr.bf16.mxu0 0
      %471 = vmatpush1.bf16.msra.mxu0 %v463
      %472 = vmatprep.subr.bf16.mxu0 0
      %473 = vmatpush1.bf16.msra.mxu0 %v464
      %474 = vmatprep.subr.bf16.mxu0 0
      %475 = vmatpush1.bf16.msra.mxu0 0
      %476 = vmatprep.subr.bf16.mxu0 0
      %477 = vmatpush1.bf16.msra.mxu0 0
      %478 = vmatprep.subr.bf16.mxu0 0
      %479 = vmatpush1.bf16.msra.mxu0 0
      %480 = vmatprep.subr.bf16.mxu0 0
      %481 = vmatpush1.bf16.msra.mxu0 0
      %482 = vmatprep.subr.bf16.mxu0 0
      %483 = vmatpush1.bf16.msra.mxu0 0
      %484 = vmatprep.subr.bf16.mxu0 0
      %485 = vmatpush1.bf16.msra.mxu0 0
      %486 = vmatprep.subr.bf16.mxu0 0
      %487 = vmatpush1.bf16.msra.mxu0 0
      %488 = vmatprep.subr.bf16.mxu0 0
      %489 = vmatpush1.bf16.msra.mxu0 0
      %490 = vmatprep.subr.bf16.mxu0 0
      %491 = vmatpush1.bf16.msra.mxu0 0
      %492 = vmatprep.subr.bf16.mxu0 0
      %493 = vmatpush1.bf16.msra.mxu0 0
      %494 = vmatprep.subr.bf16.mxu0 0
      %495 = vmatpush1.bf16.msra.mxu0 0
      %496 = vmatprep.subr.bf16.mxu0 0
      %497 = vmatpush1.bf16.msra.mxu0 0
      %498 = vmatprep.subr.bf16.mxu0 0
      %499 = vmatpush1.bf16.msra.mxu0 0
      %500 = vmatprep.subr.bf16.mxu0 0
      %501 = vmatpush1.bf16.msra.mxu0 0
      %502 = vmatprep.mubr.bf16.mxu0 0
      %503 = vmatmul.mubr.bf16.gmra.mrb[0].mxu0 %v468
      %v504 = vpop.f32.mrb[0].mxu0
      %v505 = vadd.f32 %v453, %v504
      %v506 = vpop.f32.mrb[0].mxu0
      %v507 = vpop.f32.mrb[0].mxu0
      %v508 = vpop.f32.mrb[0].mxu0
      %509 = vdwg.mxu0
      %511 = vrot.lane.b32.xlu0 %v438, 120
      %v512 = vpop.permute.xlu0 %511
      %514 = vrot.lane.b32.xlu0 %v438, 112
      %v515 = vpop.permute.xlu0 %514
      %517 = vrot.lane.b32.xlu0 %v438, 104
      %v518 = vpop.permute.xlu0 %517
      %v520 = vcombine.low %v438, %v515
      %v521 = vcombine.high %v438, %v515
      %v523 = vunpack.c.l.s4 1983009808
      %v524 = vunpack.c.0.s8 %v523
      %v525 = vlaneseq
      %v526 = vshrl.u32 %v525, 7
      %v527 = vsub.s32 %v524, %v526
      %v528 = vrot.slane %v520, %v527
      %v530 = vunpack.c.l.s4 1983009808
      %v531 = vunpack.c.0.s8 %v530
      %v532 = vlaneseq
      %v533 = vshrl.u32 %v532, 7
      %v534 = vsub.s32 %v531, %v533
      %v535 = vrot.slane %v521, %v534
      %v536 = vcombine.low %v512, %v518
      %v537 = vcombine.high %v512, %v518
      %v539 = vunpack.c.l.s4 1983009808
      %v540 = vunpack.c.0.s8 %v539
      %v541 = vlaneseq
      %v542 = vshrl.u32 %v541, 7
      %v543 = vsub.s32 %v540, %v542
      %v544 = vrot.slane %v536, %v543
      %v546 = vunpack.c.l.s4 1983009808
      %v547 = vunpack.c.0.s8 %v546
      %v548 = vlaneseq
      %v549 = vshrl.u32 %v548, 7
      %v550 = vsub.s32 %v547, %v549
      %v551 = vrot.slane %v537, %v550
      %v552 = vcombine.low %v528, %v544
      %v553 = vcombine.high %v528, %v544
      %v555 = vunpack.c.l.s4 1934713408
      %v556 = vunpack.c.0.s8 %v555
      %v557 = vlaneseq
      %v558 = vshrl.u32 %v557, 7
      %v559 = vsub.s32 %v556, %v558
      %v560 = vrot.slane %v552, %v559
      %v562 = vunpack.c.l.s4 1934713408
      %v563 = vunpack.c.0.s8 %v562
      %v564 = vlaneseq
      %v565 = vshrl.u32 %v564, 7
      %v566 = vsub.s32 %v563, %v565
      %v567 = vrot.slane %v553, %v566
      %v568 = vcombine.low %v535, %v551
      %v569 = vcombine.high %v535, %v551
      %v571 = vunpack.c.l.s4 1934713408
      %v572 = vunpack.c.0.s8 %v571
      %v573 = vlaneseq
      %v574 = vshrl.u32 %v573, 7
      %v575 = vsub.s32 %v572, %v574
      %v576 = vrot.slane %v568, %v575
      %v578 = vunpack.c.l.s4 1934713408
      %v579 = vunpack.c.0.s8 %v578
      %v580 = vlaneseq
      %v581 = vshrl.u32 %v580, 7
      %v582 = vsub.s32 %v579, %v581
      %v583 = vrot.slane %v569, %v582
      %v584 = vcombine.high %v560, 0.0
      %v585 = vcombine.high %v567, 0.0
      %v586 = vcombine.high %v576, 0.0
      %v587 = vcombine.high %v583, 0.0
      %v588 = vcombine.low %v560, %v567
      %v590 = vunpack.c.l.s4 1983009808
      %v591 = vunpack.c.0.s8 %v590
      %v592 = vlaneseq
      %v593 = vshrl.u32 %v592, 7
      %v594 = vsub.s32 %v591, %v593
      %v595 = vrot.slane %v588, %v594
      %v596 = vcombine.low %v584, %v585
      %v598 = vunpack.c.l.s4 1983009808
      %v599 = vunpack.c.0.s8 %v598
      %v600 = vlaneseq
      %v601 = vshrl.u32 %v600, 7
      %v602 = vsub.s32 %v599, %v601
      %v603 = vrot.slane %v596, %v602
      %v604 = vcombine.low %v576, %v583
      %v606 = vunpack.c.l.s4 1983009808
      %v607 = vunpack.c.0.s8 %v606
      %v608 = vlaneseq
      %v609 = vshrl.u32 %v608, 7
      %v610 = vsub.s32 %v607, %v609
      %v611 = vrot.slane %v604, %v610
      %v612 = vcombine.low %v586, %v587
      %v614 = vunpack.c.l.s4 1983009808
      %v615 = vunpack.c.0.s8 %v614
      %v616 = vlaneseq
      %v617 = vshrl.u32 %v616, 7
      %v618 = vsub.s32 %v615, %v617
      %v619 = vrot.slane %v612, %v618
      %v620 = vcombine.low %v595, %v603
      %v621 = vcombine.high %v595, %v603
      %v623 = vunpack.c.l.s4 1934713408
      %v624 = vunpack.c.0.s8 %v623
      %v625 = vlaneseq
      %v626 = vshrl.u32 %v625, 7
      %v627 = vsub.s32 %v624, %v626
      %v628 = vrot.slane %v620, %v627
      %v630 = vunpack.c.l.s4 1934713408
      %v631 = vunpack.c.0.s8 %v630
      %v632 = vlaneseq
      %v633 = vshrl.u32 %v632, 7
      %v634 = vsub.s32 %v631, %v633
      %v635 = vrot.slane %v621, %v634
      %v636 = vcombine.low %v611, %v619
      %v637 = vcombine.high %v611, %v619
      %v639 = vunpack.c.l.s4 1934713408
      %v640 = vunpack.c.0.s8 %v639
      %v641 = vlaneseq
      %v642 = vshrl.u32 %v641, 7
      %v643 = vsub.s32 %v640, %v642
      %v644 = vrot.slane %v636, %v643
      %v646 = vunpack.c.l.s4 1934713408
      %v647 = vunpack.c.0.s8 %v646
      %v648 = vlaneseq
      %v649 = vshrl.u32 %v648, 7
      %v650 = vsub.s32 %v647, %v649
      %v651 = vrot.slane %v637, %v650
      %v652 = vcombine.low %v628, %v644
      %v653 = vcombine.high %v628, %v644
      %v654 = vcombine.low %v635, %v651
      %v655 = vcombine.high %v635, %v651
      %v656 = vpack.c.bf16 %v652, %v652
      %v657 = vpack.c.bf16 %v653, %v653
      %v658 = vpack.c.bf16 %v654, %v654
      %v659 = vpack.c.bf16 %v655, %v655
      %661 = vrot.lane.b32.xlu0 %v505, 120
      %v662 = vpop.permute.xlu0 %661
      %664 = vrot.lane.b32.xlu0 %v505, 112
      %v665 = vpop.permute.xlu0 %664
      %667 = vrot.lane.b32.xlu0 %v505, 104
      %v668 = vpop.permute.xlu0 %667
      %v670 = vcombine.low %v505, %v665
      %v671 = vcombine.high %v505, %v665
      %v673 = vunpack.c.l.s4 1983009808
      %v674 = vunpack.c.0.s8 %v673
      %v675 = vlaneseq
      %v676 = vshrl.u32 %v675, 7
      %v677 = vsub.s32 %v674, %v676
      %v678 = vrot.slane %v670, %v677
      %v680 = vunpack.c.l.s4 1983009808
      %v681 = vunpack.c.0.s8 %v680
      %v682 = vlaneseq
      %v683 = vshrl.u32 %v682, 7
      %v684 = vsub.s32 %v681, %v683
      %v685 = vrot.slane %v671, %v684
      %v686 = vcombine.low %v662, %v668
      %v687 = vcombine.high %v662, %v668
      %v689 = vunpack.c.l.s4 1983009808
      %v690 = vunpack.c.0.s8 %v689
      %v691 = vlaneseq
      %v692 = vshrl.u32 %v691, 7
      %v693 = vsub.s32 %v690, %v692
      %v694 = vrot.slane %v686, %v693
      %v696 = vunpack.c.l.s4 1983009808
      %v697 = vunpack.c.0.s8 %v696
      %v698 = vlaneseq
      %v699 = vshrl.u32 %v698, 7
      %v700 = vsub.s32 %v697, %v699
      %v701 = vrot.slane %v687, %v700
      %v702 = vcombine.low %v678, %v694
      %v703 = vcombine.high %v678, %v694
      %v705 = vunpack.c.l.s4 1934713408
      %v706 = vunpack.c.0.s8 %v705
      %v707 = vlaneseq
      %v708 = vshrl.u32 %v707, 7
      %v709 = vsub.s32 %v706, %v708
      %v710 = vrot.slane %v702, %v709
      %v712 = vunpack.c.l.s4 1934713408
      %v713 = vunpack.c.0.s8 %v712
      %v714 = vlaneseq
      %v715 = vshrl.u32 %v714, 7
      %v716 = vsub.s32 %v713, %v715
      %v717 = vrot.slane %v703, %v716
      %v718 = vcombine.low %v685, %v701
      %v719 = vcombine.high %v685, %v701
      %v721 = vunpack.c.l.s4 1934713408
      %v722 = vunpack.c.0.s8 %v721
      %v723 = vlaneseq
      %v724 = vshrl.u32 %v723, 7
      %v725 = vsub.s32 %v722, %v724
      %v726 = vrot.slane %v718, %v725
      %v728 = vunpack.c.l.s4 1934713408
      %v729 = vunpack.c.0.s8 %v728
      %v730 = vlaneseq
      %v731 = vshrl.u32 %v730, 7
      %v732 = vsub.s32 %v729, %v731
      %v733 = vrot.slane %v719, %v732
      %v734 = vcombine.high %v710, 0.0
      %v735 = vcombine.high %v717, 0.0
      %v736 = vcombine.high %v726, 0.0
      %v737 = vcombine.high %v733, 0.0
      %v738 = vcombine.low %v710, %v717
      %v740 = vunpack.c.l.s4 1983009808
      %v741 = vunpack.c.0.s8 %v740
      %v742 = vlaneseq
      %v743 = vshrl.u32 %v742, 7
      %v744 = vsub.s32 %v741, %v743
      %v745 = vrot.slane %v738, %v744
      %v746 = vcombine.low %v734, %v735
      %v748 = vunpack.c.l.s4 1983009808
      %v749 = vunpack.c.0.s8 %v748
      %v750 = vlaneseq
      %v751 = vshrl.u32 %v750, 7
      %v752 = vsub.s32 %v749, %v751
      %v753 = vrot.slane %v746, %v752
      %v754 = vcombine.low %v726, %v733
      %v756 = vunpack.c.l.s4 1983009808
      %v757 = vunpack.c.0.s8 %v756
      %v758 = vlaneseq
      %v759 = vshrl.u32 %v758, 7
      %v760 = vsub.s32 %v757, %v759
      %v761 = vrot.slane %v754, %v760
      %v762 = vcombine.low %v736, %v737
      %v764 = vunpack.c.l.s4 1983009808
      %v765 = vunpack.c.0.s8 %v764
      %v766 = vlaneseq
      %v767 = vshrl.u32 %v766, 7
      %v768 = vsub.s32 %v765, %v767
      %v769 = vrot.slane %v762, %v768
      %v770 = vcombine.low %v745, %v753
      %v771 = vcombine.high %v745, %v753
      %v773 = vunpack.c.l.s4 1934713408
      %v774 = vunpack.c.0.s8 %v773
      %v775 = vlaneseq
      %v776 = vshrl.u32 %v775, 7
      %v777 = vsub.s32 %v774, %v776
      %v778 = vrot.slane %v770, %v777
      %v780 = vunpack.c.l.s4 1934713408
      %v781 = vunpack.c.0.s8 %v780
      %v782 = vlaneseq
      %v783 = vshrl.u32 %v782, 7
      %v784 = vsub.s32 %v781, %v783
      %v785 = vrot.slane %v771, %v784
      %v786 = vcombine.low %v761, %v769
      %v787 = vcombine.high %v761, %v769
      %v789 = vunpack.c.l.s4 1934713408
      %v790 = vunpack.c.0.s8 %v789
      %v791 = vlaneseq
      %v792 = vshrl.u32 %v791, 7
      %v793 = vsub.s32 %v790, %v792
      %v794 = vrot.slane %v786, %v793
      %v796 = vunpack.c.l.s4 1934713408
      %v797 = vunpack.c.0.s8 %v796
      %v798 = vlaneseq
      %v799 = vshrl.u32 %v798, 7
      %v800 = vsub.s32 %v797, %v799
      %v801 = vrot.slane %v787, %v800
      %v802 = vcombine.low %v778, %v794
      %v803 = vcombine.high %v778, %v794
      %v804 = vcombine.low %v785, %v801
      %v805 = vcombine.high %v785, %v801
      %v806 = vpack.c.bf16 %v802, %v802
      %v807 = vpack.c.bf16 %v803, %v803
      %v808 = vpack.c.bf16 %v804, %v804
      %v809 = vpack.c.bf16 %v805, %v805
      %810 = vrot.lane.b32.xlu0 %v505, 96
      %v811 = vpop.permute.xlu0 %810
      %812 = vrot.lane.b32.xlu0 %v662, 96
      %v813 = vpop.permute.xlu0 %812
      %814 = vrot.lane.b32.xlu0 %v665, 96
      %v815 = vpop.permute.xlu0 %814
      %816 = vrot.lane.b32.xlu0 %v668, 96
      %v817 = vpop.permute.xlu0 %816
      %v822 = vcombine.low %v811, %v815
      %v823 = vcombine.high %v811, %v815
      %v825 = vunpack.c.l.s4 1983009808
      %v826 = vunpack.c.0.s8 %v825
      %v827 = vlaneseq
      %v828 = vshrl.u32 %v827, 7
      %v829 = vsub.s32 %v826, %v828
      %v830 = vrot.slane %v822, %v829
      %v832 = vunpack.c.l.s4 1983009808
      %v833 = vunpack.c.0.s8 %v832
      %v834 = vlaneseq
      %v835 = vshrl.u32 %v834, 7
      %v836 = vsub.s32 %v833, %v835
      %v837 = vrot.slane %v823, %v836
      %v838 = vcombine.low %v813, %v817
      %v839 = vcombine.high %v813, %v817
      %v841 = vunpack.c.l.s4 1983009808
      %v842 = vunpack.c.0.s8 %v841
      %v843 = vlaneseq
      %v844 = vshrl.u32 %v843, 7
      %v845 = vsub.s32 %v842, %v844
      %v846 = vrot.slane %v838, %v845
      %v848 = vunpack.c.l.s4 1983009808
      %v849 = vunpack.c.0.s8 %v848
      %v850 = vlaneseq
      %v851 = vshrl.u32 %v850, 7
      %v852 = vsub.s32 %v849, %v851
      %v853 = vrot.slane %v839, %v852
      %v854 = vcombine.low %v830, %v846
      %v855 = vcombine.high %v830, %v846
      %v857 = vunpack.c.l.s4 1934713408
      %v858 = vunpack.c.0.s8 %v857
      %v859 = vlaneseq
      %v860 = vshrl.u32 %v859, 7
      %v861 = vsub.s32 %v858, %v860
      %v862 = vrot.slane %v854, %v861
      %v864 = vunpack.c.l.s4 1934713408
      %v865 = vunpack.c.0.s8 %v864
      %v866 = vlaneseq
      %v867 = vshrl.u32 %v866, 7
      %v868 = vsub.s32 %v865, %v867
      %v869 = vrot.slane %v855, %v868
      %v870 = vcombine.low %v837, %v853
      %v871 = vcombine.high %v837, %v853
      %v873 = vunpack.c.l.s4 1934713408
      %v874 = vunpack.c.0.s8 %v873
      %v875 = vlaneseq
      %v876 = vshrl.u32 %v875, 7
      %v877 = vsub.s32 %v874, %v876
      %v878 = vrot.slane %v870, %v877
      %v880 = vunpack.c.l.s4 1934713408
      %v881 = vunpack.c.0.s8 %v880
      %v882 = vlaneseq
      %v883 = vshrl.u32 %v882, 7
      %v884 = vsub.s32 %v881, %v883
      %v885 = vrot.slane %v871, %v884
      %v886 = vcombine.high %v862, 0.0
      %v887 = vcombine.high %v869, 0.0
      %v888 = vcombine.high %v878, 0.0
      %v889 = vcombine.high %v885, 0.0
      %v890 = vcombine.low %v862, %v869
      %v892 = vunpack.c.l.s4 1983009808
      %v893 = vunpack.c.0.s8 %v892
      %v894 = vlaneseq
      %v895 = vshrl.u32 %v894, 7
      %v896 = vsub.s32 %v893, %v895
      %v897 = vrot.slane %v890, %v896
      %v898 = vcombine.low %v886, %v887
      %v900 = vunpack.c.l.s4 1983009808
      %v901 = vunpack.c.0.s8 %v900
      %v902 = vlaneseq
      %v903 = vshrl.u32 %v902, 7
      %v904 = vsub.s32 %v901, %v903
      %v905 = vrot.slane %v898, %v904
      %v906 = vcombine.low %v878, %v885
      %v908 = vunpack.c.l.s4 1983009808
      %v909 = vunpack.c.0.s8 %v908
      %v910 = vlaneseq
      %v911 = vshrl.u32 %v910, 7
      %v912 = vsub.s32 %v909, %v911
      %v913 = vrot.slane %v906, %v912
      %v914 = vcombine.low %v888, %v889
      %v916 = vunpack.c.l.s4 1983009808
      %v917 = vunpack.c.0.s8 %v916
      %v918 = vlaneseq
      %v919 = vshrl.u32 %v918, 7
      %v920 = vsub.s32 %v917, %v919
      %v921 = vrot.slane %v914, %v920
      %v922 = vcombine.low %v897, %v905
      %v923 = vcombine.high %v897, %v905
      %v925 = vunpack.c.l.s4 1934713408
      %v926 = vunpack.c.0.s8 %v925
      %v927 = vlaneseq
      %v928 = vshrl.u32 %v927, 7
      %v929 = vsub.s32 %v926, %v928
      %v930 = vrot.slane %v922, %v929
      %v932 = vunpack.c.l.s4 1934713408
      %v933 = vunpack.c.0.s8 %v932
      %v934 = vlaneseq
      %v935 = vshrl.u32 %v934, 7
      %v936 = vsub.s32 %v933, %v935
      %v937 = vrot.slane %v923, %v936
      %v938 = vcombine.low %v913, %v921
      %v939 = vcombine.high %v913, %v921
      %v941 = vunpack.c.l.s4 1934713408
      %v942 = vunpack.c.0.s8 %v941
      %v943 = vlaneseq
      %v944 = vshrl.u32 %v943, 7
      %v945 = vsub.s32 %v942, %v944
      %v946 = vrot.slane %v938, %v945
      %v948 = vunpack.c.l.s4 1934713408
      %v949 = vunpack.c.0.s8 %v948
      %v950 = vlaneseq
      %v951 = vshrl.u32 %v950, 7
      %v952 = vsub.s32 %v949, %v951
      %v953 = vrot.slane %v939, %v952
      %v954 = vcombine.low %v930, %v946
      %v955 = vcombine.high %v930, %v946
      %v956 = vcombine.low %v937, %v953
      %v957 = vcombine.high %v937, %v953
      %v958 = vpack.c.bf16 %v954, %v954
      %v959 = vpack.c.bf16 %v955, %v955
      %v960 = vpack.c.bf16 %v956, %v956
      %v961 = vpack.c.bf16 %v957, %v957
      %vm962 = vcmask 64512
      %v964 = vsel %vm962, %v656, 0
      %v967 = vsel %vm962, %v806, 0
      %969 = vmatprep.subr.bf16.mxu0 0
      %970 = vmatpush1.bf16.xpose.msra.mxu0 %v967
      %971 = vmatprep.subr.bf16.mxu0 0
      %972 = vmatpush1.bf16.xpose.msra.mxu0 0
      %973 = vmatprep.subr.bf16.mxu0 0
      %974 = vmatpush1.bf16.xpose.msra.mxu0 0
      %975 = vmatprep.subr.bf16.mxu0 0
      %976 = vmatpush1.bf16.xpose.msra.mxu0 0
      %977 = vmatprep.subr.bf16.mxu0 0
      %978 = vmatpush1.bf16.xpose.msra.mxu0 0
      %979 = vmatprep.subr.bf16.mxu0 0
      %980 = vmatpush1.bf16.xpose.msra.mxu0 0
      %981 = vmatprep.subr.bf16.mxu0 0
      %982 = vmatpush1.bf16.xpose.msra.mxu0 0
      %983 = vmatprep.subr.bf16.mxu0 0
      %984 = vmatpush1.bf16.xpose.msra.mxu0 0
      %985 = vmatprep.subr.bf16.mxu0 0
      %986 = vmatpush1.bf16.xpose.msra.mxu0 0
      %987 = vmatprep.subr.bf16.mxu0 0
      %988 = vmatpush1.bf16.xpose.msra.mxu0 0
      %989 = vmatprep.subr.bf16.mxu0 0
      %990 = vmatpush1.bf16.xpose.msra.mxu0 0
      %991 = vmatprep.subr.bf16.mxu0 0
      %992 = vmatpush1.bf16.xpose.msra.mxu0 0
      %993 = vmatprep.subr.bf16.mxu0 0
      %994 = vmatpush1.bf16.xpose.msra.mxu0 0
      %995 = vmatprep.subr.bf16.mxu0 0
      %996 = vmatpush1.bf16.xpose.msra.mxu0 0
      %997 = vmatprep.subr.bf16.mxu0 0
      %998 = vmatpush1.bf16.xpose.msra.mxu0 0
      %999 = vmatprep.subr.bf16.mxu0 0
      %1000 = vmatpush1.bf16.xpose.msra.mxu0 0
      %1001 = vmatprep.mubr.bf16.mxu0 0
      %1002 = vmatmul.mubr.bf16.gmra.mrb[0].mxu0 %v964
      %v1003 = vpop.f32.mrb[0].mxu0
      %v1004 = vadd.f32 0.0, %v1003
      %v1005 = vpop.f32.mrb[0].mxu0
      %v1006 = vpop.f32.mrb[0].mxu0
      %v1007 = vpop.f32.mrb[0].mxu0
      %1008 = vdwg.mxu0
      %v1010 = vsel %vm962, %v657, 0
      %v1013 = vsel %vm962, %v807, 0
      %1015 = vmatprep.subr.bf16.mxu0 0
      %1016 = vmatpush1.bf16.xpose.msra.mxu0 %v1013
      %1017 = vmatprep.subr.bf16.mxu0 0
      %1018 = vmatpush1.bf16.xpose.msra.mxu0 0
      %1019 = vmatprep.subr.bf16.mxu0 0
      %1020 = vmatpush1.bf16.xpose.msra.mxu0 0
      %1021 = vmatprep.subr.bf16.mxu0 0
      %1022 = vmatpush1.bf16.xpose.msra.mxu0 0
      %1023 = vmatprep.subr.bf16.mxu0 0
      %1024 = vmatpush1.bf16.xpose.msra.mxu0 0
      %1025 = vmatprep.subr.bf16.mxu0 0
      %1026 = vmatpush1.bf16.xpose.msra.mxu0 0
      %1027 = vmatprep.subr.bf16.mxu0 0
      %1028 = vmatpush1.bf16.xpose.msra.mxu0 0
      %1029 = vmatprep.subr.bf16.mxu0 0
      %1030 = vmatpush1.bf16.xpose.msra.mxu0 0
      %1031 = vmatprep.subr.bf16.mxu0 0
      %1032 = vmatpush1.bf16.xpose.msra.mxu0 0
      %1033 = vmatprep.subr.bf16.mxu0 0
      %1034 = vmatpush1.bf16.xpose.msra.mxu0 0
      %1035 = vmatprep.subr.bf16.mxu0 0
      %1036 = vmatpush1.bf16.xpose.msra.mxu0 0
      %1037 = vmatprep.subr.bf16.mxu0 0
      %1038 = vmatpush1.bf16.xpose.msra.mxu0 0
      %1039 = vmatprep.subr.bf16.mxu0 0
      %1040 = vmatpush1.bf16.xpose.msra.mxu0 0
      %1041 = vmatprep.subr.bf16.mxu0 0
      %1042 = vmatpush1.bf16.xpose.msra.mxu0 0
      %1043 = vmatprep.subr.bf16.mxu0 0
      %1044 = vmatpush1.bf16.xpose.msra.mxu0 0
      %1045 = vmatprep.subr.bf16.mxu0 0
      %1046 = vmatpush1.bf16.xpose.msra.mxu0 0
      %1047 = vmatprep.mubr.bf16.mxu0 0
      %1048 = vmatmul.mubr.bf16.gmra.mrb[0].mxu0 %v1010
      %v1049 = vpop.f32.mrb[0].mxu0
      %v1050 = vadd.f32 0.0, %v1049
      %v1051 = vpop.f32.mrb[0].mxu0
      %v1052 = vpop.f32.mrb[0].mxu0
      %v1053 = vpop.f32.mrb[0].mxu0
      %1054 = vdwg.mxu0
      %v1056 = vsel %vm962, %v658, 0
      %v1059 = vsel %vm962, %v808, 0
      %1061 = vmatprep.subr.bf16.mxu0 0
      %1062 = vmatpush1.bf16.xpose.msra.mxu0 %v1059
      %1063 = vmatprep.subr.bf16.mxu0 0
      %1064 = vmatpush1.bf16.xpose.msra.mxu0 0
      %1065 = vmatprep.subr.bf16.mxu0 0
      %1066 = vmatpush1.bf16.xpose.msra.mxu0 0
      %1067 = vmatprep.subr.bf16.mxu0 0
      %1068 = vmatpush1.bf16.xpose.msra.mxu0 0
      %1069 = vmatprep.subr.bf16.mxu0 0
      %1070 = vmatpush1.bf16.xpose.msra.mxu0 0
      %1071 = vmatprep.subr.bf16.mxu0 0
      %1072 = vmatpush1.bf16.xpose.msra.mxu0 0
      %1073 = vmatprep.subr.bf16.mxu0 0
      %1074 = vmatpush1.bf16.xpose.msra.mxu0 0
      %1075 = vmatprep.subr.bf16.mxu0 0
      %1076 = vmatpush1.bf16.xpose.msra.mxu0 0
      %1077 = vmatprep.subr.bf16.mxu0 0
      %1078 = vmatpush1.bf16.xpose.msra.mxu0 0
      %1079 = vmatprep.subr.bf16.mxu0 0
      %1080 = vmatpush1.bf16.xpose.msra.mxu0 0
      %1081 = vmatprep.subr.bf16.mxu0 0
      %1082 = vmatpush1.bf16.xpose.msra.mxu0 0
      %1083 = vmatprep.subr.bf16.mxu0 0
      %1084 = vmatpush1.bf16.xpose.msra.mxu0 0
      %1085 = vmatprep.subr.bf16.mxu0 0
      %1086 = vmatpush1.bf16.xpose.msra.mxu0 0
      %1087 = vmatprep.subr.bf16.mxu0 0
      %1088 = vmatpush1.bf16.xpose.msra.mxu0 0
      %1089 = vmatprep.subr.bf16.mxu0 0
      %1090 = vmatpush1.bf16.xpose.msra.mxu0 0
      %1091 = vmatprep.subr.bf16.mxu0 0
      %1092 = vmatpush1.bf16.xpose.msra.mxu0 0
      %1093 = vmatprep.mubr.bf16.mxu0 0
      %1094 = vmatmul.mubr.bf16.gmra.mrb[0].mxu0 %v1056
      %v1095 = vpop.f32.mrb[0].mxu0
      %v1096 = vadd.f32 0.0, %v1095
      %v1097 = vpop.f32.mrb[0].mxu0
      %v1098 = vpop.f32.mrb[0].mxu0
      %v1099 = vpop.f32.mrb[0].mxu0
      %1100 = vdwg.mxu0
      %v1102 = vsel %vm962, %v659, 0
      %v1105 = vsel %vm962, %v809, 0
      %1107 = vmatprep.subr.bf16.mxu0 0
      %1108 = vmatpush1.bf16.xpose.msra.mxu0 %v1105
      %1109 = vmatprep.subr.bf16.mxu0 0
      %1110 = vmatpush1.bf16.xpose.msra.mxu0 0
      %1111 = vmatprep.subr.bf16.mxu0 0
      %1112 = vmatpush1.bf16.xpose.msra.mxu0 0
      %1113 = vmatprep.subr.bf16.mxu0 0
      %1114 = vmatpush1.bf16.xpose.msra.mxu0 0
      %1115 = vmatprep.subr.bf16.mxu0 0
      %1116 = vmatpush1.bf16.xpose.msra.mxu0 0
      %1117 = vmatprep.subr.bf16.mxu0 0
      %1118 = vmatpush1.bf16.xpose.msra.mxu0 0
      %1119 = vmatprep.subr.bf16.mxu0 0
      %1120 = vmatpush1.bf16.xpose.msra.mxu0 0
      %1121 = vmatprep.subr.bf16.mxu0 0
      %1122 = vmatpush1.bf16.xpose.msra.mxu0 0
      %1123 = vmatprep.subr.bf16.mxu0 0
      %1124 = vmatpush1.bf16.xpose.msra.mxu0 0
      %1125 = vmatprep.subr.bf16.mxu0 0
      %1126 = vmatpush1.bf16.xpose.msra.mxu0 0
      %1127 = vmatprep.subr.bf16.mxu0 0
      %1128 = vmatpush1.bf16.xpose.msra.mxu0 0
      %1129 = vmatprep.subr.bf16.mxu0 0
      %1130 = vmatpush1.bf16.xpose.msra.mxu0 0
      %1131 = vmatprep.subr.bf16.mxu0 0
      %1132 = vmatpush1.bf16.xpose.msra.mxu0 0
      %1133 = vmatprep.subr.bf16.mxu0 0
      %1134 = vmatpush1.bf16.xpose.msra.mxu0 0
      %1135 = vmatprep.subr.bf16.mxu0 0
      %1136 = vmatpush1.bf16.xpose.msra.mxu0 0
      %1137 = vmatprep.subr.bf16.mxu0 0
      %1138 = vmatpush1.bf16.xpose.msra.mxu0 0
      %1139 = vmatprep.mubr.bf16.mxu0 0
      %1140 = vmatmul.mubr.bf16.gmra.mrb[0].mxu0 %v1102
      %v1141 = vpop.f32.mrb[0].mxu0
      %v1142 = vadd.f32 0.0, %v1141
      %v1143 = vpop.f32.mrb[0].mxu0
      %v1144 = vpop.f32.mrb[0].mxu0
      %v1145 = vpop.f32.mrb[0].mxu0
      %1146 = vdwg.mxu0
      %v1147 = vmul.f32 %v1004, 0.35355338
      %v1148 = vmul.f32 %v1050, 0.35355338
      %v1149 = vmul.f32 %v1096, 0.35355338
      %v1150 = vmul.f32 %v1142, 0.35355338
      %v1151 = vsel %vm962, %v1147, -inf
      %1152 = vmax.xlane.f32.xlu0 %v1151
      %v1153 = vpop.xlane.xlu0 %1152
      %v1154 = vsel %vm962, %v1148, -inf
      %1155 = vmax.xlane.f32.xlu0 %v1154
      %v1156 = vpop.xlane.xlu0 %1155
      %v1157 = vsel %vm962, %v1149, -inf
      %1158 = vmax.xlane.f32.xlu0 %v1157
      %v1159 = vpop.xlane.xlu0 %1158
      %v1160 = vsel %vm962, %v1150, -inf
      %1161 = vmax.xlane.f32.xlu0 %v1160
      %v1162 = vpop.xlane.xlu0 %1161
      %v1163 = vsub.f32 %v1147, %v1153
      %v1164 = vsub.f32 %v1148, %v1156
      %v1165 = vsub.f32 %v1149, %v1159
      %v1166 = vsub.f32 %v1150, %v1162
      %v1167 = vmul.f32 %v1163, 1.442695
      %v1168 = vpow.pop %v1167
      %v1169 = vmul.f32 %v1164, 1.442695
      %v1170 = vpow.pop %v1169
      %v1171 = vmul.f32 %v1165, 1.442695
      %v1172 = vpow.pop %v1171
      %v1173 = vmul.f32 %v1166, 1.442695
      %v1174 = vpow.pop %v1173
      %v1175 = vsel %vm962, %v1168, 0.0
      %1176 = vadd.xlane.f32.xlu0 %v1175
      %v1177 = vpop.xlane.xlu0 %1176
      %v1178 = vsel %vm962, %v1170, 0.0
      %1179 = vadd.xlane.f32.xlu0 %v1178
      %v1180 = vpop.xlane.xlu0 %1179
      %v1181 = vsel %vm962, %v1172, 0.0
      %1182 = vadd.xlane.f32.xlu0 %v1181
      %v1183 = vpop.xlane.xlu0 %1182
      %v1184 = vsel %vm962, %v1174, 0.0
      %1185 = vadd.xlane.f32.xlu0 %v1184
      %v1186 = vpop.xlane.xlu0 %1185
      %v1187 = vrcp.pop %v1177
      %v1188 = vmul.f32 %v1168, %v1187
      %v1189 = vrcp.pop %v1180
      %v1190 = vmul.f32 %v1170, %v1189
      %v1191 = vrcp.pop %v1183
      %v1192 = vmul.f32 %v1172, %v1191
      %v1193 = vrcp.pop %v1186
      %v1194 = vmul.f32 %v1174, %v1193
      %v1195 = vpack.c.bf16 %v1188, %v1188
      %v1196 = vpack.c.bf16 %v1190, %v1190
      %v1197 = vpack.c.bf16 %v1192, %v1192
      %v1198 = vpack.c.bf16 %v1194, %v1194
      %v1200 = vsel %vm962, %v1195, 0
      %vm1202 = vcmask 1043456
      %v1204 = vsel %vm1202, %v958, 0
      %1206 = vmatprep.subr.bf16.mxu0 0
      %1207 = vmatpush1.bf16.msra.mxu0 %v1204
      %1208 = vmatprep.subr.bf16.mxu0 0
      %1209 = vmatpush1.bf16.msra.mxu0 0
      %1210 = vmatprep.subr.bf16.mxu0 0
      %1211 = vmatpush1.bf16.msra.mxu0 0
      %1212 = vmatprep.subr.bf16.mxu0 0
      %1213 = vmatpush1.bf16.msra.mxu0 0
      %1214 = vmatprep.subr.bf16.mxu0 0
      %1215 = vmatpush1.bf16.msra.mxu0 0
      %1216 = vmatprep.subr.bf16.mxu0 0
      %1217 = vmatpush1.bf16.msra.mxu0 0
      %1218 = vmatprep.subr.bf16.mxu0 0
      %1219 = vmatpush1.bf16.msra.mxu0 0
      %1220 = vmatprep.subr.bf16.mxu0 0
      %1221 = vmatpush1.bf16.msra.mxu0 0
      %1222 = vmatprep.subr.bf16.mxu0 0
      %1223 = vmatpush1.bf16.msra.mxu0 0
      %1224 = vmatprep.subr.bf16.mxu0 0
      %1225 = vmatpush1.bf16.msra.mxu0 0
      %1226 = vmatprep.subr.bf16.mxu0 0
      %1227 = vmatpush1.bf16.msra.mxu0 0
      %1228 = vmatprep.subr.bf16.mxu0 0
      %1229 = vmatpush1.bf16.msra.mxu0 0
      %1230 = vmatprep.subr.bf16.mxu0 0
      %1231 = vmatpush1.bf16.msra.mxu0 0
      %1232 = vmatprep.subr.bf16.mxu0 0
      %1233 = vmatpush1.bf16.msra.mxu0 0
      %1234 = vmatprep.subr.bf16.mxu0 0
      %1235 = vmatpush1.bf16.msra.mxu0 0
      %1236 = vmatprep.subr.bf16.mxu0 0
      %1237 = vmatpush1.bf16.msra.mxu0 0
      %1238 = vmatprep.mubr.bf16.mxu0 0
      %1239 = vmatmul.mubr.bf16.gmra.mrb[0].mxu0 %v1200
      %v1240 = vpop.f32.mrb[0].mxu0
      %v1241 = vadd.f32 0.0, %v1240
      %v1242 = vpop.f32.mrb[0].mxu0
      %v1243 = vpop.f32.mrb[0].mxu0
      %v1244 = vpop.f32.mrb[0].mxu0
      %1245 = vdwg.mxu0
      %v1247 = vsel %vm962, %v1196, 0
      %v1250 = vsel %vm1202, %v959, 0
      %1252 = vmatprep.subr.bf16.mxu0 0
      %1253 = vmatpush1.bf16.msra.mxu0 %v1250
      %1254 = vmatprep.subr.bf16.mxu0 0
      %1255 = vmatpush1.bf16.msra.mxu0 0
      %1256 = vmatprep.subr.bf16.mxu0 0
      %1257 = vmatpush1.bf16.msra.mxu0 0
      %1258 = vmatprep.subr.bf16.mxu0 0
      %1259 = vmatpush1.bf16.msra.mxu0 0
      %1260 = vmatprep.subr.bf16.mxu0 0
      %1261 = vmatpush1.bf16.msra.mxu0 0
      %1262 = vmatprep.subr.bf16.mxu0 0
      %1263 = vmatpush1.bf16.msra.mxu0 0
      %1264 = vmatprep.subr.bf16.mxu0 0
      %1265 = vmatpush1.bf16.msra.mxu0 0
      %1266 = vmatprep.subr.bf16.mxu0 0
      %1267 = vmatpush1.bf16.msra.mxu0 0
      %1268 = vmatprep.subr.bf16.mxu0 0
      %1269 = vmatpush1.bf16.msra.mxu0 0
      %1270 = vmatprep.subr.bf16.mxu0 0
      %1271 = vmatpush1.bf16.msra.mxu0 0
      %1272 = vmatprep.subr.bf16.mxu0 0
      %1273 = vmatpush1.bf16.msra.mxu0 0
      %1274 = vmatprep.subr.bf16.mxu0 0
      %1275 = vmatpush1.bf16.msra.mxu0 0
      %1276 = vmatprep.subr.bf16.mxu0 0
      %1277 = vmatpush1.bf16.msra.mxu0 0
      %1278 = vmatprep.subr.bf16.mxu0 0
      %1279 = vmatpush1.bf16.msra.mxu0 0
      %1280 = vmatprep.subr.bf16.mxu0 0
      %1281 = vmatpush1.bf16.msra.mxu0 0
      %1282 = vmatprep.subr.bf16.mxu0 0
      %1283 = vmatpush1.bf16.msra.mxu0 0
      %1284 = vmatprep.mubr.bf16.mxu0 0
      %1285 = vmatmul.mubr.bf16.gmra.mrb[0].mxu0 %v1247
      %v1286 = vpop.f32.mrb[0].mxu0
      %v1287 = vadd.f32 0.0, %v1286
      %v1288 = vpop.f32.mrb[0].mxu0
      %v1289 = vpop.f32.mrb[0].mxu0
      %v1290 = vpop.f32.mrb[0].mxu0
      %1291 = vdwg.mxu0
      %v1293 = vsel %vm962, %v1197, 0
      %v1296 = vsel %vm1202, %v960, 0
      %1298 = vmatprep.subr.bf16.mxu0 0
      %1299 = vmatpush1.bf16.msra.mxu0 %v1296
      %1300 = vmatprep.subr.bf16.mxu0 0
      %1301 = vmatpush1.bf16.msra.mxu0 0
      %1302 = vmatprep.subr.bf16.mxu0 0
      %1303 = vmatpush1.bf16.msra.mxu0 0
      %1304 = vmatprep.subr.bf16.mxu0 0
      %1305 = vmatpush1.bf16.msra.mxu0 0
      %1306 = vmatprep.subr.bf16.mxu0 0
      %1307 = vmatpush1.bf16.msra.mxu0 0
      %1308 = vmatprep.subr.bf16.mxu0 0
      %1309 = vmatpush1.bf16.msra.mxu0 0
      %1310 = vmatprep.subr.bf16.mxu0 0
      %1311 = vmatpush1.bf16.msra.mxu0 0
      %1312 = vmatprep.subr.bf16.mxu0 0
      %1313 = vmatpush1.bf16.msra.mxu0 0
      %1314 = vmatprep.subr.bf16.mxu0 0
      %1315 = vmatpush1.bf16.msra.mxu0 0
      %1316 = vmatprep.subr.bf16.mxu0 0
      %1317 = vmatpush1.bf16.msra.mxu0 0
      %1318 = vmatprep.subr.bf16.mxu0 0
      %1319 = vmatpush1.bf16.msra.mxu0 0
      %1320 = vmatprep.subr.bf16.mxu0 0
      %1321 = vmatpush1.bf16.msra.mxu0 0
      %1322 = vmatprep.subr.bf16.mxu0 0
      %1323 = vmatpush1.bf16.msra.mxu0 0
      %1324 = vmatprep.subr.bf16.mxu0 0
      %1325 = vmatpush1.bf16.msra.mxu0 0
      %1326 = vmatprep.subr.bf16.mxu0 0
      %1327 = vmatpush1.bf16.msra.mxu0 0
      %1328 = vmatprep.subr.bf16.mxu0 0
      %1329 = vmatpush1.bf16.msra.mxu0 0
      %1330 = vmatprep.mubr.bf16.mxu0 0
      %1331 = vmatmul.mubr.bf16.gmra.mrb[0].mxu0 %v1293
      %v1332 = vpop.f32.mrb[0].mxu0
      %v1333 = vadd.f32 0.0, %v1332
      %v1334 = vpop.f32.mrb[0].mxu0
      %v1335 = vpop.f32.mrb[0].mxu0
      %v1336 = vpop.f32.mrb[0].mxu0
      %1337 = vdwg.mxu0
      %v1339 = vsel %vm962, %v1198, 0
      %v1342 = vsel %vm1202, %v961, 0
      %1344 = vmatprep.subr.bf16.mxu0 0
      %1345 = vmatpush1.bf16.msra.mxu0 %v1342
      %1346 = vmatprep.subr.bf16.mxu0 0
      %1347 = vmatpush1.bf16.msra.mxu0 0
      %1348 = vmatprep.subr.bf16.mxu0 0
      %1349 = vmatpush1.bf16.msra.mxu0 0
      %1350 = vmatprep.subr.bf16.mxu0 0
      %1351 = vmatpush1.bf16.msra.mxu0 0
      %1352 = vmatprep.subr.bf16.mxu0 0
      %1353 = vmatpush1.bf16.msra.mxu0 0
      %1354 = vmatprep.subr.bf16.mxu0 0
      %1355 = vmatpush1.bf16.msra.mxu0 0
      %1356 = vmatprep.subr.bf16.mxu0 0
      %1357 = vmatpush1.bf16.msra.mxu0 0
      %1358 = vmatprep.subr.bf16.mxu0 0
      %1359 = vmatpush1.bf16.msra.mxu0 0
      %1360 = vmatprep.subr.bf16.mxu0 0
      %1361 = vmatpush1.bf16.msra.mxu0 0
      %1362 = vmatprep.subr.bf16.mxu0 0
      %1363 = vmatpush1.bf16.msra.mxu0 0
      %1364 = vmatprep.subr.bf16.mxu0 0
      %1365 = vmatpush1.bf16.msra.mxu0 0
      %1366 = vmatprep.subr.bf16.mxu0 0
      %1367 = vmatpush1.bf16.msra.mxu0 0
      %1368 = vmatprep.subr.bf16.mxu0 0
      %1369 = vmatpush1.bf16.msra.mxu0 0
      %1370 = vmatprep.subr.bf16.mxu0 0
      %1371 = vmatpush1.bf16.msra.mxu0 0
      %1372 = vmatprep.subr.bf16.mxu0 0
      %1373 = vmatpush1.bf16.msra.mxu0 0
      %1374 = vmatprep.subr.bf16.mxu0 0
      %1375 = vmatpush1.bf16.msra.mxu0 0
      %1376 = vmatprep.mubr.bf16.mxu0 0
      %1377 = vmatmul.mubr.bf16.gmra.mrb[0].mxu0 %v1339
      %v1378 = vpop.f32.mrb[0].mxu0
      %v1379 = vadd.f32 0.0, %v1378
      %v1380 = vpop.f32.mrb[0].mxu0
      %v1381 = vpop.f32.mrb[0].mxu0
      %v1382 = vpop.f32.mrb[0].mxu0
      %1383 = vdwg.mxu0
      %v1384 = vcombine.low %v1241, %v1333
      %v1385 = vcombine.high %v1241, %v1333
      %v1387 = vunpack.c.l.s4 1983009808
      %v1388 = vunpack.c.0.s8 %v1387
      %v1389 = vlaneseq
      %v1390 = vshrl.u32 %v1389, 7
      %v1391 = vsub.s32 %v1388, %v1390
      %v1392 = vrot.slane %v1384, %v1391
      %v1394 = vunpack.c.l.s4 1983009808
      %v1395 = vunpack.c.0.s8 %v1394
      %v1396 = vlaneseq
      %v1397 = vshrl.u32 %v1396, 7
      %v1398 = vsub.s32 %v1395, %v1397
      %v1399 = vrot.slane %v1385, %v1398
      %v1400 = vcombine.low %v1287, %v1379
      %v1401 = vcombine.high %v1287, %v1379
      %v1403 = vunpack.c.l.s4 1983009808
      %v1404 = vunpack.c.0.s8 %v1403
      %v1405 = vlaneseq
      %v1406 = vshrl.u32 %v1405, 7
      %v1407 = vsub.s32 %v1404, %v1406
      %v1408 = vrot.slane %v1400, %v1407
      %v1410 = vunpack.c.l.s4 1983009808
      %v1411 = vunpack.c.0.s8 %v1410
      %v1412 = vlaneseq
      %v1413 = vshrl.u32 %v1412, 7
      %v1414 = vsub.s32 %v1411, %v1413
      %v1415 = vrot.slane %v1401, %v1414
      %v1416 = vcombine.low %v1392, %v1408
      %v1417 = vcombine.high %v1392, %v1408
      %v1419 = vunpack.c.l.s4 1934713408
      %v1420 = vunpack.c.0.s8 %v1419
      %v1421 = vlaneseq
      %v1422 = vshrl.u32 %v1421, 7
      %v1423 = vsub.s32 %v1420, %v1422
      %v1424 = vrot.slane %v1416, %v1423
      %v1426 = vunpack.c.l.s4 1934713408
      %v1427 = vunpack.c.0.s8 %v1426
      %v1428 = vlaneseq
      %v1429 = vshrl.u32 %v1428, 7
      %v1430 = vsub.s32 %v1427, %v1429
      %v1431 = vrot.slane %v1417, %v1430
      %v1432 = vcombine.low %v1399, %v1415
      %v1433 = vcombine.high %v1399, %v1415
      %v1435 = vunpack.c.l.s4 1934713408
      %v1436 = vunpack.c.0.s8 %v1435
      %v1437 = vlaneseq
      %v1438 = vshrl.u32 %v1437, 7
      %v1439 = vsub.s32 %v1436, %v1438
      %v1440 = vrot.slane %v1432, %v1439
      %v1442 = vunpack.c.l.s4 1934713408
      %v1443 = vunpack.c.0.s8 %v1442
      %v1444 = vlaneseq
      %v1445 = vshrl.u32 %v1444, 7
      %v1446 = vsub.s32 %v1443, %v1445
      %v1447 = vrot.slane %v1433, %v1446
      %v1448 = vcombine.high %v1424, 0.0
      %v1449 = vcombine.high %v1431, 0.0
      %v1450 = vcombine.high %v1440, 0.0
      %v1451 = vcombine.high %v1447, 0.0
      %v1452 = vcombine.low %v1424, %v1431
      %v1454 = vunpack.c.l.s4 1983009808
      %v1455 = vunpack.c.0.s8 %v1454
      %v1456 = vlaneseq
      %v1457 = vshrl.u32 %v1456, 7
      %v1458 = vsub.s32 %v1455, %v1457
      %v1459 = vrot.slane %v1452, %v1458
      %v1460 = vcombine.low %v1448, %v1449
      %v1462 = vunpack.c.l.s4 1983009808
      %v1463 = vunpack.c.0.s8 %v1462
      %v1464 = vlaneseq
      %v1465 = vshrl.u32 %v1464, 7
      %v1466 = vsub.s32 %v1463, %v1465
      %v1467 = vrot.slane %v1460, %v1466
      %v1468 = vcombine.low %v1440, %v1447
      %v1470 = vunpack.c.l.s4 1983009808
      %v1471 = vunpack.c.0.s8 %v1470
      %v1472 = vlaneseq
      %v1473 = vshrl.u32 %v1472, 7
      %v1474 = vsub.s32 %v1471, %v1473
      %v1475 = vrot.slane %v1468, %v1474
      %v1476 = vcombine.low %v1450, %v1451
      %v1478 = vunpack.c.l.s4 1983009808
      %v1479 = vunpack.c.0.s8 %v1478
      %v1480 = vlaneseq
      %v1481 = vshrl.u32 %v1480, 7
      %v1482 = vsub.s32 %v1479, %v1481
      %v1483 = vrot.slane %v1476, %v1482
      %v1484 = vcombine.low %v1459, %v1467
      %v1485 = vcombine.high %v1459, %v1467
      %v1487 = vunpack.c.l.s4 1934713408
      %v1488 = vunpack.c.0.s8 %v1487
      %v1489 = vlaneseq
      %v1490 = vshrl.u32 %v1489, 7
      %v1491 = vsub.s32 %v1488, %v1490
      %v1492 = vrot.slane %v1484, %v1491
      %v1494 = vunpack.c.l.s4 1934713408
      %v1495 = vunpack.c.0.s8 %v1494
      %v1496 = vlaneseq
      %v1497 = vshrl.u32 %v1496, 7
      %v1498 = vsub.s32 %v1495, %v1497
      %v1499 = vrot.slane %v1485, %v1498
      %v1500 = vcombine.low %v1475, %v1483
      %v1501 = vcombine.high %v1475, %v1483
      %v1503 = vunpack.c.l.s4 1934713408
      %v1504 = vunpack.c.0.s8 %v1503
      %v1505 = vlaneseq
      %v1506 = vshrl.u32 %v1505, 7
      %v1507 = vsub.s32 %v1504, %v1506
      %v1508 = vrot.slane %v1500, %v1507
      %v1510 = vunpack.c.l.s4 1934713408
      %v1511 = vunpack.c.0.s8 %v1510
      %v1512 = vlaneseq
      %v1513 = vshrl.u32 %v1512, 7
      %v1514 = vsub.s32 %v1511, %v1513
      %v1515 = vrot.slane %v1501, %v1514
      %v1516 = vcombine.low %v1492, %v1508
      %v1517 = vcombine.high %v1492, %v1508
      %v1518 = vcombine.low %v1499, %v1515
      %v1519 = vcombine.high %v1499, %v1515
      %1521 = vrot.lane.b32.xlu0 %v1517, 8
      %v1522 = vpop.permute.xlu0 %1521
      %1525 = vrot.lane.b32.xlu0 %v1518, 16
      %v1526 = vpop.permute.xlu0 %1525
      %1529 = vrot.lane.b32.xlu0 %v1519, 24
      %v1530 = vpop.permute.xlu0 %1529
      %v1532 = vsel %vm962, %v1516, %v1522
      %vm1533 = vcmask 130048
      %v1534 = vsel %vm1533, %v1532, %v1526
      %vm1535 = vcmask 195584
      %v1536 = vsel %vm1535, %v1534, %v1530
      %v1537 = vld [vmem:[%s6] sm:$0xf]
      %v1538 = vld [vmem:[%s6 + $0x4] sm:$0xf]
      %v1539 = vld [vmem:[%s6 + $0x8] sm:$0xf]
      %v1540 = vld [vmem:[%s6 + $0xc] sm:$0xf]
      %v1541 = vpack.c.bf16 %v1536, %v1536
      %v1542 = vld [vmem:[%s7] sm:$0x1]
      %v1544 = vlaneseq
      %v1545 = vshrl.u32 %v1544, 7
      %v1546 = vsub.s32 0, %v1545
      %v1547 = vrot.slane %v1542, %v1546
      %v1553 = vunpack.c.l.b16 %v1537
      %v1554 = vunpack.c.l.b16 %v1538
      %v1555 = vunpack.c.l.b16 %v1539
      %v1556 = vunpack.c.l.b16 %v1540
      %v1557 = vpack.c.b16 %v1554, %v1553
      %v1558 = vpack.c.b16 %v1556, %v1555
      %v1562 = vsel %vm399, %v1541, 0
      %1564 = vmatprep.subr.bf16.mxu0 0
      %1565 = vmatpush1.bf16.msra.mxu0 %v1557
      %1566 = vmatprep.subr.bf16.mxu0 0
      %1567 = vmatpush1.bf16.msra.mxu0 %v1558
      %1568 = vmatprep.subr.bf16.mxu0 0
      %1569 = vmatpush1.bf16.msra.mxu0 0
      %1570 = vmatprep.subr.bf16.mxu0 0
      %1571 = vmatpush1.bf16.msra.mxu0 0
      %1572 = vmatprep.subr.bf16.mxu0 0
      %1573 = vmatpush1.bf16.msra.mxu0 0
      %1574 = vmatprep.subr.bf16.mxu0 0
      %1575 = vmatpush1.bf16.msra.mxu0 0
      %1576 = vmatprep.subr.bf16.mxu0 0
      %1577 = vmatpush1.bf16.msra.mxu0 0
      %1578 = vmatprep.subr.bf16.mxu0 0
      %1579 = vmatpush1.bf16.msra.mxu0 0
      %1580 = vmatprep.subr.bf16.mxu0 0
      %1581 = vmatpush1.bf16.msra.mxu0 0
      %1582 = vmatprep.subr.bf16.mxu0 0
      %1583 = vmatpush1.bf16.msra.mxu0 0
      %1584 = vmatprep.subr.bf16.mxu0 0
      %1585 = vmatpush1.bf16.msra.mxu0 0
      %1586 = vmatprep.subr.bf16.mxu0 0
      %1587 = vmatpush1.bf16.msra.mxu0 0
      %1588 = vmatprep.subr.bf16.mxu0 0
      %1589 = vmatpush1.bf16.msra.mxu0 0
      %1590 = vmatprep.subr.bf16.mxu0 0
      %1591 = vmatpush1.bf16.msra.mxu0 0
      %1592 = vmatprep.subr.bf16.mxu0 0
      %1593 = vmatpush1.bf16.msra.mxu0 0
      %1594 = vmatprep.subr.bf16.mxu0 0
      %1595 = vmatpush1.bf16.msra.mxu0 0
      %1596 = vmatprep.mubr.bf16.mxu0 0
      %1597 = vmatmul.mubr.bf16.gmra.mrb[0].mxu0 %v1562
      %v1598 = vpop.f32.mrb[0].mxu0
      %v1599 = vadd.f32 %v1547, %v1598
      %v1600 = vpop.f32.mrb[0].mxu0
      %v1601 = vpop.f32.mrb[0].mxu0
      %v1602 = vpop.f32.mrb[0].mxu0
      %1603 = vdwg.mxu0
      %v1604 = vadd.f32 %v373, %v1599
      %v1605 = vld [vmem:[%s8] sm:$0x1]
      %v1606 = vld [vmem:[%s9] sm:$0x1]
      %v1607 = vsel %vm399, %v1604, 0.0
      %1608 = vadd.xlane.f32.xlu0 %v1607
      %v1609 = vpop.xlane.xlu0 %1608
      %v1610 = vrcp.pop 32.0
      %v1611 = vmul.f32 %v1609, %v1610
      %v1612 = vsub.f32 %v1604, %v1611
      %v1613 = vmul.f32 %v1612, %v1612
      %v1614 = vsel %vm399, %v1613, 0.0
      %1615 = vadd.xlane.f32.xlu0 %v1614
      %v1616 = vpop.xlane.xlu0 %1615
      %v1617 = vmul.f32 %v1616, %v1610
      %v1618 = vadd.f32 %v1617, 1e-05
      %v1619 = vrsqrt.pop %v1618
      %v1620 = vmul.f32 %v1612, %v1619
      %v1622 = vlaneseq
      %v1623 = vshrl.u32 %v1622, 7
      %v1624 = vsub.s32 0, %v1623
      %v1625 = vrot.slane %v1605, %v1624
      %v1627 = vmul.f32 %v1620, %v1625
      %v1629 = vlaneseq
      %v1630 = vshrl.u32 %v1629, 7
      %v1631 = vsub.s32 0, %v1630
      %v1632 = vrot.slane %v1606, %v1631
      %v1634 = vadd.f32 %v1627, %v1632
      %1635 = vst.msk [vmem:[%s371] sm:$0xff] %vm399, %v1634
      %p1636 = scmp.lt.s32.totalorder %s21, 1
      %s1637 = scalar_select %p1636, %s21, 1
      %s1638 = smul.addr %s1637, 8
      %s1639 = scalar_lea.vmem %s10, %s1638
      // Predicated region
      $region61: #{vanilla_transformer_forward.19} parent=59 // pred_check
        %p1640 = pneg %p259
      $region62: #{vanilla_transformer_forward.19} parent=59 // pred_check_branch
        %1642 = sbr.rel (%p1640) target = $region64
      $region63: #{vanilla_transformer_forward.19} parent=59 // pred_region
        _
      $region64: #{vanilla_transformer_forward.19} parent=59 // pred_fallthru
        _
    $region60: #{vanilla_transformer_forward.19} parent=5 // pred_fallthru
      _
    %p1643 = scmp.le.s32.totalorder 2, %s16
    // Predicated region
    $region65: #{vanilla_transformer_forward.19} parent=5 // pred_check
      %p1644 = pneg %p1643
    $region66: #{vanilla_transformer_forward.19} parent=5 // pred_check_branch
      %1646 = sbr.rel (%p1644) target = $region68
    $region67: #{vanilla_transformer_forward.19} parent=5 // pred_region
      %s1647 = ssub.s32 %s16, 2
      // Predicated region
      $region69: #{vanilla_transformer_forward.19} parent=67 // pred_check
        %p1648 = pneg %p265
      $region70: #{vanilla_transformer_forward.19} parent=67 // pred_check_branch
        %1650 = sbr.rel (%p1648) target = $region72
      $region71: #{vanilla_transformer_forward.19} parent=67 // pred_region
        %p1651 = scmp.lt.s32.totalorder %s22, 1
        %s1652 = scalar_select %p1651, %s22, 1
        %s1653 = smul.addr %s1652, 8
        %s1654 = scalar_lea.vmem %s10, %s1653
      $region72: #{vanilla_transformer_forward.19} parent=67 // pred_fallthru
        _
    $region68: #{vanilla_transformer_forward.19} parent=5 // pred_fallthru
      _
  $region6: #{vanilla_transformer_forward.19} parent=0 // loop_footer
    %s20 = sadd.s32 1, %s16
  $region7: #{vanilla_transformer_forward.19} parent=0 // loop_footer_branch
    %15 = sbr.rel target = $region3
  $region8: #{vanilla_transformer_forward.19} parent=0 // loop_exit
    _

</llo_original>
